<compile_context>
chip_gen: v6e
topology: v6e:2x2x1
jax: 0.10.0
libtpu: 0.0.40
codegen_flags: <defaults>
</compile_context>

<pallas_src>
import math

import jax
import jax.numpy as jnp
from jax import lax
from jax.experimental import pallas as pl
from jax.experimental.pallas import tpu as pltpu

_LN_EPS = 1e-5

# cached kernel configuration: (wide_proj, single_buffer_weights)
_KERNEL_CONFIG = None


# ----------------------------------------------------------------------------
# Generation-aware sizing helpers
# ----------------------------------------------------------------------------
def _vmem_limit_bytes():
    """~100 MiB on 128-MiB VMEM parts (v5e/v6e), ~51 MiB on 64-MiB parts (v7x)."""
    try:
        info = pltpu.get_tpu_info()
        cap = int(getattr(info, "vmem_capacity_bytes", 0) or 0)
    except Exception:
        cap = 0
    if cap <= 0:
        cap = 64 * 1024 * 1024
    return int(min(cap * 0.8, 100 * 1024 * 1024))


def _pick_row_tile(n):
    if n <= 256:
        return n
    for t in (256, 128, 64, 32, 16, 8):
        if n % t == 0:
            return t
    return n


def _pick_vocab_tile(V):
    # smaller tile cap on 64-MiB-VMEM parts (v7x); larger on 128-MiB parts
    max_tv = 2048 if _vmem_limit_bytes() >= 80 * 1024 * 1024 else 1024
    if V % 128 != 0:
        return V
    tv = min(V, max_tv)
    while V % tv:
        tv //= 2
    return max(tv, 128)


# ----------------------------------------------------------------------------
# Fused transformer-layer kernel (one grid step per batch element)
# ----------------------------------------------------------------------------
def _make_layer_kernel(T, S, E, H, wide_proj):
    Dh = E // H
    f32 = jnp.float32
    bf16 = jnp.bfloat16

    def kernel(x_ref, kv_ref,
               wq_ref, bq_ref, wk_ref, bk_ref, wv_ref, bv_ref,
               wo_ref, bo_ref, ln1g_ref, ln1b_ref,
               w1_ref, b1_ref, w2_ref, b2_ref, ln2g_ref, ln2b_ref,
               out_ref, ent_ref):
        x = x_ref[...]      # (T, E) bf16
        kvx = kv_ref[...]   # (S, E) bf16

        if wide_proj:
            # Single full-width matmuls per projection (N = E lanes on the MXU);
            # 1/sqrt(Dh) already folded into wq/bq on the host.
            q = jnp.dot(x, wq_ref[...], preferred_element_type=f32) + bq_ref[...]    # (T,E)
            k = jnp.dot(kvx, wk_ref[...], preferred_element_type=f32) + bk_ref[...]  # (S,E)
            v = jnp.dot(kvx, wv_ref[...], preferred_element_type=f32) + bv_ref[...]  # (S,E)
            qh = q.reshape(T, H, Dh).transpose(1, 0, 2).astype(bf16)   # (H,T,Dh)
            kh = k.reshape(S, H, Dh).transpose(1, 0, 2).astype(bf16)   # (H,S,Dh)
            vh = v.reshape(S, H, Dh).transpose(1, 0, 2).astype(bf16)   # (H,S,Dh)
        else:
            # Lowering-safe fallback: per-head batched projections (leading batch dim).
            xb = jnp.broadcast_to(x[None], (H, T, E))
            kvb = jnp.broadcast_to(kvx[None], (H, S, E))
            qh = (jnp.einsum('hte,hed->htd', xb, wq_ref[...],
                             preferred_element_type=f32) + bq_ref[...]).astype(bf16)
            kh = (jnp.einsum('hse,hed->hsd', kvb, wk_ref[...],
                             preferred_element_type=f32) + bk_ref[...]).astype(bf16)
            vh = (jnp.einsum('hse,hed->hsd', kvb, wv_ref[...],
                             preferred_element_type=f32) + bv_ref[...]).astype(bf16)

        # scores + softmax (f32 elementwise math, single exp pass)
        # TODO(synk): flash-style tiling / online softmax for large T,S.
        s = jnp.einsum('htd,hsd->hts', qh, kh, preferred_element_type=f32)  # (H,T,S)
        sp = s - jnp.max(s, axis=-1, keepdims=True)
        e = jnp.exp(sp)
        z = jnp.sum(e, axis=-1, keepdims=True)                              # (H,T,1)
        p = e * pl.reciprocal(z, approx=True)                               # (H,T,S)

        # exact entropy without an (H,T,S) log: ent = log Z - sum(p * s')
        ent_ht = jnp.log(z[..., 0]) - jnp.sum(p * sp, axis=-1)              # (H,T)
        ent_ref[...] = jnp.max(ent_ht, axis=0, keepdims=True)               # (1,T)

        # attention output
        o = jnp.einsum('hts,hsd->htd', p.astype(bf16), vh,
                       preferred_element_type=f32)                          # (H,T,Dh)

        if wide_proj:
            # head-merge fused into a single (T, H*Dh) x (H*Dh, E) MXU matmul
            o_flat = o.transpose(1, 0, 2).reshape(T, E).astype(bf16)        # (T,E)
            a = jnp.dot(o_flat, wo_ref[...], preferred_element_type=f32) + bo_ref[...]
        else:
            # fallback: per-head out-proj accumulated over heads
            a = jnp.sum(jnp.einsum('htd,hde->hte', o.astype(bf16), wo_ref[...],
                                   preferred_element_type=f32), axis=0) + bo_ref[...]

        # LayerNorm 1 (no residual in the "NoRes" model)
        mu = jnp.mean(a, axis=-1, keepdims=True)
        var = jnp.mean((a - mu) ** 2, axis=-1, keepdims=True)
        x2 = (a - mu) * lax.rsqrt(var + _LN_EPS) * ln1g_ref[...] + ln1b_ref[...]

        # FFN: Linear(E,4E) -> ReLU -> Linear(4E,E)
        h1 = jnp.dot(x2.astype(bf16), w1_ref[...], preferred_element_type=f32) + b1_ref[...]
        h1 = jnp.maximum(h1, 0.0)
        f = jnp.dot(h1.astype(bf16), w2_ref[...], preferred_element_type=f32) + b2_ref[...]

        # LayerNorm 2 -> layer output (bf16, consumed by the vocab-head kernel)
        mu2 = jnp.mean(f, axis=-1, keepdims=True)
        var2 = jnp.mean((f - mu2) ** 2, axis=-1, keepdims=True)
        out_ref[...] = ((f - mu2) * lax.rsqrt(var2 + _LN_EPS) * ln2g_ref[...]
                        + ln2b_ref[...]).astype(out_ref.dtype)

    return kernel


# ----------------------------------------------------------------------------
# Host-side (one-time) weight preparation: transpose / head-split / fold scale / bf16
# ----------------------------------------------------------------------------
def prepare_kernel_params(p, num_heads):
    E = p["in_proj_w"].shape[1]
    H = num_heads
    Dh = E // H
    scale = 1.0 / math.sqrt(Dh)
    bf16, f32 = jnp.bfloat16, jnp.float32

    wq = p["in_proj_w"][0:E]
    wk = p["in_proj_w"][E:2 * E]
    wv = p["in_proj_w"][2 * E:3 * E]
    bq = p["in_proj_b"][0:E]
    bk = p["in_proj_b"][E:2 * E]
    bv = p["in_proj_b"][2 * E:3 * E]

    def heads_rhs(w):  # (E_out, E_in) -> (H, E_in, Dh): per-head RHS for x @ W.T
        return jnp.transpose(w.T.reshape(E, H, Dh), (1, 0, 2))

    return {
        "bo": p["out_proj_b"].reshape(1, E).astype(f32),
        "ln1g": p["ln1_g"].reshape(1, E).astype(f32),
        "ln1b": p["ln1_b"].reshape(1, E).astype(f32),
        "w1t": p["ff1_w"].T.astype(bf16),                      # (E, 4E)
        "b1": p["ff1_b"].reshape(1, -1).astype(f32),
        "w2t": p["ff2_w"].T.astype(bf16),                      # (4E, E)
        "b2": p["ff2_b"].reshape(1, E).astype(f32),
        "ln2g": p["ln2_g"].reshape(1, E).astype(f32),
        "ln2b": p["ln2_b"].reshape(1, E).astype(f32),
        "wvo": p["out_w"].T.astype(bf16),                      # (E, V)
        "bvo": p["out_b"].reshape(1, -1).astype(f32),
        # wide-projection layout: (E, E) MXU RHS operands (preferred)
        "wide": {
            "wq": (wq.T * scale).astype(bf16),
            "bq": (bq * scale).reshape(1, E).astype(f32),
            "wk": wk.T.astype(bf16),
            "bk": bk.reshape(1, E).astype(f32),
            "wv": wv.T.astype(bf16),
            "bv": bv.reshape(1, E).astype(f32),
            "wo": p["out_proj_w"].T.astype(bf16),              # (H*Dh, E)
        },
        # per-head layout (lowering-safe fallback)
        "heads": {
            "wq": (heads_rhs(wq) * scale).astype(bf16),
            "bq": (bq * scale).reshape(H, 1, Dh).astype(f32),
            "wk": heads_rhs(wk).astype(bf16),
            "bk": bk.reshape(H, 1, Dh).astype(f32),
            "wv": heads_rhs(wv).astype(bf16),
            "bv": bv.reshape(H, 1, Dh).astype(f32),
            "wo": p["out_proj_w"].T.reshape(H, Dh, E).astype(bf16),
        },
    }


# ----------------------------------------------------------------------------
# Fused layer wrapper (pallas_call #1)
# ----------------------------------------------------------------------------
def fused_layer_forward(emb, kv, kp, num_heads):
    """emb: (B,T,E), kv: (B,S,E). Returns (layer_out (B,T,E) bf16,
    ent (B,1,T) f32 = max-over-heads attention entropy)."""
    global _KERNEL_CONFIG
    B, T, E = emb.shape
    S = kv.shape[1]
    H = num_heads
    assert E % H == 0

    # activations are only consumed as bf16 MXU LHS -> ship them as bf16
    emb_b = emb.astype(jnp.bfloat16)
    kv_b = kv.astype(jnp.bfloat16)
    vmem_limit = _vmem_limit_bytes()

    def run(wide_proj, single_buffer_weights):
        w = kp["wide"] if wide_proj else kp["heads"]
        const_ws = (w["wq"], w["bq"], w["wk"], w["bk"], w["wv"], w["bv"], w["wo"],
                    kp["bo"], kp["ln1g"], kp["ln1b"],
                    kp["w1t"], kp["b1"], kp["w2t"], kp["b2"], kp["ln2g"], kp["ln2b"])

        def weight_spec(arr):
            idx = lambda b, nd=arr.ndim: (0,) * nd
            if single_buffer_weights:
                # constant block index across the whole grid -> no double-buffering
                return pl.BlockSpec(arr.shape, idx, pipeline_mode=pl.Buffered(1))
            return pl.BlockSpec(arr.shape, idx)

        in_specs = ([pl.BlockSpec((None, T, E), lambda b: (b, 0, 0)),   # emb (per batch)
                     pl.BlockSpec((None, S, E), lambda b: (b, 0, 0))]   # kv  (per batch)
                    + [weight_spec(arr) for arr in const_ws])
        out_specs = [pl.BlockSpec((None, T, E), lambda b: (b, 0, 0)),   # layer out (bf16)
                     pl.BlockSpec((None, 1, T), lambda b: (b, 0, 0))]   # entropy (lanes=T)

        return pl.pallas_call(
            _make_layer_kernel(T, S, E, H, wide_proj),
            out_shape=(jax.ShapeDtypeStruct((B, T, E), jnp.bfloat16),
                       jax.ShapeDtypeStruct((B, 1, T), jnp.float32)),
            grid=(B,),
            in_specs=in_specs,
            out_specs=out_specs,
            compiler_params=pltpu.CompilerParams(
                dimension_semantics=("parallel",),
                vmem_limit_bytes=vmem_limit),
        )(emb_b, kv_b, *const_ws)

    all_cfgs = [(True, True), (True, False), (False, True), (False, False)]
    cfgs = all_cfgs if _KERNEL_CONFIG is None else (
        [_KERNEL_CONFIG] + [c for c in all_cfgs if c != _KERNEL_CONFIG])
    last_err = None
    for cfg in cfgs:
        try:
            out, ent = run(*cfg)
        except Exception as err:   # lowering not supported -> try a safer variant
            last_err = err
            continue
        _KERNEL_CONFIG = cfg
        return out, ent
    raise last_err


# ----------------------------------------------------------------------------
# Vocab head (pallas_call #2): standard tiled matmul, weight streamed once per tile
# ----------------------------------------------------------------------------
def vocab_head_forward(layer_out, kp, vocab_tile=None):
    B, T, E = layer_out.shape
    V = kp["wvo"].shape[1]
    M = B * T
    x2d = layer_out.reshape(M, E)
    TM = _pick_row_tile(M)
    TV = _pick_vocab_tile(V) if vocab_tile is None else vocab_tile
    assert V % TV == 0 and M % TM == 0

    def kernel(x_ref, w_ref, b_ref, o_ref):
        o_ref[...] = (jnp.dot(x_ref[...], w_ref[...],
                              preferred_element_type=jnp.float32) + b_ref[...])

    logits = pl.pallas_call(
        kernel,
        out_shape=jax.ShapeDtypeStruct((M, V), jnp.float32),
        grid=(M // TM, V // TV),
        in_specs=[pl.BlockSpec((TM, E), lambda i, j: (i, 0)),
                  pl.BlockSpec((E, TV), lambda i, j: (0, j)),
                  pl.BlockSpec((1, TV), lambda i, j: (0, j))],
        out_specs=pl.BlockSpec((TM, TV), lambda i, j: (i, j)),
        compiler_params=pltpu.CompilerParams(
            dimension_semantics=("parallel", "parallel"),
            vmem_limit_bytes=_vmem_limit_bytes()),
    )(x2d, kp["wvo"], kp["bvo"])
    return logits.reshape(B, T, V)


def transformer_forward(emb, kv, kp, num_heads, vocab_tile=None):
    layer_out, ent = fused_layer_forward(emb, kv, kp, num_heads)
    logits = vocab_head_forward(layer_out, kp, vocab_tile=vocab_tile)
    return logits, ent


# ----------------------------------------------------------------------------
# Full model: embedding + memory layer + vocab head + memory update (JAX glue)
# ----------------------------------------------------------------------------
class PallasTransformerXLNoRes:
    def __init__(self, vocab_size, embed_dim, num_heads, mem_size, key):
        E, V = embed_dim, vocab_size
        ks = jax.random.split(key, 8)
        s = 0.02
        self.num_heads = num_heads
        self.mem_size = mem_size
        self.params = {
            "embed": jax.random.normal(ks[0], (V, E), jnp.float32) * s,
            "in_proj_w": jax.random.normal(ks[1], (3 * E, E), jnp.float32) * s,
            "in_proj_b": jnp.zeros((3 * E,), jnp.float32),
            "out_proj_w": jax.random.normal(ks[2], (E, E), jnp.float32) * s,
            "out_proj_b": jnp.zeros((E,), jnp.float32),
            "ln1_g": jnp.ones((E,), jnp.float32),
            "ln1_b": jnp.zeros((E,), jnp.float32),
            "ff1_w": jax.random.normal(ks[3], (4 * E, E), jnp.float32) * s,
            "ff1_b": jax.random.normal(ks[4], (4 * E,), jnp.float32) * s,
            "ff2_w": jax.random.normal(ks[5], (E, 4 * E), jnp.float32) * s,
            "ff2_b": jnp.zeros((E,), jnp.float32),
            "ln2_g": jnp.ones((E,), jnp.float32),
            "ln2_b": jnp.zeros((E,), jnp.float32),
            "out_w": jax.random.normal(ks[6], (V, E), jnp.float32) * s,
            "out_b": jax.random.normal(ks[7], (V,), jnp.float32) * s,
        }
        # one-time host-side weight layout prep (transpose / head-split / bf16)
        self.kparams = prepare_kernel_params(self.params, num_heads)

    def __call__(self, tokens, mem_x, mem_ent, vocab_tile=None):
        p = self.params
        B, T = tokens.shape
        emb = jnp.take(p["embed"], tokens, axis=0)                    # (B, T, E)

        if mem_x is None:
            kv = emb                                                  # k = v = x
        else:
            M = mem_x.shape[0]
            mem_b = jnp.broadcast_to(mem_x[None], (B, M, mem_x.shape[1]))
            kv = jnp.concatenate([mem_b, emb], axis=1)                # (B, M+T, E)

        logits, ent = transformer_forward(emb, kv, self.kparams, self.num_heads,
                                          vocab_tile=vocab_tile)

        # ent: (B,1,T) = max-over-heads entropy (torch: ent_h[0].max(dim=0)[0])
        ent_tok = ent[0, 0]                                           # (T,)
        x_det = lax.stop_gradient(emb[0])                             # (T, E)

        if mem_x is None:
            mem_x_new, mem_ent_new = x_det, ent_tok
        else:
            mem_x_new = jnp.concatenate([mem_x, x_det], axis=0)
            mem_ent_new = jnp.concatenate([mem_ent, ent_tok], axis=0)

        eps = 1e-10
        if mem_x_new.shape[0] > self.mem_size:                        # static shape check
            total_ent = jnp.sum(mem_ent_new) + eps
            top_vals, top_idx = lax.top_k(mem_ent_new, self.mem_size)
            ratio = jnp.sum(top_vals) / total_ent                     # traced; no host sync
            mem_x_new = mem_x_new[top_idx]
            mem_ent_new = mem_ent_new[top_idx]
        else:
            ratio = jnp.float32(1.0)

        return logits, mem_x_new, mem_ent_new, ratio


# ----------------------------------------------------------------------------
# Pure-JAX f32 reference (mirrors torch semantics) for correctness checks
# ----------------------------------------------------------------------------
def reference_layer(emb, kv, p, num_heads):
    B, T, E = emb.shape
    S = kv.shape[1]
    H = num_heads
    Dh = E // H
    q = emb @ p["in_proj_w"][0:E].T + p["in_proj_b"][0:E]
    k = kv @ p["in_proj_w"][E:2 * E].T + p["in_proj_b"][E:2 * E]
    v = kv @ p["in_proj_w"][2 * E:].T + p["in_proj_b"][2 * E:]
    q = q.reshape(B, T, H, Dh).transpose(0, 2, 1, 3) / math.sqrt(Dh)
    k = k.reshape(B, S, H, Dh).transpose(0, 2, 1, 3)
    v = v.reshape(B, S, H, Dh).transpose(0, 2, 1, 3)
    w = jax.nn.softmax(jnp.einsum("bhtd,bhsd->bhts", q, k), axis=-1)
    ao = jnp.einsum("bhts,bhsd->bhtd", w, v).transpose(0, 2, 1, 3).reshape(B, T, E)
    ao = ao @ p["out_proj_w"].T + p["out_proj_b"]

    def ln(x, g, b):
        mu = x.mean(-1, keepdims=True)
        var = ((x - mu) ** 2).mean(-1, keepdims=True)
        return (x - mu) / jnp.sqrt(var + _LN_EPS) * g + b

    x2 = ln(ao, p["ln1_g"], p["ln1_b"])
    f = jnp.maximum(x2 @ p["ff1_w"].T + p["ff1_b"], 0.0) @ p["ff2_w"].T + p["ff2_b"]
    out = ln(f, p["ln2_g"], p["ln2_b"])
    logits = out @ p["out_w"].T + p["out_b"]
    ent = -(w * jnp.log(w + 1e-10)).sum(-1)            # (B, H, T)
    return logits, ent.max(axis=1)                     # (B, T): max over heads


# ----------------------------------------------------------------------------
if __name__ == "__main__":
    vocab_size = 256
    embed_dim = 32
    num_heads = 2
    mem_size = 10
    B, T = 2, 8

    key = jax.random.PRNGKey(0)
    model = PallasTransformerXLNoRes(vocab_size, embed_dim, num_heads, mem_size, key)

    tokens = jax.random.randint(jax.random.fold_in(key, 123), (B, T), 0, vocab_size,
                                dtype=jnp.int32)

    # step 1: no memory (k = v = x path); vocab_tile=128 -> 2 vocab tiles exercised
    logits1, mem_x, mem_ent, ratio1 = model(tokens, None, None, vocab_tile=128)
    jax.block_until_ready(logits1)

    # correctness check of the fused kernels vs. pure-JAX f32 reference
    # (kernels use bf16 MXU inputs + approx reciprocal -> loose tolerance)
    emb = jnp.take(model.params["embed"], tokens, axis=0)
    ref_logits, ref_ent = reference_layer(emb, emb, model.params, num_heads)
    klogits, kent = transformer_forward(emb, emb, model.kparams, num_heads, vocab_tile=128)
    assert jnp.allclose(klogits, ref_logits, atol=2e-2, rtol=2e-2), \
        float(jnp.max(jnp.abs(klogits - ref_logits)))
    assert jnp.allclose(kent[:, 0, :], ref_ent, atol=2e-2, rtol=2e-2), \
        float(jnp.max(jnp.abs(kent[:, 0, :] - ref_ent)))

    # step 2: with memory -> concat + top-k eviction path (mem grows to 16 > 10)
    tokens2 = jax.random.randint(jax.random.fold_in(key, 456), (B, T), 0, vocab_size,
                                 dtype=jnp.int32)
    logits2, mem_x2, mem_ent2, ratio2 = model(tokens2, mem_x, mem_ent, vocab_tile=128)
    jax.block_until_ready(logits2)

    # check the memory (S != T) path too
    emb2 = jnp.take(model.params["embed"], tokens2, axis=0)
    kv2 = jnp.concatenate([jnp.broadcast_to(mem_x[None], (B,) + mem_x.shape), emb2], axis=1)
    ref_logits2, _ = reference_layer(emb2, kv2, model.params, num_heads)
    assert jnp.allclose(logits2, ref_logits2, atol=2e-2, rtol=2e-2), \
        float(jnp.max(jnp.abs(logits2 - ref_logits2)))

    assert logits1.shape == (B, T, vocab_size)
    assert logits2.shape == (B, T, vocab_size)
    assert mem_x2.shape == (mem_size, embed_dim)
    assert mem_ent2.shape == (mem_size,)
    assert 0.0 < float(ratio2) <= 1.0 and float(ratio1) == 1.0

    print("KERNEL_OK")
</pallas_src>

<mosaic_0001>
module attributes {stable_mosaic.version = 11 : i64} {
  func.func @kernel(%arg0: i32, %arg1: memref<1x8x32xbf16, #tpu.memory_space<vmem>>, %arg2: memref<1x8x32xbf16, #tpu.memory_space<vmem>>, %arg3: memref<32x32xbf16, #tpu.memory_space<vmem>>, %arg4: memref<1x32xf32, #tpu.memory_space<vmem>>, %arg5: memref<32x32xbf16, #tpu.memory_space<vmem>>, %arg6: memref<1x32xf32, #tpu.memory_space<vmem>>, %arg7: memref<32x32xbf16, #tpu.memory_space<vmem>>, %arg8: memref<1x32xf32, #tpu.memory_space<vmem>>, %arg9: memref<32x32xbf16, #tpu.memory_space<vmem>>, %arg10: memref<1x32xf32, #tpu.memory_space<vmem>>, %arg11: memref<1x32xf32, #tpu.memory_space<vmem>>, %arg12: memref<1x32xf32, #tpu.memory_space<vmem>>, %arg13: memref<32x128xbf16, #tpu.memory_space<vmem>>, %arg14: memref<1x128xf32, #tpu.memory_space<vmem>>, %arg15: memref<128x32xbf16, #tpu.memory_space<vmem>>, %arg16: memref<1x32xf32, #tpu.memory_space<vmem>>, %arg17: memref<1x32xf32, #tpu.memory_space<vmem>>, %arg18: memref<1x32xf32, #tpu.memory_space<vmem>>, %arg19: memref<1x8x32xbf16, #tpu.memory_space<vmem>>, %arg20: memref<1x1x8xf32, #tpu.memory_space<vmem>>) attributes {dimension_semantics = [#tpu.dimension_semantics<parallel>], iteration_bounds = array<i64: 2>, scalar_prefetch = 0 : i64, scratch_operands = 0 : i64, tpu.core_type = #tpu.core_type<tc>, window_params = [{transform_indices = @transform_0, window_bounds = array<i64: 1, 8, 32>}, {transform_indices = @transform_1, window_bounds = array<i64: 1, 8, 32>}, {pipeline_mode = #tpu.pipeline_mode<synchronous>, transform_indices = @transform_2, window_bounds = array<i64: 32, 32>}, {pipeline_mode = #tpu.pipeline_mode<synchronous>, transform_indices = @transform_3, window_bounds = array<i64: 1, 32>}, {pipeline_mode = #tpu.pipeline_mode<synchronous>, transform_indices = @transform_4, window_bounds = array<i64: 32, 32>}, {pipeline_mode = #tpu.pipeline_mode<synchronous>, transform_indices = @transform_5, window_bounds = array<i64: 1, 32>}, {pipeline_mode = #tpu.pipeline_mode<synchronous>, transform_indices = @transform_6, window_bounds = array<i64: 32, 32>}, {pipeline_mode = #tpu.pipeline_mode<synchronous>, transform_indices = @transform_7, window_bounds = array<i64: 1, 32>}, {pipeline_mode = #tpu.pipeline_mode<synchronous>, transform_indices = @transform_8, window_bounds = array<i64: 32, 32>}, {pipeline_mode = #tpu.pipeline_mode<synchronous>, transform_indices = @transform_9, window_bounds = array<i64: 1, 32>}, {pipeline_mode = #tpu.pipeline_mode<synchronous>, transform_indices = @transform_10, window_bounds = array<i64: 1, 32>}, {pipeline_mode = #tpu.pipeline_mode<synchronous>, transform_indices = @transform_11, window_bounds = array<i64: 1, 32>}, {pipeline_mode = #tpu.pipeline_mode<synchronous>, transform_indices = @transform_12, window_bounds = array<i64: 32, 128>}, {pipeline_mode = #tpu.pipeline_mode<synchronous>, transform_indices = @transform_13, window_bounds = array<i64: 1, 128>}, {pipeline_mode = #tpu.pipeline_mode<synchronous>, transform_indices = @transform_14, window_bounds = array<i64: 128, 32>}, {pipeline_mode = #tpu.pipeline_mode<synchronous>, transform_indices = @transform_15, window_bounds = array<i64: 1, 32>}, {pipeline_mode = #tpu.pipeline_mode<synchronous>, transform_indices = @transform_16, window_bounds = array<i64: 1, 32>}, {pipeline_mode = #tpu.pipeline_mode<synchronous>, transform_indices = @transform_17, window_bounds = array<i64: 1, 32>}, {transform_indices = @transform_18, window_bounds = array<i64: 1, 8, 32>}, {transform_indices = @transform_19, window_bounds = array<i64: 1, 1, 8>}]} {
    %c0 = arith.constant 0 : index
    %c0_0 = arith.constant 0 : index
    %c0_1 = arith.constant 0 : index
    %0 = vector.load %arg1[%c0, %c0_0, %c0_1] : memref<1x8x32xbf16, #tpu.memory_space<vmem>>, vector<1x8x32xbf16>
    %1 = vector.shape_cast %0 : vector<1x8x32xbf16> to vector<8x32xbf16>
    %c0_2 = arith.constant 0 : index
    %c0_3 = arith.constant 0 : index
    %c0_4 = arith.constant 0 : index
    %2 = vector.load %arg2[%c0_2, %c0_3, %c0_4] : memref<1x8x32xbf16, #tpu.memory_space<vmem>>, vector<1x8x32xbf16>
    %3 = vector.shape_cast %2 : vector<1x8x32xbf16> to vector<8x32xbf16>
    %c0_5 = arith.constant 0 : index
    %c0_6 = arith.constant 0 : index
    %4 = vector.load %arg3[%c0_5, %c0_6] : memref<32x32xbf16, #tpu.memory_space<vmem>>, vector<32x32xbf16>
    %cst = arith.constant dense<0.000000e+00> : vector<8x32xf32>
    %5 = tpu.matmul %1, %4, %cst {dimension_numbers = #tpu.dot_dimension_numbers<[1], [0], [0], [1], [0, 0, 1, 1], [], []>} : vector<8x32xbf16>, vector<32x32xbf16>, vector<8x32xf32> -> vector<8x32xf32>
    %c0_7 = arith.constant 0 : index
    %c0_8 = arith.constant 0 : index
    %6 = vector.load %arg4[%c0_7, %c0_8] : memref<1x32xf32, #tpu.memory_space<vmem>>, vector<1x32xf32>
    %7 = vector.broadcast %6 : vector<1x32xf32> to vector<8x32xf32>
    %8 = arith.addf %5, %7 : vector<8x32xf32>
    %c0_9 = arith.constant 0 : index
    %c0_10 = arith.constant 0 : index
    %9 = vector.load %arg5[%c0_9, %c0_10] : memref<32x32xbf16, #tpu.memory_space<vmem>>, vector<32x32xbf16>
    %cst_11 = arith.constant dense<0.000000e+00> : vector<8x32xf32>
    %10 = tpu.matmul %3, %9, %cst_11 {dimension_numbers = #tpu.dot_dimension_numbers<[1], [0], [0], [1], [0, 0, 1, 1], [], []>} : vector<8x32xbf16>, vector<32x32xbf16>, vector<8x32xf32> -> vector<8x32xf32>
    %c0_12 = arith.constant 0 : index
    %c0_13 = arith.constant 0 : index
    %11 = vector.load %arg6[%c0_12, %c0_13] : memref<1x32xf32, #tpu.memory_space<vmem>>, vector<1x32xf32>
    %12 = vector.broadcast %11 : vector<1x32xf32> to vector<8x32xf32>
    %13 = arith.addf %10, %12 : vector<8x32xf32>
    %c0_14 = arith.constant 0 : index
    %c0_15 = arith.constant 0 : index
    %14 = vector.load %arg7[%c0_14, %c0_15] : memref<32x32xbf16, #tpu.memory_space<vmem>>, vector<32x32xbf16>
    %cst_16 = arith.constant dense<0.000000e+00> : vector<8x32xf32>
    %15 = tpu.matmul %3, %14, %cst_16 {dimension_numbers = #tpu.dot_dimension_numbers<[1], [0], [0], [1], [0, 0, 1, 1], [], []>} : vector<8x32xbf16>, vector<32x32xbf16>, vector<8x32xf32> -> vector<8x32xf32>
    %c0_17 = arith.constant 0 : index
    %c0_18 = arith.constant 0 : index
    %16 = vector.load %arg8[%c0_17, %c0_18] : memref<1x32xf32, #tpu.memory_space<vmem>>, vector<1x32xf32>
    %17 = vector.broadcast %16 : vector<1x32xf32> to vector<8x32xf32>
    %18 = arith.addf %15, %17 : vector<8x32xf32>
    %19 = vector.shape_cast %8 : vector<8x32xf32> to vector<8x2x16xf32>
    %20 = tpu.transpose %19, [1, 0, 2] : vector<8x2x16xf32> -> vector<2x8x16xf32>
    %21 = arith.truncf %20 : vector<2x8x16xf32> to vector<2x8x16xbf16>
    %22 = vector.shape_cast %13 : vector<8x32xf32> to vector<8x2x16xf32>
    %23 = tpu.transpose %22, [1, 0, 2] : vector<8x2x16xf32> -> vector<2x8x16xf32>
    %24 = arith.truncf %23 : vector<2x8x16xf32> to vector<2x8x16xbf16>
    %25 = vector.shape_cast %18 : vector<8x32xf32> to vector<8x2x16xf32>
    %26 = tpu.transpose %25, [1, 0, 2] : vector<8x2x16xf32> -> vector<2x8x16xf32>
    %27 = arith.truncf %26 : vector<2x8x16xf32> to vector<2x8x16xbf16>
    "tpu.trace_start"() <{level = 10 : i32, message = "htd,hsd->hts"}> : () -> ()
    %cst_19 = arith.constant dense<0.000000e+00> : vector<2x8x8xf32>
    %28 = tpu.matmul %21, %24, %cst_19 {dimension_numbers = #tpu.dot_dimension_numbers<[2], [2], [1], [1], [0, 0, 0, 1, 1, 1], [0], [0]>} : vector<2x8x16xbf16>, vector<2x8x16xbf16>, vector<2x8x8xf32> -> vector<2x8x8xf32>
    "tpu.trace_stop"() : () -> ()
    %cst_20 = arith.constant dense<0xFF800000> : vector<2x8xf32>
    %29 = vector.multi_reduction <maximumf>, %28, %cst_20 [2] : vector<2x8x8xf32> to vector<2x8xf32>
    %30 = vector.shape_cast %29 : vector<2x8xf32> to vector<2x8x1xf32>
    %31 = vector.broadcast %30 : vector<2x8x1xf32> to vector<2x8x8xf32>
    %32 = arith.subf %28, %31 : vector<2x8x8xf32>
    %33 = math.exp %32 : vector<2x8x8xf32>
    %cst_21 = arith.constant dense<0.000000e+00> : vector<2x8xf32>
    %34 = vector.multi_reduction <add>, %33, %cst_21 [2] : vector<2x8x8xf32> to vector<2x8xf32>
    %35 = vector.shape_cast %34 : vector<2x8xf32> to vector<2x8x1xf32>
    %36 = tpu.reciprocal %35 {approx = true} : vector<2x8x1xf32> -> vector<2x8x1xf32>
    %37 = vector.broadcast %36 : vector<2x8x1xf32> to vector<2x8x8xf32>
    %38 = arith.mulf %33, %37 : vector<2x8x8xf32>
    %39 = vector.shape_cast %35 : vector<2x8x1xf32> to vector<2x8xf32>
    %40 = math.log %39 : vector<2x8xf32>
    %41 = arith.mulf %38, %32 : vector<2x8x8xf32>
    %cst_22 = arith.constant dense<0.000000e+00> : vector<2x8xf32>
    %42 = vector.multi_reduction <add>, %41, %cst_22 [2] : vector<2x8x8xf32> to vector<2x8xf32>
    %43 = arith.subf %40, %42 : vector<2x8xf32>
    %cst_23 = arith.constant dense<0xFF800000> : vector<8xf32>
    %44 = vector.multi_reduction <maximumf>, %43, %cst_23 [0] : vector<2x8xf32> to vector<8xf32>
    %45 = vector.shape_cast %44 : vector<8xf32> to vector<1x8xf32>
    %c0_24 = arith.constant 0 : index
    %c0_25 = arith.constant 0 : index
    %c0_26 = arith.constant 0 : index
    %46 = vector.load %arg20[%c0_24, %c0_25, %c0_26] : memref<1x1x8xf32, #tpu.memory_space<vmem>>, vector<1x1x8xf32>
    %47 = vector.shape_cast %46 : vector<1x1x8xf32> to vector<1x8xf32>
    %48 = vector.shape_cast %45 : vector<1x8xf32> to vector<1x1x8xf32>
    tpu.vector_store %arg20[%c0_24, %c0_25, %c0_26], %48 {strides = array<i32>} : memref<1x1x8xf32, #tpu.memory_space<vmem>>, vector<1x1x8xf32>,
    %49 = arith.truncf %38 : vector<2x8x8xf32> to vector<2x8x8xbf16>
    "tpu.trace_start"() <{level = 10 : i32, message = "hts,hsd->htd"}> : () -> ()
    %cst_27 = arith.constant dense<0.000000e+00> : vector<2x8x16xf32>
    %50 = tpu.matmul %49, %27, %cst_27 {dimension_numbers = #tpu.dot_dimension_numbers<[2], [1], [1], [2], [0, 0, 0, 1, 1, 2], [0], [0]>} : vector<2x8x8xbf16>, vector<2x8x16xbf16>, vector<2x8x16xf32> -> vector<2x8x16xf32>
    "tpu.trace_stop"() : () -> ()
    %51 = tpu.transpose %50, [1, 0, 2] : vector<2x8x16xf32> -> vector<8x2x16xf32>
    %52 = vector.shape_cast %51 : vector<8x2x16xf32> to vector<8x32xf32>
    %53 = arith.truncf %52 : vector<8x32xf32> to vector<8x32xbf16>
    %c0_28 = arith.constant 0 : index
    %c0_29 = arith.constant 0 : index
    %54 = vector.load %arg9[%c0_28, %c0_29] : memref<32x32xbf16, #tpu.memory_space<vmem>>, vector<32x32xbf16>
    %cst_30 = arith.constant dense<0.000000e+00> : vector<8x32xf32>
    %55 = tpu.matmul %53, %54, %cst_30 {dimension_numbers = #tpu.dot_dimension_numbers<[1], [0], [0], [1], [0, 0, 1, 1], [], []>} : vector<8x32xbf16>, vector<32x32xbf16>, vector<8x32xf32> -> vector<8x32xf32>
    %c0_31 = arith.constant 0 : index
    %c0_32 = arith.constant 0 : index
    %56 = vector.load %arg10[%c0_31, %c0_32] : memref<1x32xf32, #tpu.memory_space<vmem>>, vector<1x32xf32>
    %57 = vector.broadcast %56 : vector<1x32xf32> to vector<8x32xf32>
    %58 = arith.addf %55, %57 : vector<8x32xf32>
    %cst_33 = arith.constant dense<0.000000e+00> : vector<8xf32>
    %59 = vector.multi_reduction <add>, %58, %cst_33 [1] : vector<8x32xf32> to vector<8xf32>
    %60 = vector.shape_cast %59 : vector<8xf32> to vector<8x1xf32>
    %cst_34 = arith.constant 3.200000e+01 : f32
    %61 = vector.broadcast %cst_34 : f32 to vector<8x1xf32>
    %62 = arith.divf %60, %61 : vector<8x1xf32>
    %63 = vector.broadcast %62 : vector<8x1xf32> to vector<8x32xf32>
    %64 = arith.subf %58, %63 : vector<8x32xf32>
    %65 = arith.mulf %64, %64 : vector<8x32xf32>
    %cst_35 = arith.constant dense<0.000000e+00> : vector<8xf32>
    %66 = vector.multi_reduction <add>, %65, %cst_35 [1] : vector<8x32xf32> to vector<8xf32>
    %67 = vector.shape_cast %66 : vector<8xf32> to vector<8x1xf32>
    %cst_36 = arith.constant 3.200000e+01 : f32
    %68 = vector.broadcast %cst_36 : f32 to vector<8x1xf32>
    %69 = arith.divf %67, %68 : vector<8x1xf32>
    %70 = vector.broadcast %62 : vector<8x1xf32> to vector<8x32xf32>
    %71 = arith.subf %58, %70 : vector<8x32xf32>
    %cst_37 = arith.constant 9.99999974E-6 : f32
    %72 = vector.broadcast %cst_37 : f32 to vector<8x1xf32>
    %73 = arith.addf %69, %72 : vector<8x1xf32>
    %74 = math.rsqrt %73 : vector<8x1xf32>
    %75 = vector.broadcast %74 : vector<8x1xf32> to vector<8x32xf32>
    %76 = arith.mulf %71, %75 : vector<8x32xf32>
    %c0_38 = arith.constant 0 : index
    %c0_39 = arith.constant 0 : index
    %77 = vector.load %arg11[%c0_38, %c0_39] : memref<1x32xf32, #tpu.memory_space<vmem>>, vector<1x32xf32>
    %78 = vector.broadcast %77 : vector<1x32xf32> to vector<8x32xf32>
    %79 = arith.mulf %76, %78 : vector<8x32xf32>
    %c0_40 = arith.constant 0 : index
    %c0_41 = arith.constant 0 : index
    %80 = vector.load %arg12[%c0_40, %c0_41] : memref<1x32xf32, #tpu.memory_space<vmem>>, vector<1x32xf32>
    %81 = vector.broadcast %80 : vector<1x32xf32> to vector<8x32xf32>
    %82 = arith.addf %79, %81 : vector<8x32xf32>
    %83 = arith.truncf %82 : vector<8x32xf32> to vector<8x32xbf16>
    %c0_42 = arith.constant 0 : index
    %c0_43 = arith.constant 0 : index
    %84 = vector.load %arg13[%c0_42, %c0_43] : memref<32x128xbf16, #tpu.memory_space<vmem>>, vector<32x128xbf16>
    %cst_44 = arith.constant dense<0.000000e+00> : vector<8x128xf32>
    %85 = tpu.matmul %83, %84, %cst_44 {dimension_numbers = #tpu.dot_dimension_numbers<[1], [0], [0], [1], [0, 0, 1, 1], [], []>} : vector<8x32xbf16>, vector<32x128xbf16>, vector<8x128xf32> -> vector<8x128xf32>
    %c0_45 = arith.constant 0 : index
    %c0_46 = arith.constant 0 : index
    %86 = vector.load %arg14[%c0_45, %c0_46] : memref<1x128xf32, #tpu.memory_space<vmem>>, vector<1x128xf32>
    %87 = vector.broadcast %86 : vector<1x128xf32> to vector<8x128xf32>
    %88 = arith.addf %85, %87 : vector<8x128xf32>
    %cst_47 = arith.constant 0.000000e+00 : f32
    %89 = vector.broadcast %cst_47 : f32 to vector<8x128xf32>
    %90 = arith.maximumf %88, %89 : vector<8x128xf32>
    %91 = arith.truncf %90 : vector<8x128xf32> to vector<8x128xbf16>
    %c0_48 = arith.constant 0 : index
    %c0_49 = arith.constant 0 : index
    %92 = vector.load %arg15[%c0_48, %c0_49] : memref<128x32xbf16, #tpu.memory_space<vmem>>, vector<128x32xbf16>
    %cst_50 = arith.constant dense<0.000000e+00> : vector<8x32xf32>
    %93 = tpu.matmul %91, %92, %cst_50 {dimension_numbers = #tpu.dot_dimension_numbers<[1], [0], [0], [1], [0, 0, 1, 1], [], []>} : vector<8x128xbf16>, vector<128x32xbf16>, vector<8x32xf32> -> vector<8x32xf32>
    %c0_51 = arith.constant 0 : index
    %c0_52 = arith.constant 0 : index
    %94 = vector.load %arg16[%c0_51, %c0_52] : memref<1x32xf32, #tpu.memory_space<vmem>>, vector<1x32xf32>
    %95 = vector.broadcast %94 : vector<1x32xf32> to vector<8x32xf32>
    %96 = arith.addf %93, %95 : vector<8x32xf32>
    %cst_53 = arith.constant dense<0.000000e+00> : vector<8xf32>
    %97 = vector.multi_reduction <add>, %96, %cst_53 [1] : vector<8x32xf32> to vector<8xf32>
    %98 = vector.shape_cast %97 : vector<8xf32> to vector<8x1xf32>
    %cst_54 = arith.constant 3.200000e+01 : f32
    %99 = vector.broadcast %cst_54 : f32 to vector<8x1xf32>
    %100 = arith.divf %98, %99 : vector<8x1xf32>
    %101 = vector.broadcast %100 : vector<8x1xf32> to vector<8x32xf32>
    %102 = arith.subf %96, %101 : vector<8x32xf32>
    %103 = arith.mulf %102, %102 : vector<8x32xf32>
    %cst_55 = arith.constant dense<0.000000e+00> : vector<8xf32>
    %104 = vector.multi_reduction <add>, %103, %cst_55 [1] : vector<8x32xf32> to vector<8xf32>
    %105 = vector.shape_cast %104 : vector<8xf32> to vector<8x1xf32>
    %cst_56 = arith.constant 3.200000e+01 : f32
    %106 = vector.broadcast %cst_56 : f32 to vector<8x1xf32>
    %107 = arith.divf %105, %106 : vector<8x1xf32>
    %108 = vector.broadcast %100 : vector<8x1xf32> to vector<8x32xf32>
    %109 = arith.subf %96, %108 : vector<8x32xf32>
    %cst_57 = arith.constant 9.99999974E-6 : f32
    %110 = vector.broadcast %cst_57 : f32 to vector<8x1xf32>
    %111 = arith.addf %107, %110 : vector<8x1xf32>
    %112 = math.rsqrt %111 : vector<8x1xf32>
    %113 = vector.broadcast %112 : vector<8x1xf32> to vector<8x32xf32>
    %114 = arith.mulf %109, %113 : vector<8x32xf32>
    %c0_58 = arith.constant 0 : index
    %c0_59 = arith.constant 0 : index
    %115 = vector.load %arg17[%c0_58, %c0_59] : memref<1x32xf32, #tpu.memory_space<vmem>>, vector<1x32xf32>
    %116 = vector.broadcast %115 : vector<1x32xf32> to vector<8x32xf32>
    %117 = arith.mulf %114, %116 : vector<8x32xf32>
    %c0_60 = arith.constant 0 : index
    %c0_61 = arith.constant 0 : index
    %118 = vector.load %arg18[%c0_60, %c0_61] : memref<1x32xf32, #tpu.memory_space<vmem>>, vector<1x32xf32>
    %119 = vector.broadcast %118 : vector<1x32xf32> to vector<8x32xf32>
    %120 = arith.addf %117, %119 : vector<8x32xf32>
    %121 = arith.truncf %120 : vector<8x32xf32> to vector<8x32xbf16>
    %c0_62 = arith.constant 0 : index
    %c0_63 = arith.constant 0 : index
    %c0_64 = arith.constant 0 : index
    %122 = vector.load %arg19[%c0_62, %c0_63, %c0_64] : memref<1x8x32xbf16, #tpu.memory_space<vmem>>, vector<1x8x32xbf16>
    %123 = vector.shape_cast %122 : vector<1x8x32xbf16> to vector<8x32xbf16>
    %124 = vector.shape_cast %121 : vector<8x32xbf16> to vector<1x8x32xbf16>
    tpu.vector_store %arg19[%c0_62, %c0_63, %c0_64], %124 {strides = array<i32>} : memref<1x8x32xbf16, #tpu.memory_space<vmem>>, vector<1x8x32xbf16>,
    return
  }
  func.func @transform_0(%arg0: i32) -> (i32, i32, i32) {
    %c0_i32 = arith.constant 0 : i32
    %c0_i32_0 = arith.constant 0 : i32
    %c0_i32_1 = arith.constant 0 : i32
    return %arg0, %c0_i32, %c0_i32_0 : i32, i32, i32
  }
  func.func @transform_1(%arg0: i32) -> (i32, i32, i32) {
    %c0_i32 = arith.constant 0 : i32
    %c0_i32_0 = arith.constant 0 : i32
    %c0_i32_1 = arith.constant 0 : i32
    return %arg0, %c0_i32, %c0_i32_0 : i32, i32, i32
  }
  func.func @transform_2(%arg0: i32) -> (i32, i32) {
    %c0_i32 = arith.constant 0 : i32
    %c0_i32_0 = arith.constant 0 : i32
    %c0_i32_1 = arith.constant 0 : i32
    return %c0_i32, %c0_i32_0 : i32, i32
  }
  func.func @transform_3(%arg0: i32) -> (i32, i32) {
    %c0_i32 = arith.constant 0 : i32
    %c0_i32_0 = arith.constant 0 : i32
    %c0_i32_1 = arith.constant 0 : i32
    return %c0_i32, %c0_i32_0 : i32, i32
  }
  func.func @transform_4(%arg0: i32) -> (i32, i32) {
    %c0_i32 = arith.constant 0 : i32
    %c0_i32_0 = arith.constant 0 : i32
    %c0_i32_1 = arith.constant 0 : i32
    return %c0_i32, %c0_i32_0 : i32, i32
  }
  func.func @transform_5(%arg0: i32) -> (i32, i32) {
    %c0_i32 = arith.constant 0 : i32
    %c0_i32_0 = arith.constant 0 : i32
    %c0_i32_1 = arith.constant 0 : i32
    return %c0_i32, %c0_i32_0 : i32, i32
  }
  func.func @transform_6(%arg0: i32) -> (i32, i32) {
    %c0_i32 = arith.constant 0 : i32
    %c0_i32_0 = arith.constant 0 : i32
    %c0_i32_1 = arith.constant 0 : i32
    return %c0_i32, %c0_i32_0 : i32, i32
  }
  func.func @transform_7(%arg0: i32) -> (i32, i32) {
    %c0_i32 = arith.constant 0 : i32
    %c0_i32_0 = arith.constant 0 : i32
    %c0_i32_1 = arith.constant 0 : i32
    return %c0_i32, %c0_i32_0 : i32, i32
  }
  func.func @transform_8(%arg0: i32) -> (i32, i32) {
    %c0_i32 = arith.constant 0 : i32
    %c0_i32_0 = arith.constant 0 : i32
    %c0_i32_1 = arith.constant 0 : i32
    return %c0_i32, %c0_i32_0 : i32, i32
  }
  func.func @transform_9(%arg0: i32) -> (i32, i32) {
    %c0_i32 = arith.constant 0 : i32
    %c0_i32_0 = arith.constant 0 : i32
    %c0_i32_1 = arith.constant 0 : i32
    return %c0_i32, %c0_i32_0 : i32, i32
  }
  func.func @transform_10(%arg0: i32) -> (i32, i32) {
    %c0_i32 = arith.constant 0 : i32
    %c0_i32_0 = arith.constant 0 : i32
    %c0_i32_1 = arith.constant 0 : i32
    return %c0_i32, %c0_i32_0 : i32, i32
  }
  func.func @transform_11(%arg0: i32) -> (i32, i32) {
    %c0_i32 = arith.constant 0 : i32
    %c0_i32_0 = arith.constant 0 : i32
    %c0_i32_1 = arith.constant 0 : i32
    return %c0_i32, %c0_i32_0 : i32, i32
  }
  func.func @transform_12(%arg0: i32) -> (i32, i32) {
    %c0_i32 = arith.constant 0 : i32
    %c0_i32_0 = arith.constant 0 : i32
    %c0_i32_1 = arith.constant 0 : i32
    return %c0_i32, %c0_i32_0 : i32, i32
  }
  func.func @transform_13(%arg0: i32) -> (i32, i32) {
    %c0_i32 = arith.constant 0 : i32
    %c0_i32_0 = arith.constant 0 : i32
    %c0_i32_1 = arith.constant 0 : i32
    return %c0_i32, %c0_i32_0 : i32, i32
  }
  func.func @transform_14(%arg0: i32) -> (i32, i32) {
    %c0_i32 = arith.constant 0 : i32
    %c0_i32_0 = arith.constant 0 : i32
    %c0_i32_1 = arith.constant 0 : i32
    return %c0_i32, %c0_i32_0 : i32, i32
  }
  func.func @transform_15(%arg0: i32) -> (i32, i32) {
    %c0_i32 = arith.constant 0 : i32
    %c0_i32_0 = arith.constant 0 : i32
    %c0_i32_1 = arith.constant 0 : i32
    return %c0_i32, %c0_i32_0 : i32, i32
  }
  func.func @transform_16(%arg0: i32) -> (i32, i32) {
    %c0_i32 = arith.constant 0 : i32
    %c0_i32_0 = arith.constant 0 : i32
    %c0_i32_1 = arith.constant 0 : i32
    return %c0_i32, %c0_i32_0 : i32, i32
  }
  func.func @transform_17(%arg0: i32) -> (i32, i32) {
    %c0_i32 = arith.constant 0 : i32
    %c0_i32_0 = arith.constant 0 : i32
    %c0_i32_1 = arith.constant 0 : i32
    return %c0_i32, %c0_i32_0 : i32, i32
  }
  func.func @transform_18(%arg0: i32) -> (i32, i32, i32) {
    %c0_i32 = arith.constant 0 : i32
    %c0_i32_0 = arith.constant 0 : i32
    %c0_i32_1 = arith.constant 0 : i32
    return %arg0, %c0_i32, %c0_i32_0 : i32, i32, i32
  }
  func.func @transform_19(%arg0: i32) -> (i32, i32, i32) {
    %c0_i32 = arith.constant 0 : i32
    %c0_i32_0 = arith.constant 0 : i32
    %c0_i32_1 = arith.constant 0 : i32
    return %arg0, %c0_i32, %c0_i32_0 : i32, i32, i32
  }
}

module attributes {stable_mosaic.version = 11 : i64} {
  func.func @kernel(%arg0: i32, %arg1: memref<1x8x32xbf16, #tpu.memory_space<vmem>>, %arg2: memref<1x8x32xbf16, #tpu.memory_space<vmem>>, %arg3: memref<32x32xbf16, #tpu.memory_space<vmem>>, %arg4: memref<1x32xf32, #tpu.memory_space<vmem>>, %arg5: memref<32x32xbf16, #tpu.memory_space<vmem>>, %arg6: memref<1x32xf32, #tpu.memory_space<vmem>>, %arg7: memref<32x32xbf16, #tpu.memory_space<vmem>>, %arg8: memref<1x32xf32, #tpu.memory_space<vmem>>, %arg9: memref<32x32xbf16, #tpu.memory_space<vmem>>, %arg10: memref<1x32xf32, #tpu.memory_space<vmem>>, %arg11: memref<1x32xf32, #tpu.memory_space<vmem>>, %arg12: memref<1x32xf32, #tpu.memory_space<vmem>>, %arg13: memref<32x128xbf16, #tpu.memory_space<vmem>>, %arg14: memref<1x128xf32, #tpu.memory_space<vmem>>, %arg15: memref<128x32xbf16, #tpu.memory_space<vmem>>, %arg16: memref<1x32xf32, #tpu.memory_space<vmem>>, %arg17: memref<1x32xf32, #tpu.memory_space<vmem>>, %arg18: memref<1x32xf32, #tpu.memory_space<vmem>>, %arg19: memref<1x8x32xbf16, #tpu.memory_space<vmem>>, %arg20: memref<1x1x8xf32, #tpu.memory_space<vmem>>) attributes {dimension_semantics = [#tpu.dimension_semantics<parallel>], iteration_bounds = array<i64: 2>, scalar_prefetch = 0 : i64, scratch_operands = 0 : i64, tpu.core_type = #tpu.core_type<tc>, window_params = [{transform_indices = @transform_0, window_bounds = array<i64: 1, 8, 32>}, {transform_indices = @transform_1, window_bounds = array<i64: 1, 8, 32>}, {pipeline_mode = #tpu.pipeline_mode<synchronous>, transform_indices = @transform_2, window_bounds = array<i64: 32, 32>}, {pipeline_mode = #tpu.pipeline_mode<synchronous>, transform_indices = @transform_3, window_bounds = array<i64: 1, 32>}, {pipeline_mode = #tpu.pipeline_mode<synchronous>, transform_indices = @transform_4, window_bounds = array<i64: 32, 32>}, {pipeline_mode = #tpu.pipeline_mode<synchronous>, transform_indices = @transform_5, window_bounds = array<i64: 1, 32>}, {pipeline_mode = #tpu.pipeline_mode<synchronous>, transform_indices = @transform_6, window_bounds = array<i64: 32, 32>}, {pipeline_mode = #tpu.pipeline_mode<synchronous>, transform_indices = @transform_7, window_bounds = array<i64: 1, 32>}, {pipeline_mode = #tpu.pipeline_mode<synchronous>, transform_indices = @transform_8, window_bounds = array<i64: 32, 32>}, {pipeline_mode = #tpu.pipeline_mode<synchronous>, transform_indices = @transform_9, window_bounds = array<i64: 1, 32>}, {pipeline_mode = #tpu.pipeline_mode<synchronous>, transform_indices = @transform_10, window_bounds = array<i64: 1, 32>}, {pipeline_mode = #tpu.pipeline_mode<synchronous>, transform_indices = @transform_11, window_bounds = array<i64: 1, 32>}, {pipeline_mode = #tpu.pipeline_mode<synchronous>, transform_indices = @transform_12, window_bounds = array<i64: 32, 128>}, {pipeline_mode = #tpu.pipeline_mode<synchronous>, transform_indices = @transform_13, window_bounds = array<i64: 1, 128>}, {pipeline_mode = #tpu.pipeline_mode<synchronous>, transform_indices = @transform_14, window_bounds = array<i64: 128, 32>}, {pipeline_mode = #tpu.pipeline_mode<synchronous>, transform_indices = @transform_15, window_bounds = array<i64: 1, 32>}, {pipeline_mode = #tpu.pipeline_mode<synchronous>, transform_indices = @transform_16, window_bounds = array<i64: 1, 32>}, {pipeline_mode = #tpu.pipeline_mode<synchronous>, transform_indices = @transform_17, window_bounds = array<i64: 1, 32>}, {transform_indices = @transform_18, window_bounds = array<i64: 1, 8, 32>}, {transform_indices = @transform_19, window_bounds = array<i64: 1, 1, 8>}]} {
    %c0 = arith.constant 0 : index
    %c0_0 = arith.constant 0 : index
    %c0_1 = arith.constant 0 : index
    %0 = vector.load %arg1[%c0, %c0_0, %c0_1] : memref<1x8x32xbf16, #tpu.memory_space<vmem>>, vector<1x8x32xbf16>
    %1 = vector.shape_cast %0 : vector<1x8x32xbf16> to vector<8x32xbf16>
    %c0_2 = arith.constant 0 : index
    %c0_3 = arith.constant 0 : index
    %c0_4 = arith.constant 0 : index
    %2 = vector.load %arg2[%c0_2, %c0_3, %c0_4] : memref<1x8x32xbf16, #tpu.memory_space<vmem>>, vector<1x8x32xbf16>
    %3 = vector.shape_cast %2 : vector<1x8x32xbf16> to vector<8x32xbf16>
    %c0_5 = arith.constant 0 : index
    %c0_6 = arith.constant 0 : index
    %4 = vector.load %arg3[%c0_5, %c0_6] : memref<32x32xbf16, #tpu.memory_space<vmem>>, vector<32x32xbf16>
    %cst = arith.constant dense<0.000000e+00> : vector<8x32xf32>
    %5 = tpu.matmul %1, %4, %cst {dimension_numbers = #tpu.dot_dimension_numbers<[1], [0], [0], [1], [0, 0, 1, 1], [], []>} : vector<8x32xbf16>, vector<32x32xbf16>, vector<8x32xf32> -> vector<8x32xf32>
    %c0_7 = arith.constant 0 : index
    %c0_8 = arith.constant 0 : index
    %6 = vector.load %arg4[%c0_7, %c0_8] : memref<1x32xf32, #tpu.memory_space<vmem>>, vector<1x32xf32>
    %7 = vector.broadcast %6 : vector<1x32xf32> to vector<8x32xf32>
    %8 = arith.addf %5, %7 : vector<8x32xf32>
    %c0_9 = arith.constant 0 : index
    %c0_10 = arith.constant 0 : index
    %9 = vector.load %arg5[%c0_9, %c0_10] : memref<32x32xbf16, #tpu.memory_space<vmem>>, vector<32x32xbf16>
    %cst_11 = arith.constant dense<0.000000e+00> : vector<8x32xf32>
    %10 = tpu.matmul %3, %9, %cst_11 {dimension_numbers = #tpu.dot_dimension_numbers<[1], [0], [0], [1], [0, 0, 1, 1], [], []>} : vector<8x32xbf16>, vector<32x32xbf16>, vector<8x32xf32> -> vector<8x32xf32>
    %c0_12 = arith.constant 0 : index
    %c0_13 = arith.constant 0 : index
    %11 = vector.load %arg6[%c0_12, %c0_13] : memref<1x32xf32, #tpu.memory_space<vmem>>, vector<1x32xf32>
    %12 = vector.broadcast %11 : vector<1x32xf32> to vector<8x32xf32>
    %13 = arith.addf %10, %12 : vector<8x32xf32>
    %c0_14 = arith.constant 0 : index
    %c0_15 = arith.constant 0 : index
    %14 = vector.load %arg7[%c0_14, %c0_15] : memref<32x32xbf16, #tpu.memory_space<vmem>>, vector<32x32xbf16>
    %cst_16 = arith.constant dense<0.000000e+00> : vector<8x32xf32>
    %15 = tpu.matmul %3, %14, %cst_16 {dimension_numbers = #tpu.dot_dimension_numbers<[1], [0], [0], [1], [0, 0, 1, 1], [], []>} : vector<8x32xbf16>, vector<32x32xbf16>, vector<8x32xf32> -> vector<8x32xf32>
    %c0_17 = arith.constant 0 : index
    %c0_18 = arith.constant 0 : index
    %16 = vector.load %arg8[%c0_17, %c0_18] : memref<1x32xf32, #tpu.memory_space<vmem>>, vector<1x32xf32>
    %17 = vector.broadcast %16 : vector<1x32xf32> to vector<8x32xf32>
    %18 = arith.addf %15, %17 : vector<8x32xf32>
    %19 = vector.shape_cast %8 : vector<8x32xf32> to vector<8x2x16xf32>
    %20 = tpu.transpose %19, [1, 0, 2] : vector<8x2x16xf32> -> vector<2x8x16xf32>
    %21 = arith.truncf %20 : vector<2x8x16xf32> to vector<2x8x16xbf16>
    %22 = vector.shape_cast %13 : vector<8x32xf32> to vector<8x2x16xf32>
    %23 = tpu.transpose %22, [1, 0, 2] : vector<8x2x16xf32> -> vector<2x8x16xf32>
    %24 = arith.truncf %23 : vector<2x8x16xf32> to vector<2x8x16xbf16>
    %25 = vector.shape_cast %18 : vector<8x32xf32> to vector<8x2x16xf32>
    %26 = tpu.transpose %25, [1, 0, 2] : vector<8x2x16xf32> -> vector<2x8x16xf32>
    %27 = arith.truncf %26 : vector<2x8x16xf32> to vector<2x8x16xbf16>
    "tpu.trace_start"() <{level = 10 : i32, message = "htd,hsd->hts"}> : () -> ()
    %cst_19 = arith.constant dense<0.000000e+00> : vector<2x8x8xf32>
    %28 = tpu.matmul %21, %24, %cst_19 {dimension_numbers = #tpu.dot_dimension_numbers<[2], [2], [1], [1], [0, 0, 0, 1, 1, 1], [0], [0]>} : vector<2x8x16xbf16>, vector<2x8x16xbf16>, vector<2x8x8xf32> -> vector<2x8x8xf32>
    "tpu.trace_stop"() : () -> ()
    %cst_20 = arith.constant dense<0xFF800000> : vector<2x8xf32>
    %29 = vector.multi_reduction <maximumf>, %28, %cst_20 [2] : vector<2x8x8xf32> to vector<2x8xf32>
    %30 = vector.shape_cast %29 : vector<2x8xf32> to vector<2x8x1xf32>
    %31 = vector.broadcast %30 : vector<2x8x1xf32> to vector<2x8x8xf32>
    %32 = arith.subf %28, %31 : vector<2x8x8xf32>
    %33 = math.exp %32 : vector<2x8x8xf32>
    %cst_21 = arith.constant dense<0.000000e+00> : vector<2x8xf32>
    %34 = vector.multi_reduction <add>, %33, %cst_21 [2] : vector<2x8x8xf32> to vector<2x8xf32>
    %35 = vector.shape_cast %34 : vector<2x8xf32> to vector<2x8x1xf32>
    %36 = tpu.reciprocal %35 {approx = true} : vector<2x8x1xf32> -> vector<2x8x1xf32>
    %37 = vector.broadcast %36 : vector<2x8x1xf32> to vector<2x8x8xf32>
    %38 = arith.mulf %33, %37 : vector<2x8x8xf32>
    %39 = vector.shape_cast %35 : vector<2x8x1xf32> to vector<2x8xf32>
    %40 = math.log %39 : vector<2x8xf32>
    %41 = arith.mulf %38, %32 : vector<2x8x8xf32>
    %cst_22 = arith.constant dense<0.000000e+00> : vector<2x8xf32>
    %42 = vector.multi_reduction <add>, %41, %cst_22 [2] : vector<2x8x8xf32> to vector<2x8xf32>
    %43 = arith.subf %40, %42 : vector<2x8xf32>
    %cst_23 = arith.constant dense<0xFF800000> : vector<8xf32>
    %44 = vector.multi_reduction <maximumf>, %43, %cst_23 [0] : vector<2x8xf32> to vector<8xf32>
    %45 = vector.shape_cast %44 : vector<8xf32> to vector<1x8xf32>
    %c0_24 = arith.constant 0 : index
    %c0_25 = arith.constant 0 : index
    %c0_26 = arith.constant 0 : index
    %46 = vector.load %arg20[%c0_24, %c0_25, %c0_26] : memref<1x1x8xf32, #tpu.memory_space<vmem>>, vector<1x1x8xf32>
    %47 = vector.shape_cast %46 : vector<1x1x8xf32> to vector<1x8xf32>
    %48 = vector.shape_cast %45 : vector<1x8xf32> to vector<1x1x8xf32>
    tpu.vector_store %arg20[%c0_24, %c0_25, %c0_26], %48 {strides = array<i32>} : memref<1x1x8xf32, #tpu.memory_space<vmem>>, vector<1x1x8xf32>,
    %49 = arith.truncf %38 : vector<2x8x8xf32> to vector<2x8x8xbf16>
    "tpu.trace_start"() <{level = 10 : i32, message = "hts,hsd->htd"}> : () -> ()
    %cst_27 = arith.constant dense<0.000000e+00> : vector<2x8x16xf32>
    %50 = tpu.matmul %49, %27, %cst_27 {dimension_numbers = #tpu.dot_dimension_numbers<[2], [1], [1], [2], [0, 0, 0, 1, 1, 2], [0], [0]>} : vector<2x8x8xbf16>, vector<2x8x16xbf16>, vector<2x8x16xf32> -> vector<2x8x16xf32>
    "tpu.trace_stop"() : () -> ()
    %51 = tpu.transpose %50, [1, 0, 2] : vector<2x8x16xf32> -> vector<8x2x16xf32>
    %52 = vector.shape_cast %51 : vector<8x2x16xf32> to vector<8x32xf32>
    %53 = arith.truncf %52 : vector<8x32xf32> to vector<8x32xbf16>
    %c0_28 = arith.constant 0 : index
    %c0_29 = arith.constant 0 : index
    %54 = vector.load %arg9[%c0_28, %c0_29] : memref<32x32xbf16, #tpu.memory_space<vmem>>, vector<32x32xbf16>
    %cst_30 = arith.constant dense<0.000000e+00> : vector<8x32xf32>
    %55 = tpu.matmul %53, %54, %cst_30 {dimension_numbers = #tpu.dot_dimension_numbers<[1], [0], [0], [1], [0, 0, 1, 1], [], []>} : vector<8x32xbf16>, vector<32x32xbf16>, vector<8x32xf32> -> vector<8x32xf32>
    %c0_31 = arith.constant 0 : index
    %c0_32 = arith.constant 0 : index
    %56 = vector.load %arg10[%c0_31, %c0_32] : memref<1x32xf32, #tpu.memory_space<vmem>>, vector<1x32xf32>
    %57 = vector.broadcast %56 : vector<1x32xf32> to vector<8x32xf32>
    %58 = arith.addf %55, %57 : vector<8x32xf32>
    %cst_33 = arith.constant dense<0.000000e+00> : vector<8xf32>
    %59 = vector.multi_reduction <add>, %58, %cst_33 [1] : vector<8x32xf32> to vector<8xf32>
    %60 = vector.shape_cast %59 : vector<8xf32> to vector<8x1xf32>
    %cst_34 = arith.constant 3.200000e+01 : f32
    %61 = vector.broadcast %cst_34 : f32 to vector<8x1xf32>
    %62 = arith.divf %60, %61 : vector<8x1xf32>
    %63 = vector.broadcast %62 : vector<8x1xf32> to vector<8x32xf32>
    %64 = arith.subf %58, %63 : vector<8x32xf32>
    %65 = arith.mulf %64, %64 : vector<8x32xf32>
    %cst_35 = arith.constant dense<0.000000e+00> : vector<8xf32>
    %66 = vector.multi_reduction <add>, %65, %cst_35 [1] : vector<8x32xf32> to vector<8xf32>
    %67 = vector.shape_cast %66 : vector<8xf32> to vector<8x1xf32>
    %cst_36 = arith.constant 3.200000e+01 : f32
    %68 = vector.broadcast %cst_36 : f32 to vector<8x1xf32>
    %69 = arith.divf %67, %68 : vector<8x1xf32>
    %70 = vector.broadcast %62 : vector<8x1xf32> to vector<8x32xf32>
    %71 = arith.subf %58, %70 : vector<8x32xf32>
    %cst_37 = arith.constant 9.99999974E-6 : f32
    %72 = vector.broadcast %cst_37 : f32 to vector<8x1xf32>
    %73 = arith.addf %69, %72 : vector<8x1xf32>
    %74 = math.rsqrt %73 : vector<8x1xf32>
    %75 = vector.broadcast %74 : vector<8x1xf32> to vector<8x32xf32>
    %76 = arith.mulf %71, %75 : vector<8x32xf32>
    %c0_38 = arith.constant 0 : index
    %c0_39 = arith.constant 0 : index
    %77 = vector.load %arg11[%c0_38, %c0_39] : memref<1x32xf32, #tpu.memory_space<vmem>>, vector<1x32xf32>
    %78 = vector.broadcast %77 : vector<1x32xf32> to vector<8x32xf32>
    %79 = arith.mulf %76, %78 : vector<8x32xf32>
    %c0_40 = arith.constant 0 : index
    %c0_41 = arith.constant 0 : index
    %80 = vector.load %arg12[%c0_40, %c0_41] : memref<1x32xf32, #tpu.memory_space<vmem>>, vector<1x32xf32>
    %81 = vector.broadcast %80 : vector<1x32xf32> to vector<8x32xf32>
    %82 = arith.addf %79, %81 : vector<8x32xf32>
    %83 = arith.truncf %82 : vector<8x32xf32> to vector<8x32xbf16>
    %c0_42 = arith.constant 0 : index
    %c0_43 = arith.constant 0 : index
    %84 = vector.load %arg13[%c0_42, %c0_43] : memref<32x128xbf16, #tpu.memory_space<vmem>>, vector<32x128xbf16>
    %cst_44 = arith.constant dense<0.000000e+00> : vector<8x128xf32>
    %85 = tpu.matmul %83, %84, %cst_44 {dimension_numbers = #tpu.dot_dimension_numbers<[1], [0], [0], [1], [0, 0, 1, 1], [], []>} : vector<8x32xbf16>, vector<32x128xbf16>, vector<8x128xf32> -> vector<8x128xf32>
    %c0_45 = arith.constant 0 : index
    %c0_46 = arith.constant 0 : index
    %86 = vector.load %arg14[%c0_45, %c0_46] : memref<1x128xf32, #tpu.memory_space<vmem>>, vector<1x128xf32>
    %87 = vector.broadcast %86 : vector<1x128xf32> to vector<8x128xf32>
    %88 = arith.addf %85, %87 : vector<8x128xf32>
    %cst_47 = arith.constant 0.000000e+00 : f32
    %89 = vector.broadcast %cst_47 : f32 to vector<8x128xf32>
    %90 = arith.maximumf %88, %89 : vector<8x128xf32>
    %91 = arith.truncf %90 : vector<8x128xf32> to vector<8x128xbf16>
    %c0_48 = arith.constant 0 : index
    %c0_49 = arith.constant 0 : index
    %92 = vector.load %arg15[%c0_48, %c0_49] : memref<128x32xbf16, #tpu.memory_space<vmem>>, vector<128x32xbf16>
    %cst_50 = arith.constant dense<0.000000e+00> : vector<8x32xf32>
    %93 = tpu.matmul %91, %92, %cst_50 {dimension_numbers = #tpu.dot_dimension_numbers<[1], [0], [0], [1], [0, 0, 1, 1], [], []>} : vector<8x128xbf16>, vector<128x32xbf16>, vector<8x32xf32> -> vector<8x32xf32>
    %c0_51 = arith.constant 0 : index
    %c0_52 = arith.constant 0 : index
    %94 = vector.load %arg16[%c0_51, %c0_52] : memref<1x32xf32, #tpu.memory_space<vmem>>, vector<1x32xf32>
    %95 = vector.broadcast %94 : vector<1x32xf32> to vector<8x32xf32>
    %96 = arith.addf %93, %95 : vector<8x32xf32>
    %cst_53 = arith.constant dense<0.000000e+00> : vector<8xf32>
    %97 = vector.multi_reduction <add>, %96, %cst_53 [1] : vector<8x32xf32> to vector<8xf32>
    %98 = vector.shape_cast %97 : vector<8xf32> to vector<8x1xf32>
    %cst_54 = arith.constant 3.200000e+01 : f32
    %99 = vector.broadcast %cst_54 : f32 to vector<8x1xf32>
    %100 = arith.divf %98, %99 : vector<8x1xf32>
    %101 = vector.broadcast %100 : vector<8x1xf32> to vector<8x32xf32>
    %102 = arith.subf %96, %101 : vector<8x32xf32>
    %103 = arith.mulf %102, %102 : vector<8x32xf32>
    %cst_55 = arith.constant dense<0.000000e+00> : vector<8xf32>
    %104 = vector.multi_reduction <add>, %103, %cst_55 [1] : vector<8x32xf32> to vector<8xf32>
    %105 = vector.shape_cast %104 : vector<8xf32> to vector<8x1xf32>
    %cst_56 = arith.constant 3.200000e+01 : f32
    %106 = vector.broadcast %cst_56 : f32 to vector<8x1xf32>
    %107 = arith.divf %105, %106 : vector<8x1xf32>
    %108 = vector.broadcast %100 : vector<8x1xf32> to vector<8x32xf32>
    %109 = arith.subf %96, %108 : vector<8x32xf32>
    %cst_57 = arith.constant 9.99999974E-6 : f32
    %110 = vector.broadcast %cst_57 : f32 to vector<8x1xf32>
    %111 = arith.addf %107, %110 : vector<8x1xf32>
    %112 = math.rsqrt %111 : vector<8x1xf32>
    %113 = vector.broadcast %112 : vector<8x1xf32> to vector<8x32xf32>
    %114 = arith.mulf %109, %113 : vector<8x32xf32>
    %c0_58 = arith.constant 0 : index
    %c0_59 = arith.constant 0 : index
    %115 = vector.load %arg17[%c0_58, %c0_59] : memref<1x32xf32, #tpu.memory_space<vmem>>, vector<1x32xf32>
    %116 = vector.broadcast %115 : vector<1x32xf32> to vector<8x32xf32>
    %117 = arith.mulf %114, %116 : vector<8x32xf32>
    %c0_60 = arith.constant 0 : index
    %c0_61 = arith.constant 0 : index
    %118 = vector.load %arg18[%c0_60, %c0_61] : memref<1x32xf32, #tpu.memory_space<vmem>>, vector<1x32xf32>
    %119 = vector.broadcast %118 : vector<1x32xf32> to vector<8x32xf32>
    %120 = arith.addf %117, %119 : vector<8x32xf32>
    %121 = arith.truncf %120 : vector<8x32xf32> to vector<8x32xbf16>
    %c0_62 = arith.constant 0 : index
    %c0_63 = arith.constant 0 : index
    %c0_64 = arith.constant 0 : index
    %122 = vector.load %arg19[%c0_62, %c0_63, %c0_64] : memref<1x8x32xbf16, #tpu.memory_space<vmem>>, vector<1x8x32xbf16>
    %123 = vector.shape_cast %122 : vector<1x8x32xbf16> to vector<8x32xbf16>
    %124 = vector.shape_cast %121 : vector<8x32xbf16> to vector<1x8x32xbf16>
    tpu.vector_store %arg19[%c0_62, %c0_63, %c0_64], %124 {strides = array<i32>} : memref<1x8x32xbf16, #tpu.memory_space<vmem>>, vector<1x8x32xbf16>,
    return
  }
  func.func @transform_0(%arg0: i32) -> (i32, i32, i32) {
    %c0_i32 = arith.constant 0 : i32
    %c0_i32_0 = arith.constant 0 : i32
    %c0_i32_1 = arith.constant 0 : i32
    return %arg0, %c0_i32, %c0_i32_0 : i32, i32, i32
  }
  func.func @transform_1(%arg0: i32) -> (i32, i32, i32) {
    %c0_i32 = arith.constant 0 : i32
    %c0_i32_0 = arith.constant 0 : i32
    %c0_i32_1 = arith.constant 0 : i32
    return %arg0, %c0_i32, %c0_i32_0 : i32, i32, i32
  }
  func.func @transform_2(%arg0: i32) -> (i32, i32) {
    %c0_i32 = arith.constant 0 : i32
    %c0_i32_0 = arith.constant 0 : i32
    %c0_i32_1 = arith.constant 0 : i32
    return %c0_i32, %c0_i32_0 : i32, i32
  }
  func.func @transform_3(%arg0: i32) -> (i32, i32) {
    %c0_i32 = arith.constant 0 : i32
    %c0_i32_0 = arith.constant 0 : i32
    %c0_i32_1 = arith.constant 0 : i32
    return %c0_i32, %c0_i32_0 : i32, i32
  }
  func.func @transform_4(%arg0: i32) -> (i32, i32) {
    %c0_i32 = arith.constant 0 : i32
    %c0_i32_0 = arith.constant 0 : i32
    %c0_i32_1 = arith.constant 0 : i32
    return %c0_i32, %c0_i32_0 : i32, i32
  }
  func.func @transform_5(%arg0: i32) -> (i32, i32) {
    %c0_i32 = arith.constant 0 : i32
    %c0_i32_0 = arith.constant 0 : i32
    %c0_i32_1 = arith.constant 0 : i32
    return %c0_i32, %c0_i32_0 : i32, i32
  }
  func.func @transform_6(%arg0: i32) -> (i32, i32) {
    %c0_i32 = arith.constant 0 : i32
    %c0_i32_0 = arith.constant 0 : i32
    %c0_i32_1 = arith.constant 0 : i32
    return %c0_i32, %c0_i32_0 : i32, i32
  }
  func.func @transform_7(%arg0: i32) -> (i32, i32) {
    %c0_i32 = arith.constant 0 : i32
    %c0_i32_0 = arith.constant 0 : i32
    %c0_i32_1 = arith.constant 0 : i32
    return %c0_i32, %c0_i32_0 : i32, i32
  }
  func.func @transform_8(%arg0: i32) -> (i32, i32) {
    %c0_i32 = arith.constant 0 : i32
    %c0_i32_0 = arith.constant 0 : i32
    %c0_i32_1 = arith.constant 0 : i32
    return %c0_i32, %c0_i32_0 : i32, i32
  }
  func.func @transform_9(%arg0: i32) -> (i32, i32) {
    %c0_i32 = arith.constant 0 : i32
    %c0_i32_0 = arith.constant 0 : i32
    %c0_i32_1 = arith.constant 0 : i32
    return %c0_i32, %c0_i32_0 : i32, i32
  }
  func.func @transform_10(%arg0: i32) -> (i32, i32) {
    %c0_i32 = arith.constant 0 : i32
    %c0_i32_0 = arith.constant 0 : i32
    %c0_i32_1 = arith.constant 0 : i32
    return %c0_i32, %c0_i32_0 : i32, i32
  }
  func.func @transform_11(%arg0: i32) -> (i32, i32) {
    %c0_i32 = arith.constant 0 : i32
    %c0_i32_0 = arith.constant 0 : i32
    %c0_i32_1 = arith.constant 0 : i32
    return %c0_i32, %c0_i32_0 : i32, i32
  }
  func.func @transform_12(%arg0: i32) -> (i32, i32) {
    %c0_i32 = arith.constant 0 : i32
    %c0_i32_0 = arith.constant 0 : i32
    %c0_i32_1 = arith.constant 0 : i32
    return %c0_i32, %c0_i32_0 : i32, i32
  }
  func.func @transform_13(%arg0: i32) -> (i32, i32) {
    %c0_i32 = arith.constant 0 : i32
    %c0_i32_0 = arith.constant 0 : i32
    %c0_i32_1 = arith.constant 0 : i32
    return %c0_i32, %c0_i32_0 : i32, i32
  }
  func.func @transform_14(%arg0: i32) -> (i32, i32) {
    %c0_i32 = arith.constant 0 : i32
    %c0_i32_0 = arith.constant 0 : i32
    %c0_i32_1 = arith.constant 0 : i32
    return %c0_i32, %c0_i32_0 : i32, i32
  }
  func.func @transform_15(%arg0: i32) -> (i32, i32) {
    %c0_i32 = arith.constant 0 : i32
    %c0_i32_0 = arith.constant 0 : i32
    %c0_i32_1 = arith.constant 0 : i32
    return %c0_i32, %c0_i32_0 : i32, i32
  }
  func.func @transform_16(%arg0: i32) -> (i32, i32) {
    %c0_i32 = arith.constant 0 : i32
    %c0_i32_0 = arith.constant 0 : i32
    %c0_i32_1 = arith.constant 0 : i32
    return %c0_i32, %c0_i32_0 : i32, i32
  }
  func.func @transform_17(%arg0: i32) -> (i32, i32) {
    %c0_i32 = arith.constant 0 : i32
    %c0_i32_0 = arith.constant 0 : i32
    %c0_i32_1 = arith.constant 0 : i32
    return %c0_i32, %c0_i32_0 : i32, i32
  }
  func.func @transform_18(%arg0: i32) -> (i32, i32, i32) {
    %c0_i32 = arith.constant 0 : i32
    %c0_i32_0 = arith.constant 0 : i32
    %c0_i32_1 = arith.constant 0 : i32
    return %arg0, %c0_i32, %c0_i32_0 : i32, i32, i32
  }
  func.func @transform_19(%arg0: i32) -> (i32, i32, i32) {
    %c0_i32 = arith.constant 0 : i32
    %c0_i32_0 = arith.constant 0 : i32
    %c0_i32_1 = arith.constant 0 : i32
    return %arg0, %c0_i32, %c0_i32_0 : i32, i32, i32
  }
}

module attributes {stable_mosaic.version = 11 : i64} {
  func.func @kernel(%arg0: i32, %arg1: memref<1x8x32xbf16, #tpu.memory_space<vmem>>, %arg2: memref<1x8x32xbf16, #tpu.memory_space<vmem>>, %arg3: memref<2x32x16xbf16, #tpu.memory_space<vmem>>, %arg4: memref<2x1x16xf32, #tpu.memory_space<vmem>>, %arg5: memref<2x32x16xbf16, #tpu.memory_space<vmem>>, %arg6: memref<2x1x16xf32, #tpu.memory_space<vmem>>, %arg7: memref<2x32x16xbf16, #tpu.memory_space<vmem>>, %arg8: memref<2x1x16xf32, #tpu.memory_space<vmem>>, %arg9: memref<2x16x32xbf16, #tpu.memory_space<vmem>>, %arg10: memref<1x32xf32, #tpu.memory_space<vmem>>, %arg11: memref<1x32xf32, #tpu.memory_space<vmem>>, %arg12: memref<1x32xf32, #tpu.memory_space<vmem>>, %arg13: memref<32x128xbf16, #tpu.memory_space<vmem>>, %arg14: memref<1x128xf32, #tpu.memory_space<vmem>>, %arg15: memref<128x32xbf16, #tpu.memory_space<vmem>>, %arg16: memref<1x32xf32, #tpu.memory_space<vmem>>, %arg17: memref<1x32xf32, #tpu.memory_space<vmem>>, %arg18: memref<1x32xf32, #tpu.memory_space<vmem>>, %arg19: memref<1x8x32xbf16, #tpu.memory_space<vmem>>, %arg20: memref<1x1x8xf32, #tpu.memory_space<vmem>>) attributes {dimension_semantics = [#tpu.dimension_semantics<parallel>], iteration_bounds = array<i64: 2>, scalar_prefetch = 0 : i64, scratch_operands = 0 : i64, tpu.core_type = #tpu.core_type<tc>, window_params = [{transform_indices = @transform_0, window_bounds = array<i64: 1, 8, 32>}, {transform_indices = @transform_1, window_bounds = array<i64: 1, 8, 32>}, {pipeline_mode = #tpu.pipeline_mode<synchronous>, transform_indices = @transform_2, window_bounds = array<i64: 2, 32, 16>}, {pipeline_mode = #tpu.pipeline_mode<synchronous>, transform_indices = @transform_3, window_bounds = array<i64: 2, 1, 16>}, {pipeline_mode = #tpu.pipeline_mode<synchronous>, transform_indices = @transform_4, window_bounds = array<i64: 2, 32, 16>}, {pipeline_mode = #tpu.pipeline_mode<synchronous>, transform_indices = @transform_5, window_bounds = array<i64: 2, 1, 16>}, {pipeline_mode = #tpu.pipeline_mode<synchronous>, transform_indices = @transform_6, window_bounds = array<i64: 2, 32, 16>}, {pipeline_mode = #tpu.pipeline_mode<synchronous>, transform_indices = @transform_7, window_bounds = array<i64: 2, 1, 16>}, {pipeline_mode = #tpu.pipeline_mode<synchronous>, transform_indices = @transform_8, window_bounds = array<i64: 2, 16, 32>}, {pipeline_mode = #tpu.pipeline_mode<synchronous>, transform_indices = @transform_9, window_bounds = array<i64: 1, 32>}, {pipeline_mode = #tpu.pipeline_mode<synchronous>, transform_indices = @transform_10, window_bounds = array<i64: 1, 32>}, {pipeline_mode = #tpu.pipeline_mode<synchronous>, transform_indices = @transform_11, window_bounds = array<i64: 1, 32>}, {pipeline_mode = #tpu.pipeline_mode<synchronous>, transform_indices = @transform_12, window_bounds = array<i64: 32, 128>}, {pipeline_mode = #tpu.pipeline_mode<synchronous>, transform_indices = @transform_13, window_bounds = array<i64: 1, 128>}, {pipeline_mode = #tpu.pipeline_mode<synchronous>, transform_indices = @transform_14, window_bounds = array<i64: 128, 32>}, {pipeline_mode = #tpu.pipeline_mode<synchronous>, transform_indices = @transform_15, window_bounds = array<i64: 1, 32>}, {pipeline_mode = #tpu.pipeline_mode<synchronous>, transform_indices = @transform_16, window_bounds = array<i64: 1, 32>}, {pipeline_mode = #tpu.pipeline_mode<synchronous>, transform_indices = @transform_17, window_bounds = array<i64: 1, 32>}, {transform_indices = @transform_18, window_bounds = array<i64: 1, 8, 32>}, {transform_indices = @transform_19, window_bounds = array<i64: 1, 1, 8>}]} {
    %c0 = arith.constant 0 : index
    %c0_0 = arith.constant 0 : index
    %c0_1 = arith.constant 0 : index
    %0 = vector.load %arg1[%c0, %c0_0, %c0_1] : memref<1x8x32xbf16, #tpu.memory_space<vmem>>, vector<1x8x32xbf16>
    %1 = vector.shape_cast %0 : vector<1x8x32xbf16> to vector<8x32xbf16>
    %c0_2 = arith.constant 0 : index
    %c0_3 = arith.constant 0 : index
    %c0_4 = arith.constant 0 : index
    %2 = vector.load %arg2[%c0_2, %c0_3, %c0_4] : memref<1x8x32xbf16, #tpu.memory_space<vmem>>, vector<1x8x32xbf16>
    %3 = vector.shape_cast %2 : vector<1x8x32xbf16> to vector<8x32xbf16>
    %4 = vector.shape_cast %1 : vector<8x32xbf16> to vector<1x8x32xbf16>
    %5 = vector.shape_cast %4 : vector<1x8x32xbf16> to vector<1x8x32xbf16>
    %6 = vector.broadcast %5 : vector<1x8x32xbf16> to vector<2x8x32xbf16>
    %7 = vector.shape_cast %3 : vector<8x32xbf16> to vector<1x8x32xbf16>
    %8 = vector.shape_cast %7 : vector<1x8x32xbf16> to vector<1x8x32xbf16>
    %9 = vector.broadcast %8 : vector<1x8x32xbf16> to vector<2x8x32xbf16>
    %c0_5 = arith.constant 0 : index
    %c0_6 = arith.constant 0 : index
    %c0_7 = arith.constant 0 : index
    %10 = vector.load %arg3[%c0_5, %c0_6, %c0_7] : memref<2x32x16xbf16, #tpu.memory_space<vmem>>, vector<2x32x16xbf16>
    "tpu.trace_start"() <{level = 10 : i32, message = "hte,hed->htd"}> : () -> ()
    %cst = arith.constant dense<0.000000e+00> : vector<2x8x16xf32>
    %11 = tpu.matmul %6, %10, %cst {dimension_numbers = #tpu.dot_dimension_numbers<[2], [1], [1], [2], [0, 0, 0, 1, 1, 2], [0], [0]>} : vector<2x8x32xbf16>, vector<2x32x16xbf16>, vector<2x8x16xf32> -> vector<2x8x16xf32>
    "tpu.trace_stop"() : () -> ()
    %c0_8 = arith.constant 0 : index
    %c0_9 = arith.constant 0 : index
    %c0_10 = arith.constant 0 : index
    %12 = vector.load %arg4[%c0_8, %c0_9, %c0_10] : memref<2x1x16xf32, #tpu.memory_space<vmem>>, vector<2x1x16xf32>
    %13 = vector.broadcast %12 : vector<2x1x16xf32> to vector<2x8x16xf32>
    %14 = arith.addf %11, %13 : vector<2x8x16xf32>
    %15 = arith.truncf %14 : vector<2x8x16xf32> to vector<2x8x16xbf16>
    %c0_11 = arith.constant 0 : index
    %c0_12 = arith.constant 0 : index
    %c0_13 = arith.constant 0 : index
    %16 = vector.load %arg5[%c0_11, %c0_12, %c0_13] : memref<2x32x16xbf16, #tpu.memory_space<vmem>>, vector<2x32x16xbf16>
    "tpu.trace_start"() <{level = 10 : i32, message = "hse,hed->hsd"}> : () -> ()
    %cst_14 = arith.constant dense<0.000000e+00> : vector<2x8x16xf32>
    %17 = tpu.matmul %9, %16, %cst_14 {dimension_numbers = #tpu.dot_dimension_numbers<[2], [1], [1], [2], [0, 0, 0, 1, 1, 2], [0], [0]>} : vector<2x8x32xbf16>, vector<2x32x16xbf16>, vector<2x8x16xf32> -> vector<2x8x16xf32>
    "tpu.trace_stop"() : () -> ()
    %c0_15 = arith.constant 0 : index
    %c0_16 = arith.constant 0 : index
    %c0_17 = arith.constant 0 : index
    %18 = vector.load %arg6[%c0_15, %c0_16, %c0_17] : memref<2x1x16xf32, #tpu.memory_space<vmem>>, vector<2x1x16xf32>
    %19 = vector.broadcast %18 : vector<2x1x16xf32> to vector<2x8x16xf32>
    %20 = arith.addf %17, %19 : vector<2x8x16xf32>
    %21 = arith.truncf %20 : vector<2x8x16xf32> to vector<2x8x16xbf16>
    %c0_18 = arith.constant 0 : index
    %c0_19 = arith.constant 0 : index
    %c0_20 = arith.constant 0 : index
    %22 = vector.load %arg7[%c0_18, %c0_19, %c0_20] : memref<2x32x16xbf16, #tpu.memory_space<vmem>>, vector<2x32x16xbf16>
    "tpu.trace_start"() <{level = 10 : i32, message = "hse,hed->hsd"}> : () -> ()
    %cst_21 = arith.constant dense<0.000000e+00> : vector<2x8x16xf32>
    %23 = tpu.matmul %9, %22, %cst_21 {dimension_numbers = #tpu.dot_dimension_numbers<[2], [1], [1], [2], [0, 0, 0, 1, 1, 2], [0], [0]>} : vector<2x8x32xbf16>, vector<2x32x16xbf16>, vector<2x8x16xf32> -> vector<2x8x16xf32>
    "tpu.trace_stop"() : () -> ()
    %c0_22 = arith.constant 0 : index
    %c0_23 = arith.constant 0 : index
    %c0_24 = arith.constant 0 : index
    %24 = vector.load %arg8[%c0_22, %c0_23, %c0_24] : memref<2x1x16xf32, #tpu.memory_space<vmem>>, vector<2x1x16xf32>
    %25 = vector.broadcast %24 : vector<2x1x16xf32> to vector<2x8x16xf32>
    %26 = arith.addf %23, %25 : vector<2x8x16xf32>
    %27 = arith.truncf %26 : vector<2x8x16xf32> to vector<2x8x16xbf16>
    "tpu.trace_start"() <{level = 10 : i32, message = "htd,hsd->hts"}> : () -> ()
    %cst_25 = arith.constant dense<0.000000e+00> : vector<2x8x8xf32>
    %28 = tpu.matmul %15, %21, %cst_25 {dimension_numbers = #tpu.dot_dimension_numbers<[2], [2], [1], [1], [0, 0, 0, 1, 1, 1], [0], [0]>} : vector<2x8x16xbf16>, vector<2x8x16xbf16>, vector<2x8x8xf32> -> vector<2x8x8xf32>
    "tpu.trace_stop"() : () -> ()
    %cst_26 = arith.constant dense<0xFF800000> : vector<2x8xf32>
    %29 = vector.multi_reduction <maximumf>, %28, %cst_26 [2] : vector<2x8x8xf32> to vector<2x8xf32>
    %30 = vector.shape_cast %29 : vector<2x8xf32> to vector<2x8x1xf32>
    %31 = vector.broadcast %30 : vector<2x8x1xf32> to vector<2x8x8xf32>
    %32 = arith.subf %28, %31 : vector<2x8x8xf32>
    %33 = math.exp %32 : vector<2x8x8xf32>
    %cst_27 = arith.constant dense<0.000000e+00> : vector<2x8xf32>
    %34 = vector.multi_reduction <add>, %33, %cst_27 [2] : vector<2x8x8xf32> to vector<2x8xf32>
    %35 = vector.shape_cast %34 : vector<2x8xf32> to vector<2x8x1xf32>
    %36 = tpu.reciprocal %35 {approx = true} : vector<2x8x1xf32> -> vector<2x8x1xf32>
    %37 = vector.broadcast %36 : vector<2x8x1xf32> to vector<2x8x8xf32>
    %38 = arith.mulf %33, %37 : vector<2x8x8xf32>
    %39 = vector.shape_cast %35 : vector<2x8x1xf32> to vector<2x8xf32>
    %40 = math.log %39 : vector<2x8xf32>
    %41 = arith.mulf %38, %32 : vector<2x8x8xf32>
    %cst_28 = arith.constant dense<0.000000e+00> : vector<2x8xf32>
    %42 = vector.multi_reduction <add>, %41, %cst_28 [2] : vector<2x8x8xf32> to vector<2x8xf32>
    %43 = arith.subf %40, %42 : vector<2x8xf32>
    %cst_29 = arith.constant dense<0xFF800000> : vector<8xf32>
    %44 = vector.multi_reduction <maximumf>, %43, %cst_29 [0] : vector<2x8xf32> to vector<8xf32>
    %45 = vector.shape_cast %44 : vector<8xf32> to vector<1x8xf32>
    %c0_30 = arith.constant 0 : index
    %c0_31 = arith.constant 0 : index
    %c0_32 = arith.constant 0 : index
    %46 = vector.load %arg20[%c0_30, %c0_31, %c0_32] : memref<1x1x8xf32, #tpu.memory_space<vmem>>, vector<1x1x8xf32>
    %47 = vector.shape_cast %46 : vector<1x1x8xf32> to vector<1x8xf32>
    %48 = vector.shape_cast %45 : vector<1x8xf32> to vector<1x1x8xf32>
    tpu.vector_store %arg20[%c0_30, %c0_31, %c0_32], %48 {strides = array<i32>} : memref<1x1x8xf32, #tpu.memory_space<vmem>>, vector<1x1x8xf32>,
    %49 = arith.truncf %38 : vector<2x8x8xf32> to vector<2x8x8xbf16>
    "tpu.trace_start"() <{level = 10 : i32, message = "hts,hsd->htd"}> : () -> ()
    %cst_33 = arith.constant dense<0.000000e+00> : vector<2x8x16xf32>
    %50 = tpu.matmul %49, %27, %cst_33 {dimension_numbers = #tpu.dot_dimension_numbers<[2], [1], [1], [2], [0, 0, 0, 1, 1, 2], [0], [0]>} : vector<2x8x8xbf16>, vector<2x8x16xbf16>, vector<2x8x16xf32> -> vector<2x8x16xf32>
    "tpu.trace_stop"() : () -> ()
    %51 = arith.truncf %50 : vector<2x8x16xf32> to vector<2x8x16xbf16>
    %c0_34 = arith.constant 0 : index
    %c0_35 = arith.constant 0 : index
    %c0_36 = arith.constant 0 : index
    %52 = vector.load %arg9[%c0_34, %c0_35, %c0_36] : memref<2x16x32xbf16, #tpu.memory_space<vmem>>, vector<2x16x32xbf16>
    "tpu.trace_start"() <{level = 10 : i32, message = "htd,hde->hte"}> : () -> ()
    %cst_37 = arith.constant dense<0.000000e+00> : vector<2x8x32xf32>
    %53 = tpu.matmul %51, %52, %cst_37 {dimension_numbers = #tpu.dot_dimension_numbers<[2], [1], [1], [2], [0, 0, 0, 1, 1, 2], [0], [0]>} : vector<2x8x16xbf16>, vector<2x16x32xbf16>, vector<2x8x32xf32> -> vector<2x8x32xf32>
    "tpu.trace_stop"() : () -> ()
    %cst_38 = arith.constant dense<0.000000e+00> : vector<8x32xf32>
    %54 = vector.multi_reduction <add>, %53, %cst_38 [0] : vector<2x8x32xf32> to vector<8x32xf32>
    %c0_39 = arith.constant 0 : index
    %c0_40 = arith.constant 0 : index
    %55 = vector.load %arg10[%c0_39, %c0_40] : memref<1x32xf32, #tpu.memory_space<vmem>>, vector<1x32xf32>
    %56 = vector.broadcast %55 : vector<1x32xf32> to vector<8x32xf32>
    %57 = arith.addf %54, %56 : vector<8x32xf32>
    %cst_41 = arith.constant dense<0.000000e+00> : vector<8xf32>
    %58 = vector.multi_reduction <add>, %57, %cst_41 [1] : vector<8x32xf32> to vector<8xf32>
    %59 = vector.shape_cast %58 : vector<8xf32> to vector<8x1xf32>
    %cst_42 = arith.constant 3.200000e+01 : f32
    %60 = vector.broadcast %cst_42 : f32 to vector<8x1xf32>
    %61 = arith.divf %59, %60 : vector<8x1xf32>
    %62 = vector.broadcast %61 : vector<8x1xf32> to vector<8x32xf32>
    %63 = arith.subf %57, %62 : vector<8x32xf32>
    %64 = arith.mulf %63, %63 : vector<8x32xf32>
    %cst_43 = arith.constant dense<0.000000e+00> : vector<8xf32>
    %65 = vector.multi_reduction <add>, %64, %cst_43 [1] : vector<8x32xf32> to vector<8xf32>
    %66 = vector.shape_cast %65 : vector<8xf32> to vector<8x1xf32>
    %cst_44 = arith.constant 3.200000e+01 : f32
    %67 = vector.broadcast %cst_44 : f32 to vector<8x1xf32>
    %68 = arith.divf %66, %67 : vector<8x1xf32>
    %69 = vector.broadcast %61 : vector<8x1xf32> to vector<8x32xf32>
    %70 = arith.subf %57, %69 : vector<8x32xf32>
    %cst_45 = arith.constant 9.99999974E-6 : f32
    %71 = vector.broadcast %cst_45 : f32 to vector<8x1xf32>
    %72 = arith.addf %68, %71 : vector<8x1xf32>
    %73 = math.rsqrt %72 : vector<8x1xf32>
    %74 = vector.broadcast %73 : vector<8x1xf32> to vector<8x32xf32>
    %75 = arith.mulf %70, %74 : vector<8x32xf32>
    %c0_46 = arith.constant 0 : index
    %c0_47 = arith.constant 0 : index
    %76 = vector.load %arg11[%c0_46, %c0_47] : memref<1x32xf32, #tpu.memory_space<vmem>>, vector<1x32xf32>
    %77 = vector.broadcast %76 : vector<1x32xf32> to vector<8x32xf32>
    %78 = arith.mulf %75, %77 : vector<8x32xf32>
    %c0_48 = arith.constant 0 : index
    %c0_49 = arith.constant 0 : index
    %79 = vector.load %arg12[%c0_48, %c0_49] : memref<1x32xf32, #tpu.memory_space<vmem>>, vector<1x32xf32>
    %80 = vector.broadcast %79 : vector<1x32xf32> to vector<8x32xf32>
    %81 = arith.addf %78, %80 : vector<8x32xf32>
    %82 = arith.truncf %81 : vector<8x32xf32> to vector<8x32xbf16>
    %c0_50 = arith.constant 0 : index
    %c0_51 = arith.constant 0 : index
    %83 = vector.load %arg13[%c0_50, %c0_51] : memref<32x128xbf16, #tpu.memory_space<vmem>>, vector<32x128xbf16>
    %cst_52 = arith.constant dense<0.000000e+00> : vector<8x128xf32>
    %84 = tpu.matmul %82, %83, %cst_52 {dimension_numbers = #tpu.dot_dimension_numbers<[1], [0], [0], [1], [0, 0, 1, 1], [], []>} : vector<8x32xbf16>, vector<32x128xbf16>, vector<8x128xf32> -> vector<8x128xf32>
    %c0_53 = arith.constant 0 : index
    %c0_54 = arith.constant 0 : index
    %85 = vector.load %arg14[%c0_53, %c0_54] : memref<1x128xf32, #tpu.memory_space<vmem>>, vector<1x128xf32>
    %86 = vector.broadcast %85 : vector<1x128xf32> to vector<8x128xf32>
    %87 = arith.addf %84, %86 : vector<8x128xf32>
    %cst_55 = arith.constant 0.000000e+00 : f32
    %88 = vector.broadcast %cst_55 : f32 to vector<8x128xf32>
    %89 = arith.maximumf %87, %88 : vector<8x128xf32>
    %90 = arith.truncf %89 : vector<8x128xf32> to vector<8x128xbf16>
    %c0_56 = arith.constant 0 : index
    %c0_57 = arith.constant 0 : index
    %91 = vector.load %arg15[%c0_56, %c0_57] : memref<128x32xbf16, #tpu.memory_space<vmem>>, vector<128x32xbf16>
    %cst_58 = arith.constant dense<0.000000e+00> : vector<8x32xf32>
    %92 = tpu.matmul %90, %91, %cst_58 {dimension_numbers = #tpu.dot_dimension_numbers<[1], [0], [0], [1], [0, 0, 1, 1], [], []>} : vector<8x128xbf16>, vector<128x32xbf16>, vector<8x32xf32> -> vector<8x32xf32>
    %c0_59 = arith.constant 0 : index
    %c0_60 = arith.constant 0 : index
    %93 = vector.load %arg16[%c0_59, %c0_60] : memref<1x32xf32, #tpu.memory_space<vmem>>, vector<1x32xf32>
    %94 = vector.broadcast %93 : vector<1x32xf32> to vector<8x32xf32>
    %95 = arith.addf %92, %94 : vector<8x32xf32>
    %cst_61 = arith.constant dense<0.000000e+00> : vector<8xf32>
    %96 = vector.multi_reduction <add>, %95, %cst_61 [1] : vector<8x32xf32> to vector<8xf32>
    %97 = vector.shape_cast %96 : vector<8xf32> to vector<8x1xf32>
    %cst_62 = arith.constant 3.200000e+01 : f32
    %98 = vector.broadcast %cst_62 : f32 to vector<8x1xf32>
    %99 = arith.divf %97, %98 : vector<8x1xf32>
    %100 = vector.broadcast %99 : vector<8x1xf32> to vector<8x32xf32>
    %101 = arith.subf %95, %100 : vector<8x32xf32>
    %102 = arith.mulf %101, %101 : vector<8x32xf32>
    %cst_63 = arith.constant dense<0.000000e+00> : vector<8xf32>
    %103 = vector.multi_reduction <add>, %102, %cst_63 [1] : vector<8x32xf32> to vector<8xf32>
    %104 = vector.shape_cast %103 : vector<8xf32> to vector<8x1xf32>
    %cst_64 = arith.constant 3.200000e+01 : f32
    %105 = vector.broadcast %cst_64 : f32 to vector<8x1xf32>
    %106 = arith.divf %104, %105 : vector<8x1xf32>
    %107 = vector.broadcast %99 : vector<8x1xf32> to vector<8x32xf32>
    %108 = arith.subf %95, %107 : vector<8x32xf32>
    %cst_65 = arith.constant 9.99999974E-6 : f32
    %109 = vector.broadcast %cst_65 : f32 to vector<8x1xf32>
    %110 = arith.addf %106, %109 : vector<8x1xf32>
    %111 = math.rsqrt %110 : vector<8x1xf32>
    %112 = vector.broadcast %111 : vector<8x1xf32> to vector<8x32xf32>
    %113 = arith.mulf %108, %112 : vector<8x32xf32>
    %c0_66 = arith.constant 0 : index
    %c0_67 = arith.constant 0 : index
    %114 = vector.load %arg17[%c0_66, %c0_67] : memref<1x32xf32, #tpu.memory_space<vmem>>, vector<1x32xf32>
    %115 = vector.broadcast %114 : vector<1x32xf32> to vector<8x32xf32>
    %116 = arith.mulf %113, %115 : vector<8x32xf32>
    %c0_68 = arith.constant 0 : index
    %c0_69 = arith.constant 0 : index
    %117 = vector.load %arg18[%c0_68, %c0_69] : memref<1x32xf32, #tpu.memory_space<vmem>>, vector<1x32xf32>
    %118 = vector.broadcast %117 : vector<1x32xf32> to vector<8x32xf32>
    %119 = arith.addf %116, %118 : vector<8x32xf32>
    %120 = arith.truncf %119 : vector<8x32xf32> to vector<8x32xbf16>
    %c0_70 = arith.constant 0 : index
    %c0_71 = arith.constant 0 : index
    %c0_72 = arith.constant 0 : index
    %121 = vector.load %arg19[%c0_70, %c0_71, %c0_72] : memref<1x8x32xbf16, #tpu.memory_space<vmem>>, vector<1x8x32xbf16>
    %122 = vector.shape_cast %121 : vector<1x8x32xbf16> to vector<8x32xbf16>
    %123 = vector.shape_cast %120 : vector<8x32xbf16> to vector<1x8x32xbf16>
    tpu.vector_store %arg19[%c0_70, %c0_71, %c0_72], %123 {strides = array<i32>} : memref<1x8x32xbf16, #tpu.memory_space<vmem>>, vector<1x8x32xbf16>,
    return
  }
  func.func @transform_0(%arg0: i32) -> (i32, i32, i32) {
    %c0_i32 = arith.constant 0 : i32
    %c0_i32_0 = arith.constant 0 : i32
    %c0_i32_1 = arith.constant 0 : i32
    return %arg0, %c0_i32, %c0_i32_0 : i32, i32, i32
  }
  func.func @transform_1(%arg0: i32) -> (i32, i32, i32) {
    %c0_i32 = arith.constant 0 : i32
    %c0_i32_0 = arith.constant 0 : i32
    %c0_i32_1 = arith.constant 0 : i32
    return %arg0, %c0_i32, %c0_i32_0 : i32, i32, i32
  }
  func.func @transform_2(%arg0: i32) -> (i32, i32, i32) {
    %c0_i32 = arith.constant 0 : i32
    %c0_i32_0 = arith.constant 0 : i32
    %c0_i32_1 = arith.constant 0 : i32
    %c0_i32_2 = arith.constant 0 : i32
    return %c0_i32, %c0_i32_0, %c0_i32_1 : i32, i32, i32
  }
  func.func @transform_3(%arg0: i32) -> (i32, i32, i32) {
    %c0_i32 = arith.constant 0 : i32
    %c0_i32_0 = arith.constant 0 : i32
    %c0_i32_1 = arith.constant 0 : i32
    %c0_i32_2 = arith.constant 0 : i32
    return %c0_i32, %c0_i32_0, %c0_i32_1 : i32, i32, i32
  }
  func.func @transform_4(%arg0: i32) -> (i32, i32, i32) {
    %c0_i32 = arith.constant 0 : i32
    %c0_i32_0 = arith.constant 0 : i32
    %c0_i32_1 = arith.constant 0 : i32
    %c0_i32_2 = arith.constant 0 : i32
    return %c0_i32, %c0_i32_0, %c0_i32_1 : i32, i32, i32
  }
  func.func @transform_5(%arg0: i32) -> (i32, i32, i32) {
    %c0_i32 = arith.constant 0 : i32
    %c0_i32_0 = arith.constant 0 : i32
    %c0_i32_1 = arith.constant 0 : i32
    %c0_i32_2 = arith.constant 0 : i32
    return %c0_i32, %c0_i32_0, %c0_i32_1 : i32, i32, i32
  }
  func.func @transform_6(%arg0: i32) -> (i32, i32, i32) {
    %c0_i32 = arith.constant 0 : i32
    %c0_i32_0 = arith.constant 0 : i32
    %c0_i32_1 = arith.constant 0 : i32
    %c0_i32_2 = arith.constant 0 : i32
    return %c0_i32, %c0_i32_0, %c0_i32_1 : i32, i32, i32
  }
  func.func @transform_7(%arg0: i32) -> (i32, i32, i32) {
    %c0_i32 = arith.constant 0 : i32
    %c0_i32_0 = arith.constant 0 : i32
    %c0_i32_1 = arith.constant 0 : i32
    %c0_i32_2 = arith.constant 0 : i32
    return %c0_i32, %c0_i32_0, %c0_i32_1 : i32, i32, i32
  }
  func.func @transform_8(%arg0: i32) -> (i32, i32, i32) {
    %c0_i32 = arith.constant 0 : i32
    %c0_i32_0 = arith.constant 0 : i32
    %c0_i32_1 = arith.constant 0 : i32
    %c0_i32_2 = arith.constant 0 : i32
    return %c0_i32, %c0_i32_0, %c0_i32_1 : i32, i32, i32
  }
  func.func @transform_9(%arg0: i32) -> (i32, i32) {
    %c0_i32 = arith.constant 0 : i32
    %c0_i32_0 = arith.constant 0 : i32
    %c0_i32_1 = arith.constant 0 : i32
    return %c0_i32, %c0_i32_0 : i32, i32
  }
  func.func @transform_10(%arg0: i32) -> (i32, i32) {
    %c0_i32 = arith.constant 0 : i32
    %c0_i32_0 = arith.constant 0 : i32
    %c0_i32_1 = arith.constant 0 : i32
    return %c0_i32, %c0_i32_0 : i32, i32
  }
  func.func @transform_11(%arg0: i32) -> (i32, i32) {
    %c0_i32 = arith.constant 0 : i32
    %c0_i32_0 = arith.constant 0 : i32
    %c0_i32_1 = arith.constant 0 : i32
    return %c0_i32, %c0_i32_0 : i32, i32
  }
  func.func @transform_12(%arg0: i32) -> (i32, i32) {
    %c0_i32 = arith.constant 0 : i32
    %c0_i32_0 = arith.constant 0 : i32
    %c0_i32_1 = arith.constant 0 : i32
    return %c0_i32, %c0_i32_0 : i32, i32
  }
  func.func @transform_13(%arg0: i32) -> (i32, i32) {
    %c0_i32 = arith.constant 0 : i32
    %c0_i32_0 = arith.constant 0 : i32
    %c0_i32_1 = arith.constant 0 : i32
    return %c0_i32, %c0_i32_0 : i32, i32
  }
  func.func @transform_14(%arg0: i32) -> (i32, i32) {
    %c0_i32 = arith.constant 0 : i32
    %c0_i32_0 = arith.constant 0 : i32
    %c0_i32_1 = arith.constant 0 : i32
    return %c0_i32, %c0_i32_0 : i32, i32
  }
  func.func @transform_15(%arg0: i32) -> (i32, i32) {
    %c0_i32 = arith.constant 0 : i32
    %c0_i32_0 = arith.constant 0 : i32
    %c0_i32_1 = arith.constant 0 : i32
    return %c0_i32, %c0_i32_0 : i32, i32
  }
  func.func @transform_16(%arg0: i32) -> (i32, i32) {
    %c0_i32 = arith.constant 0 : i32
    %c0_i32_0 = arith.constant 0 : i32
    %c0_i32_1 = arith.constant 0 : i32
    return %c0_i32, %c0_i32_0 : i32, i32
  }
  func.func @transform_17(%arg0: i32) -> (i32, i32) {
    %c0_i32 = arith.constant 0 : i32
    %c0_i32_0 = arith.constant 0 : i32
    %c0_i32_1 = arith.constant 0 : i32
    return %c0_i32, %c0_i32_0 : i32, i32
  }
  func.func @transform_18(%arg0: i32) -> (i32, i32, i32) {
    %c0_i32 = arith.constant 0 : i32
    %c0_i32_0 = arith.constant 0 : i32
    %c0_i32_1 = arith.constant 0 : i32
    return %arg0, %c0_i32, %c0_i32_0 : i32, i32, i32
  }
  func.func @transform_19(%arg0: i32) -> (i32, i32, i32) {
    %c0_i32 = arith.constant 0 : i32
    %c0_i32_0 = arith.constant 0 : i32
    %c0_i32_1 = arith.constant 0 : i32
    return %arg0, %c0_i32, %c0_i32_0 : i32, i32, i32
  }
}

module attributes {stable_mosaic.version = 11 : i64} {
  func.func @kernel(%arg0: i32, %arg1: memref<1x8x32xbf16, #tpu.memory_space<vmem>>, %arg2: memref<1x8x32xbf16, #tpu.memory_space<vmem>>, %arg3: memref<2x32x16xbf16, #tpu.memory_space<vmem>>, %arg4: memref<2x1x16xf32, #tpu.memory_space<vmem>>, %arg5: memref<2x32x16xbf16, #tpu.memory_space<vmem>>, %arg6: memref<2x1x16xf32, #tpu.memory_space<vmem>>, %arg7: memref<2x32x16xbf16, #tpu.memory_space<vmem>>, %arg8: memref<2x1x16xf32, #tpu.memory_space<vmem>>, %arg9: memref<2x16x32xbf16, #tpu.memory_space<vmem>>, %arg10: memref<1x32xf32, #tpu.memory_space<vmem>>, %arg11: memref<1x32xf32, #tpu.memory_space<vmem>>, %arg12: memref<1x32xf32, #tpu.memory_space<vmem>>, %arg13: memref<32x128xbf16, #tpu.memory_space<vmem>>, %arg14: memref<1x128xf32, #tpu.memory_space<vmem>>, %arg15: memref<128x32xbf16, #tpu.memory_space<vmem>>, %arg16: memref<1x32xf32, #tpu.memory_space<vmem>>, %arg17: memref<1x32xf32, #tpu.memory_space<vmem>>, %arg18: memref<1x32xf32, #tpu.memory_space<vmem>>, %arg19: memref<1x8x32xbf16, #tpu.memory_space<vmem>>, %arg20: memref<1x1x8xf32, #tpu.memory_space<vmem>>) attributes {dimension_semantics = [#tpu.dimension_semantics<parallel>], iteration_bounds = array<i64: 2>, scalar_prefetch = 0 : i64, scratch_operands = 0 : i64, tpu.core_type = #tpu.core_type<tc>, window_params = [{transform_indices = @transform_0, window_bounds = array<i64: 1, 8, 32>}, {transform_indices = @transform_1, window_bounds = array<i64: 1, 8, 32>}, {pipeline_mode = #tpu.pipeline_mode<synchronous>, transform_indices = @transform_2, window_bounds = array<i64: 2, 32, 16>}, {pipeline_mode = #tpu.pipeline_mode<synchronous>, transform_indices = @transform_3, window_bounds = array<i64: 2, 1, 16>}, {pipeline_mode = #tpu.pipeline_mode<synchronous>, transform_indices = @transform_4, window_bounds = array<i64: 2, 32, 16>}, {pipeline_mode = #tpu.pipeline_mode<synchronous>, transform_indices = @transform_5, window_bounds = array<i64: 2, 1, 16>}, {pipeline_mode = #tpu.pipeline_mode<synchronous>, transform_indices = @transform_6, window_bounds = array<i64: 2, 32, 16>}, {pipeline_mode = #tpu.pipeline_mode<synchronous>, transform_indices = @transform_7, window_bounds = array<i64: 2, 1, 16>}, {pipeline_mode = #tpu.pipeline_mode<synchronous>, transform_indices = @transform_8, window_bounds = array<i64: 2, 16, 32>}, {pipeline_mode = #tpu.pipeline_mode<synchronous>, transform_indices = @transform_9, window_bounds = array<i64: 1, 32>}, {pipeline_mode = #tpu.pipeline_mode<synchronous>, transform_indices = @transform_10, window_bounds = array<i64: 1, 32>}, {pipeline_mode = #tpu.pipeline_mode<synchronous>, transform_indices = @transform_11, window_bounds = array<i64: 1, 32>}, {pipeline_mode = #tpu.pipeline_mode<synchronous>, transform_indices = @transform_12, window_bounds = array<i64: 32, 128>}, {pipeline_mode = #tpu.pipeline_mode<synchronous>, transform_indices = @transform_13, window_bounds = array<i64: 1, 128>}, {pipeline_mode = #tpu.pipeline_mode<synchronous>, transform_indices = @transform_14, window_bounds = array<i64: 128, 32>}, {pipeline_mode = #tpu.pipeline_mode<synchronous>, transform_indices = @transform_15, window_bounds = array<i64: 1, 32>}, {pipeline_mode = #tpu.pipeline_mode<synchronous>, transform_indices = @transform_16, window_bounds = array<i64: 1, 32>}, {pipeline_mode = #tpu.pipeline_mode<synchronous>, transform_indices = @transform_17, window_bounds = array<i64: 1, 32>}, {transform_indices = @transform_18, window_bounds = array<i64: 1, 8, 32>}, {transform_indices = @transform_19, window_bounds = array<i64: 1, 1, 8>}]} {
    %c0 = arith.constant 0 : index
    %c0_0 = arith.constant 0 : index
    %c0_1 = arith.constant 0 : index
    %0 = vector.load %arg1[%c0, %c0_0, %c0_1] : memref<1x8x32xbf16, #tpu.memory_space<vmem>>, vector<1x8x32xbf16>
    %1 = vector.shape_cast %0 : vector<1x8x32xbf16> to vector<8x32xbf16>
    %c0_2 = arith.constant 0 : index
    %c0_3 = arith.constant 0 : index
    %c0_4 = arith.constant 0 : index
    %2 = vector.load %arg2[%c0_2, %c0_3, %c0_4] : memref<1x8x32xbf16, #tpu.memory_space<vmem>>, vector<1x8x32xbf16>
    %3 = vector.shape_cast %2 : vector<1x8x32xbf16> to vector<8x32xbf16>
    %4 = vector.shape_cast %1 : vector<8x32xbf16> to vector<1x8x32xbf16>
    %5 = vector.shape_cast %4 : vector<1x8x32xbf16> to vector<1x8x32xbf16>
    %6 = vector.broadcast %5 : vector<1x8x32xbf16> to vector<2x8x32xbf16>
    %7 = vector.shape_cast %3 : vector<8x32xbf16> to vector<1x8x32xbf16>
    %8 = vector.shape_cast %7 : vector<1x8x32xbf16> to vector<1x8x32xbf16>
    %9 = vector.broadcast %8 : vector<1x8x32xbf16> to vector<2x8x32xbf16>
    %c0_5 = arith.constant 0 : index
    %c0_6 = arith.constant 0 : index
    %c0_7 = arith.constant 0 : index
    %10 = vector.load %arg3[%c0_5, %c0_6, %c0_7] : memref<2x32x16xbf16, #tpu.memory_space<vmem>>, vector<2x32x16xbf16>
    "tpu.trace_start"() <{level = 10 : i32, message = "hte,hed->htd"}> : () -> ()
    %cst = arith.constant dense<0.000000e+00> : vector<2x8x16xf32>
    %11 = tpu.matmul %6, %10, %cst {dimension_numbers = #tpu.dot_dimension_numbers<[2], [1], [1], [2], [0, 0, 0, 1, 1, 2], [0], [0]>} : vector<2x8x32xbf16>, vector<2x32x16xbf16>, vector<2x8x16xf32> -> vector<2x8x16xf32>
    "tpu.trace_stop"() : () -> ()
    %c0_8 = arith.constant 0 : index
    %c0_9 = arith.constant 0 : index
    %c0_10 = arith.constant 0 : index
    %12 = vector.load %arg4[%c0_8, %c0_9, %c0_10] : memref<2x1x16xf32, #tpu.memory_space<vmem>>, vector<2x1x16xf32>
    %13 = vector.broadcast %12 : vector<2x1x16xf32> to vector<2x8x16xf32>
    %14 = arith.addf %11, %13 : vector<2x8x16xf32>
    %15 = arith.truncf %14 : vector<2x8x16xf32> to vector<2x8x16xbf16>
    %c0_11 = arith.constant 0 : index
    %c0_12 = arith.constant 0 : index
    %c0_13 = arith.constant 0 : index
    %16 = vector.load %arg5[%c0_11, %c0_12, %c0_13] : memref<2x32x16xbf16, #tpu.memory_space<vmem>>, vector<2x32x16xbf16>
    "tpu.trace_start"() <{level = 10 : i32, message = "hse,hed->hsd"}> : () -> ()
    %cst_14 = arith.constant dense<0.000000e+00> : vector<2x8x16xf32>
    %17 = tpu.matmul %9, %16, %cst_14 {dimension_numbers = #tpu.dot_dimension_numbers<[2], [1], [1], [2], [0, 0, 0, 1, 1, 2], [0], [0]>} : vector<2x8x32xbf16>, vector<2x32x16xbf16>, vector<2x8x16xf32> -> vector<2x8x16xf32>
    "tpu.trace_stop"() : () -> ()
    %c0_15 = arith.constant 0 : index
    %c0_16 = arith.constant 0 : index
    %c0_17 = arith.constant 0 : index
    %18 = vector.load %arg6[%c0_15, %c0_16, %c0_17] : memref<2x1x16xf32, #tpu.memory_space<vmem>>, vector<2x1x16xf32>
    %19 = vector.broadcast %18 : vector<2x1x16xf32> to vector<2x8x16xf32>
    %20 = arith.addf %17, %19 : vector<2x8x16xf32>
    %21 = arith.truncf %20 : vector<2x8x16xf32> to vector<2x8x16xbf16>
    %c0_18 = arith.constant 0 : index
    %c0_19 = arith.constant 0 : index
    %c0_20 = arith.constant 0 : index
    %22 = vector.load %arg7[%c0_18, %c0_19, %c0_20] : memref<2x32x16xbf16, #tpu.memory_space<vmem>>, vector<2x32x16xbf16>
    "tpu.trace_start"() <{level = 10 : i32, message = "hse,hed->hsd"}> : () -> ()
    %cst_21 = arith.constant dense<0.000000e+00> : vector<2x8x16xf32>
    %23 = tpu.matmul %9, %22, %cst_21 {dimension_numbers = #tpu.dot_dimension_numbers<[2], [1], [1], [2], [0, 0, 0, 1, 1, 2], [0], [0]>} : vector<2x8x32xbf16>, vector<2x32x16xbf16>, vector<2x8x16xf32> -> vector<2x8x16xf32>
    "tpu.trace_stop"() : () -> ()
    %c0_22 = arith.constant 0 : index
    %c0_23 = arith.constant 0 : index
    %c0_24 = arith.constant 0 : index
    %24 = vector.load %arg8[%c0_22, %c0_23, %c0_24] : memref<2x1x16xf32, #tpu.memory_space<vmem>>, vector<2x1x16xf32>
    %25 = vector.broadcast %24 : vector<2x1x16xf32> to vector<2x8x16xf32>
    %26 = arith.addf %23, %25 : vector<2x8x16xf32>
    %27 = arith.truncf %26 : vector<2x8x16xf32> to vector<2x8x16xbf16>
    "tpu.trace_start"() <{level = 10 : i32, message = "htd,hsd->hts"}> : () -> ()
    %cst_25 = arith.constant dense<0.000000e+00> : vector<2x8x8xf32>
    %28 = tpu.matmul %15, %21, %cst_25 {dimension_numbers = #tpu.dot_dimension_numbers<[2], [2], [1], [1], [0, 0, 0, 1, 1, 1], [0], [0]>} : vector<2x8x16xbf16>, vector<2x8x16xbf16>, vector<2x8x8xf32> -> vector<2x8x8xf32>
    "tpu.trace_stop"() : () -> ()
    %cst_26 = arith.constant dense<0xFF800000> : vector<2x8xf32>
    %29 = vector.multi_reduction <maximumf>, %28, %cst_26 [2] : vector<2x8x8xf32> to vector<2x8xf32>
    %30 = vector.shape_cast %29 : vector<2x8xf32> to vector<2x8x1xf32>
    %31 = vector.broadcast %30 : vector<2x8x1xf32> to vector<2x8x8xf32>
    %32 = arith.subf %28, %31 : vector<2x8x8xf32>
    %33 = math.exp %32 : vector<2x8x8xf32>
    %cst_27 = arith.constant dense<0.000000e+00> : vector<2x8xf32>
    %34 = vector.multi_reduction <add>, %33, %cst_27 [2] : vector<2x8x8xf32> to vector<2x8xf32>
    %35 = vector.shape_cast %34 : vector<2x8xf32> to vector<2x8x1xf32>
    %36 = tpu.reciprocal %35 {approx = true} : vector<2x8x1xf32> -> vector<2x8x1xf32>
    %37 = vector.broadcast %36 : vector<2x8x1xf32> to vector<2x8x8xf32>
    %38 = arith.mulf %33, %37 : vector<2x8x8xf32>
    %39 = vector.shape_cast %35 : vector<2x8x1xf32> to vector<2x8xf32>
    %40 = math.log %39 : vector<2x8xf32>
    %41 = arith.mulf %38, %32 : vector<2x8x8xf32>
    %cst_28 = arith.constant dense<0.000000e+00> : vector<2x8xf32>
    %42 = vector.multi_reduction <add>, %41, %cst_28 [2] : vector<2x8x8xf32> to vector<2x8xf32>
    %43 = arith.subf %40, %42 : vector<2x8xf32>
    %cst_29 = arith.constant dense<0xFF800000> : vector<8xf32>
    %44 = vector.multi_reduction <maximumf>, %43, %cst_29 [0] : vector<2x8xf32> to vector<8xf32>
    %45 = vector.shape_cast %44 : vector<8xf32> to vector<1x8xf32>
    %c0_30 = arith.constant 0 : index
    %c0_31 = arith.constant 0 : index
    %c0_32 = arith.constant 0 : index
    %46 = vector.load %arg20[%c0_30, %c0_31, %c0_32] : memref<1x1x8xf32, #tpu.memory_space<vmem>>, vector<1x1x8xf32>
    %47 = vector.shape_cast %46 : vector<1x1x8xf32> to vector<1x8xf32>
    %48 = vector.shape_cast %45 : vector<1x8xf32> to vector<1x1x8xf32>
    tpu.vector_store %arg20[%c0_30, %c0_31, %c0_32], %48 {strides = array<i32>} : memref<1x1x8xf32, #tpu.memory_space<vmem>>, vector<1x1x8xf32>,
    %49 = arith.truncf %38 : vector<2x8x8xf32> to vector<2x8x8xbf16>
    "tpu.trace_start"() <{level = 10 : i32, message = "hts,hsd->htd"}> : () -> ()
    %cst_33 = arith.constant dense<0.000000e+00> : vector<2x8x16xf32>
    %50 = tpu.matmul %49, %27, %cst_33 {dimension_numbers = #tpu.dot_dimension_numbers<[2], [1], [1], [2], [0, 0, 0, 1, 1, 2], [0], [0]>} : vector<2x8x8xbf16>, vector<2x8x16xbf16>, vector<2x8x16xf32> -> vector<2x8x16xf32>
    "tpu.trace_stop"() : () -> ()
    %51 = arith.truncf %50 : vector<2x8x16xf32> to vector<2x8x16xbf16>
    %c0_34 = arith.constant 0 : index
    %c0_35 = arith.constant 0 : index
    %c0_36 = arith.constant 0 : index
    %52 = vector.load %arg9[%c0_34, %c0_35, %c0_36] : memref<2x16x32xbf16, #tpu.memory_space<vmem>>, vector<2x16x32xbf16>
    "tpu.trace_start"() <{level = 10 : i32, message = "htd,hde->hte"}> : () -> ()
    %cst_37 = arith.constant dense<0.000000e+00> : vector<2x8x32xf32>
    %53 = tpu.matmul %51, %52, %cst_37 {dimension_numbers = #tpu.dot_dimension_numbers<[2], [1], [1], [2], [0, 0, 0, 1, 1, 2], [0], [0]>} : vector<2x8x16xbf16>, vector<2x16x32xbf16>, vector<2x8x32xf32> -> vector<2x8x32xf32>
    "tpu.trace_stop"() : () -> ()
    %cst_38 = arith.constant dense<0.000000e+00> : vector<8x32xf32>
    %54 = vector.multi_reduction <add>, %53, %cst_38 [0] : vector<2x8x32xf32> to vector<8x32xf32>
    %c0_39 = arith.constant 0 : index
    %c0_40 = arith.constant 0 : index
    %55 = vector.load %arg10[%c0_39, %c0_40] : memref<1x32xf32, #tpu.memory_space<vmem>>, vector<1x32xf32>
    %56 = vector.broadcast %55 : vector<1x32xf32> to vector<8x32xf32>
    %57 = arith.addf %54, %56 : vector<8x32xf32>
    %cst_41 = arith.constant dense<0.000000e+00> : vector<8xf32>
    %58 = vector.multi_reduction <add>, %57, %cst_41 [1] : vector<8x32xf32> to vector<8xf32>
    %59 = vector.shape_cast %58 : vector<8xf32> to vector<8x1xf32>
    %cst_42 = arith.constant 3.200000e+01 : f32
    %60 = vector.broadcast %cst_42 : f32 to vector<8x1xf32>
    %61 = arith.divf %59, %60 : vector<8x1xf32>
    %62 = vector.broadcast %61 : vector<8x1xf32> to vector<8x32xf32>
    %63 = arith.subf %57, %62 : vector<8x32xf32>
    %64 = arith.mulf %63, %63 : vector<8x32xf32>
    %cst_43 = arith.constant dense<0.000000e+00> : vector<8xf32>
    %65 = vector.multi_reduction <add>, %64, %cst_43 [1] : vector<8x32xf32> to vector<8xf32>
    %66 = vector.shape_cast %65 : vector<8xf32> to vector<8x1xf32>
    %cst_44 = arith.constant 3.200000e+01 : f32
    %67 = vector.broadcast %cst_44 : f32 to vector<8x1xf32>
    %68 = arith.divf %66, %67 : vector<8x1xf32>
    %69 = vector.broadcast %61 : vector<8x1xf32> to vector<8x32xf32>
    %70 = arith.subf %57, %69 : vector<8x32xf32>
    %cst_45 = arith.constant 9.99999974E-6 : f32
    %71 = vector.broadcast %cst_45 : f32 to vector<8x1xf32>
    %72 = arith.addf %68, %71 : vector<8x1xf32>
    %73 = math.rsqrt %72 : vector<8x1xf32>
    %74 = vector.broadcast %73 : vector<8x1xf32> to vector<8x32xf32>
    %75 = arith.mulf %70, %74 : vector<8x32xf32>
    %c0_46 = arith.constant 0 : index
    %c0_47 = arith.constant 0 : index
    %76 = vector.load %arg11[%c0_46, %c0_47] : memref<1x32xf32, #tpu.memory_space<vmem>>, vector<1x32xf32>
    %77 = vector.broadcast %76 : vector<1x32xf32> to vector<8x32xf32>
    %78 = arith.mulf %75, %77 : vector<8x32xf32>
    %c0_48 = arith.constant 0 : index
    %c0_49 = arith.constant 0 : index
    %79 = vector.load %arg12[%c0_48, %c0_49] : memref<1x32xf32, #tpu.memory_space<vmem>>, vector<1x32xf32>
    %80 = vector.broadcast %79 : vector<1x32xf32> to vector<8x32xf32>
    %81 = arith.addf %78, %80 : vector<8x32xf32>
    %82 = arith.truncf %81 : vector<8x32xf32> to vector<8x32xbf16>
    %c0_50 = arith.constant 0 : index
    %c0_51 = arith.constant 0 : index
    %83 = vector.load %arg13[%c0_50, %c0_51] : memref<32x128xbf16, #tpu.memory_space<vmem>>, vector<32x128xbf16>
    %cst_52 = arith.constant dense<0.000000e+00> : vector<8x128xf32>
    %84 = tpu.matmul %82, %83, %cst_52 {dimension_numbers = #tpu.dot_dimension_numbers<[1], [0], [0], [1], [0, 0, 1, 1], [], []>} : vector<8x32xbf16>, vector<32x128xbf16>, vector<8x128xf32> -> vector<8x128xf32>
    %c0_53 = arith.constant 0 : index
    %c0_54 = arith.constant 0 : index
    %85 = vector.load %arg14[%c0_53, %c0_54] : memref<1x128xf32, #tpu.memory_space<vmem>>, vector<1x128xf32>
    %86 = vector.broadcast %85 : vector<1x128xf32> to vector<8x128xf32>
    %87 = arith.addf %84, %86 : vector<8x128xf32>
    %cst_55 = arith.constant 0.000000e+00 : f32
    %88 = vector.broadcast %cst_55 : f32 to vector<8x128xf32>
    %89 = arith.maximumf %87, %88 : vector<8x128xf32>
    %90 = arith.truncf %89 : vector<8x128xf32> to vector<8x128xbf16>
    %c0_56 = arith.constant 0 : index
    %c0_57 = arith.constant 0 : index
    %91 = vector.load %arg15[%c0_56, %c0_57] : memref<128x32xbf16, #tpu.memory_space<vmem>>, vector<128x32xbf16>
    %cst_58 = arith.constant dense<0.000000e+00> : vector<8x32xf32>
    %92 = tpu.matmul %90, %91, %cst_58 {dimension_numbers = #tpu.dot_dimension_numbers<[1], [0], [0], [1], [0, 0, 1, 1], [], []>} : vector<8x128xbf16>, vector<128x32xbf16>, vector<8x32xf32> -> vector<8x32xf32>
    %c0_59 = arith.constant 0 : index
    %c0_60 = arith.constant 0 : index
    %93 = vector.load %arg16[%c0_59, %c0_60] : memref<1x32xf32, #tpu.memory_space<vmem>>, vector<1x32xf32>
    %94 = vector.broadcast %93 : vector<1x32xf32> to vector<8x32xf32>
    %95 = arith.addf %92, %94 : vector<8x32xf32>
    %cst_61 = arith.constant dense<0.000000e+00> : vector<8xf32>
    %96 = vector.multi_reduction <add>, %95, %cst_61 [1] : vector<8x32xf32> to vector<8xf32>
    %97 = vector.shape_cast %96 : vector<8xf32> to vector<8x1xf32>
    %cst_62 = arith.constant 3.200000e+01 : f32
    %98 = vector.broadcast %cst_62 : f32 to vector<8x1xf32>
    %99 = arith.divf %97, %98 : vector<8x1xf32>
    %100 = vector.broadcast %99 : vector<8x1xf32> to vector<8x32xf32>
    %101 = arith.subf %95, %100 : vector<8x32xf32>
    %102 = arith.mulf %101, %101 : vector<8x32xf32>
    %cst_63 = arith.constant dense<0.000000e+00> : vector<8xf32>
    %103 = vector.multi_reduction <add>, %102, %cst_63 [1] : vector<8x32xf32> to vector<8xf32>
    %104 = vector.shape_cast %103 : vector<8xf32> to vector<8x1xf32>
    %cst_64 = arith.constant 3.200000e+01 : f32
    %105 = vector.broadcast %cst_64 : f32 to vector<8x1xf32>
    %106 = arith.divf %104, %105 : vector<8x1xf32>
    %107 = vector.broadcast %99 : vector<8x1xf32> to vector<8x32xf32>
    %108 = arith.subf %95, %107 : vector<8x32xf32>
    %cst_65 = arith.constant 9.99999974E-6 : f32
    %109 = vector.broadcast %cst_65 : f32 to vector<8x1xf32>
    %110 = arith.addf %106, %109 : vector<8x1xf32>
    %111 = math.rsqrt %110 : vector<8x1xf32>
    %112 = vector.broadcast %111 : vector<8x1xf32> to vector<8x32xf32>
    %113 = arith.mulf %108, %112 : vector<8x32xf32>
    %c0_66 = arith.constant 0 : index
    %c0_67 = arith.constant 0 : index
    %114 = vector.load %arg17[%c0_66, %c0_67] : memref<1x32xf32, #tpu.memory_space<vmem>>, vector<1x32xf32>
    %115 = vector.broadcast %114 : vector<1x32xf32> to vector<8x32xf32>
    %116 = arith.mulf %113, %115 : vector<8x32xf32>
    %c0_68 = arith.constant 0 : index
    %c0_69 = arith.constant 0 : index
    %117 = vector.load %arg18[%c0_68, %c0_69] : memref<1x32xf32, #tpu.memory_space<vmem>>, vector<1x32xf32>
    %118 = vector.broadcast %117 : vector<1x32xf32> to vector<8x32xf32>
    %119 = arith.addf %116, %118 : vector<8x32xf32>
    %120 = arith.truncf %119 : vector<8x32xf32> to vector<8x32xbf16>
    %c0_70 = arith.constant 0 : index
    %c0_71 = arith.constant 0 : index
    %c0_72 = arith.constant 0 : index
    %121 = vector.load %arg19[%c0_70, %c0_71, %c0_72] : memref<1x8x32xbf16, #tpu.memory_space<vmem>>, vector<1x8x32xbf16>
    %122 = vector.shape_cast %121 : vector<1x8x32xbf16> to vector<8x32xbf16>
    %123 = vector.shape_cast %120 : vector<8x32xbf16> to vector<1x8x32xbf16>
    tpu.vector_store %arg19[%c0_70, %c0_71, %c0_72], %123 {strides = array<i32>} : memref<1x8x32xbf16, #tpu.memory_space<vmem>>, vector<1x8x32xbf16>,
    return
  }
  func.func @transform_0(%arg0: i32) -> (i32, i32, i32) {
    %c0_i32 = arith.constant 0 : i32
    %c0_i32_0 = arith.constant 0 : i32
    %c0_i32_1 = arith.constant 0 : i32
    return %arg0, %c0_i32, %c0_i32_0 : i32, i32, i32
  }
  func.func @transform_1(%arg0: i32) -> (i32, i32, i32) {
    %c0_i32 = arith.constant 0 : i32
    %c0_i32_0 = arith.constant 0 : i32
    %c0_i32_1 = arith.constant 0 : i32
    return %arg0, %c0_i32, %c0_i32_0 : i32, i32, i32
  }
  func.func @transform_2(%arg0: i32) -> (i32, i32, i32) {
    %c0_i32 = arith.constant 0 : i32
    %c0_i32_0 = arith.constant 0 : i32
    %c0_i32_1 = arith.constant 0 : i32
    %c0_i32_2 = arith.constant 0 : i32
    return %c0_i32, %c0_i32_0, %c0_i32_1 : i32, i32, i32
  }
  func.func @transform_3(%arg0: i32) -> (i32, i32, i32) {
    %c0_i32 = arith.constant 0 : i32
    %c0_i32_0 = arith.constant 0 : i32
    %c0_i32_1 = arith.constant 0 : i32
    %c0_i32_2 = arith.constant 0 : i32
    return %c0_i32, %c0_i32_0, %c0_i32_1 : i32, i32, i32
  }
  func.func @transform_4(%arg0: i32) -> (i32, i32, i32) {
    %c0_i32 = arith.constant 0 : i32
    %c0_i32_0 = arith.constant 0 : i32
    %c0_i32_1 = arith.constant 0 : i32
    %c0_i32_2 = arith.constant 0 : i32
    return %c0_i32, %c0_i32_0, %c0_i32_1 : i32, i32, i32
  }
  func.func @transform_5(%arg0: i32) -> (i32, i32, i32) {
    %c0_i32 = arith.constant 0 : i32
    %c0_i32_0 = arith.constant 0 : i32
    %c0_i32_1 = arith.constant 0 : i32
    %c0_i32_2 = arith.constant 0 : i32
    return %c0_i32, %c0_i32_0, %c0_i32_1 : i32, i32, i32
  }
  func.func @transform_6(%arg0: i32) -> (i32, i32, i32) {
    %c0_i32 = arith.constant 0 : i32
    %c0_i32_0 = arith.constant 0 : i32
    %c0_i32_1 = arith.constant 0 : i32
    %c0_i32_2 = arith.constant 0 : i32
    return %c0_i32, %c0_i32_0, %c0_i32_1 : i32, i32, i32
  }
  func.func @transform_7(%arg0: i32) -> (i32, i32, i32) {
    %c0_i32 = arith.constant 0 : i32
    %c0_i32_0 = arith.constant 0 : i32
    %c0_i32_1 = arith.constant 0 : i32
    %c0_i32_2 = arith.constant 0 : i32
    return %c0_i32, %c0_i32_0, %c0_i32_1 : i32, i32, i32
  }
  func.func @transform_8(%arg0: i32) -> (i32, i32, i32) {
    %c0_i32 = arith.constant 0 : i32
    %c0_i32_0 = arith.constant 0 : i32
    %c0_i32_1 = arith.constant 0 : i32
    %c0_i32_2 = arith.constant 0 : i32
    return %c0_i32, %c0_i32_0, %c0_i32_1 : i32, i32, i32
  }
  func.func @transform_9(%arg0: i32) -> (i32, i32) {
    %c0_i32 = arith.constant 0 : i32
    %c0_i32_0 = arith.constant 0 : i32
    %c0_i32_1 = arith.constant 0 : i32
    return %c0_i32, %c0_i32_0 : i32, i32
  }
  func.func @transform_10(%arg0: i32) -> (i32, i32) {
    %c0_i32 = arith.constant 0 : i32
    %c0_i32_0 = arith.constant 0 : i32
    %c0_i32_1 = arith.constant 0 : i32
    return %c0_i32, %c0_i32_0 : i32, i32
  }
  func.func @transform_11(%arg0: i32) -> (i32, i32) {
    %c0_i32 = arith.constant 0 : i32
    %c0_i32_0 = arith.constant 0 : i32
    %c0_i32_1 = arith.constant 0 : i32
    return %c0_i32, %c0_i32_0 : i32, i32
  }
  func.func @transform_12(%arg0: i32) -> (i32, i32) {
    %c0_i32 = arith.constant 0 : i32
    %c0_i32_0 = arith.constant 0 : i32
    %c0_i32_1 = arith.constant 0 : i32
    return %c0_i32, %c0_i32_0 : i32, i32
  }
  func.func @transform_13(%arg0: i32) -> (i32, i32) {
    %c0_i32 = arith.constant 0 : i32
    %c0_i32_0 = arith.constant 0 : i32
    %c0_i32_1 = arith.constant 0 : i32
    return %c0_i32, %c0_i32_0 : i32, i32
  }
  func.func @transform_14(%arg0: i32) -> (i32, i32) {
    %c0_i32 = arith.constant 0 : i32
    %c0_i32_0 = arith.constant 0 : i32
    %c0_i32_1 = arith.constant 0 : i32
    return %c0_i32, %c0_i32_0 : i32, i32
  }
  func.func @transform_15(%arg0: i32) -> (i32, i32) {
    %c0_i32 = arith.constant 0 : i32
    %c0_i32_0 = arith.constant 0 : i32
    %c0_i32_1 = arith.constant 0 : i32
    return %c0_i32, %c0_i32_0 : i32, i32
  }
  func.func @transform_16(%arg0: i32) -> (i32, i32) {
    %c0_i32 = arith.constant 0 : i32
    %c0_i32_0 = arith.constant 0 : i32
    %c0_i32_1 = arith.constant 0 : i32
    return %c0_i32, %c0_i32_0 : i32, i32
  }
  func.func @transform_17(%arg0: i32) -> (i32, i32) {
    %c0_i32 = arith.constant 0 : i32
    %c0_i32_0 = arith.constant 0 : i32
    %c0_i32_1 = arith.constant 0 : i32
    return %c0_i32, %c0_i32_0 : i32, i32
  }
  func.func @transform_18(%arg0: i32) -> (i32, i32, i32) {
    %c0_i32 = arith.constant 0 : i32
    %c0_i32_0 = arith.constant 0 : i32
    %c0_i32_1 = arith.constant 0 : i32
    return %arg0, %c0_i32, %c0_i32_0 : i32, i32, i32
  }
  func.func @transform_19(%arg0: i32) -> (i32, i32, i32) {
    %c0_i32 = arith.constant 0 : i32
    %c0_i32_0 = arith.constant 0 : i32
    %c0_i32_1 = arith.constant 0 : i32
    return %arg0, %c0_i32, %c0_i32_0 : i32, i32, i32
  }
}

</mosaic_0001>

<llo_original>
// kernel: tpu_custom_call.1
$region0: #{tpu_custom_call.1}
  #allocation0 [shape = 'u32[]', space=smem, size = 0x4, offset = 0x4, fixed_abs, tag = 'smem constant byte address 0x4 - core index']
  #allocation1 [shape = 'u32[144,128]{1,0:T(1,128)}', space=vmem, size = 0x12000, scoped, tag = 'internal scratch']
  %s0 = inlined_call_operand.hbm [shape: bf16[2,8,32], index: 0, kind: input, shape index: {}]
  %s1 = inlined_call_operand.hbm [shape: bf16[2,8,32], index: 1, kind: input, shape index: {}]
  %s2 = inlined_call_operand.vmem [shape: bf16[32,32], index: 2, kind: input, shape index: {}]
  %s3 = inlined_call_operand.vmem [shape: f32[1,32], index: 3, kind: input, shape index: {}]
  %s4 = inlined_call_operand.vmem [shape: bf16[32,32], index: 4, kind: input, shape index: {}]
  %s5 = inlined_call_operand.vmem [shape: f32[1,32], index: 5, kind: input, shape index: {}]
  %s6 = inlined_call_operand.vmem [shape: bf16[32,32], index: 6, kind: input, shape index: {}]
  %s7 = inlined_call_operand.vmem [shape: f32[1,32], index: 7, kind: input, shape index: {}]
  %s8 = inlined_call_operand.vmem [shape: bf16[32,32], index: 8, kind: input, shape index: {}]
  %s9 = inlined_call_operand.vmem [shape: f32[1,32], index: 9, kind: input, shape index: {}]
  %s10 = inlined_call_operand.vmem [shape: f32[1,32], index: 10, kind: input, shape index: {}]
  %s11 = inlined_call_operand.vmem [shape: f32[1,32], index: 11, kind: input, shape index: {}]
  %s12 = inlined_call_operand.vmem [shape: bf16[32,128], index: 12, kind: input, shape index: {}]
  %s13 = inlined_call_operand.vmem [shape: f32[1,128], index: 13, kind: input, shape index: {}]
  %s14 = inlined_call_operand.vmem [shape: bf16[128,32], index: 14, kind: input, shape index: {}]
  %s15 = inlined_call_operand.vmem [shape: f32[1,32], index: 15, kind: input, shape index: {}]
  %s16 = inlined_call_operand.vmem [shape: f32[1,32], index: 16, kind: input, shape index: {}]
  %s17 = inlined_call_operand.vmem [shape: f32[1,32], index: 17, kind: input, shape index: {}]
  %s18 = inlined_call_operand.hbm [shape: bf16[2,8,32], index: 18, kind: output, shape index: {0}]
  %s19 = inlined_call_operand.hbm [shape: f32[2,1,8], index: 19, kind: output, shape index: {1}]
  %20 = xla_tuple %s18, %s19
  %s21 = sld [smem:[#allocation0]]
  $region121: #{tpu_custom_call.1} parent=0
    _
  %s23 = ssub.s32 1, %s21
  %s24 = scalar_select 0, %s23, %s21
  $region1: #{tpu_custom_call.1} parent=0
    #allocation2 [shape = 'u8[4096]{0}', space=vmem, size = 0x1000, scoped, tag = 'input window, operand 0']
    #allocation3 [shape = 's32[2]{0}', space=sflag, size = 0x8, scoped, tag = 'scoped memory for tpu_custom_call.1']
    #allocation4 [shape = 's32[2]{0}', space=sflag, size = 0x8, scoped, tag = 'scoped memory for tpu_custom_call.1']
    #allocation5 [shape = 'u8[4096]{0}', space=vmem, size = 0x1000, scoped, tag = 'input window, operand 1']
    #allocation6 [shape = 's32[2]{0}', space=sflag, size = 0x8, scoped, tag = 'scoped memory for tpu_custom_call.1']
    #allocation7 [shape = 'u8[4096]{0}', space=vmem, size = 0x1000, scoped, tag = 'output window, operand 0']
    #allocation8 [shape = 'u8[1024]{0}', space=vmem, size = 0x400, scoped, tag = 'output window, operand 1']
    #allocation9 [shape = 's32[2]{0}', space=sflag, size = 0x8, scoped, tag = 'scoped memory for tpu_custom_call.1']
    %25 = vsyncpa [#allocation3], 0
    %s26 = scalar_lea.sflag [#allocation3], 1
    %27 = vsyncpa %s26, 0
    %28 = vsyncpa [#allocation6], 0
    %s29 = scalar_lea.sflag [#allocation6], 1
    %30 = vsyncpa %s29, 0
    %31 = vsyncpa [#allocation4], 0
    %s32 = scalar_lea.sflag [#allocation4], 1
    %33 = vsyncpa %s32, 0
    %34 = vsyncpa [#allocation9], 0
    %s35 = scalar_lea.sflag [#allocation9], 1
    %36 = vsyncpa %s35, 0
    loop: start=0, step=1, limit=4
    $region2: #{tpu_custom_call.1} parent=1 // loop_pre_header
      _
    $region3: #{tpu_custom_call.1} parent=1 // loop_header
      %s38 = sphi 0, %s42
      %p39 = scmp.ge.s32.totalorder %s38, 4
      %s48 = sphi 0, %s50
      %s51 = sphi 0, %s48
      %s52 = sphi 0, %s51
      %s68 = sphi 0, %s52
      %s74 = sphi 0, %s76
      %s77 = sphi 0, %s74
      %s78 = sphi 0, %s77
      %s94 = sphi 0, %s78
      %s98 = sphi 0, %s98
      %s100 = sphi 0, %s98
      %s101 = sphi 0, %s100
      %s115 = sphi 0, %s101
      %s119 = sphi 0, %s119
      %s121 = sphi 0, %s119
      %s122 = sphi 0, %s121
      %s136 = sphi 0, %s122
      %s140 = sphi 0, %s140
      %s142 = sphi 0, %s140
      %s143 = sphi 0, %s142
      %s157 = sphi 0, %s143
      %s161 = sphi 0, %s161
      %s163 = sphi 0, %s161
      %s164 = sphi 0, %s163
      %s178 = sphi 0, %s164
      %s182 = sphi 0, %s182
      %s184 = sphi 0, %s182
      %s185 = sphi 0, %s184
      %s199 = sphi 0, %s185
      %s203 = sphi 0, %s203
      %s205 = sphi 0, %s203
      %s206 = sphi 0, %s205
      %s220 = sphi 0, %s206
      %s224 = sphi 0, %s224
      %s226 = sphi 0, %s224
      %s227 = sphi 0, %s226
      %s241 = sphi 0, %s227
      %s245 = sphi 0, %s245
      %s247 = sphi 0, %s245
      %s248 = sphi 0, %s247
      %s262 = sphi 0, %s248
      %s266 = sphi 0, %s266
      %s268 = sphi 0, %s266
      %s269 = sphi 0, %s268
      %s283 = sphi 0, %s269
      %s287 = sphi 0, %s287
      %s289 = sphi 0, %s287
      %s290 = sphi 0, %s289
      %s304 = sphi 0, %s290
      %s308 = sphi 0, %s308
      %s310 = sphi 0, %s308
      %s311 = sphi 0, %s310
      %s325 = sphi 0, %s311
      %s329 = sphi 0, %s329
      %s331 = sphi 0, %s329
      %s332 = sphi 0, %s331
      %s346 = sphi 0, %s332
      %s350 = sphi 0, %s350
      %s352 = sphi 0, %s350
      %s353 = sphi 0, %s352
      %s367 = sphi 0, %s353
      %s371 = sphi 0, %s371
      %s373 = sphi 0, %s371
      %s374 = sphi 0, %s373
      %s388 = sphi 0, %s374
      %s392 = sphi 0, %s392
      %s394 = sphi 0, %s392
      %s395 = sphi 0, %s394
      %s409 = sphi 0, %s395
      %s413 = sphi 0, %s413
      %s415 = sphi 0, %s413
      %s416 = sphi 0, %s415
      %s430 = sphi 0, %s416
      %s436 = sphi 0, %s438
      %s439 = sphi 0, %s436
      %s440 = sphi 0, %s439
      %s456 = sphi 0, %s440
      %s462 = sphi 0, %s464
      %s465 = sphi 0, %s462
      %s466 = sphi 0, %s465
      %s482 = sphi 0, %s466
    $region4: #{tpu_custom_call.1} parent=1 // loop_header_branch
      %41 = sbr.rel (%p39) target = $region8
    $region5: #{tpu_custom_call.1} parent=1 // loop_body
      %s43 = ssub.s32 %s38, 1
      %s44 = ssub.s32 %s38, 2
      %s45 = sadd.s32 %s38, 1
      %s46 = ssub.s32 %s38, %s45
      %p47 = scmp.eq.s32.totalorder %s46, 0
      %s49 = sadd.s32 %s48, 1
      %s50 = scalar_select %p47, %s48, %s49
      %p53 = pneg %p47
      %p54 = scmp.eq.s32.totalorder %s38, 1
      %p55 = por %p53, %p54
      %p56 = scmp.ne.s32.totalorder %s48, %s51
      %p57 = scmp.eq.s32.totalorder %s38, 0
      %p58 = por %p56, %p57
      %p59 = scmp.ne.s32.totalorder %s48, %s51
      %p60 = scmp.eq.s32.totalorder %s43, 1
      %p61 = por %p59, %p60
      %p62 = scmp.ne.s32.totalorder %s51, %s52
      %p63 = scmp.eq.s32.totalorder %s43, 0
      %p64 = por %p62, %p63
      %p65 = scmp.ne.s32.totalorder %s51, %s52
      %p66 = scmp.eq.s32.totalorder %s44, 1
      %p67 = por %p65, %p66
      %p69 = scmp.ne.s32.totalorder %s52, %s68
      %p70 = scmp.eq.s32.totalorder %s44, 0
      %p71 = por %p69, %p70
      %s72 = ssub.s32 %s38, %s45
      %p73 = scmp.eq.s32.totalorder %s72, 0
      %s75 = sadd.s32 %s74, 1
      %s76 = scalar_select %p73, %s74, %s75
      %p79 = pneg %p73
      %p80 = scmp.eq.s32.totalorder %s38, 1
      %p81 = por %p79, %p80
      %p82 = scmp.ne.s32.totalorder %s74, %s77
      %p83 = scmp.eq.s32.totalorder %s38, 0
      %p84 = por %p82, %p83
      %p85 = scmp.ne.s32.totalorder %s74, %s77
      %p86 = scmp.eq.s32.totalorder %s43, 1
      %p87 = por %p85, %p86
      %p88 = scmp.ne.s32.totalorder %s77, %s78
      %p89 = scmp.eq.s32.totalorder %s43, 0
      %p90 = por %p88, %p89
      %p91 = scmp.ne.s32.totalorder %s77, %s78
      %p92 = scmp.eq.s32.totalorder %s44, 1
      %p93 = por %p91, %p92
      %p95 = scmp.ne.s32.totalorder %s78, %s94
      %p96 = scmp.eq.s32.totalorder %s44, 0
      %p97 = por %p95, %p96
      %s99 = sadd.s32 %s98, 1
      %p102 = scmp.eq.s32.totalorder %s38, 1
      %p103 = scmp.ne.s32.totalorder %s98, %s100
      %p104 = scmp.eq.s32.totalorder %s38, 0
      %p105 = por %p103, %p104
      %p106 = scmp.ne.s32.totalorder %s98, %s100
      %p107 = scmp.eq.s32.totalorder %s43, 1
      %p108 = por %p106, %p107
      %p109 = scmp.ne.s32.totalorder %s100, %s101
      %p110 = scmp.eq.s32.totalorder %s43, 0
      %p111 = por %p109, %p110
      %p112 = scmp.ne.s32.totalorder %s100, %s101
      %p113 = scmp.eq.s32.totalorder %s44, 1
      %p114 = por %p112, %p113
      %p116 = scmp.ne.s32.totalorder %s101, %s115
      %p117 = scmp.eq.s32.totalorder %s44, 0
      %p118 = por %p116, %p117
      %s120 = sadd.s32 %s119, 1
      %p123 = scmp.eq.s32.totalorder %s38, 1
      %p124 = scmp.ne.s32.totalorder %s119, %s121
      %p125 = scmp.eq.s32.totalorder %s38, 0
      %p126 = por %p124, %p125
      %p127 = scmp.ne.s32.totalorder %s119, %s121
      %p128 = scmp.eq.s32.totalorder %s43, 1
      %p129 = por %p127, %p128
      %p130 = scmp.ne.s32.totalorder %s121, %s122
      %p131 = scmp.eq.s32.totalorder %s43, 0
      %p132 = por %p130, %p131
      %p133 = scmp.ne.s32.totalorder %s121, %s122
      %p134 = scmp.eq.s32.totalorder %s44, 1
      %p135 = por %p133, %p134
      %p137 = scmp.ne.s32.totalorder %s122, %s136
      %p138 = scmp.eq.s32.totalorder %s44, 0
      %p139 = por %p137, %p138
      %s141 = sadd.s32 %s140, 1
      %p144 = scmp.eq.s32.totalorder %s38, 1
      %p145 = scmp.ne.s32.totalorder %s140, %s142
      %p146 = scmp.eq.s32.totalorder %s38, 0
      %p147 = por %p145, %p146
      %p148 = scmp.ne.s32.totalorder %s140, %s142
      %p149 = scmp.eq.s32.totalorder %s43, 1
      %p150 = por %p148, %p149
      %p151 = scmp.ne.s32.totalorder %s142, %s143
      %p152 = scmp.eq.s32.totalorder %s43, 0
      %p153 = por %p151, %p152
      %p154 = scmp.ne.s32.totalorder %s142, %s143
      %p155 = scmp.eq.s32.totalorder %s44, 1
      %p156 = por %p154, %p155
      %p158 = scmp.ne.s32.totalorder %s143, %s157
      %p159 = scmp.eq.s32.totalorder %s44, 0
      %p160 = por %p158, %p159
      %s162 = sadd.s32 %s161, 1
      %p165 = scmp.eq.s32.totalorder %s38, 1
      %p166 = scmp.ne.s32.totalorder %s161, %s163
      %p167 = scmp.eq.s32.totalorder %s38, 0
      %p168 = por %p166, %p167
      %p169 = scmp.ne.s32.totalorder %s161, %s163
      %p170 = scmp.eq.s32.totalorder %s43, 1
      %p171 = por %p169, %p170
      %p172 = scmp.ne.s32.totalorder %s163, %s164
      %p173 = scmp.eq.s32.totalorder %s43, 0
      %p174 = por %p172, %p173
      %p175 = scmp.ne.s32.totalorder %s163, %s164
      %p176 = scmp.eq.s32.totalorder %s44, 1
      %p177 = por %p175, %p176
      %p179 = scmp.ne.s32.totalorder %s164, %s178
      %p180 = scmp.eq.s32.totalorder %s44, 0
      %p181 = por %p179, %p180
      %s183 = sadd.s32 %s182, 1
      %p186 = scmp.eq.s32.totalorder %s38, 1
      %p187 = scmp.ne.s32.totalorder %s182, %s184
      %p188 = scmp.eq.s32.totalorder %s38, 0
      %p189 = por %p187, %p188
      %p190 = scmp.ne.s32.totalorder %s182, %s184
      %p191 = scmp.eq.s32.totalorder %s43, 1
      %p192 = por %p190, %p191
      %p193 = scmp.ne.s32.totalorder %s184, %s185
      %p194 = scmp.eq.s32.totalorder %s43, 0
      %p195 = por %p193, %p194
      %p196 = scmp.ne.s32.totalorder %s184, %s185
      %p197 = scmp.eq.s32.totalorder %s44, 1
      %p198 = por %p196, %p197
      %p200 = scmp.ne.s32.totalorder %s185, %s199
      %p201 = scmp.eq.s32.totalorder %s44, 0
      %p202 = por %p200, %p201
      %s204 = sadd.s32 %s203, 1
      %p207 = scmp.eq.s32.totalorder %s38, 1
      %p208 = scmp.ne.s32.totalorder %s203, %s205
      %p209 = scmp.eq.s32.totalorder %s38, 0
      %p210 = por %p208, %p209
      %p211 = scmp.ne.s32.totalorder %s203, %s205
      %p212 = scmp.eq.s32.totalorder %s43, 1
      %p213 = por %p211, %p212
      %p214 = scmp.ne.s32.totalorder %s205, %s206
      %p215 = scmp.eq.s32.totalorder %s43, 0
      %p216 = por %p214, %p215
      %p217 = scmp.ne.s32.totalorder %s205, %s206
      %p218 = scmp.eq.s32.totalorder %s44, 1
      %p219 = por %p217, %p218
      %p221 = scmp.ne.s32.totalorder %s206, %s220
      %p222 = scmp.eq.s32.totalorder %s44, 0
      %p223 = por %p221, %p222
      %s225 = sadd.s32 %s224, 1
      %p228 = scmp.eq.s32.totalorder %s38, 1
      %p229 = scmp.ne.s32.totalorder %s224, %s226
      %p230 = scmp.eq.s32.totalorder %s38, 0
      %p231 = por %p229, %p230
      %p232 = scmp.ne.s32.totalorder %s224, %s226
      %p233 = scmp.eq.s32.totalorder %s43, 1
      %p234 = por %p232, %p233
      %p235 = scmp.ne.s32.totalorder %s226, %s227
      %p236 = scmp.eq.s32.totalorder %s43, 0
      %p237 = por %p235, %p236
      %p238 = scmp.ne.s32.totalorder %s226, %s227
      %p239 = scmp.eq.s32.totalorder %s44, 1
      %p240 = por %p238, %p239
      %p242 = scmp.ne.s32.totalorder %s227, %s241
      %p243 = scmp.eq.s32.totalorder %s44, 0
      %p244 = por %p242, %p243
      %s246 = sadd.s32 %s245, 1
      %p249 = scmp.eq.s32.totalorder %s38, 1
      %p250 = scmp.ne.s32.totalorder %s245, %s247
      %p251 = scmp.eq.s32.totalorder %s38, 0
      %p252 = por %p250, %p251
      %p253 = scmp.ne.s32.totalorder %s245, %s247
      %p254 = scmp.eq.s32.totalorder %s43, 1
      %p255 = por %p253, %p254
      %p256 = scmp.ne.s32.totalorder %s247, %s248
      %p257 = scmp.eq.s32.totalorder %s43, 0
      %p258 = por %p256, %p257
      %p259 = scmp.ne.s32.totalorder %s247, %s248
      %p260 = scmp.eq.s32.totalorder %s44, 1
      %p261 = por %p259, %p260
      %p263 = scmp.ne.s32.totalorder %s248, %s262
      %p264 = scmp.eq.s32.totalorder %s44, 0
      %p265 = por %p263, %p264
      %s267 = sadd.s32 %s266, 1
      %p270 = scmp.eq.s32.totalorder %s38, 1
      %p271 = scmp.ne.s32.totalorder %s266, %s268
      %p272 = scmp.eq.s32.totalorder %s38, 0
      %p273 = por %p271, %p272
      %p274 = scmp.ne.s32.totalorder %s266, %s268
      %p275 = scmp.eq.s32.totalorder %s43, 1
      %p276 = por %p274, %p275
      %p277 = scmp.ne.s32.totalorder %s268, %s269
      %p278 = scmp.eq.s32.totalorder %s43, 0
      %p279 = por %p277, %p278
      %p280 = scmp.ne.s32.totalorder %s268, %s269
      %p281 = scmp.eq.s32.totalorder %s44, 1
      %p282 = por %p280, %p281
      %p284 = scmp.ne.s32.totalorder %s269, %s283
      %p285 = scmp.eq.s32.totalorder %s44, 0
      %p286 = por %p284, %p285
      %s288 = sadd.s32 %s287, 1
      %p291 = scmp.eq.s32.totalorder %s38, 1
      %p292 = scmp.ne.s32.totalorder %s287, %s289
      %p293 = scmp.eq.s32.totalorder %s38, 0
      %p294 = por %p292, %p293
      %p295 = scmp.ne.s32.totalorder %s287, %s289
      %p296 = scmp.eq.s32.totalorder %s43, 1
      %p297 = por %p295, %p296
      %p298 = scmp.ne.s32.totalorder %s289, %s290
      %p299 = scmp.eq.s32.totalorder %s43, 0
      %p300 = por %p298, %p299
      %p301 = scmp.ne.s32.totalorder %s289, %s290
      %p302 = scmp.eq.s32.totalorder %s44, 1
      %p303 = por %p301, %p302
      %p305 = scmp.ne.s32.totalorder %s290, %s304
      %p306 = scmp.eq.s32.totalorder %s44, 0
      %p307 = por %p305, %p306
      %s309 = sadd.s32 %s308, 1
      %p312 = scmp.eq.s32.totalorder %s38, 1
      %p313 = scmp.ne.s32.totalorder %s308, %s310
      %p314 = scmp.eq.s32.totalorder %s38, 0
      %p315 = por %p313, %p314
      %p316 = scmp.ne.s32.totalorder %s308, %s310
      %p317 = scmp.eq.s32.totalorder %s43, 1
      %p318 = por %p316, %p317
      %p319 = scmp.ne.s32.totalorder %s310, %s311
      %p320 = scmp.eq.s32.totalorder %s43, 0
      %p321 = por %p319, %p320
      %p322 = scmp.ne.s32.totalorder %s310, %s311
      %p323 = scmp.eq.s32.totalorder %s44, 1
      %p324 = por %p322, %p323
      %p326 = scmp.ne.s32.totalorder %s311, %s325
      %p327 = scmp.eq.s32.totalorder %s44, 0
      %p328 = por %p326, %p327
      %s330 = sadd.s32 %s329, 1
      %p333 = scmp.eq.s32.totalorder %s38, 1
      %p334 = scmp.ne.s32.totalorder %s329, %s331
      %p335 = scmp.eq.s32.totalorder %s38, 0
      %p336 = por %p334, %p335
      %p337 = scmp.ne.s32.totalorder %s329, %s331
      %p338 = scmp.eq.s32.totalorder %s43, 1
      %p339 = por %p337, %p338
      %p340 = scmp.ne.s32.totalorder %s331, %s332
      %p341 = scmp.eq.s32.totalorder %s43, 0
      %p342 = por %p340, %p341
      %p343 = scmp.ne.s32.totalorder %s331, %s332
      %p344 = scmp.eq.s32.totalorder %s44, 1
      %p345 = por %p343, %p344
      %p347 = scmp.ne.s32.totalorder %s332, %s346
      %p348 = scmp.eq.s32.totalorder %s44, 0
      %p349 = por %p347, %p348
      %s351 = sadd.s32 %s350, 1
      %p354 = scmp.eq.s32.totalorder %s38, 1
      %p355 = scmp.ne.s32.totalorder %s350, %s352
      %p356 = scmp.eq.s32.totalorder %s38, 0
      %p357 = por %p355, %p356
      %p358 = scmp.ne.s32.totalorder %s350, %s352
      %p359 = scmp.eq.s32.totalorder %s43, 1
      %p360 = por %p358, %p359
      %p361 = scmp.ne.s32.totalorder %s352, %s353
      %p362 = scmp.eq.s32.totalorder %s43, 0
      %p363 = por %p361, %p362
      %p364 = scmp.ne.s32.totalorder %s352, %s353
      %p365 = scmp.eq.s32.totalorder %s44, 1
      %p366 = por %p364, %p365
      %p368 = scmp.ne.s32.totalorder %s353, %s367
      %p369 = scmp.eq.s32.totalorder %s44, 0
      %p370 = por %p368, %p369
      %s372 = sadd.s32 %s371, 1
      %p375 = scmp.eq.s32.totalorder %s38, 1
      %p376 = scmp.ne.s32.totalorder %s371, %s373
      %p377 = scmp.eq.s32.totalorder %s38, 0
      %p378 = por %p376, %p377
      %p379 = scmp.ne.s32.totalorder %s371, %s373
      %p380 = scmp.eq.s32.totalorder %s43, 1
      %p381 = por %p379, %p380
      %p382 = scmp.ne.s32.totalorder %s373, %s374
      %p383 = scmp.eq.s32.totalorder %s43, 0
      %p384 = por %p382, %p383
      %p385 = scmp.ne.s32.totalorder %s373, %s374
      %p386 = scmp.eq.s32.totalorder %s44, 1
      %p387 = por %p385, %p386
      %p389 = scmp.ne.s32.totalorder %s374, %s388
      %p390 = scmp.eq.s32.totalorder %s44, 0
      %p391 = por %p389, %p390
      %s393 = sadd.s32 %s392, 1
      %p396 = scmp.eq.s32.totalorder %s38, 1
      %p397 = scmp.ne.s32.totalorder %s392, %s394
      %p398 = scmp.eq.s32.totalorder %s38, 0
      %p399 = por %p397, %p398
      %p400 = scmp.ne.s32.totalorder %s392, %s394
      %p401 = scmp.eq.s32.totalorder %s43, 1
      %p402 = por %p400, %p401
      %p403 = scmp.ne.s32.totalorder %s394, %s395
      %p404 = scmp.eq.s32.totalorder %s43, 0
      %p405 = por %p403, %p404
      %p406 = scmp.ne.s32.totalorder %s394, %s395
      %p407 = scmp.eq.s32.totalorder %s44, 1
      %p408 = por %p406, %p407
      %p410 = scmp.ne.s32.totalorder %s395, %s409
      %p411 = scmp.eq.s32.totalorder %s44, 0
      %p412 = por %p410, %p411
      %s414 = sadd.s32 %s413, 1
      %p417 = scmp.eq.s32.totalorder %s38, 1
      %p418 = scmp.ne.s32.totalorder %s413, %s415
      %p419 = scmp.eq.s32.totalorder %s38, 0
      %p420 = por %p418, %p419
      %p421 = scmp.ne.s32.totalorder %s413, %s415
      %p422 = scmp.eq.s32.totalorder %s43, 1
      %p423 = por %p421, %p422
      %p424 = scmp.ne.s32.totalorder %s415, %s416
      %p425 = scmp.eq.s32.totalorder %s43, 0
      %p426 = por %p424, %p425
      %p427 = scmp.ne.s32.totalorder %s415, %s416
      %p428 = scmp.eq.s32.totalorder %s44, 1
      %p429 = por %p427, %p428
      %p431 = scmp.ne.s32.totalorder %s416, %s430
      %p432 = scmp.eq.s32.totalorder %s44, 0
      %p433 = por %p431, %p432
      %s434 = ssub.s32 %s38, %s45
      %p435 = scmp.eq.s32.totalorder %s434, 0
      %s437 = sadd.s32 %s436, 1
      %s438 = scalar_select %p435, %s436, %s437
      %p441 = pneg %p435
      %p442 = scmp.eq.s32.totalorder %s38, 1
      %p443 = por %p441, %p442
      %p444 = scmp.ne.s32.totalorder %s436, %s439
      %p445 = scmp.eq.s32.totalorder %s38, 0
      %p446 = por %p444, %p445
      %p447 = scmp.ne.s32.totalorder %s436, %s439
      %p448 = scmp.eq.s32.totalorder %s43, 1
      %p449 = por %p447, %p448
      %p450 = scmp.ne.s32.totalorder %s439, %s440
      %p451 = scmp.eq.s32.totalorder %s43, 0
      %p452 = por %p450, %p451
      %p453 = scmp.ne.s32.totalorder %s439, %s440
      %p454 = scmp.eq.s32.totalorder %s44, 1
      %p455 = por %p453, %p454
      %p457 = scmp.ne.s32.totalorder %s440, %s456
      %p458 = scmp.eq.s32.totalorder %s44, 0
      %p459 = por %p457, %p458
      %s460 = ssub.s32 %s38, %s45
      %p461 = scmp.eq.s32.totalorder %s460, 0
      %s463 = sadd.s32 %s462, 1
      %s464 = scalar_select %p461, %s462, %s463
      %p467 = pneg %p461
      %p468 = scmp.eq.s32.totalorder %s38, 1
      %p469 = por %p467, %p468
      %p470 = scmp.ne.s32.totalorder %s462, %s465
      %p471 = scmp.eq.s32.totalorder %s38, 0
      %p472 = por %p470, %p471
      %p473 = scmp.ne.s32.totalorder %s462, %s465
      %p474 = scmp.eq.s32.totalorder %s43, 1
      %p475 = por %p473, %p474
      %p476 = scmp.ne.s32.totalorder %s465, %s466
      %p477 = scmp.eq.s32.totalorder %s43, 0
      %p478 = por %p476, %p477
      %p479 = scmp.ne.s32.totalorder %s465, %s466
      %p480 = scmp.eq.s32.totalorder %s44, 1
      %p481 = por %p479, %p480
      %p483 = scmp.ne.s32.totalorder %s466, %s482
      %p484 = scmp.eq.s32.totalorder %s44, 0
      %p485 = por %p483, %p484
      %p486 = scmp.le.s32.totalorder 1, %s38
      %p487 = scmp.lt.s32.totalorder %s38, 3
      %p488 = pnand %p486, %p487
      %p489 = pneg %p488
      // Predicated region
      $region9: #{tpu_custom_call.1} parent=5 // pred_check
        _
      $region10: #{tpu_custom_call.1} parent=5 // pred_check_branch
        %491 = sbr.rel (%p488) target = $region12
      $region11: #{tpu_custom_call.1} parent=5 // pred_region
        %s492 = ssub.s32 %s38, 1
        // Predicated region
        $region13: #{tpu_custom_call.1} parent=11 // pred_check
          %p493 = pneg %p111
        $region14: #{tpu_custom_call.1} parent=11 // pred_check_branch
          %495 = sbr.rel (%p493) target = $region16
        $region15: #{tpu_custom_call.1} parent=11 // pred_region
          _
        $region16: #{tpu_custom_call.1} parent=11 // pred_fallthru
          _
        // Predicated region
        $region17: #{tpu_custom_call.1} parent=11 // pred_check
          %p496 = pneg %p132
        $region18: #{tpu_custom_call.1} parent=11 // pred_check_branch
          %498 = sbr.rel (%p496) target = $region20
        $region19: #{tpu_custom_call.1} parent=11 // pred_region
          _
        $region20: #{tpu_custom_call.1} parent=11 // pred_fallthru
          _
        // Predicated region
        $region21: #{tpu_custom_call.1} parent=11 // pred_check
          %p499 = pneg %p153
        $region22: #{tpu_custom_call.1} parent=11 // pred_check_branch
          %501 = sbr.rel (%p499) target = $region24
        $region23: #{tpu_custom_call.1} parent=11 // pred_region
          _
        $region24: #{tpu_custom_call.1} parent=11 // pred_fallthru
          _
        // Predicated region
        $region25: #{tpu_custom_call.1} parent=11 // pred_check
          %p502 = pneg %p174
        $region26: #{tpu_custom_call.1} parent=11 // pred_check_branch
          %504 = sbr.rel (%p502) target = $region28
        $region27: #{tpu_custom_call.1} parent=11 // pred_region
          _
        $region28: #{tpu_custom_call.1} parent=11 // pred_fallthru
          _
        // Predicated region
        $region29: #{tpu_custom_call.1} parent=11 // pred_check
          %p505 = pneg %p195
        $region30: #{tpu_custom_call.1} parent=11 // pred_check_branch
          %507 = sbr.rel (%p505) target = $region32
        $region31: #{tpu_custom_call.1} parent=11 // pred_region
          _
        $region32: #{tpu_custom_call.1} parent=11 // pred_fallthru
          _
        // Predicated region
        $region33: #{tpu_custom_call.1} parent=11 // pred_check
          %p508 = pneg %p216
        $region34: #{tpu_custom_call.1} parent=11 // pred_check_branch
          %510 = sbr.rel (%p508) target = $region36
        $region35: #{tpu_custom_call.1} parent=11 // pred_region
          _
        $region36: #{tpu_custom_call.1} parent=11 // pred_fallthru
          _
        // Predicated region
        $region37: #{tpu_custom_call.1} parent=11 // pred_check
          %p511 = pneg %p237
        $region38: #{tpu_custom_call.1} parent=11 // pred_check_branch
          %513 = sbr.rel (%p511) target = $region40
        $region39: #{tpu_custom_call.1} parent=11 // pred_region
          _
        $region40: #{tpu_custom_call.1} parent=11 // pred_fallthru
          _
        // Predicated region
        $region41: #{tpu_custom_call.1} parent=11 // pred_check
          %p514 = pneg %p258
        $region42: #{tpu_custom_call.1} parent=11 // pred_check_branch
          %516 = sbr.rel (%p514) target = $region44
        $region43: #{tpu_custom_call.1} parent=11 // pred_region
          _
        $region44: #{tpu_custom_call.1} parent=11 // pred_fallthru
          _
        // Predicated region
        $region45: #{tpu_custom_call.1} parent=11 // pred_check
          %p517 = pneg %p279
        $region46: #{tpu_custom_call.1} parent=11 // pred_check_branch
          %519 = sbr.rel (%p517) target = $region48
        $region47: #{tpu_custom_call.1} parent=11 // pred_region
          _
        $region48: #{tpu_custom_call.1} parent=11 // pred_fallthru
          _
        // Predicated region
        $region49: #{tpu_custom_call.1} parent=11 // pred_check
          %p520 = pneg %p300
        $region50: #{tpu_custom_call.1} parent=11 // pred_check_branch
          %522 = sbr.rel (%p520) target = $region52
        $region51: #{tpu_custom_call.1} parent=11 // pred_region
          _
        $region52: #{tpu_custom_call.1} parent=11 // pred_fallthru
          _
        // Predicated region
        $region53: #{tpu_custom_call.1} parent=11 // pred_check
          %p523 = pneg %p321
        $region54: #{tpu_custom_call.1} parent=11 // pred_check_branch
          %525 = sbr.rel (%p523) target = $region56
        $region55: #{tpu_custom_call.1} parent=11 // pred_region
          _
        $region56: #{tpu_custom_call.1} parent=11 // pred_fallthru
          _
        // Predicated region
        $region57: #{tpu_custom_call.1} parent=11 // pred_check
          %p526 = pneg %p342
        $region58: #{tpu_custom_call.1} parent=11 // pred_check_branch
          %528 = sbr.rel (%p526) target = $region60
        $region59: #{tpu_custom_call.1} parent=11 // pred_region
          _
        $region60: #{tpu_custom_call.1} parent=11 // pred_fallthru
          _
        // Predicated region
        $region61: #{tpu_custom_call.1} parent=11 // pred_check
          %p529 = pneg %p363
        $region62: #{tpu_custom_call.1} parent=11 // pred_check_branch
          %531 = sbr.rel (%p529) target = $region64
        $region63: #{tpu_custom_call.1} parent=11 // pred_region
          _
        $region64: #{tpu_custom_call.1} parent=11 // pred_fallthru
          _
        // Predicated region
        $region65: #{tpu_custom_call.1} parent=11 // pred_check
          %p532 = pneg %p384
        $region66: #{tpu_custom_call.1} parent=11 // pred_check_branch
          %534 = sbr.rel (%p532) target = $region68
        $region67: #{tpu_custom_call.1} parent=11 // pred_region
          _
        $region68: #{tpu_custom_call.1} parent=11 // pred_fallthru
          _
        // Predicated region
        $region69: #{tpu_custom_call.1} parent=11 // pred_check
          %p535 = pneg %p405
        $region70: #{tpu_custom_call.1} parent=11 // pred_check_branch
          %537 = sbr.rel (%p535) target = $region72
        $region71: #{tpu_custom_call.1} parent=11 // pred_region
          _
        $region72: #{tpu_custom_call.1} parent=11 // pred_fallthru
          _
        // Predicated region
        $region73: #{tpu_custom_call.1} parent=11 // pred_check
          %p538 = pneg %p426
        $region74: #{tpu_custom_call.1} parent=11 // pred_check_branch
          %540 = sbr.rel (%p538) target = $region76
        $region75: #{tpu_custom_call.1} parent=11 // pred_region
          _
        $region76: #{tpu_custom_call.1} parent=11 // pred_fallthru
          _
      $region12: #{tpu_custom_call.1} parent=5 // pred_fallthru
        _
      %p541 = scmp.lt.s32.totalorder %s38, 2
      // Predicated region
      $region77: #{tpu_custom_call.1} parent=5 // pred_check
        %p542 = pneg %p541
      $region78: #{tpu_custom_call.1} parent=5 // pred_check_branch
        %544 = sbr.rel (%p542) target = $region80
      $region79: #{tpu_custom_call.1} parent=5 // pred_region
        // Predicated region
        $region81: #{tpu_custom_call.1} parent=79 // pred_check
          %p545 = pneg %p58
        $region82: #{tpu_custom_call.1} parent=79 // pred_check_branch
          %547 = sbr.rel (%p545) target = $region84
        $region83: #{tpu_custom_call.1} parent=79 // pred_region
          %s548 = sand.u32 %s48, 1
          %s549 = scalar_lea.sflag [#allocation3], %s548
          %s550 = sand.u32 %s48, 1
          %s551 = smul.addr %s550, 4
          %s552 = scalar_lea.vmem [#allocation2], %s551
          %s554 = ssub.s32 64, 64
          %555 = vsyncadd %s549, %s554
          %s556 = smul.addr %s38, 64
          %s557 = scalar_lea.hbm %s0, %s556
          %s559 = sshll.u32 %s552, 4
          %s560 = int_to_ptr.vmem [resolvable:$true] %s559
          %562 = dma.hbm_to_vmem [thread:$0]  %s557, 64, %s560, %s549
        $region84: #{tpu_custom_call.1} parent=79 // pred_fallthru
          _
        // Predicated region
        $region85: #{tpu_custom_call.1} parent=79 // pred_check
          %p563 = pneg %p84
        $region86: #{tpu_custom_call.1} parent=79 // pred_check_branch
          %565 = sbr.rel (%p563) target = $region88
        $region87: #{tpu_custom_call.1} parent=79 // pred_region
          %s566 = sand.u32 %s74, 1
          %s567 = scalar_lea.sflag [#allocation6], %s566
          %s568 = sand.u32 %s74, 1
          %s569 = smul.addr %s568, 4
          %s570 = scalar_lea.vmem [#allocation5], %s569
          %s572 = ssub.s32 64, 64
          %573 = vsyncadd %s567, %s572
          %s574 = smul.addr %s38, 64
          %s575 = scalar_lea.hbm %s1, %s574
          %s577 = sshll.u32 %s570, 4
          %s578 = int_to_ptr.vmem [resolvable:$true] %s577
          %580 = dma.hbm_to_vmem [thread:$0]  %s575, 64, %s578, %s567
        $region88: #{tpu_custom_call.1} parent=79 // pred_fallthru
          _
      $region80: #{tpu_custom_call.1} parent=5 // pred_fallthru
        _
      %p581 = scmp.le.s32.totalorder 1, %s38
      %p582 = scmp.lt.s32.totalorder %s38, 3
      %p583 = pnand %p581, %p582
      %p584 = pneg %p583
      // Predicated region
      $region89: #{tpu_custom_call.1} parent=5 // pred_check
        _
      $region90: #{tpu_custom_call.1} parent=5 // pred_check_branch
        %586 = sbr.rel (%p583) target = $region92
      $region91: #{tpu_custom_call.1} parent=5 // pred_region
        %s587 = ssub.s32 %s38, 1
        %s588 = sand.u32 %s51, 1
        %s589 = scalar_lea.sflag [#allocation3], %s588
        %s590 = sand.u32 %s51, 1
        %s591 = smul.addr %s590, 4
        %s592 = scalar_lea.vmem [#allocation2], %s591
        // Predicated region
        $region93: #{tpu_custom_call.1} parent=91 // pred_check
          %p593 = pneg %p64
        $region94: #{tpu_custom_call.1} parent=91 // pred_check_branch
          %595 = sbr.rel (%p593) target = $region96
        $region95: #{tpu_custom_call.1} parent=91 // pred_region
          %596 = dma.done %s589, 64
        $region96: #{tpu_custom_call.1} parent=91 // pred_fallthru
          _
        %s597 = sand.u32 %s77, 1
        %s598 = scalar_lea.sflag [#allocation6], %s597
        %s599 = sand.u32 %s77, 1
        %s600 = smul.addr %s599, 4
        %s601 = scalar_lea.vmem [#allocation5], %s600
        // Predicated region
        $region97: #{tpu_custom_call.1} parent=91 // pred_check
          %p602 = pneg %p90
        $region98: #{tpu_custom_call.1} parent=91 // pred_check_branch
          %604 = sbr.rel (%p602) target = $region100
        $region99: #{tpu_custom_call.1} parent=91 // pred_region
          %605 = dma.done %s598, 64
        $region100: #{tpu_custom_call.1} parent=91 // pred_fallthru
          _
        %s606 = sand.u32 %s51, 1
        %s607 = scalar_lea.sflag [#allocation3], %s606
        %s608 = sand.u32 %s51, 1
        %s609 = smul.addr %s608, 4
        %s610 = scalar_lea.vmem [#allocation2], %s609
        %p611 = pneg %p64
        %p612 = pneg %p61
        %s613 = sand.u32 %s77, 1
        %s614 = scalar_lea.sflag [#allocation6], %s613
        %s615 = sand.u32 %s77, 1
        %s616 = smul.addr %s615, 4
        %s617 = scalar_lea.vmem [#allocation5], %s616
        %p618 = pneg %p90
        %p619 = pneg %p87
        %p620 = pneg %p111
        %p621 = pneg %p108
        %p622 = pneg %p132
        %p623 = pneg %p129
        %p624 = pneg %p153
        %p625 = pneg %p150
        %p626 = pneg %p174
        %p627 = pneg %p171
        %p628 = pneg %p195
        %p629 = pneg %p192
        %p630 = pneg %p216
        %p631 = pneg %p213
        %p632 = pneg %p237
        %p633 = pneg %p234
        %p634 = pneg %p258
        %p635 = pneg %p255
        %p636 = pneg %p279
        %p637 = pneg %p276
        %p638 = pneg %p300
        %p639 = pneg %p297
        %p640 = pneg %p321
        %p641 = pneg %p318
        %p642 = pneg %p342
        %p643 = pneg %p339
        %p644 = pneg %p363
        %p645 = pneg %p360
        %p646 = pneg %p384
        %p647 = pneg %p381
        %p648 = pneg %p405
        %p649 = pneg %p402
        %p650 = pneg %p426
        %p651 = pneg %p423
        %p652 = pneg %p452
        %p653 = pneg %p449
        %s654 = sand.u32 %s439, 1
        %s655 = scalar_lea.sflag [#allocation4], %s654
        %s656 = sand.u32 %s439, 1
        %s657 = smul.addr %s656, 4
        %s658 = scalar_lea.vmem [#allocation7], %s657
        %p659 = pneg %p478
        %p660 = pneg %p475
        %s661 = sand.u32 %s465, 1
        %s662 = scalar_lea.sflag [#allocation9], %s661
        %s663 = sand.u32 %s465, 1
        %s664 = scalar_lea.vmem [#allocation8], %s663
        %v666 = vld [vmem:[%s592] sm:$0xf]
        %v667 = vld [vmem:[%s601] sm:$0xf]
        %v668 = vld [vmem:[%s2] sm:$0xf]
        %v669 = vld [vmem:[%s2 + $0x4] sm:$0xf]
        %v670 = vld [vmem:[%s2 + $0x8] sm:$0xf]
        %v671 = vld [vmem:[%s2 + $0xc] sm:$0xf]
        %v672 = vld [vmem:[%s3] sm:$0x1]
        %v674 = vlaneseq
        %v675 = vshrl.u32 %v674, 7
        %v676 = vsub.s32 0, %v675
        %v677 = vrot.slane %v672, %v676
        %v683 = vunpack.c.l.b16 %v668
        %v684 = vunpack.c.l.b16 %v669
        %v685 = vunpack.c.l.b16 %v670
        %v686 = vunpack.c.l.b16 %v671
        %v687 = vpack.c.b16 %v684, %v683
        %v688 = vpack.c.b16 %v686, %v685
        %vm691 = vcmask 261120
        %v693 = vsel %vm691, %v666, 0
        %695 = vmatprep.subr.bf16.mxu0 0
        %696 = vmatpush1.bf16.msra.mxu0 0
        %697 = vmatprep.subr.bf16.mxu0 0
        %698 = vmatpush1.bf16.msra.mxu0 0
        %699 = vmatprep.subr.bf16.mxu0 0
        %700 = vmatpush1.bf16.msra.mxu0 0
        %701 = vmatprep.subr.bf16.mxu0 0
        %702 = vmatpush1.bf16.msra.mxu0 0
        %703 = vmatprep.subr.bf16.mxu0 0
        %704 = vmatpush1.bf16.msra.mxu0 0
        %705 = vmatprep.subr.bf16.mxu0 0
        %706 = vmatpush1.bf16.msra.mxu0 0
        %707 = vmatprep.subr.bf16.mxu0 0
        %708 = vmatpush1.bf16.msra.mxu0 %v688
        %709 = vmatprep.subr.bf16.mxu0 0
        %710 = vmatpush1.bf16.msra.mxu0 %v687
        %711 = vmatprep.subr.bf16.mxu0 0
        %712 = vmatpush2.bf16.msra.mxu0 0
        %713 = vmatprep.subr.bf16.mxu0 0
        %714 = vmatpush2.bf16.msra.mxu0 0
        %715 = vmatprep.subr.bf16.mxu0 0
        %716 = vmatpush2.bf16.msra.mxu0 0
        %717 = vmatprep.subr.bf16.mxu0 0
        %718 = vmatpush2.bf16.msra.mxu0 0
        %719 = vmatprep.subr.bf16.mxu0 0
        %720 = vmatpush2.bf16.msra.mxu0 0
        %721 = vmatprep.subr.bf16.mxu0 0
        %722 = vmatpush2.bf16.msra.mxu0 0
        %723 = vmatprep.subr.bf16.mxu0 0
        %724 = vmatpush2.bf16.msra.mxu0 0
        %725 = vmatprep.subr.bf16.mxu0 0
        %726 = vmatpush2.bf16.msra.mxu0 0
        %727 = vmatprep.mubr.bf16.mxu0 0
        %728 = vmatmul.mubr.bf16.gmra.mxu0 %v693
        %v729 = vpop.f32.mrf.mxu0
        %v730 = vadd.f32 %v677, %v729
        %v731 = vpop.f32.mrf.mxu0
        %v732 = vpop.f32.mrf.mxu0
        %v733 = vpop.f32.mrf.mxu0
        %734 = vdwg.mxu0
        %v735 = vld [vmem:[%s4] sm:$0xf]
        %v736 = vld [vmem:[%s4 + $0x4] sm:$0xf]
        %v737 = vld [vmem:[%s4 + $0x8] sm:$0xf]
        %v738 = vld [vmem:[%s4 + $0xc] sm:$0xf]
        %v739 = vld [vmem:[%s5] sm:$0x1]
        %v741 = vlaneseq
        %v742 = vshrl.u32 %v741, 7
        %v743 = vsub.s32 0, %v742
        %v744 = vrot.slane %v739, %v743
        %v750 = vunpack.c.l.b16 %v735
        %v751 = vunpack.c.l.b16 %v736
        %v752 = vunpack.c.l.b16 %v737
        %v753 = vunpack.c.l.b16 %v738
        %v754 = vpack.c.b16 %v751, %v750
        %v755 = vpack.c.b16 %v753, %v752
        %v759 = vsel %vm691, %v667, 0
        %761 = vmatprep.subr.bf16.mxu0 0
        %762 = vmatpush1.bf16.msra.mxu0 0
        %763 = vmatprep.subr.bf16.mxu0 0
        %764 = vmatpush1.bf16.msra.mxu0 0
        %765 = vmatprep.subr.bf16.mxu0 0
        %766 = vmatpush1.bf16.msra.mxu0 0
        %767 = vmatprep.subr.bf16.mxu0 0
        %768 = vmatpush1.bf16.msra.mxu0 0
        %769 = vmatprep.subr.bf16.mxu0 0
        %770 = vmatpush1.bf16.msra.mxu0 0
        %771 = vmatprep.subr.bf16.mxu0 0
        %772 = vmatpush1.bf16.msra.mxu0 0
        %773 = vmatprep.subr.bf16.mxu0 0
        %774 = vmatpush1.bf16.msra.mxu0 %v755
        %775 = vmatprep.subr.bf16.mxu0 0
        %776 = vmatpush1.bf16.msra.mxu0 %v754
        %777 = vmatprep.subr.bf16.mxu0 0
        %778 = vmatpush2.bf16.msra.mxu0 0
        %779 = vmatprep.subr.bf16.mxu0 0
        %780 = vmatpush2.bf16.msra.mxu0 0
        %781 = vmatprep.subr.bf16.mxu0 0
        %782 = vmatpush2.bf16.msra.mxu0 0
        %783 = vmatprep.subr.bf16.mxu0 0
        %784 = vmatpush2.bf16.msra.mxu0 0
        %785 = vmatprep.subr.bf16.mxu0 0
        %786 = vmatpush2.bf16.msra.mxu0 0
        %787 = vmatprep.subr.bf16.mxu0 0
        %788 = vmatpush2.bf16.msra.mxu0 0
        %789 = vmatprep.subr.bf16.mxu0 0
        %790 = vmatpush2.bf16.msra.mxu0 0
        %791 = vmatprep.subr.bf16.mxu0 0
        %792 = vmatpush2.bf16.msra.mxu0 0
        %793 = vmatprep.mubr.bf16.mxu0 0
        %794 = vmatmul.mubr.bf16.gmra.mxu0 %v759
        %v795 = vpop.f32.mrf.mxu0
        %v796 = vadd.f32 %v744, %v795
        %v797 = vpop.f32.mrf.mxu0
        %v798 = vpop.f32.mrf.mxu0
        %v799 = vpop.f32.mrf.mxu0
        %800 = vdwg.mxu0
        %v801 = vld [vmem:[%s6] sm:$0xf]
        %v802 = vld [vmem:[%s6 + $0x4] sm:$0xf]
        %v803 = vld [vmem:[%s6 + $0x8] sm:$0xf]
        %v804 = vld [vmem:[%s6 + $0xc] sm:$0xf]
        %v805 = vld [vmem:[%s7] sm:$0x1]
        %v807 = vlaneseq
        %v808 = vshrl.u32 %v807, 7
        %v809 = vsub.s32 0, %v808
        %v810 = vrot.slane %v805, %v809
        %v816 = vunpack.c.l.b16 %v801
        %v817 = vunpack.c.l.b16 %v802
        %v818 = vunpack.c.l.b16 %v803
        %v819 = vunpack.c.l.b16 %v804
        %v820 = vpack.c.b16 %v817, %v816
        %v821 = vpack.c.b16 %v819, %v818
        %824 = vmatprep.subr.bf16.mxu0 0
        %825 = vmatpush1.bf16.msra.mxu0 0
        %826 = vmatprep.subr.bf16.mxu0 0
        %827 = vmatpush1.bf16.msra.mxu0 0
        %828 = vmatprep.subr.bf16.mxu0 0
        %829 = vmatpush1.bf16.msra.mxu0 0
        %830 = vmatprep.subr.bf16.mxu0 0
        %831 = vmatpush1.bf16.msra.mxu0 0
        %832 = vmatprep.subr.bf16.mxu0 0
        %833 = vmatpush1.bf16.msra.mxu0 0
        %834 = vmatprep.subr.bf16.mxu0 0
        %835 = vmatpush1.bf16.msra.mxu0 0
        %836 = vmatprep.subr.bf16.mxu0 0
        %837 = vmatpush1.bf16.msra.mxu0 %v821
        %838 = vmatprep.subr.bf16.mxu0 0
        %839 = vmatpush1.bf16.msra.mxu0 %v820
        %840 = vmatprep.subr.bf16.mxu0 0
        %841 = vmatpush2.bf16.msra.mxu0 0
        %842 = vmatprep.subr.bf16.mxu0 0
        %843 = vmatpush2.bf16.msra.mxu0 0
        %844 = vmatprep.subr.bf16.mxu0 0
        %845 = vmatpush2.bf16.msra.mxu0 0
        %846 = vmatprep.subr.bf16.mxu0 0
        %847 = vmatpush2.bf16.msra.mxu0 0
        %848 = vmatprep.subr.bf16.mxu0 0
        %849 = vmatpush2.bf16.msra.mxu0 0
        %850 = vmatprep.subr.bf16.mxu0 0
        %851 = vmatpush2.bf16.msra.mxu0 0
        %852 = vmatprep.subr.bf16.mxu0 0
        %853 = vmatpush2.bf16.msra.mxu0 0
        %854 = vmatprep.subr.bf16.mxu0 0
        %855 = vmatpush2.bf16.msra.mxu0 0
        %856 = vmatprep.mubr.bf16.mxu0 0
        %857 = vmatmul.mubr.bf16.gmra.mxu0 %v759
        %v858 = vpop.f32.mrf.mxu0
        %v859 = vadd.f32 %v810, %v858
        %v860 = vpop.f32.mrf.mxu0
        %v861 = vpop.f32.mrf.mxu0
        %v862 = vpop.f32.mrf.mxu0
        %863 = vdwg.mxu0
        %865 = vrot.lane.b32.xlu0 %v730, 112
        %v866 = vpop.permute.xlu0 %865
        %v868 = vcombine.high %v730, 0.0
        %v870 = vunpack.c.l.s4 1983009808
        %v871 = vunpack.c.0.s8 %v870
        %v872 = vlaneseq
        %v873 = vshrl.u32 %v872, 7
        %v874 = vsub.s32 %v871, %v873
        %v875 = vrot.slane %v730, %v874
        %v877 = vunpack.c.l.s4 1983009808
        %v878 = vunpack.c.0.s8 %v877
        %v879 = vlaneseq
        %v880 = vshrl.u32 %v879, 7
        %v881 = vsub.s32 %v878, %v880
        %v882 = vrot.slane %v868, %v881
        %v883 = vcombine.high %v866, 0.0
        %v885 = vunpack.c.l.s4 1983009808
        %v886 = vunpack.c.0.s8 %v885
        %v887 = vlaneseq
        %v888 = vshrl.u32 %v887, 7
        %v889 = vsub.s32 %v886, %v888
        %v890 = vrot.slane %v866, %v889
        %v892 = vunpack.c.l.s4 1983009808
        %v893 = vunpack.c.0.s8 %v892
        %v894 = vlaneseq
        %v895 = vshrl.u32 %v894, 7
        %v896 = vsub.s32 %v893, %v895
        %v897 = vrot.slane %v883, %v896
        %v898 = vcombine.low %v875, %v890
        %v899 = vcombine.high %v875, %v890
        %v901 = vunpack.c.l.s4 1934713408
        %v902 = vunpack.c.0.s8 %v901
        %v903 = vlaneseq
        %v904 = vshrl.u32 %v903, 7
        %v905 = vsub.s32 %v902, %v904
        %v906 = vrot.slane %v898, %v905
        %v908 = vunpack.c.l.s4 1934713408
        %v909 = vunpack.c.0.s8 %v908
        %v910 = vlaneseq
        %v911 = vshrl.u32 %v910, 7
        %v912 = vsub.s32 %v909, %v911
        %v913 = vrot.slane %v899, %v912
        %v914 = vcombine.low %v882, %v897
        %v915 = vcombine.high %v882, %v897
        %v917 = vunpack.c.l.s4 1934713408
        %v918 = vunpack.c.0.s8 %v917
        %v919 = vlaneseq
        %v920 = vshrl.u32 %v919, 7
        %v921 = vsub.s32 %v918, %v920
        %v922 = vrot.slane %v914, %v921
        %v924 = vunpack.c.l.s4 1934713408
        %v925 = vunpack.c.0.s8 %v924
        %v926 = vlaneseq
        %v927 = vshrl.u32 %v926, 7
        %v928 = vsub.s32 %v925, %v927
        %v929 = vrot.slane %v915, %v928
        %v930 = vcombine.high %v906, 0.0
        %v931 = vcombine.high %v913, 0.0
        %v932 = vcombine.high %v922, 0.0
        %v933 = vcombine.high %v929, 0.0
        %v934 = vcombine.low %v906, %v913
        %v936 = vunpack.c.l.s4 1983009808
        %v937 = vunpack.c.0.s8 %v936
        %v938 = vlaneseq
        %v939 = vshrl.u32 %v938, 7
        %v940 = vsub.s32 %v937, %v939
        %v941 = vrot.slane %v934, %v940
        %v942 = vcombine.low %v930, %v931
        %v944 = vunpack.c.l.s4 1983009808
        %v945 = vunpack.c.0.s8 %v944
        %v946 = vlaneseq
        %v947 = vshrl.u32 %v946, 7
        %v948 = vsub.s32 %v945, %v947
        %v949 = vrot.slane %v942, %v948
        %v950 = vcombine.low %v922, %v929
        %v952 = vunpack.c.l.s4 1983009808
        %v953 = vunpack.c.0.s8 %v952
        %v954 = vlaneseq
        %v955 = vshrl.u32 %v954, 7
        %v956 = vsub.s32 %v953, %v955
        %v957 = vrot.slane %v950, %v956
        %v958 = vcombine.low %v932, %v933
        %v960 = vunpack.c.l.s4 1983009808
        %v961 = vunpack.c.0.s8 %v960
        %v962 = vlaneseq
        %v963 = vshrl.u32 %v962, 7
        %v964 = vsub.s32 %v961, %v963
        %v965 = vrot.slane %v958, %v964
        %v966 = vcombine.low %v941, %v949
        %v968 = vunpack.c.l.s4 1934713408
        %v969 = vunpack.c.0.s8 %v968
        %v970 = vlaneseq
        %v971 = vshrl.u32 %v970, 7
        %v972 = vsub.s32 %v969, %v971
        %v973 = vrot.slane %v966, %v972
        %v974 = vcombine.low %v957, %v965
        %v976 = vunpack.c.l.s4 1934713408
        %v977 = vunpack.c.0.s8 %v976
        %v978 = vlaneseq
        %v979 = vshrl.u32 %v978, 7
        %v980 = vsub.s32 %v977, %v979
        %v981 = vrot.slane %v974, %v980
        %v982 = vcombine.low %v973, %v981
        %v983 = vcombine.high %v973, %v981
        %v984 = vpack.c.bf16 %v982, %v982
        %v985 = vpack.c.bf16 %v983, %v983
        %987 = vrot.lane.b32.xlu0 %v796, 112
        %v988 = vpop.permute.xlu0 %987
        %v990 = vcombine.high %v796, 0.0
        %v992 = vunpack.c.l.s4 1983009808
        %v993 = vunpack.c.0.s8 %v992
        %v994 = vlaneseq
        %v995 = vshrl.u32 %v994, 7
        %v996 = vsub.s32 %v993, %v995
        %v997 = vrot.slane %v796, %v996
        %v999 = vunpack.c.l.s4 1983009808
        %v1000 = vunpack.c.0.s8 %v999
        %v1001 = vlaneseq
        %v1002 = vshrl.u32 %v1001, 7
        %v1003 = vsub.s32 %v1000, %v1002
        %v1004 = vrot.slane %v990, %v1003
        %v1005 = vcombine.high %v988, 0.0
        %v1007 = vunpack.c.l.s4 1983009808
        %v1008 = vunpack.c.0.s8 %v1007
        %v1009 = vlaneseq
        %v1010 = vshrl.u32 %v1009, 7
        %v1011 = vsub.s32 %v1008, %v1010
        %v1012 = vrot.slane %v988, %v1011
        %v1014 = vunpack.c.l.s4 1983009808
        %v1015 = vunpack.c.0.s8 %v1014
        %v1016 = vlaneseq
        %v1017 = vshrl.u32 %v1016, 7
        %v1018 = vsub.s32 %v1015, %v1017
        %v1019 = vrot.slane %v1005, %v1018
        %v1020 = vcombine.low %v997, %v1012
        %v1021 = vcombine.high %v997, %v1012
        %v1023 = vunpack.c.l.s4 1934713408
        %v1024 = vunpack.c.0.s8 %v1023
        %v1025 = vlaneseq
        %v1026 = vshrl.u32 %v1025, 7
        %v1027 = vsub.s32 %v1024, %v1026
        %v1028 = vrot.slane %v1020, %v1027
        %v1030 = vunpack.c.l.s4 1934713408
        %v1031 = vunpack.c.0.s8 %v1030
        %v1032 = vlaneseq
        %v1033 = vshrl.u32 %v1032, 7
        %v1034 = vsub.s32 %v1031, %v1033
        %v1035 = vrot.slane %v1021, %v1034
        %v1036 = vcombine.low %v1004, %v1019
        %v1037 = vcombine.high %v1004, %v1019
        %v1039 = vunpack.c.l.s4 1934713408
        %v1040 = vunpack.c.0.s8 %v1039
        %v1041 = vlaneseq
        %v1042 = vshrl.u32 %v1041, 7
        %v1043 = vsub.s32 %v1040, %v1042
        %v1044 = vrot.slane %v1036, %v1043
        %v1046 = vunpack.c.l.s4 1934713408
        %v1047 = vunpack.c.0.s8 %v1046
        %v1048 = vlaneseq
        %v1049 = vshrl.u32 %v1048, 7
        %v1050 = vsub.s32 %v1047, %v1049
        %v1051 = vrot.slane %v1037, %v1050
        %v1052 = vcombine.high %v1028, 0.0
        %v1053 = vcombine.high %v1035, 0.0
        %v1054 = vcombine.high %v1044, 0.0
        %v1055 = vcombine.high %v1051, 0.0
        %v1056 = vcombine.low %v1028, %v1035
        %v1058 = vunpack.c.l.s4 1983009808
        %v1059 = vunpack.c.0.s8 %v1058
        %v1060 = vlaneseq
        %v1061 = vshrl.u32 %v1060, 7
        %v1062 = vsub.s32 %v1059, %v1061
        %v1063 = vrot.slane %v1056, %v1062
        %v1064 = vcombine.low %v1052, %v1053
        %v1066 = vunpack.c.l.s4 1983009808
        %v1067 = vunpack.c.0.s8 %v1066
        %v1068 = vlaneseq
        %v1069 = vshrl.u32 %v1068, 7
        %v1070 = vsub.s32 %v1067, %v1069
        %v1071 = vrot.slane %v1064, %v1070
        %v1072 = vcombine.low %v1044, %v1051
        %v1074 = vunpack.c.l.s4 1983009808
        %v1075 = vunpack.c.0.s8 %v1074
        %v1076 = vlaneseq
        %v1077 = vshrl.u32 %v1076, 7
        %v1078 = vsub.s32 %v1075, %v1077
        %v1079 = vrot.slane %v1072, %v1078
        %v1080 = vcombine.low %v1054, %v1055
        %v1082 = vunpack.c.l.s4 1983009808
        %v1083 = vunpack.c.0.s8 %v1082
        %v1084 = vlaneseq
        %v1085 = vshrl.u32 %v1084, 7
        %v1086 = vsub.s32 %v1083, %v1085
        %v1087 = vrot.slane %v1080, %v1086
        %v1088 = vcombine.low %v1063, %v1071
        %v1090 = vunpack.c.l.s4 1934713408
        %v1091 = vunpack.c.0.s8 %v1090
        %v1092 = vlaneseq
        %v1093 = vshrl.u32 %v1092, 7
        %v1094 = vsub.s32 %v1091, %v1093
        %v1095 = vrot.slane %v1088, %v1094
        %v1096 = vcombine.low %v1079, %v1087
        %v1098 = vunpack.c.l.s4 1934713408
        %v1099 = vunpack.c.0.s8 %v1098
        %v1100 = vlaneseq
        %v1101 = vshrl.u32 %v1100, 7
        %v1102 = vsub.s32 %v1099, %v1101
        %v1103 = vrot.slane %v1096, %v1102
        %v1104 = vcombine.low %v1095, %v1103
        %v1105 = vcombine.high %v1095, %v1103
        %v1106 = vpack.c.bf16 %v1104, %v1104
        %v1107 = vpack.c.bf16 %v1105, %v1105
        %1109 = vrot.lane.b32.xlu0 %v859, 112
        %v1110 = vpop.permute.xlu0 %1109
        %v1112 = vcombine.high %v859, 0.0
        %v1114 = vunpack.c.l.s4 1983009808
        %v1115 = vunpack.c.0.s8 %v1114
        %v1116 = vlaneseq
        %v1117 = vshrl.u32 %v1116, 7
        %v1118 = vsub.s32 %v1115, %v1117
        %v1119 = vrot.slane %v859, %v1118
        %v1121 = vunpack.c.l.s4 1983009808
        %v1122 = vunpack.c.0.s8 %v1121
        %v1123 = vlaneseq
        %v1124 = vshrl.u32 %v1123, 7
        %v1125 = vsub.s32 %v1122, %v1124
        %v1126 = vrot.slane %v1112, %v1125
        %v1127 = vcombine.high %v1110, 0.0
        %v1129 = vunpack.c.l.s4 1983009808
        %v1130 = vunpack.c.0.s8 %v1129
        %v1131 = vlaneseq
        %v1132 = vshrl.u32 %v1131, 7
        %v1133 = vsub.s32 %v1130, %v1132
        %v1134 = vrot.slane %v1110, %v1133
        %v1136 = vunpack.c.l.s4 1983009808
        %v1137 = vunpack.c.0.s8 %v1136
        %v1138 = vlaneseq
        %v1139 = vshrl.u32 %v1138, 7
        %v1140 = vsub.s32 %v1137, %v1139
        %v1141 = vrot.slane %v1127, %v1140
        %v1142 = vcombine.low %v1119, %v1134
        %v1143 = vcombine.high %v1119, %v1134
        %v1145 = vunpack.c.l.s4 1934713408
        %v1146 = vunpack.c.0.s8 %v1145
        %v1147 = vlaneseq
        %v1148 = vshrl.u32 %v1147, 7
        %v1149 = vsub.s32 %v1146, %v1148
        %v1150 = vrot.slane %v1142, %v1149
        %v1152 = vunpack.c.l.s4 1934713408
        %v1153 = vunpack.c.0.s8 %v1152
        %v1154 = vlaneseq
        %v1155 = vshrl.u32 %v1154, 7
        %v1156 = vsub.s32 %v1153, %v1155
        %v1157 = vrot.slane %v1143, %v1156
        %v1158 = vcombine.low %v1126, %v1141
        %v1159 = vcombine.high %v1126, %v1141
        %v1161 = vunpack.c.l.s4 1934713408
        %v1162 = vunpack.c.0.s8 %v1161
        %v1163 = vlaneseq
        %v1164 = vshrl.u32 %v1163, 7
        %v1165 = vsub.s32 %v1162, %v1164
        %v1166 = vrot.slane %v1158, %v1165
        %v1168 = vunpack.c.l.s4 1934713408
        %v1169 = vunpack.c.0.s8 %v1168
        %v1170 = vlaneseq
        %v1171 = vshrl.u32 %v1170, 7
        %v1172 = vsub.s32 %v1169, %v1171
        %v1173 = vrot.slane %v1159, %v1172
        %v1174 = vcombine.high %v1150, 0.0
        %v1175 = vcombine.high %v1157, 0.0
        %v1176 = vcombine.high %v1166, 0.0
        %v1177 = vcombine.high %v1173, 0.0
        %v1178 = vcombine.low %v1150, %v1157
        %v1180 = vunpack.c.l.s4 1983009808
        %v1181 = vunpack.c.0.s8 %v1180
        %v1182 = vlaneseq
        %v1183 = vshrl.u32 %v1182, 7
        %v1184 = vsub.s32 %v1181, %v1183
        %v1185 = vrot.slane %v1178, %v1184
        %v1186 = vcombine.low %v1174, %v1175
        %v1188 = vunpack.c.l.s4 1983009808
        %v1189 = vunpack.c.0.s8 %v1188
        %v1190 = vlaneseq
        %v1191 = vshrl.u32 %v1190, 7
        %v1192 = vsub.s32 %v1189, %v1191
        %v1193 = vrot.slane %v1186, %v1192
        %v1194 = vcombine.low %v1166, %v1173
        %v1196 = vunpack.c.l.s4 1983009808
        %v1197 = vunpack.c.0.s8 %v1196
        %v1198 = vlaneseq
        %v1199 = vshrl.u32 %v1198, 7
        %v1200 = vsub.s32 %v1197, %v1199
        %v1201 = vrot.slane %v1194, %v1200
        %v1202 = vcombine.low %v1176, %v1177
        %v1204 = vunpack.c.l.s4 1983009808
        %v1205 = vunpack.c.0.s8 %v1204
        %v1206 = vlaneseq
        %v1207 = vshrl.u32 %v1206, 7
        %v1208 = vsub.s32 %v1205, %v1207
        %v1209 = vrot.slane %v1202, %v1208
        %v1210 = vcombine.low %v1185, %v1193
        %v1212 = vunpack.c.l.s4 1934713408
        %v1213 = vunpack.c.0.s8 %v1212
        %v1214 = vlaneseq
        %v1215 = vshrl.u32 %v1214, 7
        %v1216 = vsub.s32 %v1213, %v1215
        %v1217 = vrot.slane %v1210, %v1216
        %v1218 = vcombine.low %v1201, %v1209
        %v1220 = vunpack.c.l.s4 1934713408
        %v1221 = vunpack.c.0.s8 %v1220
        %v1222 = vlaneseq
        %v1223 = vshrl.u32 %v1222, 7
        %v1224 = vsub.s32 %v1221, %v1223
        %v1225 = vrot.slane %v1218, %v1224
        %v1226 = vcombine.low %v1217, %v1225
        %v1227 = vcombine.high %v1217, %v1225
        %v1228 = vpack.c.bf16 %v1226, %v1226
        %v1229 = vpack.c.bf16 %v1227, %v1227
        %vm1230 = vcmask 130048
        %v1232 = vsel %vm1230, %v984, 0
        %v1235 = vsel %vm1230, %v1106, 0
        %1237 = vmatprep.subr.bf16.mxu0 0
        %1238 = vmatpush1.bf16.xpose.msra.mxu0 0
        %1239 = vmatprep.subr.bf16.mxu0 0
        %1240 = vmatpush1.bf16.xpose.msra.mxu0 0
        %1241 = vmatprep.subr.bf16.mxu0 0
        %1242 = vmatpush1.bf16.xpose.msra.mxu0 0
        %1243 = vmatprep.subr.bf16.mxu0 0
        %1244 = vmatpush1.bf16.xpose.msra.mxu0 0
        %1245 = vmatprep.subr.bf16.mxu0 0
        %1246 = vmatpush1.bf16.xpose.msra.mxu0 0
        %1247 = vmatprep.subr.bf16.mxu0 0
        %1248 = vmatpush1.bf16.xpose.msra.mxu0 0
        %1249 = vmatprep.subr.bf16.mxu0 0
        %1250 = vmatpush1.bf16.xpose.msra.mxu0 0
        %1251 = vmatprep.subr.bf16.mxu0 0
        %1252 = vmatpush1.bf16.xpose.msra.mxu0 %v1235
        %1253 = vmatprep.subr.bf16.mxu0 0
        %1254 = vmatpush2.bf16.xpose.msra.mxu0 0
        %1255 = vmatprep.subr.bf16.mxu0 0
        %1256 = vmatpush2.bf16.xpose.msra.mxu0 0
        %1257 = vmatprep.subr.bf16.mxu0 0
        %1258 = vmatpush2.bf16.xpose.msra.mxu0 0
        %1259 = vmatprep.subr.bf16.mxu0 0
        %1260 = vmatpush2.bf16.xpose.msra.mxu0 0
        %1261 = vmatprep.subr.bf16.mxu0 0
        %1262 = vmatpush2.bf16.xpose.msra.mxu0 0
        %1263 = vmatprep.subr.bf16.mxu0 0
        %1264 = vmatpush2.bf16.xpose.msra.mxu0 0
        %1265 = vmatprep.subr.bf16.mxu0 0
        %1266 = vmatpush2.bf16.xpose.msra.mxu0 0
        %1267 = vmatprep.subr.bf16.mxu0 0
        %1268 = vmatpush2.bf16.xpose.msra.mxu0 0
        %1269 = vmatprep.mubr.bf16.mxu0 0
        %1270 = vmatmul.mubr.bf16.gmra.mxu0 %v1232
        %v1271 = vpop.f32.mrf.mxu0
        %v1272 = vadd.f32 0.0, %v1271
        %v1273 = vpop.f32.mrf.mxu0
        %v1274 = vpop.f32.mrf.mxu0
        %v1275 = vpop.f32.mrf.mxu0
        %1276 = vdwg.mxu0
        %v1278 = vsel %vm1230, %v985, 0
        %v1281 = vsel %vm1230, %v1107, 0
        %1283 = vmatprep.subr.bf16.mxu0 0
        %1284 = vmatpush1.bf16.xpose.msra.mxu0 0
        %1285 = vmatprep.subr.bf16.mxu0 0
        %1286 = vmatpush1.bf16.xpose.msra.mxu0 0
        %1287 = vmatprep.subr.bf16.mxu0 0
        %1288 = vmatpush1.bf16.xpose.msra.mxu0 0
        %1289 = vmatprep.subr.bf16.mxu0 0
        %1290 = vmatpush1.bf16.xpose.msra.mxu0 0
        %1291 = vmatprep.subr.bf16.mxu0 0
        %1292 = vmatpush1.bf16.xpose.msra.mxu0 0
        %1293 = vmatprep.subr.bf16.mxu0 0
        %1294 = vmatpush1.bf16.xpose.msra.mxu0 0
        %1295 = vmatprep.subr.bf16.mxu0 0
        %1296 = vmatpush1.bf16.xpose.msra.mxu0 0
        %1297 = vmatprep.subr.bf16.mxu0 0
        %1298 = vmatpush1.bf16.xpose.msra.mxu0 %v1281
        %1299 = vmatprep.subr.bf16.mxu0 0
        %1300 = vmatpush2.bf16.xpose.msra.mxu0 0
        %1301 = vmatprep.subr.bf16.mxu0 0
        %1302 = vmatpush2.bf16.xpose.msra.mxu0 0
        %1303 = vmatprep.subr.bf16.mxu0 0
        %1304 = vmatpush2.bf16.xpose.msra.mxu0 0
        %1305 = vmatprep.subr.bf16.mxu0 0
        %1306 = vmatpush2.bf16.xpose.msra.mxu0 0
        %1307 = vmatprep.subr.bf16.mxu0 0
        %1308 = vmatpush2.bf16.xpose.msra.mxu0 0
        %1309 = vmatprep.subr.bf16.mxu0 0
        %1310 = vmatpush2.bf16.xpose.msra.mxu0 0
        %1311 = vmatprep.subr.bf16.mxu0 0
        %1312 = vmatpush2.bf16.xpose.msra.mxu0 0
        %1313 = vmatprep.subr.bf16.mxu0 0
        %1314 = vmatpush2.bf16.xpose.msra.mxu0 0
        %1315 = vmatprep.mubr.bf16.mxu0 0
        %1316 = vmatmul.mubr.bf16.gmra.mxu0 %v1278
        %v1317 = vpop.f32.mrf.mxu0
        %v1318 = vadd.f32 0.0, %v1317
        %v1319 = vpop.f32.mrf.mxu0
        %v1320 = vpop.f32.mrf.mxu0
        %v1321 = vpop.f32.mrf.mxu0
        %1322 = vdwg.mxu0
        %vm1323 = vcmask 64512
        %v1324 = vsel %vm1323, %v1272, -inf
        %1325 = vmax.xlane.f32.xlu0 %v1324
        %v1326 = vpop.xlane.xlu0 %1325
        %v1327 = vsel %vm1323, %v1318, -inf
        %1328 = vmax.xlane.f32.xlu0 %v1327
        %v1329 = vpop.xlane.xlu0 %1328
        %v1330 = vsub.f32 %v1272, %v1326
        %v1331 = vsub.f32 %v1318, %v1329
        %v1332 = vmul.f32 %v1330, 1.442695
        %v1333 = vpow.pop %v1332
        %v1334 = vmul.f32 %v1331, 1.442695
        %v1335 = vpow.pop %v1334
        %v1336 = vsel %vm1323, %v1333, 0.0
        %1337 = vadd.xlane.f32.xlu0 %v1336
        %v1338 = vpop.xlane.xlu0 %1337
        %v1339 = vsel %vm1323, %v1335, 0.0
        %1340 = vadd.xlane.f32.xlu0 %v1339
        %v1341 = vpop.xlane.xlu0 %1340
        %v1342 = vrcp.pop %v1338
        %v1343 = vrcp.pop %v1341
        %v1344 = vmul.f32 %v1333, %v1342
        %v1345 = vmul.f32 %v1335, %v1343
        %v1346 = vlog2.pop %v1338
        %v1347 = vmul.f32 %v1346, 0.6931472
        %v1348 = vlog2.pop %v1341
        %v1349 = vmul.f32 %v1348, 0.6931472
        %v1350 = vmul.f32 %v1344, %v1330
        %v1351 = vmul.f32 %v1345, %v1331
        %v1352 = vsel %vm1323, %v1350, 0.0
        %1353 = vadd.xlane.f32.xlu0 %v1352
        %v1354 = vpop.xlane.xlu0 %1353
        %v1355 = vsel %vm1323, %v1351, 0.0
        %1356 = vadd.xlane.f32.xlu0 %v1355
        %v1357 = vpop.xlane.xlu0 %1356
        %v1358 = vsub.f32 %v1347, %v1354
        %v1359 = vsub.f32 %v1349, %v1357
        %v1360 = vmax.f32 %v1358, %v1359
        %v1362 = vlaneseq
        %v1363 = vand.u32 %v1362, 127
        %v1364 = vlaneseq
        %v1365 = vshrl.u32 %v1364, 7
        %v1366 = vsub.s32 %v1363, %v1365
        %v1367 = vrot.slane %v1360, %v1366
        %vm1369 = vcmask 57344
        %1370 = vst.msk [vmem:[%s664] sm:$0x1] %vm1369, %v1367
        %v1371 = vpack.c.bf16 %v1344, %v1344
        %v1372 = vpack.c.bf16 %v1345, %v1345
        %v1374 = vsel %vm1323, %v1371, 0
        %vm1376 = vcmask 1043456
        %v1378 = vsel %vm1376, %v1228, 0
        %1380 = vmatprep.subr.bf16.mxu0 0
        %1381 = vmatpush1.bf16.msra.mxu0 0
        %1382 = vmatprep.subr.bf16.mxu0 0
        %1383 = vmatpush1.bf16.msra.mxu0 0
        %1384 = vmatprep.subr.bf16.mxu0 0
        %1385 = vmatpush1.bf16.msra.mxu0 0
        %1386 = vmatprep.subr.bf16.mxu0 0
        %1387 = vmatpush1.bf16.msra.mxu0 0
        %1388 = vmatprep.subr.bf16.mxu0 0
        %1389 = vmatpush1.bf16.msra.mxu0 0
        %1390 = vmatprep.subr.bf16.mxu0 0
        %1391 = vmatpush1.bf16.msra.mxu0 0
        %1392 = vmatprep.subr.bf16.mxu0 0
        %1393 = vmatpush1.bf16.msra.mxu0 0
        %1394 = vmatprep.subr.bf16.mxu0 0
        %1395 = vmatpush1.bf16.msra.mxu0 %v1378
        %1396 = vmatprep.subr.bf16.mxu0 0
        %1397 = vmatpush2.bf16.msra.mxu0 0
        %1398 = vmatprep.subr.bf16.mxu0 0
        %1399 = vmatpush2.bf16.msra.mxu0 0
        %1400 = vmatprep.subr.bf16.mxu0 0
        %1401 = vmatpush2.bf16.msra.mxu0 0
        %1402 = vmatprep.subr.bf16.mxu0 0
        %1403 = vmatpush2.bf16.msra.mxu0 0
        %1404 = vmatprep.subr.bf16.mxu0 0
        %1405 = vmatpush2.bf16.msra.mxu0 0
        %1406 = vmatprep.subr.bf16.mxu0 0
        %1407 = vmatpush2.bf16.msra.mxu0 0
        %1408 = vmatprep.subr.bf16.mxu0 0
        %1409 = vmatpush2.bf16.msra.mxu0 0
        %1410 = vmatprep.subr.bf16.mxu0 0
        %1411 = vmatpush2.bf16.msra.mxu0 0
        %1412 = vmatprep.mubr.bf16.mxu0 0
        %1413 = vmatmul.mubr.bf16.gmra.mxu0 %v1374
        %v1414 = vpop.f32.mrf.mxu0
        %v1415 = vadd.f32 0.0, %v1414
        %v1416 = vpop.f32.mrf.mxu0
        %v1417 = vpop.f32.mrf.mxu0
        %v1418 = vpop.f32.mrf.mxu0
        %1419 = vdwg.mxu0
        %v1421 = vsel %vm1323, %v1372, 0
        %v1424 = vsel %vm1376, %v1229, 0
        %1426 = vmatprep.subr.bf16.mxu0 0
        %1427 = vmatpush1.bf16.msra.mxu0 0
        %1428 = vmatprep.subr.bf16.mxu0 0
        %1429 = vmatpush1.bf16.msra.mxu0 0
        %1430 = vmatprep.subr.bf16.mxu0 0
        %1431 = vmatpush1.bf16.msra.mxu0 0
        %1432 = vmatprep.subr.bf16.mxu0 0
        %1433 = vmatpush1.bf16.msra.mxu0 0
        %1434 = vmatprep.subr.bf16.mxu0 0
        %1435 = vmatpush1.bf16.msra.mxu0 0
        %1436 = vmatprep.subr.bf16.mxu0 0
        %1437 = vmatpush1.bf16.msra.mxu0 0
        %1438 = vmatprep.subr.bf16.mxu0 0
        %1439 = vmatpush1.bf16.msra.mxu0 0
        %1440 = vmatprep.subr.bf16.mxu0 0
        %1441 = vmatpush1.bf16.msra.mxu0 %v1424
        %1442 = vmatprep.subr.bf16.mxu0 0
        %1443 = vmatpush2.bf16.msra.mxu0 0
        %1444 = vmatprep.subr.bf16.mxu0 0
        %1445 = vmatpush2.bf16.msra.mxu0 0
        %1446 = vmatprep.subr.bf16.mxu0 0
        %1447 = vmatpush2.bf16.msra.mxu0 0
        %1448 = vmatprep.subr.bf16.mxu0 0
        %1449 = vmatpush2.bf16.msra.mxu0 0
        %1450 = vmatprep.subr.bf16.mxu0 0
        %1451 = vmatpush2.bf16.msra.mxu0 0
        %1452 = vmatprep.subr.bf16.mxu0 0
        %1453 = vmatpush2.bf16.msra.mxu0 0
        %1454 = vmatprep.subr.bf16.mxu0 0
        %1455 = vmatpush2.bf16.msra.mxu0 0
        %1456 = vmatprep.subr.bf16.mxu0 0
        %1457 = vmatpush2.bf16.msra.mxu0 0
        %1458 = vmatprep.mubr.bf16.mxu0 0
        %1459 = vmatmul.mubr.bf16.gmra.mxu0 %v1421
        %v1460 = vpop.f32.mrf.mxu0
        %v1461 = vadd.f32 0.0, %v1460
        %v1462 = vpop.f32.mrf.mxu0
        %v1463 = vpop.f32.mrf.mxu0
        %v1464 = vpop.f32.mrf.mxu0
        %1465 = vdwg.mxu0
        %v1466 = vcombine.high %v1415, 0.0
        %v1468 = vunpack.c.l.s4 1983009808
        %v1469 = vunpack.c.0.s8 %v1468
        %v1470 = vlaneseq
        %v1471 = vshrl.u32 %v1470, 7
        %v1472 = vsub.s32 %v1469, %v1471
        %v1473 = vrot.slane %v1415, %v1472
        %v1475 = vunpack.c.l.s4 1983009808
        %v1476 = vunpack.c.0.s8 %v1475
        %v1477 = vlaneseq
        %v1478 = vshrl.u32 %v1477, 7
        %v1479 = vsub.s32 %v1476, %v1478
        %v1480 = vrot.slane %v1466, %v1479
        %v1481 = vcombine.high %v1461, 0.0
        %v1483 = vunpack.c.l.s4 1983009808
        %v1484 = vunpack.c.0.s8 %v1483
        %v1485 = vlaneseq
        %v1486 = vshrl.u32 %v1485, 7
        %v1487 = vsub.s32 %v1484, %v1486
        %v1488 = vrot.slane %v1461, %v1487
        %v1490 = vunpack.c.l.s4 1983009808
        %v1491 = vunpack.c.0.s8 %v1490
        %v1492 = vlaneseq
        %v1493 = vshrl.u32 %v1492, 7
        %v1494 = vsub.s32 %v1491, %v1493
        %v1495 = vrot.slane %v1481, %v1494
        %v1496 = vcombine.low %v1473, %v1488
        %v1497 = vcombine.high %v1473, %v1488
        %v1499 = vunpack.c.l.s4 1934713408
        %v1500 = vunpack.c.0.s8 %v1499
        %v1501 = vlaneseq
        %v1502 = vshrl.u32 %v1501, 7
        %v1503 = vsub.s32 %v1500, %v1502
        %v1504 = vrot.slane %v1496, %v1503
        %v1506 = vunpack.c.l.s4 1934713408
        %v1507 = vunpack.c.0.s8 %v1506
        %v1508 = vlaneseq
        %v1509 = vshrl.u32 %v1508, 7
        %v1510 = vsub.s32 %v1507, %v1509
        %v1511 = vrot.slane %v1497, %v1510
        %v1512 = vcombine.low %v1480, %v1495
        %v1513 = vcombine.high %v1480, %v1495
        %v1515 = vunpack.c.l.s4 1934713408
        %v1516 = vunpack.c.0.s8 %v1515
        %v1517 = vlaneseq
        %v1518 = vshrl.u32 %v1517, 7
        %v1519 = vsub.s32 %v1516, %v1518
        %v1520 = vrot.slane %v1512, %v1519
        %v1522 = vunpack.c.l.s4 1934713408
        %v1523 = vunpack.c.0.s8 %v1522
        %v1524 = vlaneseq
        %v1525 = vshrl.u32 %v1524, 7
        %v1526 = vsub.s32 %v1523, %v1525
        %v1527 = vrot.slane %v1513, %v1526
        %v1528 = vcombine.high %v1504, 0.0
        %v1529 = vcombine.high %v1511, 0.0
        %v1530 = vcombine.high %v1520, 0.0
        %v1531 = vcombine.high %v1527, 0.0
        %v1532 = vcombine.low %v1504, %v1511
        %v1534 = vunpack.c.l.s4 1983009808
        %v1535 = vunpack.c.0.s8 %v1534
        %v1536 = vlaneseq
        %v1537 = vshrl.u32 %v1536, 7
        %v1538 = vsub.s32 %v1535, %v1537
        %v1539 = vrot.slane %v1532, %v1538
        %v1540 = vcombine.low %v1528, %v1529
        %v1542 = vunpack.c.l.s4 1983009808
        %v1543 = vunpack.c.0.s8 %v1542
        %v1544 = vlaneseq
        %v1545 = vshrl.u32 %v1544, 7
        %v1546 = vsub.s32 %v1543, %v1545
        %v1547 = vrot.slane %v1540, %v1546
        %v1548 = vcombine.low %v1520, %v1527
        %v1550 = vunpack.c.l.s4 1983009808
        %v1551 = vunpack.c.0.s8 %v1550
        %v1552 = vlaneseq
        %v1553 = vshrl.u32 %v1552, 7
        %v1554 = vsub.s32 %v1551, %v1553
        %v1555 = vrot.slane %v1548, %v1554
        %v1556 = vcombine.low %v1530, %v1531
        %v1558 = vunpack.c.l.s4 1983009808
        %v1559 = vunpack.c.0.s8 %v1558
        %v1560 = vlaneseq
        %v1561 = vshrl.u32 %v1560, 7
        %v1562 = vsub.s32 %v1559, %v1561
        %v1563 = vrot.slane %v1556, %v1562
        %v1564 = vcombine.low %v1539, %v1547
        %v1566 = vunpack.c.l.s4 1934713408
        %v1567 = vunpack.c.0.s8 %v1566
        %v1568 = vlaneseq
        %v1569 = vshrl.u32 %v1568, 7
        %v1570 = vsub.s32 %v1567, %v1569
        %v1571 = vrot.slane %v1564, %v1570
        %v1572 = vcombine.low %v1555, %v1563
        %v1574 = vunpack.c.l.s4 1934713408
        %v1575 = vunpack.c.0.s8 %v1574
        %v1576 = vlaneseq
        %v1577 = vshrl.u32 %v1576, 7
        %v1578 = vsub.s32 %v1575, %v1577
        %v1579 = vrot.slane %v1572, %v1578
        %v1580 = vcombine.low %v1571, %v1579
        %v1581 = vcombine.high %v1571, %v1579
        %1583 = vrot.lane.b32.xlu0 %v1581, 16
        %v1584 = vpop.permute.xlu0 %1583
        %v1586 = vsel %vm1230, %v1580, %v1584
        %v1587 = vpack.c.bf16 %v1586, %v1586
        %v1588 = vld [vmem:[%s8] sm:$0xf]
        %v1589 = vld [vmem:[%s8 + $0x4] sm:$0xf]
        %v1590 = vld [vmem:[%s8 + $0x8] sm:$0xf]
        %v1591 = vld [vmem:[%s8 + $0xc] sm:$0xf]
        %v1592 = vld [vmem:[%s9] sm:$0x1]
        %v1594 = vlaneseq
        %v1595 = vshrl.u32 %v1594, 7
        %v1596 = vsub.s32 0, %v1595
        %v1597 = vrot.slane %v1592, %v1596
        %v1603 = vunpack.c.l.b16 %v1588
        %v1604 = vunpack.c.l.b16 %v1589
        %v1605 = vunpack.c.l.b16 %v1590
        %v1606 = vunpack.c.l.b16 %v1591
        %v1607 = vpack.c.b16 %v1604, %v1603
        %v1608 = vpack.c.b16 %v1606, %v1605
        %v1612 = vsel %vm691, %v1587, 0
        %1614 = vmatprep.subr.bf16.mxu0 0
        %1615 = vmatpush1.bf16.msra.mxu0 0
        %1616 = vmatprep.subr.bf16.mxu0 0
        %1617 = vmatpush1.bf16.msra.mxu0 0
        %1618 = vmatprep.subr.bf16.mxu0 0
        %1619 = vmatpush1.bf16.msra.mxu0 0
        %1620 = vmatprep.subr.bf16.mxu0 0
        %1621 = vmatpush1.bf16.msra.mxu0 0
        %1622 = vmatprep.subr.bf16.mxu0 0
        %1623 = vmatpush1.bf16.msra.mxu0 0
        %1624 = vmatprep.subr.bf16.mxu0 0
        %1625 = vmatpush1.bf16.msra.mxu0 0
        %1626 = vmatprep.subr.bf16.mxu0 0
        %1627 = vmatpush1.bf16.msra.mxu0 %v1608
        %1628 = vmatprep.subr.bf16.mxu0 0
        %1629 = vmatpush1.bf16.msra.mxu0 %v1607
        %1630 = vmatprep.subr.bf16.mxu0 0
        %1631 = vmatpush2.bf16.msra.mxu0 0
        %1632 = vmatprep.subr.bf16.mxu0 0
        %1633 = vmatpush2.bf16.msra.mxu0 0
        %1634 = vmatprep.subr.bf16.mxu0 0
        %1635 = vmatpush2.bf16.msra.mxu0 0
        %1636 = vmatprep.subr.bf16.mxu0 0
        %1637 = vmatpush2.bf16.msra.mxu0 0
        %1638 = vmatprep.subr.bf16.mxu0 0
        %1639 = vmatpush2.bf16.msra.mxu0 0
        %1640 = vmatprep.subr.bf16.mxu0 0
        %1641 = vmatpush2.bf16.msra.mxu0 0
        %1642 = vmatprep.subr.bf16.mxu0 0
        %1643 = vmatpush2.bf16.msra.mxu0 0
        %1644 = vmatprep.subr.bf16.mxu0 0
        %1645 = vmatpush2.bf16.msra.mxu0 0
        %1646 = vmatprep.mubr.bf16.mxu0 0
        %1647 = vmatmul.mubr.bf16.gmra.mxu0 %v1612
        %v1648 = vpop.f32.mrf.mxu0
        %v1649 = vadd.f32 %v1597, %v1648
        %v1650 = vpop.f32.mrf.mxu0
        %v1651 = vpop.f32.mrf.mxu0
        %v1652 = vpop.f32.mrf.mxu0
        %1653 = vdwg.mxu0
        %v1654 = vsel %vm691, %v1649, 0.0
        %1655 = vadd.xlane.f32.xlu0 %v1654
        %v1656 = vpop.xlane.xlu0 %1655
        %v1657 = vrcp.pop 32.0
        %v1658 = vmul.f32 %v1656, %v1657
        %v1659 = vsub.f32 %v1649, %v1658
        %v1660 = vmul.f32 %v1659, %v1659
        %v1661 = vsel %vm691, %v1660, 0.0
        %1662 = vadd.xlane.f32.xlu0 %v1661
        %v1663 = vpop.xlane.xlu0 %1662
        %v1664 = vmul.f32 %v1663, %v1657
        %v1665 = vadd.f32 %v1664, 1e-05
        %v1666 = vrsqrt.pop %v1665
        %v1667 = vmul.f32 %v1659, %v1666
        %v1668 = vld [vmem:[%s10] sm:$0x1]
        %v1670 = vlaneseq
        %v1671 = vshrl.u32 %v1670, 7
        %v1672 = vsub.s32 0, %v1671
        %v1673 = vrot.slane %v1668, %v1672
        %v1675 = vmul.f32 %v1667, %v1673
        %v1676 = vld [vmem:[%s11] sm:$0x1]
        %v1678 = vlaneseq
        %v1679 = vshrl.u32 %v1678, 7
        %v1680 = vsub.s32 0, %v1679
        %v1681 = vrot.slane %v1676, %v1680
        %v1683 = vadd.f32 %v1675, %v1681
        %v1684 = vpack.c.bf16 %v1683, %v1683
        %v1685 = vld [vmem:[%s12] sm:$0xf]
        %v1686 = vld [vmem:[%s12 + $0x4] sm:$0xf]
        %v1687 = vld [vmem:[%s12 + $0x8] sm:$0xf]
        %v1688 = vld [vmem:[%s12 + $0xc] sm:$0xf]
        %v1689 = vld [vmem:[%s13] sm:$0x1]
        %v1691 = vlaneseq
        %v1692 = vshrl.u32 %v1691, 7
        %v1693 = vsub.s32 0, %v1692
        %v1694 = vrot.slane %v1689, %v1693
        %v1700 = vunpack.c.l.b16 %v1685
        %v1701 = vunpack.c.l.b16 %v1686
        %v1702 = vunpack.c.l.b16 %v1687
        %v1703 = vunpack.c.l.b16 %v1688
        %v1704 = vpack.c.b16 %v1701, %v1700
        %v1705 = vpack.c.b16 %v1703, %v1702
        %v1709 = vsel %vm691, %v1684, 0
        %1711 = vmatprep.subr.bf16.mxu0 0
        %1712 = vmatpush1.bf16.msra.mxu0 0
        %1713 = vmatprep.subr.bf16.mxu0 0
        %1714 = vmatpush1.bf16.msra.mxu0 0
        %1715 = vmatprep.subr.bf16.mxu0 0
        %1716 = vmatpush1.bf16.msra.mxu0 0
        %1717 = vmatprep.subr.bf16.mxu0 0
        %1718 = vmatpush1.bf16.msra.mxu0 0
        %1719 = vmatprep.subr.bf16.mxu0 0
        %1720 = vmatpush1.bf16.msra.mxu0 0
        %1721 = vmatprep.subr.bf16.mxu0 0
        %1722 = vmatpush1.bf16.msra.mxu0 0
        %1723 = vmatprep.subr.bf16.mxu0 0
        %1724 = vmatpush1.bf16.msra.mxu0 %v1705
        %1725 = vmatprep.subr.bf16.mxu0 0
        %1726 = vmatpush1.bf16.msra.mxu0 %v1704
        %1727 = vmatprep.subr.bf16.mxu0 0
        %1728 = vmatpush2.bf16.msra.mxu0 0
        %1729 = vmatprep.subr.bf16.mxu0 0
        %1730 = vmatpush2.bf16.msra.mxu0 0
        %1731 = vmatprep.subr.bf16.mxu0 0
        %1732 = vmatpush2.bf16.msra.mxu0 0
        %1733 = vmatprep.subr.bf16.mxu0 0
        %1734 = vmatpush2.bf16.msra.mxu0 0
        %1735 = vmatprep.subr.bf16.mxu0 0
        %1736 = vmatpush2.bf16.msra.mxu0 0
        %1737 = vmatprep.subr.bf16.mxu0 0
        %1738 = vmatpush2.bf16.msra.mxu0 0
        %1739 = vmatprep.subr.bf16.mxu0 0
        %1740 = vmatpush2.bf16.msra.mxu0 0
        %1741 = vmatprep.subr.bf16.mxu0 0
        %1742 = vmatpush2.bf16.msra.mxu0 0
        %1743 = vmatprep.mubr.bf16.mxu0 0
        %1744 = vmatmul.mubr.bf16.gmra.mxu0 %v1709
        %v1745 = vpop.f32.mrf.mxu0
        %v1746 = vadd.f32 %v1694, %v1745
        %v1747 = vpop.f32.mrf.mxu0
        %v1748 = vpop.f32.mrf.mxu0
        %v1749 = vpop.f32.mrf.mxu0
        %1750 = vdwg.mxu0
        %v1751 = vmax.f32 %v1746, 0.0
        %v1752 = vpack.c.bf16 %v1751, %v1751
        %v1753 = vld [vmem:[%s14] sm:$0xf]
        %v1754 = vld [vmem:[%s14 + $0x4] sm:$0xf]
        %v1755 = vld [vmem:[%s14 + $0x8] sm:$0xf]
        %v1756 = vld [vmem:[%s14 + $0xc] sm:$0xf]
        %v1757 = vld [vmem:[%s14 + $0x10] sm:$0xf]
        %v1758 = vld [vmem:[%s14 + $0x14] sm:$0xf]
        %v1759 = vld [vmem:[%s14 + $0x18] sm:$0xf]
        %v1760 = vld [vmem:[%s14 + $0x1c] sm:$0xf]
        %v1761 = vld [vmem:[%s14 + $0x20] sm:$0xf]
        %v1762 = vld [vmem:[%s14 + $0x24] sm:$0xf]
        %v1763 = vld [vmem:[%s14 + $0x28] sm:$0xf]
        %v1764 = vld [vmem:[%s14 + $0x2c] sm:$0xf]
        %v1765 = vld [vmem:[%s14 + $0x30] sm:$0xf]
        %v1766 = vld [vmem:[%s14 + $0x34] sm:$0xf]
        %v1767 = vld [vmem:[%s14 + $0x38] sm:$0xf]
        %v1768 = vld [vmem:[%s14 + $0x3c] sm:$0xf]
        %v1769 = vld [vmem:[%s15] sm:$0x1]
        %v1771 = vlaneseq
        %v1772 = vshrl.u32 %v1771, 7
        %v1773 = vsub.s32 0, %v1772
        %v1774 = vrot.slane %v1769, %v1773
        %v1792 = vunpack.c.l.b16 %v1753
        %v1793 = vunpack.c.l.b16 %v1754
        %v1794 = vunpack.c.l.b16 %v1755
        %v1795 = vunpack.c.l.b16 %v1756
        %v1796 = vunpack.c.l.b16 %v1757
        %v1797 = vunpack.c.l.b16 %v1758
        %v1798 = vunpack.c.l.b16 %v1759
        %v1799 = vunpack.c.l.b16 %v1760
        %v1800 = vunpack.c.l.b16 %v1761
        %v1801 = vunpack.c.l.b16 %v1762
        %v1802 = vunpack.c.l.b16 %v1763
        %v1803 = vunpack.c.l.b16 %v1764
        %v1804 = vunpack.c.l.b16 %v1765
        %v1805 = vunpack.c.l.b16 %v1766
        %v1806 = vunpack.c.l.b16 %v1767
        %v1807 = vunpack.c.l.b16 %v1768
        %v1808 = vpack.c.b16 %v1793, %v1792
        %v1809 = vpack.c.b16 %v1795, %v1794
        %v1810 = vpack.c.b16 %v1797, %v1796
        %v1811 = vpack.c.b16 %v1799, %v1798
        %v1812 = vpack.c.b16 %v1801, %v1800
        %v1813 = vpack.c.b16 %v1803, %v1802
        %v1814 = vpack.c.b16 %v1805, %v1804
        %v1815 = vpack.c.b16 %v1807, %v1806
        %1824 = vmatprep.subr.bf16.mxu0 0
        %1825 = vmatpush1.bf16.msra.mxu0 %v1815
        %1826 = vmatprep.subr.bf16.mxu0 0
        %1827 = vmatpush1.bf16.msra.mxu0 %v1814
        %1828 = vmatprep.subr.bf16.mxu0 0
        %1829 = vmatpush1.bf16.msra.mxu0 %v1813
        %1830 = vmatprep.subr.bf16.mxu0 0
        %1831 = vmatpush1.bf16.msra.mxu0 %v1812
        %1832 = vmatprep.subr.bf16.mxu0 0
        %1833 = vmatpush1.bf16.msra.mxu0 %v1811
        %1834 = vmatprep.subr.bf16.mxu0 0
        %1835 = vmatpush1.bf16.msra.mxu0 %v1810
        %1836 = vmatprep.subr.bf16.mxu0 0
        %1837 = vmatpush1.bf16.msra.mxu0 %v1809
        %1838 = vmatprep.subr.bf16.mxu0 0
        %1839 = vmatpush1.bf16.msra.mxu0 %v1808
        %1840 = vmatprep.subr.bf16.mxu0 0
        %1841 = vmatpush2.bf16.msra.mxu0 0
        %1842 = vmatprep.subr.bf16.mxu0 0
        %1843 = vmatpush2.bf16.msra.mxu0 0
        %1844 = vmatprep.subr.bf16.mxu0 0
        %1845 = vmatpush2.bf16.msra.mxu0 0
        %1846 = vmatprep.subr.bf16.mxu0 0
        %1847 = vmatpush2.bf16.msra.mxu0 0
        %1848 = vmatprep.subr.bf16.mxu0 0
        %1849 = vmatpush2.bf16.msra.mxu0 0
        %1850 = vmatprep.subr.bf16.mxu0 0
        %1851 = vmatpush2.bf16.msra.mxu0 0
        %1852 = vmatprep.subr.bf16.mxu0 0
        %1853 = vmatpush2.bf16.msra.mxu0 0
        %1854 = vmatprep.subr.bf16.mxu0 0
        %1855 = vmatpush2.bf16.msra.mxu0 0
        %1856 = vmatprep.mubr.bf16.mxu0 0
        %1857 = vmatmul.mubr.bf16.gmra.mxu0 %v1752
        %v1858 = vpop.f32.mrf.mxu0
        %v1859 = vadd.f32 %v1774, %v1858
        %v1860 = vpop.f32.mrf.mxu0
        %v1861 = vpop.f32.mrf.mxu0
        %v1862 = vpop.f32.mrf.mxu0
        %1863 = vdwg.mxu0
        %v1864 = vsel %vm691, %v1859, 0.0
        %1865 = vadd.xlane.f32.xlu0 %v1864
        %v1866 = vpop.xlane.xlu0 %1865
        %v1867 = vmul.f32 %v1866, %v1657
        %v1868 = vsub.f32 %v1859, %v1867
        %v1869 = vmul.f32 %v1868, %v1868
        %v1870 = vsel %vm691, %v1869, 0.0
        %1871 = vadd.xlane.f32.xlu0 %v1870
        %v1872 = vpop.xlane.xlu0 %1871
        %v1873 = vmul.f32 %v1872, %v1657
        %v1874 = vadd.f32 %v1873, 1e-05
        %v1875 = vrsqrt.pop %v1874
        %v1876 = vmul.f32 %v1868, %v1875
        %v1877 = vld [vmem:[%s16] sm:$0x1]
        %v1879 = vlaneseq
        %v1880 = vshrl.u32 %v1879, 7
        %v1881 = vsub.s32 0, %v1880
        %v1882 = vrot.slane %v1877, %v1881
        %v1884 = vmul.f32 %v1876, %v1882
        %v1885 = vld [vmem:[%s17] sm:$0x1]
        %v1887 = vlaneseq
        %v1888 = vshrl.u32 %v1887, 7
        %v1889 = vsub.s32 0, %v1888
        %v1890 = vrot.slane %v1885, %v1889
        %v1892 = vadd.f32 %v1884, %v1890
        %v1893 = vpack.c.bf16 %v1892, %v1892
        %vm1894 = vcmask 257024
        %1895 = vst.msk [vmem:[%s658] sm:$0xf] %vm1894, %v1893
        %s1896 = sand.u32 %s439, 1
        %s1897 = scalar_lea.sflag [#allocation4], %s1896
        %s1898 = sand.u32 %s439, 1
        %s1899 = smul.addr %s1898, 4
        %s1900 = scalar_lea.vmem [#allocation7], %s1899
        %s1901 = sand.u32 %s465, 1
        %s1902 = scalar_lea.sflag [#allocation9], %s1901
        %s1903 = sand.u32 %s465, 1
        %s1904 = scalar_lea.vmem [#allocation8], %s1903
        // Predicated region
        $region101: #{tpu_custom_call.1} parent=91 // pred_check
          %p1905 = pneg %p449
        $region102: #{tpu_custom_call.1} parent=91 // pred_check_branch
          %1907 = sbr.rel (%p1905) target = $region104
        $region103: #{tpu_custom_call.1} parent=91 // pred_region
          %s1909 = ssub.s32 64, 64
          %1910 = vsyncadd %s1897, %s1909
          %s1911 = smul.addr %s43, 64
          %s1912 = scalar_lea.hbm %s18, %s1911
          %s1914 = sshll.u32 %s1900, 4
          %s1915 = int_to_ptr.vmem [resolvable:$true] %s1914
          %1917 = dma.vmem_to_hbm [thread:$0]  %s1915, 64, %s1912, %s1897
        $region104: #{tpu_custom_call.1} parent=91 // pred_fallthru
          _
        // Predicated region
        $region105: #{tpu_custom_call.1} parent=91 // pred_check
          %p1918 = pneg %p475
        $region106: #{tpu_custom_call.1} parent=91 // pred_check_branch
          %1920 = sbr.rel (%p1918) target = $region108
        $region107: #{tpu_custom_call.1} parent=91 // pred_region
          %s1922 = ssub.s32 16, 16
          %1923 = vsyncadd %s1902, %s1922
          %s1924 = smul.addr %s43, 16
          %s1925 = scalar_lea.hbm %s19, %s1924
          %s1927 = sshll.u32 %s1904, 4
          %s1928 = int_to_ptr.vmem [resolvable:$true] %s1927
          %1930 = dma.vmem_to_hbm [thread:$0]  %s1928, 16, %s1925, %s1902
        $region108: #{tpu_custom_call.1} parent=91 // pred_fallthru
          _
      $region92: #{tpu_custom_call.1} parent=5 // pred_fallthru
        _
      %p1931 = scmp.le.s32.totalorder 2, %s38
      // Predicated region
      $region109: #{tpu_custom_call.1} parent=5 // pred_check
        %p1932 = pneg %p1931
      $region110: #{tpu_custom_call.1} parent=5 // pred_check_branch
        %1934 = sbr.rel (%p1932) target = $region112
      $region111: #{tpu_custom_call.1} parent=5 // pred_region
        %s1935 = ssub.s32 %s38, 2
        // Predicated region
        $region113: #{tpu_custom_call.1} parent=111 // pred_check
          %p1936 = pneg %p455
        $region114: #{tpu_custom_call.1} parent=111 // pred_check_branch
          %1938 = sbr.rel (%p1936) target = $region116
        $region115: #{tpu_custom_call.1} parent=111 // pred_region
          %s1939 = sand.u32 %s440, 1
          %s1940 = scalar_lea.sflag [#allocation4], %s1939
          %s1941 = sand.u32 %s440, 1
          %s1942 = smul.addr %s1941, 4
          %s1943 = scalar_lea.vmem [#allocation7], %s1942
          %1944 = dma.done %s1940, 64
        $region116: #{tpu_custom_call.1} parent=111 // pred_fallthru
          _
        // Predicated region
        $region117: #{tpu_custom_call.1} parent=111 // pred_check
          %p1945 = pneg %p481
        $region118: #{tpu_custom_call.1} parent=111 // pred_check_branch
          %1947 = sbr.rel (%p1945) target = $region120
        $region119: #{tpu_custom_call.1} parent=111 // pred_region
          %s1948 = sand.u32 %s466, 1
          %s1949 = scalar_lea.sflag [#allocation9], %s1948
          %s1950 = sand.u32 %s466, 1
          %s1951 = scalar_lea.vmem [#allocation8], %s1950
          %1952 = dma.done %s1949, 16
        $region120: #{tpu_custom_call.1} parent=111 // pred_fallthru
          _
      $region112: #{tpu_custom_call.1} parent=5 // pred_fallthru
        _
    $region6: #{tpu_custom_call.1} parent=1 // loop_footer
      %s42 = sadd.s32 1, %s38
    $region7: #{tpu_custom_call.1} parent=1 // loop_footer_branch
      %37 = sbr.rel target = $region3
    $region8: #{tpu_custom_call.1} parent=1 // loop_exit
      _
    %1953 = vsyncpa [#allocation3], 1
    %s1954 = scalar_lea.sflag [#allocation3], 1
    %1955 = vsyncpa %s1954, 1
    %1956 = vsyncpa [#allocation6], 1
    %s1957 = scalar_lea.sflag [#allocation6], 1
    %1958 = vsyncpa %s1957, 1
    %1959 = vsyncpa [#allocation4], 1
    %s1960 = scalar_lea.sflag [#allocation4], 1
    %1961 = vsyncpa %s1960, 1
    %1962 = vsyncpa [#allocation9], 1
    %s1963 = scalar_lea.sflag [#allocation9], 1
    %1964 = vsyncpa %s1963, 1

// kernel: tpu_custom_call.1
$region0: #{tpu_custom_call.1}
  #allocation0 [shape = 'u32[]', space=smem, size = 0x4, offset = 0x4, fixed_abs, tag = 'smem constant byte address 0x4 - core index']
  #allocation1 [shape = 'u32[144,128]{1,0:T(1,128)}', space=vmem, size = 0x12000, scoped, tag = 'internal scratch']
  %s0 = inlined_call_operand.hbm [shape: bf16[2,8,32], index: 0, kind: input, shape index: {}]
  %s1 = inlined_call_operand.hbm [shape: bf16[2,8,32], index: 1, kind: input, shape index: {}]
  %s2 = inlined_call_operand.vmem [shape: bf16[32,32], index: 2, kind: input, shape index: {}]
  %s3 = inlined_call_operand.vmem [shape: f32[1,32], index: 3, kind: input, shape index: {}]
  %s4 = inlined_call_operand.vmem [shape: bf16[32,32], index: 4, kind: input, shape index: {}]
  %s5 = inlined_call_operand.vmem [shape: f32[1,32], index: 5, kind: input, shape index: {}]
  %s6 = inlined_call_operand.vmem [shape: bf16[32,32], index: 6, kind: input, shape index: {}]
  %s7 = inlined_call_operand.vmem [shape: f32[1,32], index: 7, kind: input, shape index: {}]
  %s8 = inlined_call_operand.vmem [shape: bf16[32,32], index: 8, kind: input, shape index: {}]
  %s9 = inlined_call_operand.vmem [shape: f32[1,32], index: 9, kind: input, shape index: {}]
  %s10 = inlined_call_operand.vmem [shape: f32[1,32], index: 10, kind: input, shape index: {}]
  %s11 = inlined_call_operand.vmem [shape: f32[1,32], index: 11, kind: input, shape index: {}]
  %s12 = inlined_call_operand.vmem [shape: bf16[32,128], index: 12, kind: input, shape index: {}]
  %s13 = inlined_call_operand.vmem [shape: f32[1,128], index: 13, kind: input, shape index: {}]
  %s14 = inlined_call_operand.vmem [shape: bf16[128,32], index: 14, kind: input, shape index: {}]
  %s15 = inlined_call_operand.vmem [shape: f32[1,32], index: 15, kind: input, shape index: {}]
  %s16 = inlined_call_operand.vmem [shape: f32[1,32], index: 16, kind: input, shape index: {}]
  %s17 = inlined_call_operand.vmem [shape: f32[1,32], index: 17, kind: input, shape index: {}]
  %s18 = inlined_call_operand.hbm [shape: bf16[2,8,32], index: 18, kind: output, shape index: {0}]
  %s19 = inlined_call_operand.hbm [shape: f32[2,1,8], index: 19, kind: output, shape index: {1}]
  %20 = xla_tuple %s18, %s19
  %s21 = sld [smem:[#allocation0]]
  $region121: #{tpu_custom_call.1} parent=0
    _
  %s23 = ssub.s32 1, %s21
  %s24 = scalar_select 0, %s23, %s21
  $region1: #{tpu_custom_call.1} parent=0
    #allocation2 [shape = 'u8[4096]{0}', space=vmem, size = 0x1000, scoped, tag = 'input window, operand 0']
    #allocation3 [shape = 's32[2]{0}', space=sflag, size = 0x8, scoped, tag = 'scoped memory for tpu_custom_call.1']
    #allocation4 [shape = 's32[2]{0}', space=sflag, size = 0x8, scoped, tag = 'scoped memory for tpu_custom_call.1']
    #allocation5 [shape = 'u8[4096]{0}', space=vmem, size = 0x1000, scoped, tag = 'input window, operand 1']
    #allocation6 [shape = 's32[2]{0}', space=sflag, size = 0x8, scoped, tag = 'scoped memory for tpu_custom_call.1']
    #allocation7 [shape = 'u8[4096]{0}', space=vmem, size = 0x1000, scoped, tag = 'output window, operand 0']
    #allocation8 [shape = 'u8[1024]{0}', space=vmem, size = 0x400, scoped, tag = 'output window, operand 1']
    #allocation9 [shape = 's32[2]{0}', space=sflag, size = 0x8, scoped, tag = 'scoped memory for tpu_custom_call.1']
    %25 = vsyncpa [#allocation3], 0
    %s26 = scalar_lea.sflag [#allocation3], 1
    %27 = vsyncpa %s26, 0
    %28 = vsyncpa [#allocation6], 0
    %s29 = scalar_lea.sflag [#allocation6], 1
    %30 = vsyncpa %s29, 0
    %31 = vsyncpa [#allocation4], 0
    %s32 = scalar_lea.sflag [#allocation4], 1
    %33 = vsyncpa %s32, 0
    %34 = vsyncpa [#allocation9], 0
    %s35 = scalar_lea.sflag [#allocation9], 1
    %36 = vsyncpa %s35, 0
    loop: start=0, step=1, limit=4
    $region2: #{tpu_custom_call.1} parent=1 // loop_pre_header
      _
    $region3: #{tpu_custom_call.1} parent=1 // loop_header
      %s38 = sphi 0, %s42
      %p39 = scmp.ge.s32.totalorder %s38, 4
      %s48 = sphi 0, %s50
      %s51 = sphi 0, %s48
      %s52 = sphi 0, %s51
      %s68 = sphi 0, %s52
      %s74 = sphi 0, %s76
      %s77 = sphi 0, %s74
      %s78 = sphi 0, %s77
      %s94 = sphi 0, %s78
      %s98 = sphi 0, %s98
      %s100 = sphi 0, %s98
      %s101 = sphi 0, %s100
      %s115 = sphi 0, %s101
      %s119 = sphi 0, %s119
      %s121 = sphi 0, %s119
      %s122 = sphi 0, %s121
      %s136 = sphi 0, %s122
      %s140 = sphi 0, %s140
      %s142 = sphi 0, %s140
      %s143 = sphi 0, %s142
      %s157 = sphi 0, %s143
      %s161 = sphi 0, %s161
      %s163 = sphi 0, %s161
      %s164 = sphi 0, %s163
      %s178 = sphi 0, %s164
      %s182 = sphi 0, %s182
      %s184 = sphi 0, %s182
      %s185 = sphi 0, %s184
      %s199 = sphi 0, %s185
      %s203 = sphi 0, %s203
      %s205 = sphi 0, %s203
      %s206 = sphi 0, %s205
      %s220 = sphi 0, %s206
      %s224 = sphi 0, %s224
      %s226 = sphi 0, %s224
      %s227 = sphi 0, %s226
      %s241 = sphi 0, %s227
      %s245 = sphi 0, %s245
      %s247 = sphi 0, %s245
      %s248 = sphi 0, %s247
      %s262 = sphi 0, %s248
      %s266 = sphi 0, %s266
      %s268 = sphi 0, %s266
      %s269 = sphi 0, %s268
      %s283 = sphi 0, %s269
      %s287 = sphi 0, %s287
      %s289 = sphi 0, %s287
      %s290 = sphi 0, %s289
      %s304 = sphi 0, %s290
      %s308 = sphi 0, %s308
      %s310 = sphi 0, %s308
      %s311 = sphi 0, %s310
      %s325 = sphi 0, %s311
      %s329 = sphi 0, %s329
      %s331 = sphi 0, %s329
      %s332 = sphi 0, %s331
      %s346 = sphi 0, %s332
      %s350 = sphi 0, %s350
      %s352 = sphi 0, %s350
      %s353 = sphi 0, %s352
      %s367 = sphi 0, %s353
      %s371 = sphi 0, %s371
      %s373 = sphi 0, %s371
      %s374 = sphi 0, %s373
      %s388 = sphi 0, %s374
      %s392 = sphi 0, %s392
      %s394 = sphi 0, %s392
      %s395 = sphi 0, %s394
      %s409 = sphi 0, %s395
      %s413 = sphi 0, %s413
      %s415 = sphi 0, %s413
      %s416 = sphi 0, %s415
      %s430 = sphi 0, %s416
      %s436 = sphi 0, %s438
      %s439 = sphi 0, %s436
      %s440 = sphi 0, %s439
      %s456 = sphi 0, %s440
      %s462 = sphi 0, %s464
      %s465 = sphi 0, %s462
      %s466 = sphi 0, %s465
      %s482 = sphi 0, %s466
    $region4: #{tpu_custom_call.1} parent=1 // loop_header_branch
      %41 = sbr.rel (%p39) target = $region8
    $region5: #{tpu_custom_call.1} parent=1 // loop_body
      %s43 = ssub.s32 %s38, 1
      %s44 = ssub.s32 %s38, 2
      %s45 = sadd.s32 %s38, 1
      %s46 = ssub.s32 %s38, %s45
      %p47 = scmp.eq.s32.totalorder %s46, 0
      %s49 = sadd.s32 %s48, 1
      %s50 = scalar_select %p47, %s48, %s49
      %p53 = pneg %p47
      %p54 = scmp.eq.s32.totalorder %s38, 1
      %p55 = por %p53, %p54
      %p56 = scmp.ne.s32.totalorder %s48, %s51
      %p57 = scmp.eq.s32.totalorder %s38, 0
      %p58 = por %p56, %p57
      %p59 = scmp.ne.s32.totalorder %s48, %s51
      %p60 = scmp.eq.s32.totalorder %s43, 1
      %p61 = por %p59, %p60
      %p62 = scmp.ne.s32.totalorder %s51, %s52
      %p63 = scmp.eq.s32.totalorder %s43, 0
      %p64 = por %p62, %p63
      %p65 = scmp.ne.s32.totalorder %s51, %s52
      %p66 = scmp.eq.s32.totalorder %s44, 1
      %p67 = por %p65, %p66
      %p69 = scmp.ne.s32.totalorder %s52, %s68
      %p70 = scmp.eq.s32.totalorder %s44, 0
      %p71 = por %p69, %p70
      %s72 = ssub.s32 %s38, %s45
      %p73 = scmp.eq.s32.totalorder %s72, 0
      %s75 = sadd.s32 %s74, 1
      %s76 = scalar_select %p73, %s74, %s75
      %p79 = pneg %p73
      %p80 = scmp.eq.s32.totalorder %s38, 1
      %p81 = por %p79, %p80
      %p82 = scmp.ne.s32.totalorder %s74, %s77
      %p83 = scmp.eq.s32.totalorder %s38, 0
      %p84 = por %p82, %p83
      %p85 = scmp.ne.s32.totalorder %s74, %s77
      %p86 = scmp.eq.s32.totalorder %s43, 1
      %p87 = por %p85, %p86
      %p88 = scmp.ne.s32.totalorder %s77, %s78
      %p89 = scmp.eq.s32.totalorder %s43, 0
      %p90 = por %p88, %p89
      %p91 = scmp.ne.s32.totalorder %s77, %s78
      %p92 = scmp.eq.s32.totalorder %s44, 1
      %p93 = por %p91, %p92
      %p95 = scmp.ne.s32.totalorder %s78, %s94
      %p96 = scmp.eq.s32.totalorder %s44, 0
      %p97 = por %p95, %p96
      %s99 = sadd.s32 %s98, 1
      %p102 = scmp.eq.s32.totalorder %s38, 1
      %p103 = scmp.ne.s32.totalorder %s98, %s100
      %p104 = scmp.eq.s32.totalorder %s38, 0
      %p105 = por %p103, %p104
      %p106 = scmp.ne.s32.totalorder %s98, %s100
      %p107 = scmp.eq.s32.totalorder %s43, 1
      %p108 = por %p106, %p107
      %p109 = scmp.ne.s32.totalorder %s100, %s101
      %p110 = scmp.eq.s32.totalorder %s43, 0
      %p111 = por %p109, %p110
      %p112 = scmp.ne.s32.totalorder %s100, %s101
      %p113 = scmp.eq.s32.totalorder %s44, 1
      %p114 = por %p112, %p113
      %p116 = scmp.ne.s32.totalorder %s101, %s115
      %p117 = scmp.eq.s32.totalorder %s44, 0
      %p118 = por %p116, %p117
      %s120 = sadd.s32 %s119, 1
      %p123 = scmp.eq.s32.totalorder %s38, 1
      %p124 = scmp.ne.s32.totalorder %s119, %s121
      %p125 = scmp.eq.s32.totalorder %s38, 0
      %p126 = por %p124, %p125
      %p127 = scmp.ne.s32.totalorder %s119, %s121
      %p128 = scmp.eq.s32.totalorder %s43, 1
      %p129 = por %p127, %p128
      %p130 = scmp.ne.s32.totalorder %s121, %s122
      %p131 = scmp.eq.s32.totalorder %s43, 0
      %p132 = por %p130, %p131
      %p133 = scmp.ne.s32.totalorder %s121, %s122
      %p134 = scmp.eq.s32.totalorder %s44, 1
      %p135 = por %p133, %p134
      %p137 = scmp.ne.s32.totalorder %s122, %s136
      %p138 = scmp.eq.s32.totalorder %s44, 0
      %p139 = por %p137, %p138
      %s141 = sadd.s32 %s140, 1
      %p144 = scmp.eq.s32.totalorder %s38, 1
      %p145 = scmp.ne.s32.totalorder %s140, %s142
      %p146 = scmp.eq.s32.totalorder %s38, 0
      %p147 = por %p145, %p146
      %p148 = scmp.ne.s32.totalorder %s140, %s142
      %p149 = scmp.eq.s32.totalorder %s43, 1
      %p150 = por %p148, %p149
      %p151 = scmp.ne.s32.totalorder %s142, %s143
      %p152 = scmp.eq.s32.totalorder %s43, 0
      %p153 = por %p151, %p152
      %p154 = scmp.ne.s32.totalorder %s142, %s143
      %p155 = scmp.eq.s32.totalorder %s44, 1
      %p156 = por %p154, %p155
      %p158 = scmp.ne.s32.totalorder %s143, %s157
      %p159 = scmp.eq.s32.totalorder %s44, 0
      %p160 = por %p158, %p159
      %s162 = sadd.s32 %s161, 1
      %p165 = scmp.eq.s32.totalorder %s38, 1
      %p166 = scmp.ne.s32.totalorder %s161, %s163
      %p167 = scmp.eq.s32.totalorder %s38, 0
      %p168 = por %p166, %p167
      %p169 = scmp.ne.s32.totalorder %s161, %s163
      %p170 = scmp.eq.s32.totalorder %s43, 1
      %p171 = por %p169, %p170
      %p172 = scmp.ne.s32.totalorder %s163, %s164
      %p173 = scmp.eq.s32.totalorder %s43, 0
      %p174 = por %p172, %p173
      %p175 = scmp.ne.s32.totalorder %s163, %s164
      %p176 = scmp.eq.s32.totalorder %s44, 1
      %p177 = por %p175, %p176
      %p179 = scmp.ne.s32.totalorder %s164, %s178
      %p180 = scmp.eq.s32.totalorder %s44, 0
      %p181 = por %p179, %p180
      %s183 = sadd.s32 %s182, 1
      %p186 = scmp.eq.s32.totalorder %s38, 1
      %p187 = scmp.ne.s32.totalorder %s182, %s184
      %p188 = scmp.eq.s32.totalorder %s38, 0
      %p189 = por %p187, %p188
      %p190 = scmp.ne.s32.totalorder %s182, %s184
      %p191 = scmp.eq.s32.totalorder %s43, 1
      %p192 = por %p190, %p191
      %p193 = scmp.ne.s32.totalorder %s184, %s185
      %p194 = scmp.eq.s32.totalorder %s43, 0
      %p195 = por %p193, %p194
      %p196 = scmp.ne.s32.totalorder %s184, %s185
      %p197 = scmp.eq.s32.totalorder %s44, 1
      %p198 = por %p196, %p197
      %p200 = scmp.ne.s32.totalorder %s185, %s199
      %p201 = scmp.eq.s32.totalorder %s44, 0
      %p202 = por %p200, %p201
      %s204 = sadd.s32 %s203, 1
      %p207 = scmp.eq.s32.totalorder %s38, 1
      %p208 = scmp.ne.s32.totalorder %s203, %s205
      %p209 = scmp.eq.s32.totalorder %s38, 0
      %p210 = por %p208, %p209
      %p211 = scmp.ne.s32.totalorder %s203, %s205
      %p212 = scmp.eq.s32.totalorder %s43, 1
      %p213 = por %p211, %p212
      %p214 = scmp.ne.s32.totalorder %s205, %s206
      %p215 = scmp.eq.s32.totalorder %s43, 0
      %p216 = por %p214, %p215
      %p217 = scmp.ne.s32.totalorder %s205, %s206
      %p218 = scmp.eq.s32.totalorder %s44, 1
      %p219 = por %p217, %p218
      %p221 = scmp.ne.s32.totalorder %s206, %s220
      %p222 = scmp.eq.s32.totalorder %s44, 0
      %p223 = por %p221, %p222
      %s225 = sadd.s32 %s224, 1
      %p228 = scmp.eq.s32.totalorder %s38, 1
      %p229 = scmp.ne.s32.totalorder %s224, %s226
      %p230 = scmp.eq.s32.totalorder %s38, 0
      %p231 = por %p229, %p230
      %p232 = scmp.ne.s32.totalorder %s224, %s226
      %p233 = scmp.eq.s32.totalorder %s43, 1
      %p234 = por %p232, %p233
      %p235 = scmp.ne.s32.totalorder %s226, %s227
      %p236 = scmp.eq.s32.totalorder %s43, 0
      %p237 = por %p235, %p236
      %p238 = scmp.ne.s32.totalorder %s226, %s227
      %p239 = scmp.eq.s32.totalorder %s44, 1
      %p240 = por %p238, %p239
      %p242 = scmp.ne.s32.totalorder %s227, %s241
      %p243 = scmp.eq.s32.totalorder %s44, 0
      %p244 = por %p242, %p243
      %s246 = sadd.s32 %s245, 1
      %p249 = scmp.eq.s32.totalorder %s38, 1
      %p250 = scmp.ne.s32.totalorder %s245, %s247
      %p251 = scmp.eq.s32.totalorder %s38, 0
      %p252 = por %p250, %p251
      %p253 = scmp.ne.s32.totalorder %s245, %s247
      %p254 = scmp.eq.s32.totalorder %s43, 1
      %p255 = por %p253, %p254
      %p256 = scmp.ne.s32.totalorder %s247, %s248
      %p257 = scmp.eq.s32.totalorder %s43, 0
      %p258 = por %p256, %p257
      %p259 = scmp.ne.s32.totalorder %s247, %s248
      %p260 = scmp.eq.s32.totalorder %s44, 1
      %p261 = por %p259, %p260
      %p263 = scmp.ne.s32.totalorder %s248, %s262
      %p264 = scmp.eq.s32.totalorder %s44, 0
      %p265 = por %p263, %p264
      %s267 = sadd.s32 %s266, 1
      %p270 = scmp.eq.s32.totalorder %s38, 1
      %p271 = scmp.ne.s32.totalorder %s266, %s268
      %p272 = scmp.eq.s32.totalorder %s38, 0
      %p273 = por %p271, %p272
      %p274 = scmp.ne.s32.totalorder %s266, %s268
      %p275 = scmp.eq.s32.totalorder %s43, 1
      %p276 = por %p274, %p275
      %p277 = scmp.ne.s32.totalorder %s268, %s269
      %p278 = scmp.eq.s32.totalorder %s43, 0
      %p279 = por %p277, %p278
      %p280 = scmp.ne.s32.totalorder %s268, %s269
      %p281 = scmp.eq.s32.totalorder %s44, 1
      %p282 = por %p280, %p281
      %p284 = scmp.ne.s32.totalorder %s269, %s283
      %p285 = scmp.eq.s32.totalorder %s44, 0
      %p286 = por %p284, %p285
      %s288 = sadd.s32 %s287, 1
      %p291 = scmp.eq.s32.totalorder %s38, 1
      %p292 = scmp.ne.s32.totalorder %s287, %s289
      %p293 = scmp.eq.s32.totalorder %s38, 0
      %p294 = por %p292, %p293
      %p295 = scmp.ne.s32.totalorder %s287, %s289
      %p296 = scmp.eq.s32.totalorder %s43, 1
      %p297 = por %p295, %p296
      %p298 = scmp.ne.s32.totalorder %s289, %s290
      %p299 = scmp.eq.s32.totalorder %s43, 0
      %p300 = por %p298, %p299
      %p301 = scmp.ne.s32.totalorder %s289, %s290
      %p302 = scmp.eq.s32.totalorder %s44, 1
      %p303 = por %p301, %p302
      %p305 = scmp.ne.s32.totalorder %s290, %s304
      %p306 = scmp.eq.s32.totalorder %s44, 0
      %p307 = por %p305, %p306
      %s309 = sadd.s32 %s308, 1
      %p312 = scmp.eq.s32.totalorder %s38, 1
      %p313 = scmp.ne.s32.totalorder %s308, %s310
      %p314 = scmp.eq.s32.totalorder %s38, 0
      %p315 = por %p313, %p314
      %p316 = scmp.ne.s32.totalorder %s308, %s310
      %p317 = scmp.eq.s32.totalorder %s43, 1
      %p318 = por %p316, %p317
      %p319 = scmp.ne.s32.totalorder %s310, %s311
      %p320 = scmp.eq.s32.totalorder %s43, 0
      %p321 = por %p319, %p320
      %p322 = scmp.ne.s32.totalorder %s310, %s311
      %p323 = scmp.eq.s32.totalorder %s44, 1
      %p324 = por %p322, %p323
      %p326 = scmp.ne.s32.totalorder %s311, %s325
      %p327 = scmp.eq.s32.totalorder %s44, 0
      %p328 = por %p326, %p327
      %s330 = sadd.s32 %s329, 1
      %p333 = scmp.eq.s32.totalorder %s38, 1
      %p334 = scmp.ne.s32.totalorder %s329, %s331
      %p335 = scmp.eq.s32.totalorder %s38, 0
      %p336 = por %p334, %p335
      %p337 = scmp.ne.s32.totalorder %s329, %s331
      %p338 = scmp.eq.s32.totalorder %s43, 1
      %p339 = por %p337, %p338
      %p340 = scmp.ne.s32.totalorder %s331, %s332
      %p341 = scmp.eq.s32.totalorder %s43, 0
      %p342 = por %p340, %p341
      %p343 = scmp.ne.s32.totalorder %s331, %s332
      %p344 = scmp.eq.s32.totalorder %s44, 1
      %p345 = por %p343, %p344
      %p347 = scmp.ne.s32.totalorder %s332, %s346
      %p348 = scmp.eq.s32.totalorder %s44, 0
      %p349 = por %p347, %p348
      %s351 = sadd.s32 %s350, 1
      %p354 = scmp.eq.s32.totalorder %s38, 1
      %p355 = scmp.ne.s32.totalorder %s350, %s352
      %p356 = scmp.eq.s32.totalorder %s38, 0
      %p357 = por %p355, %p356
      %p358 = scmp.ne.s32.totalorder %s350, %s352
      %p359 = scmp.eq.s32.totalorder %s43, 1
      %p360 = por %p358, %p359
      %p361 = scmp.ne.s32.totalorder %s352, %s353
      %p362 = scmp.eq.s32.totalorder %s43, 0
      %p363 = por %p361, %p362
      %p364 = scmp.ne.s32.totalorder %s352, %s353
      %p365 = scmp.eq.s32.totalorder %s44, 1
      %p366 = por %p364, %p365
      %p368 = scmp.ne.s32.totalorder %s353, %s367
      %p369 = scmp.eq.s32.totalorder %s44, 0
      %p370 = por %p368, %p369
      %s372 = sadd.s32 %s371, 1
      %p375 = scmp.eq.s32.totalorder %s38, 1
      %p376 = scmp.ne.s32.totalorder %s371, %s373
      %p377 = scmp.eq.s32.totalorder %s38, 0
      %p378 = por %p376, %p377
      %p379 = scmp.ne.s32.totalorder %s371, %s373
      %p380 = scmp.eq.s32.totalorder %s43, 1
      %p381 = por %p379, %p380
      %p382 = scmp.ne.s32.totalorder %s373, %s374
      %p383 = scmp.eq.s32.totalorder %s43, 0
      %p384 = por %p382, %p383
      %p385 = scmp.ne.s32.totalorder %s373, %s374
      %p386 = scmp.eq.s32.totalorder %s44, 1
      %p387 = por %p385, %p386
      %p389 = scmp.ne.s32.totalorder %s374, %s388
      %p390 = scmp.eq.s32.totalorder %s44, 0
      %p391 = por %p389, %p390
      %s393 = sadd.s32 %s392, 1
      %p396 = scmp.eq.s32.totalorder %s38, 1
      %p397 = scmp.ne.s32.totalorder %s392, %s394
      %p398 = scmp.eq.s32.totalorder %s38, 0
      %p399 = por %p397, %p398
      %p400 = scmp.ne.s32.totalorder %s392, %s394
      %p401 = scmp.eq.s32.totalorder %s43, 1
      %p402 = por %p400, %p401
      %p403 = scmp.ne.s32.totalorder %s394, %s395
      %p404 = scmp.eq.s32.totalorder %s43, 0
      %p405 = por %p403, %p404
      %p406 = scmp.ne.s32.totalorder %s394, %s395
      %p407 = scmp.eq.s32.totalorder %s44, 1
      %p408 = por %p406, %p407
      %p410 = scmp.ne.s32.totalorder %s395, %s409
      %p411 = scmp.eq.s32.totalorder %s44, 0
      %p412 = por %p410, %p411
      %s414 = sadd.s32 %s413, 1
      %p417 = scmp.eq.s32.totalorder %s38, 1
      %p418 = scmp.ne.s32.totalorder %s413, %s415
      %p419 = scmp.eq.s32.totalorder %s38, 0
      %p420 = por %p418, %p419
      %p421 = scmp.ne.s32.totalorder %s413, %s415
      %p422 = scmp.eq.s32.totalorder %s43, 1
      %p423 = por %p421, %p422
      %p424 = scmp.ne.s32.totalorder %s415, %s416
      %p425 = scmp.eq.s32.totalorder %s43, 0
      %p426 = por %p424, %p425
      %p427 = scmp.ne.s32.totalorder %s415, %s416
      %p428 = scmp.eq.s32.totalorder %s44, 1
      %p429 = por %p427, %p428
      %p431 = scmp.ne.s32.totalorder %s416, %s430
      %p432 = scmp.eq.s32.totalorder %s44, 0
      %p433 = por %p431, %p432
      %s434 = ssub.s32 %s38, %s45
      %p435 = scmp.eq.s32.totalorder %s434, 0
      %s437 = sadd.s32 %s436, 1
      %s438 = scalar_select %p435, %s436, %s437
      %p441 = pneg %p435
      %p442 = scmp.eq.s32.totalorder %s38, 1
      %p443 = por %p441, %p442
      %p444 = scmp.ne.s32.totalorder %s436, %s439
      %p445 = scmp.eq.s32.totalorder %s38, 0
      %p446 = por %p444, %p445
      %p447 = scmp.ne.s32.totalorder %s436, %s439
      %p448 = scmp.eq.s32.totalorder %s43, 1
      %p449 = por %p447, %p448
      %p450 = scmp.ne.s32.totalorder %s439, %s440
      %p451 = scmp.eq.s32.totalorder %s43, 0
      %p452 = por %p450, %p451
      %p453 = scmp.ne.s32.totalorder %s439, %s440
      %p454 = scmp.eq.s32.totalorder %s44, 1
      %p455 = por %p453, %p454
      %p457 = scmp.ne.s32.totalorder %s440, %s456
      %p458 = scmp.eq.s32.totalorder %s44, 0
      %p459 = por %p457, %p458
      %s460 = ssub.s32 %s38, %s45
      %p461 = scmp.eq.s32.totalorder %s460, 0
      %s463 = sadd.s32 %s462, 1
      %s464 = scalar_select %p461, %s462, %s463
      %p467 = pneg %p461
      %p468 = scmp.eq.s32.totalorder %s38, 1
      %p469 = por %p467, %p468
      %p470 = scmp.ne.s32.totalorder %s462, %s465
      %p471 = scmp.eq.s32.totalorder %s38, 0
      %p472 = por %p470, %p471
      %p473 = scmp.ne.s32.totalorder %s462, %s465
      %p474 = scmp.eq.s32.totalorder %s43, 1
      %p475 = por %p473, %p474
      %p476 = scmp.ne.s32.totalorder %s465, %s466
      %p477 = scmp.eq.s32.totalorder %s43, 0
      %p478 = por %p476, %p477
      %p479 = scmp.ne.s32.totalorder %s465, %s466
      %p480 = scmp.eq.s32.totalorder %s44, 1
      %p481 = por %p479, %p480
      %p483 = scmp.ne.s32.totalorder %s466, %s482
      %p484 = scmp.eq.s32.totalorder %s44, 0
      %p485 = por %p483, %p484
      %p486 = scmp.le.s32.totalorder 1, %s38
      %p487 = scmp.lt.s32.totalorder %s38, 3
      %p488 = pnand %p486, %p487
      %p489 = pneg %p488
      // Predicated region
      $region9: #{tpu_custom_call.1} parent=5 // pred_check
        _
      $region10: #{tpu_custom_call.1} parent=5 // pred_check_branch
        %491 = sbr.rel (%p488) target = $region12
      $region11: #{tpu_custom_call.1} parent=5 // pred_region
        %s492 = ssub.s32 %s38, 1
        // Predicated region
        $region13: #{tpu_custom_call.1} parent=11 // pred_check
          %p493 = pneg %p111
        $region14: #{tpu_custom_call.1} parent=11 // pred_check_branch
          %495 = sbr.rel (%p493) target = $region16
        $region15: #{tpu_custom_call.1} parent=11 // pred_region
          _
        $region16: #{tpu_custom_call.1} parent=11 // pred_fallthru
          _
        // Predicated region
        $region17: #{tpu_custom_call.1} parent=11 // pred_check
          %p496 = pneg %p132
        $region18: #{tpu_custom_call.1} parent=11 // pred_check_branch
          %498 = sbr.rel (%p496) target = $region20
        $region19: #{tpu_custom_call.1} parent=11 // pred_region
          _
        $region20: #{tpu_custom_call.1} parent=11 // pred_fallthru
          _
        // Predicated region
        $region21: #{tpu_custom_call.1} parent=11 // pred_check
          %p499 = pneg %p153
        $region22: #{tpu_custom_call.1} parent=11 // pred_check_branch
          %501 = sbr.rel (%p499) target = $region24
        $region23: #{tpu_custom_call.1} parent=11 // pred_region
          _
        $region24: #{tpu_custom_call.1} parent=11 // pred_fallthru
          _
        // Predicated region
        $region25: #{tpu_custom_call.1} parent=11 // pred_check
          %p502 = pneg %p174
        $region26: #{tpu_custom_call.1} parent=11 // pred_check_branch
          %504 = sbr.rel (%p502) target = $region28
        $region27: #{tpu_custom_call.1} parent=11 // pred_region
          _
        $region28: #{tpu_custom_call.1} parent=11 // pred_fallthru
          _
        // Predicated region
        $region29: #{tpu_custom_call.1} parent=11 // pred_check
          %p505 = pneg %p195
        $region30: #{tpu_custom_call.1} parent=11 // pred_check_branch
          %507 = sbr.rel (%p505) target = $region32
        $region31: #{tpu_custom_call.1} parent=11 // pred_region
          _
        $region32: #{tpu_custom_call.1} parent=11 // pred_fallthru
          _
        // Predicated region
        $region33: #{tpu_custom_call.1} parent=11 // pred_check
          %p508 = pneg %p216
        $region34: #{tpu_custom_call.1} parent=11 // pred_check_branch
          %510 = sbr.rel (%p508) target = $region36
        $region35: #{tpu_custom_call.1} parent=11 // pred_region
          _
        $region36: #{tpu_custom_call.1} parent=11 // pred_fallthru
          _
        // Predicated region
        $region37: #{tpu_custom_call.1} parent=11 // pred_check
          %p511 = pneg %p237
        $region38: #{tpu_custom_call.1} parent=11 // pred_check_branch
          %513 = sbr.rel (%p511) target = $region40
        $region39: #{tpu_custom_call.1} parent=11 // pred_region
          _
        $region40: #{tpu_custom_call.1} parent=11 // pred_fallthru
          _
        // Predicated region
        $region41: #{tpu_custom_call.1} parent=11 // pred_check
          %p514 = pneg %p258
        $region42: #{tpu_custom_call.1} parent=11 // pred_check_branch
          %516 = sbr.rel (%p514) target = $region44
        $region43: #{tpu_custom_call.1} parent=11 // pred_region
          _
        $region44: #{tpu_custom_call.1} parent=11 // pred_fallthru
          _
        // Predicated region
        $region45: #{tpu_custom_call.1} parent=11 // pred_check
          %p517 = pneg %p279
        $region46: #{tpu_custom_call.1} parent=11 // pred_check_branch
          %519 = sbr.rel (%p517) target = $region48
        $region47: #{tpu_custom_call.1} parent=11 // pred_region
          _
        $region48: #{tpu_custom_call.1} parent=11 // pred_fallthru
          _
        // Predicated region
        $region49: #{tpu_custom_call.1} parent=11 // pred_check
          %p520 = pneg %p300
        $region50: #{tpu_custom_call.1} parent=11 // pred_check_branch
          %522 = sbr.rel (%p520) target = $region52
        $region51: #{tpu_custom_call.1} parent=11 // pred_region
          _
        $region52: #{tpu_custom_call.1} parent=11 // pred_fallthru
          _
        // Predicated region
        $region53: #{tpu_custom_call.1} parent=11 // pred_check
          %p523 = pneg %p321
        $region54: #{tpu_custom_call.1} parent=11 // pred_check_branch
          %525 = sbr.rel (%p523) target = $region56
        $region55: #{tpu_custom_call.1} parent=11 // pred_region
          _
        $region56: #{tpu_custom_call.1} parent=11 // pred_fallthru
          _
        // Predicated region
        $region57: #{tpu_custom_call.1} parent=11 // pred_check
          %p526 = pneg %p342
        $region58: #{tpu_custom_call.1} parent=11 // pred_check_branch
          %528 = sbr.rel (%p526) target = $region60
        $region59: #{tpu_custom_call.1} parent=11 // pred_region
          _
        $region60: #{tpu_custom_call.1} parent=11 // pred_fallthru
          _
        // Predicated region
        $region61: #{tpu_custom_call.1} parent=11 // pred_check
          %p529 = pneg %p363
        $region62: #{tpu_custom_call.1} parent=11 // pred_check_branch
          %531 = sbr.rel (%p529) target = $region64
        $region63: #{tpu_custom_call.1} parent=11 // pred_region
          _
        $region64: #{tpu_custom_call.1} parent=11 // pred_fallthru
          _
        // Predicated region
        $region65: #{tpu_custom_call.1} parent=11 // pred_check
          %p532 = pneg %p384
        $region66: #{tpu_custom_call.1} parent=11 // pred_check_branch
          %534 = sbr.rel (%p532) target = $region68
        $region67: #{tpu_custom_call.1} parent=11 // pred_region
          _
        $region68: #{tpu_custom_call.1} parent=11 // pred_fallthru
          _
        // Predicated region
        $region69: #{tpu_custom_call.1} parent=11 // pred_check
          %p535 = pneg %p405
        $region70: #{tpu_custom_call.1} parent=11 // pred_check_branch
          %537 = sbr.rel (%p535) target = $region72
        $region71: #{tpu_custom_call.1} parent=11 // pred_region
          _
        $region72: #{tpu_custom_call.1} parent=11 // pred_fallthru
          _
        // Predicated region
        $region73: #{tpu_custom_call.1} parent=11 // pred_check
          %p538 = pneg %p426
        $region74: #{tpu_custom_call.1} parent=11 // pred_check_branch
          %540 = sbr.rel (%p538) target = $region76
        $region75: #{tpu_custom_call.1} parent=11 // pred_region
          _
        $region76: #{tpu_custom_call.1} parent=11 // pred_fallthru
          _
      $region12: #{tpu_custom_call.1} parent=5 // pred_fallthru
        _
      %p541 = scmp.lt.s32.totalorder %s38, 2
      // Predicated region
      $region77: #{tpu_custom_call.1} parent=5 // pred_check
        %p542 = pneg %p541
      $region78: #{tpu_custom_call.1} parent=5 // pred_check_branch
        %544 = sbr.rel (%p542) target = $region80
      $region79: #{tpu_custom_call.1} parent=5 // pred_region
        // Predicated region
        $region81: #{tpu_custom_call.1} parent=79 // pred_check
          %p545 = pneg %p58
        $region82: #{tpu_custom_call.1} parent=79 // pred_check_branch
          %547 = sbr.rel (%p545) target = $region84
        $region83: #{tpu_custom_call.1} parent=79 // pred_region
          %s548 = sand.u32 %s48, 1
          %s549 = scalar_lea.sflag [#allocation3], %s548
          %s550 = sand.u32 %s48, 1
          %s551 = smul.addr %s550, 4
          %s552 = scalar_lea.vmem [#allocation2], %s551
          %s554 = ssub.s32 64, 64
          %555 = vsyncadd %s549, %s554
          %s556 = smul.addr %s38, 64
          %s557 = scalar_lea.hbm %s0, %s556
          %s559 = sshll.u32 %s552, 4
          %s560 = int_to_ptr.vmem [resolvable:$true] %s559
          %562 = dma.hbm_to_vmem [thread:$0]  %s557, 64, %s560, %s549
        $region84: #{tpu_custom_call.1} parent=79 // pred_fallthru
          _
        // Predicated region
        $region85: #{tpu_custom_call.1} parent=79 // pred_check
          %p563 = pneg %p84
        $region86: #{tpu_custom_call.1} parent=79 // pred_check_branch
          %565 = sbr.rel (%p563) target = $region88
        $region87: #{tpu_custom_call.1} parent=79 // pred_region
          %s566 = sand.u32 %s74, 1
          %s567 = scalar_lea.sflag [#allocation6], %s566
          %s568 = sand.u32 %s74, 1
          %s569 = smul.addr %s568, 4
          %s570 = scalar_lea.vmem [#allocation5], %s569
          %s572 = ssub.s32 64, 64
          %573 = vsyncadd %s567, %s572
          %s574 = smul.addr %s38, 64
          %s575 = scalar_lea.hbm %s1, %s574
          %s577 = sshll.u32 %s570, 4
          %s578 = int_to_ptr.vmem [resolvable:$true] %s577
          %580 = dma.hbm_to_vmem [thread:$0]  %s575, 64, %s578, %s567
        $region88: #{tpu_custom_call.1} parent=79 // pred_fallthru
          _
      $region80: #{tpu_custom_call.1} parent=5 // pred_fallthru
        _
      %p581 = scmp.le.s32.totalorder 1, %s38
      %p582 = scmp.lt.s32.totalorder %s38, 3
      %p583 = pnand %p581, %p582
      %p584 = pneg %p583
      // Predicated region
      $region89: #{tpu_custom_call.1} parent=5 // pred_check
        _
      $region90: #{tpu_custom_call.1} parent=5 // pred_check_branch
        %586 = sbr.rel (%p583) target = $region92
      $region91: #{tpu_custom_call.1} parent=5 // pred_region
        %s587 = ssub.s32 %s38, 1
        %s588 = sand.u32 %s51, 1
        %s589 = scalar_lea.sflag [#allocation3], %s588
        %s590 = sand.u32 %s51, 1
        %s591 = smul.addr %s590, 4
        %s592 = scalar_lea.vmem [#allocation2], %s591
        // Predicated region
        $region93: #{tpu_custom_call.1} parent=91 // pred_check
          %p593 = pneg %p64
        $region94: #{tpu_custom_call.1} parent=91 // pred_check_branch
          %595 = sbr.rel (%p593) target = $region96
        $region95: #{tpu_custom_call.1} parent=91 // pred_region
          %596 = dma.done %s589, 64
        $region96: #{tpu_custom_call.1} parent=91 // pred_fallthru
          _
        %s597 = sand.u32 %s77, 1
        %s598 = scalar_lea.sflag [#allocation6], %s597
        %s599 = sand.u32 %s77, 1
        %s600 = smul.addr %s599, 4
        %s601 = scalar_lea.vmem [#allocation5], %s600
        // Predicated region
        $region97: #{tpu_custom_call.1} parent=91 // pred_check
          %p602 = pneg %p90
        $region98: #{tpu_custom_call.1} parent=91 // pred_check_branch
          %604 = sbr.rel (%p602) target = $region100
        $region99: #{tpu_custom_call.1} parent=91 // pred_region
          %605 = dma.done %s598, 64
        $region100: #{tpu_custom_call.1} parent=91 // pred_fallthru
          _
        %s606 = sand.u32 %s51, 1
        %s607 = scalar_lea.sflag [#allocation3], %s606
        %s608 = sand.u32 %s51, 1
        %s609 = smul.addr %s608, 4
        %s610 = scalar_lea.vmem [#allocation2], %s609
        %p611 = pneg %p64
        %p612 = pneg %p61
        %s613 = sand.u32 %s77, 1
        %s614 = scalar_lea.sflag [#allocation6], %s613
        %s615 = sand.u32 %s77, 1
        %s616 = smul.addr %s615, 4
        %s617 = scalar_lea.vmem [#allocation5], %s616
        %p618 = pneg %p90
        %p619 = pneg %p87
        %p620 = pneg %p111
        %p621 = pneg %p108
        %p622 = pneg %p132
        %p623 = pneg %p129
        %p624 = pneg %p153
        %p625 = pneg %p150
        %p626 = pneg %p174
        %p627 = pneg %p171
        %p628 = pneg %p195
        %p629 = pneg %p192
        %p630 = pneg %p216
        %p631 = pneg %p213
        %p632 = pneg %p237
        %p633 = pneg %p234
        %p634 = pneg %p258
        %p635 = pneg %p255
        %p636 = pneg %p279
        %p637 = pneg %p276
        %p638 = pneg %p300
        %p639 = pneg %p297
        %p640 = pneg %p321
        %p641 = pneg %p318
        %p642 = pneg %p342
        %p643 = pneg %p339
        %p644 = pneg %p363
        %p645 = pneg %p360
        %p646 = pneg %p384
        %p647 = pneg %p381
        %p648 = pneg %p405
        %p649 = pneg %p402
        %p650 = pneg %p426
        %p651 = pneg %p423
        %p652 = pneg %p452
        %p653 = pneg %p449
        %s654 = sand.u32 %s439, 1
        %s655 = scalar_lea.sflag [#allocation4], %s654
        %s656 = sand.u32 %s439, 1
        %s657 = smul.addr %s656, 4
        %s658 = scalar_lea.vmem [#allocation7], %s657
        %p659 = pneg %p478
        %p660 = pneg %p475
        %s661 = sand.u32 %s465, 1
        %s662 = scalar_lea.sflag [#allocation9], %s661
        %s663 = sand.u32 %s465, 1
        %s664 = scalar_lea.vmem [#allocation8], %s663
        %v666 = vld [vmem:[%s592] sm:$0xf]
        %v667 = vld [vmem:[%s601] sm:$0xf]
        %v668 = vld [vmem:[%s2] sm:$0xf]
        %v669 = vld [vmem:[%s2 + $0x4] sm:$0xf]
        %v670 = vld [vmem:[%s2 + $0x8] sm:$0xf]
        %v671 = vld [vmem:[%s2 + $0xc] sm:$0xf]
        %v672 = vld [vmem:[%s3] sm:$0x1]
        %v674 = vlaneseq
        %v675 = vshrl.u32 %v674, 7
        %v676 = vsub.s32 0, %v675
        %v677 = vrot.slane %v672, %v676
        %v683 = vunpack.c.l.b16 %v668
        %v684 = vunpack.c.l.b16 %v669
        %v685 = vunpack.c.l.b16 %v670
        %v686 = vunpack.c.l.b16 %v671
        %v687 = vpack.c.b16 %v684, %v683
        %v688 = vpack.c.b16 %v686, %v685
        %vm691 = vcmask 261120
        %v693 = vsel %vm691, %v666, 0
        %695 = vmatprep.subr.bf16.mxu0 0
        %696 = vmatpush1.bf16.msra.mxu0 0
        %697 = vmatprep.subr.bf16.mxu0 0
        %698 = vmatpush1.bf16.msra.mxu0 0
        %699 = vmatprep.subr.bf16.mxu0 0
        %700 = vmatpush1.bf16.msra.mxu0 0
        %701 = vmatprep.subr.bf16.mxu0 0
        %702 = vmatpush1.bf16.msra.mxu0 0
        %703 = vmatprep.subr.bf16.mxu0 0
        %704 = vmatpush1.bf16.msra.mxu0 0
        %705 = vmatprep.subr.bf16.mxu0 0
        %706 = vmatpush1.bf16.msra.mxu0 0
        %707 = vmatprep.subr.bf16.mxu0 0
        %708 = vmatpush1.bf16.msra.mxu0 %v688
        %709 = vmatprep.subr.bf16.mxu0 0
        %710 = vmatpush1.bf16.msra.mxu0 %v687
        %711 = vmatprep.subr.bf16.mxu0 0
        %712 = vmatpush2.bf16.msra.mxu0 0
        %713 = vmatprep.subr.bf16.mxu0 0
        %714 = vmatpush2.bf16.msra.mxu0 0
        %715 = vmatprep.subr.bf16.mxu0 0
        %716 = vmatpush2.bf16.msra.mxu0 0
        %717 = vmatprep.subr.bf16.mxu0 0
        %718 = vmatpush2.bf16.msra.mxu0 0
        %719 = vmatprep.subr.bf16.mxu0 0
        %720 = vmatpush2.bf16.msra.mxu0 0
        %721 = vmatprep.subr.bf16.mxu0 0
        %722 = vmatpush2.bf16.msra.mxu0 0
        %723 = vmatprep.subr.bf16.mxu0 0
        %724 = vmatpush2.bf16.msra.mxu0 0
        %725 = vmatprep.subr.bf16.mxu0 0
        %726 = vmatpush2.bf16.msra.mxu0 0
        %727 = vmatprep.mubr.bf16.mxu0 0
        %728 = vmatmul.mubr.bf16.gmra.mxu0 %v693
        %v729 = vpop.f32.mrf.mxu0
        %v730 = vadd.f32 %v677, %v729
        %v731 = vpop.f32.mrf.mxu0
        %v732 = vpop.f32.mrf.mxu0
        %v733 = vpop.f32.mrf.mxu0
        %734 = vdwg.mxu0
        %v735 = vld [vmem:[%s4] sm:$0xf]
        %v736 = vld [vmem:[%s4 + $0x4] sm:$0xf]
        %v737 = vld [vmem:[%s4 + $0x8] sm:$0xf]
        %v738 = vld [vmem:[%s4 + $0xc] sm:$0xf]
        %v739 = vld [vmem:[%s5] sm:$0x1]
        %v741 = vlaneseq
        %v742 = vshrl.u32 %v741, 7
        %v743 = vsub.s32 0, %v742
        %v744 = vrot.slane %v739, %v743
        %v750 = vunpack.c.l.b16 %v735
        %v751 = vunpack.c.l.b16 %v736
        %v752 = vunpack.c.l.b16 %v737
        %v753 = vunpack.c.l.b16 %v738
        %v754 = vpack.c.b16 %v751, %v750
        %v755 = vpack.c.b16 %v753, %v752
        %v759 = vsel %vm691, %v667, 0
        %761 = vmatprep.subr.bf16.mxu0 0
        %762 = vmatpush1.bf16.msra.mxu0 0
        %763 = vmatprep.subr.bf16.mxu0 0
        %764 = vmatpush1.bf16.msra.mxu0 0
        %765 = vmatprep.subr.bf16.mxu0 0
        %766 = vmatpush1.bf16.msra.mxu0 0
        %767 = vmatprep.subr.bf16.mxu0 0
        %768 = vmatpush1.bf16.msra.mxu0 0
        %769 = vmatprep.subr.bf16.mxu0 0
        %770 = vmatpush1.bf16.msra.mxu0 0
        %771 = vmatprep.subr.bf16.mxu0 0
        %772 = vmatpush1.bf16.msra.mxu0 0
        %773 = vmatprep.subr.bf16.mxu0 0
        %774 = vmatpush1.bf16.msra.mxu0 %v755
        %775 = vmatprep.subr.bf16.mxu0 0
        %776 = vmatpush1.bf16.msra.mxu0 %v754
        %777 = vmatprep.subr.bf16.mxu0 0
        %778 = vmatpush2.bf16.msra.mxu0 0
        %779 = vmatprep.subr.bf16.mxu0 0
        %780 = vmatpush2.bf16.msra.mxu0 0
        %781 = vmatprep.subr.bf16.mxu0 0
        %782 = vmatpush2.bf16.msra.mxu0 0
        %783 = vmatprep.subr.bf16.mxu0 0
        %784 = vmatpush2.bf16.msra.mxu0 0
        %785 = vmatprep.subr.bf16.mxu0 0
        %786 = vmatpush2.bf16.msra.mxu0 0
        %787 = vmatprep.subr.bf16.mxu0 0
        %788 = vmatpush2.bf16.msra.mxu0 0
        %789 = vmatprep.subr.bf16.mxu0 0
        %790 = vmatpush2.bf16.msra.mxu0 0
        %791 = vmatprep.subr.bf16.mxu0 0
        %792 = vmatpush2.bf16.msra.mxu0 0
        %793 = vmatprep.mubr.bf16.mxu0 0
        %794 = vmatmul.mubr.bf16.gmra.mxu0 %v759
        %v795 = vpop.f32.mrf.mxu0
        %v796 = vadd.f32 %v744, %v795
        %v797 = vpop.f32.mrf.mxu0
        %v798 = vpop.f32.mrf.mxu0
        %v799 = vpop.f32.mrf.mxu0
        %800 = vdwg.mxu0
        %v801 = vld [vmem:[%s6] sm:$0xf]
        %v802 = vld [vmem:[%s6 + $0x4] sm:$0xf]
        %v803 = vld [vmem:[%s6 + $0x8] sm:$0xf]
        %v804 = vld [vmem:[%s6 + $0xc] sm:$0xf]
        %v805 = vld [vmem:[%s7] sm:$0x1]
        %v807 = vlaneseq
        %v808 = vshrl.u32 %v807, 7
        %v809 = vsub.s32 0, %v808
        %v810 = vrot.slane %v805, %v809
        %v816 = vunpack.c.l.b16 %v801
        %v817 = vunpack.c.l.b16 %v802
        %v818 = vunpack.c.l.b16 %v803
        %v819 = vunpack.c.l.b16 %v804
        %v820 = vpack.c.b16 %v817, %v816
        %v821 = vpack.c.b16 %v819, %v818
        %824 = vmatprep.subr.bf16.mxu0 0
        %825 = vmatpush1.bf16.msra.mxu0 0
        %826 = vmatprep.subr.bf16.mxu0 0
        %827 = vmatpush1.bf16.msra.mxu0 0
        %828 = vmatprep.subr.bf16.mxu0 0
        %829 = vmatpush1.bf16.msra.mxu0 0
        %830 = vmatprep.subr.bf16.mxu0 0
        %831 = vmatpush1.bf16.msra.mxu0 0
        %832 = vmatprep.subr.bf16.mxu0 0
        %833 = vmatpush1.bf16.msra.mxu0 0
        %834 = vmatprep.subr.bf16.mxu0 0
        %835 = vmatpush1.bf16.msra.mxu0 0
        %836 = vmatprep.subr.bf16.mxu0 0
        %837 = vmatpush1.bf16.msra.mxu0 %v821
        %838 = vmatprep.subr.bf16.mxu0 0
        %839 = vmatpush1.bf16.msra.mxu0 %v820
        %840 = vmatprep.subr.bf16.mxu0 0
        %841 = vmatpush2.bf16.msra.mxu0 0
        %842 = vmatprep.subr.bf16.mxu0 0
        %843 = vmatpush2.bf16.msra.mxu0 0
        %844 = vmatprep.subr.bf16.mxu0 0
        %845 = vmatpush2.bf16.msra.mxu0 0
        %846 = vmatprep.subr.bf16.mxu0 0
        %847 = vmatpush2.bf16.msra.mxu0 0
        %848 = vmatprep.subr.bf16.mxu0 0
        %849 = vmatpush2.bf16.msra.mxu0 0
        %850 = vmatprep.subr.bf16.mxu0 0
        %851 = vmatpush2.bf16.msra.mxu0 0
        %852 = vmatprep.subr.bf16.mxu0 0
        %853 = vmatpush2.bf16.msra.mxu0 0
        %854 = vmatprep.subr.bf16.mxu0 0
        %855 = vmatpush2.bf16.msra.mxu0 0
        %856 = vmatprep.mubr.bf16.mxu0 0
        %857 = vmatmul.mubr.bf16.gmra.mxu0 %v759
        %v858 = vpop.f32.mrf.mxu0
        %v859 = vadd.f32 %v810, %v858
        %v860 = vpop.f32.mrf.mxu0
        %v861 = vpop.f32.mrf.mxu0
        %v862 = vpop.f32.mrf.mxu0
        %863 = vdwg.mxu0
        %865 = vrot.lane.b32.xlu0 %v730, 112
        %v866 = vpop.permute.xlu0 %865
        %v868 = vcombine.high %v730, 0.0
        %v870 = vunpack.c.l.s4 1983009808
        %v871 = vunpack.c.0.s8 %v870
        %v872 = vlaneseq
        %v873 = vshrl.u32 %v872, 7
        %v874 = vsub.s32 %v871, %v873
        %v875 = vrot.slane %v730, %v874
        %v877 = vunpack.c.l.s4 1983009808
        %v878 = vunpack.c.0.s8 %v877
        %v879 = vlaneseq
        %v880 = vshrl.u32 %v879, 7
        %v881 = vsub.s32 %v878, %v880
        %v882 = vrot.slane %v868, %v881
        %v883 = vcombine.high %v866, 0.0
        %v885 = vunpack.c.l.s4 1983009808
        %v886 = vunpack.c.0.s8 %v885
        %v887 = vlaneseq
        %v888 = vshrl.u32 %v887, 7
        %v889 = vsub.s32 %v886, %v888
        %v890 = vrot.slane %v866, %v889
        %v892 = vunpack.c.l.s4 1983009808
        %v893 = vunpack.c.0.s8 %v892
        %v894 = vlaneseq
        %v895 = vshrl.u32 %v894, 7
        %v896 = vsub.s32 %v893, %v895
        %v897 = vrot.slane %v883, %v896
        %v898 = vcombine.low %v875, %v890
        %v899 = vcombine.high %v875, %v890
        %v901 = vunpack.c.l.s4 1934713408
        %v902 = vunpack.c.0.s8 %v901
        %v903 = vlaneseq
        %v904 = vshrl.u32 %v903, 7
        %v905 = vsub.s32 %v902, %v904
        %v906 = vrot.slane %v898, %v905
        %v908 = vunpack.c.l.s4 1934713408
        %v909 = vunpack.c.0.s8 %v908
        %v910 = vlaneseq
        %v911 = vshrl.u32 %v910, 7
        %v912 = vsub.s32 %v909, %v911
        %v913 = vrot.slane %v899, %v912
        %v914 = vcombine.low %v882, %v897
        %v915 = vcombine.high %v882, %v897
        %v917 = vunpack.c.l.s4 1934713408
        %v918 = vunpack.c.0.s8 %v917
        %v919 = vlaneseq
        %v920 = vshrl.u32 %v919, 7
        %v921 = vsub.s32 %v918, %v920
        %v922 = vrot.slane %v914, %v921
        %v924 = vunpack.c.l.s4 1934713408
        %v925 = vunpack.c.0.s8 %v924
        %v926 = vlaneseq
        %v927 = vshrl.u32 %v926, 7
        %v928 = vsub.s32 %v925, %v927
        %v929 = vrot.slane %v915, %v928
        %v930 = vcombine.high %v906, 0.0
        %v931 = vcombine.high %v913, 0.0
        %v932 = vcombine.high %v922, 0.0
        %v933 = vcombine.high %v929, 0.0
        %v934 = vcombine.low %v906, %v913
        %v936 = vunpack.c.l.s4 1983009808
        %v937 = vunpack.c.0.s8 %v936
        %v938 = vlaneseq
        %v939 = vshrl.u32 %v938, 7
        %v940 = vsub.s32 %v937, %v939
        %v941 = vrot.slane %v934, %v940
        %v942 = vcombine.low %v930, %v931
        %v944 = vunpack.c.l.s4 1983009808
        %v945 = vunpack.c.0.s8 %v944
        %v946 = vlaneseq
        %v947 = vshrl.u32 %v946, 7
        %v948 = vsub.s32 %v945, %v947
        %v949 = vrot.slane %v942, %v948
        %v950 = vcombine.low %v922, %v929
        %v952 = vunpack.c.l.s4 1983009808
        %v953 = vunpack.c.0.s8 %v952
        %v954 = vlaneseq
        %v955 = vshrl.u32 %v954, 7
        %v956 = vsub.s32 %v953, %v955
        %v957 = vrot.slane %v950, %v956
        %v958 = vcombine.low %v932, %v933
        %v960 = vunpack.c.l.s4 1983009808
        %v961 = vunpack.c.0.s8 %v960
        %v962 = vlaneseq
        %v963 = vshrl.u32 %v962, 7
        %v964 = vsub.s32 %v961, %v963
        %v965 = vrot.slane %v958, %v964
        %v966 = vcombine.low %v941, %v949
        %v968 = vunpack.c.l.s4 1934713408
        %v969 = vunpack.c.0.s8 %v968
        %v970 = vlaneseq
        %v971 = vshrl.u32 %v970, 7
        %v972 = vsub.s32 %v969, %v971
        %v973 = vrot.slane %v966, %v972
        %v974 = vcombine.low %v957, %v965
        %v976 = vunpack.c.l.s4 1934713408
        %v977 = vunpack.c.0.s8 %v976
        %v978 = vlaneseq
        %v979 = vshrl.u32 %v978, 7
        %v980 = vsub.s32 %v977, %v979
        %v981 = vrot.slane %v974, %v980
        %v982 = vcombine.low %v973, %v981
        %v983 = vcombine.high %v973, %v981
        %v984 = vpack.c.bf16 %v982, %v982
        %v985 = vpack.c.bf16 %v983, %v983
        %987 = vrot.lane.b32.xlu0 %v796, 112
        %v988 = vpop.permute.xlu0 %987
        %v990 = vcombine.high %v796, 0.0
        %v992 = vunpack.c.l.s4 1983009808
        %v993 = vunpack.c.0.s8 %v992
        %v994 = vlaneseq
        %v995 = vshrl.u32 %v994, 7
        %v996 = vsub.s32 %v993, %v995
        %v997 = vrot.slane %v796, %v996
        %v999 = vunpack.c.l.s4 1983009808
        %v1000 = vunpack.c.0.s8 %v999
        %v1001 = vlaneseq
        %v1002 = vshrl.u32 %v1001, 7
        %v1003 = vsub.s32 %v1000, %v1002
        %v1004 = vrot.slane %v990, %v1003
        %v1005 = vcombine.high %v988, 0.0
        %v1007 = vunpack.c.l.s4 1983009808
        %v1008 = vunpack.c.0.s8 %v1007
        %v1009 = vlaneseq
        %v1010 = vshrl.u32 %v1009, 7
        %v1011 = vsub.s32 %v1008, %v1010
        %v1012 = vrot.slane %v988, %v1011
        %v1014 = vunpack.c.l.s4 1983009808
        %v1015 = vunpack.c.0.s8 %v1014
        %v1016 = vlaneseq
        %v1017 = vshrl.u32 %v1016, 7
        %v1018 = vsub.s32 %v1015, %v1017
        %v1019 = vrot.slane %v1005, %v1018
        %v1020 = vcombine.low %v997, %v1012
        %v1021 = vcombine.high %v997, %v1012
        %v1023 = vunpack.c.l.s4 1934713408
        %v1024 = vunpack.c.0.s8 %v1023
        %v1025 = vlaneseq
        %v1026 = vshrl.u32 %v1025, 7
        %v1027 = vsub.s32 %v1024, %v1026
        %v1028 = vrot.slane %v1020, %v1027
        %v1030 = vunpack.c.l.s4 1934713408
        %v1031 = vunpack.c.0.s8 %v1030
        %v1032 = vlaneseq
        %v1033 = vshrl.u32 %v1032, 7
        %v1034 = vsub.s32 %v1031, %v1033
        %v1035 = vrot.slane %v1021, %v1034
        %v1036 = vcombine.low %v1004, %v1019
        %v1037 = vcombine.high %v1004, %v1019
        %v1039 = vunpack.c.l.s4 1934713408
        %v1040 = vunpack.c.0.s8 %v1039
        %v1041 = vlaneseq
        %v1042 = vshrl.u32 %v1041, 7
        %v1043 = vsub.s32 %v1040, %v1042
        %v1044 = vrot.slane %v1036, %v1043
        %v1046 = vunpack.c.l.s4 1934713408
        %v1047 = vunpack.c.0.s8 %v1046
        %v1048 = vlaneseq
        %v1049 = vshrl.u32 %v1048, 7
        %v1050 = vsub.s32 %v1047, %v1049
        %v1051 = vrot.slane %v1037, %v1050
        %v1052 = vcombine.high %v1028, 0.0
        %v1053 = vcombine.high %v1035, 0.0
        %v1054 = vcombine.high %v1044, 0.0
        %v1055 = vcombine.high %v1051, 0.0
        %v1056 = vcombine.low %v1028, %v1035
        %v1058 = vunpack.c.l.s4 1983009808
        %v1059 = vunpack.c.0.s8 %v1058
        %v1060 = vlaneseq
        %v1061 = vshrl.u32 %v1060, 7
        %v1062 = vsub.s32 %v1059, %v1061
        %v1063 = vrot.slane %v1056, %v1062
        %v1064 = vcombine.low %v1052, %v1053
        %v1066 = vunpack.c.l.s4 1983009808
        %v1067 = vunpack.c.0.s8 %v1066
        %v1068 = vlaneseq
        %v1069 = vshrl.u32 %v1068, 7
        %v1070 = vsub.s32 %v1067, %v1069
        %v1071 = vrot.slane %v1064, %v1070
        %v1072 = vcombine.low %v1044, %v1051
        %v1074 = vunpack.c.l.s4 1983009808
        %v1075 = vunpack.c.0.s8 %v1074
        %v1076 = vlaneseq
        %v1077 = vshrl.u32 %v1076, 7
        %v1078 = vsub.s32 %v1075, %v1077
        %v1079 = vrot.slane %v1072, %v1078
        %v1080 = vcombine.low %v1054, %v1055
        %v1082 = vunpack.c.l.s4 1983009808
        %v1083 = vunpack.c.0.s8 %v1082
        %v1084 = vlaneseq
        %v1085 = vshrl.u32 %v1084, 7
        %v1086 = vsub.s32 %v1083, %v1085
        %v1087 = vrot.slane %v1080, %v1086
        %v1088 = vcombine.low %v1063, %v1071
        %v1090 = vunpack.c.l.s4 1934713408
        %v1091 = vunpack.c.0.s8 %v1090
        %v1092 = vlaneseq
        %v1093 = vshrl.u32 %v1092, 7
        %v1094 = vsub.s32 %v1091, %v1093
        %v1095 = vrot.slane %v1088, %v1094
        %v1096 = vcombine.low %v1079, %v1087
        %v1098 = vunpack.c.l.s4 1934713408
        %v1099 = vunpack.c.0.s8 %v1098
        %v1100 = vlaneseq
        %v1101 = vshrl.u32 %v1100, 7
        %v1102 = vsub.s32 %v1099, %v1101
        %v1103 = vrot.slane %v1096, %v1102
        %v1104 = vcombine.low %v1095, %v1103
        %v1105 = vcombine.high %v1095, %v1103
        %v1106 = vpack.c.bf16 %v1104, %v1104
        %v1107 = vpack.c.bf16 %v1105, %v1105
        %1109 = vrot.lane.b32.xlu0 %v859, 112
        %v1110 = vpop.permute.xlu0 %1109
        %v1112 = vcombine.high %v859, 0.0
        %v1114 = vunpack.c.l.s4 1983009808
        %v1115 = vunpack.c.0.s8 %v1114
        %v1116 = vlaneseq
        %v1117 = vshrl.u32 %v1116, 7
        %v1118 = vsub.s32 %v1115, %v1117
        %v1119 = vrot.slane %v859, %v1118
        %v1121 = vunpack.c.l.s4 1983009808
        %v1122 = vunpack.c.0.s8 %v1121
        %v1123 = vlaneseq
        %v1124 = vshrl.u32 %v1123, 7
        %v1125 = vsub.s32 %v1122, %v1124
        %v1126 = vrot.slane %v1112, %v1125
        %v1127 = vcombine.high %v1110, 0.0
        %v1129 = vunpack.c.l.s4 1983009808
        %v1130 = vunpack.c.0.s8 %v1129
        %v1131 = vlaneseq
        %v1132 = vshrl.u32 %v1131, 7
        %v1133 = vsub.s32 %v1130, %v1132
        %v1134 = vrot.slane %v1110, %v1133
        %v1136 = vunpack.c.l.s4 1983009808
        %v1137 = vunpack.c.0.s8 %v1136
        %v1138 = vlaneseq
        %v1139 = vshrl.u32 %v1138, 7
        %v1140 = vsub.s32 %v1137, %v1139
        %v1141 = vrot.slane %v1127, %v1140
        %v1142 = vcombine.low %v1119, %v1134
        %v1143 = vcombine.high %v1119, %v1134
        %v1145 = vunpack.c.l.s4 1934713408
        %v1146 = vunpack.c.0.s8 %v1145
        %v1147 = vlaneseq
        %v1148 = vshrl.u32 %v1147, 7
        %v1149 = vsub.s32 %v1146, %v1148
        %v1150 = vrot.slane %v1142, %v1149
        %v1152 = vunpack.c.l.s4 1934713408
        %v1153 = vunpack.c.0.s8 %v1152
        %v1154 = vlaneseq
        %v1155 = vshrl.u32 %v1154, 7
        %v1156 = vsub.s32 %v1153, %v1155
        %v1157 = vrot.slane %v1143, %v1156
        %v1158 = vcombine.low %v1126, %v1141
        %v1159 = vcombine.high %v1126, %v1141
        %v1161 = vunpack.c.l.s4 1934713408
        %v1162 = vunpack.c.0.s8 %v1161
        %v1163 = vlaneseq
        %v1164 = vshrl.u32 %v1163, 7
        %v1165 = vsub.s32 %v1162, %v1164
        %v1166 = vrot.slane %v1158, %v1165
        %v1168 = vunpack.c.l.s4 1934713408
        %v1169 = vunpack.c.0.s8 %v1168
        %v1170 = vlaneseq
        %v1171 = vshrl.u32 %v1170, 7
        %v1172 = vsub.s32 %v1169, %v1171
        %v1173 = vrot.slane %v1159, %v1172
        %v1174 = vcombine.high %v1150, 0.0
        %v1175 = vcombine.high %v1157, 0.0
        %v1176 = vcombine.high %v1166, 0.0
        %v1177 = vcombine.high %v1173, 0.0
        %v1178 = vcombine.low %v1150, %v1157
        %v1180 = vunpack.c.l.s4 1983009808
        %v1181 = vunpack.c.0.s8 %v1180
        %v1182 = vlaneseq
        %v1183 = vshrl.u32 %v1182, 7
        %v1184 = vsub.s32 %v1181, %v1183
        %v1185 = vrot.slane %v1178, %v1184
        %v1186 = vcombine.low %v1174, %v1175
        %v1188 = vunpack.c.l.s4 1983009808
        %v1189 = vunpack.c.0.s8 %v1188
        %v1190 = vlaneseq
        %v1191 = vshrl.u32 %v1190, 7
        %v1192 = vsub.s32 %v1189, %v1191
        %v1193 = vrot.slane %v1186, %v1192
        %v1194 = vcombine.low %v1166, %v1173
        %v1196 = vunpack.c.l.s4 1983009808
        %v1197 = vunpack.c.0.s8 %v1196
        %v1198 = vlaneseq
        %v1199 = vshrl.u32 %v1198, 7
        %v1200 = vsub.s32 %v1197, %v1199
        %v1201 = vrot.slane %v1194, %v1200
        %v1202 = vcombine.low %v1176, %v1177
        %v1204 = vunpack.c.l.s4 1983009808
        %v1205 = vunpack.c.0.s8 %v1204
        %v1206 = vlaneseq
        %v1207 = vshrl.u32 %v1206, 7
        %v1208 = vsub.s32 %v1205, %v1207
        %v1209 = vrot.slane %v1202, %v1208
        %v1210 = vcombine.low %v1185, %v1193
        %v1212 = vunpack.c.l.s4 1934713408
        %v1213 = vunpack.c.0.s8 %v1212
        %v1214 = vlaneseq
        %v1215 = vshrl.u32 %v1214, 7
        %v1216 = vsub.s32 %v1213, %v1215
        %v1217 = vrot.slane %v1210, %v1216
        %v1218 = vcombine.low %v1201, %v1209
        %v1220 = vunpack.c.l.s4 1934713408
        %v1221 = vunpack.c.0.s8 %v1220
        %v1222 = vlaneseq
        %v1223 = vshrl.u32 %v1222, 7
        %v1224 = vsub.s32 %v1221, %v1223
        %v1225 = vrot.slane %v1218, %v1224
        %v1226 = vcombine.low %v1217, %v1225
        %v1227 = vcombine.high %v1217, %v1225
        %v1228 = vpack.c.bf16 %v1226, %v1226
        %v1229 = vpack.c.bf16 %v1227, %v1227
        %vm1230 = vcmask 130048
        %v1232 = vsel %vm1230, %v984, 0
        %v1235 = vsel %vm1230, %v1106, 0
        %1237 = vmatprep.subr.bf16.mxu0 0
        %1238 = vmatpush1.bf16.xpose.msra.mxu0 0
        %1239 = vmatprep.subr.bf16.mxu0 0
        %1240 = vmatpush1.bf16.xpose.msra.mxu0 0
        %1241 = vmatprep.subr.bf16.mxu0 0
        %1242 = vmatpush1.bf16.xpose.msra.mxu0 0
        %1243 = vmatprep.subr.bf16.mxu0 0
        %1244 = vmatpush1.bf16.xpose.msra.mxu0 0
        %1245 = vmatprep.subr.bf16.mxu0 0
        %1246 = vmatpush1.bf16.xpose.msra.mxu0 0
        %1247 = vmatprep.subr.bf16.mxu0 0
        %1248 = vmatpush1.bf16.xpose.msra.mxu0 0
        %1249 = vmatprep.subr.bf16.mxu0 0
        %1250 = vmatpush1.bf16.xpose.msra.mxu0 0
        %1251 = vmatprep.subr.bf16.mxu0 0
        %1252 = vmatpush1.bf16.xpose.msra.mxu0 %v1235
        %1253 = vmatprep.subr.bf16.mxu0 0
        %1254 = vmatpush2.bf16.xpose.msra.mxu0 0
        %1255 = vmatprep.subr.bf16.mxu0 0
        %1256 = vmatpush2.bf16.xpose.msra.mxu0 0
        %1257 = vmatprep.subr.bf16.mxu0 0
        %1258 = vmatpush2.bf16.xpose.msra.mxu0 0
        %1259 = vmatprep.subr.bf16.mxu0 0
        %1260 = vmatpush2.bf16.xpose.msra.mxu0 0
        %1261 = vmatprep.subr.bf16.mxu0 0
        %1262 = vmatpush2.bf16.xpose.msra.mxu0 0
        %1263 = vmatprep.subr.bf16.mxu0 0
        %1264 = vmatpush2.bf16.xpose.msra.mxu0 0
        %1265 = vmatprep.subr.bf16.mxu0 0
        %1266 = vmatpush2.bf16.xpose.msra.mxu0 0
        %1267 = vmatprep.subr.bf16.mxu0 0
        %1268 = vmatpush2.bf16.xpose.msra.mxu0 0
        %1269 = vmatprep.mubr.bf16.mxu0 0
        %1270 = vmatmul.mubr.bf16.gmra.mxu0 %v1232
        %v1271 = vpop.f32.mrf.mxu0
        %v1272 = vadd.f32 0.0, %v1271
        %v1273 = vpop.f32.mrf.mxu0
        %v1274 = vpop.f32.mrf.mxu0
        %v1275 = vpop.f32.mrf.mxu0
        %1276 = vdwg.mxu0
        %v1278 = vsel %vm1230, %v985, 0
        %v1281 = vsel %vm1230, %v1107, 0
        %1283 = vmatprep.subr.bf16.mxu0 0
        %1284 = vmatpush1.bf16.xpose.msra.mxu0 0
        %1285 = vmatprep.subr.bf16.mxu0 0
        %1286 = vmatpush1.bf16.xpose.msra.mxu0 0
        %1287 = vmatprep.subr.bf16.mxu0 0
        %1288 = vmatpush1.bf16.xpose.msra.mxu0 0
        %1289 = vmatprep.subr.bf16.mxu0 0
        %1290 = vmatpush1.bf16.xpose.msra.mxu0 0
        %1291 = vmatprep.subr.bf16.mxu0 0
        %1292 = vmatpush1.bf16.xpose.msra.mxu0 0
        %1293 = vmatprep.subr.bf16.mxu0 0
        %1294 = vmatpush1.bf16.xpose.msra.mxu0 0
        %1295 = vmatprep.subr.bf16.mxu0 0
        %1296 = vmatpush1.bf16.xpose.msra.mxu0 0
        %1297 = vmatprep.subr.bf16.mxu0 0
        %1298 = vmatpush1.bf16.xpose.msra.mxu0 %v1281
        %1299 = vmatprep.subr.bf16.mxu0 0
        %1300 = vmatpush2.bf16.xpose.msra.mxu0 0
        %1301 = vmatprep.subr.bf16.mxu0 0
        %1302 = vmatpush2.bf16.xpose.msra.mxu0 0
        %1303 = vmatprep.subr.bf16.mxu0 0
        %1304 = vmatpush2.bf16.xpose.msra.mxu0 0
        %1305 = vmatprep.subr.bf16.mxu0 0
        %1306 = vmatpush2.bf16.xpose.msra.mxu0 0
        %1307 = vmatprep.subr.bf16.mxu0 0
        %1308 = vmatpush2.bf16.xpose.msra.mxu0 0
        %1309 = vmatprep.subr.bf16.mxu0 0
        %1310 = vmatpush2.bf16.xpose.msra.mxu0 0
        %1311 = vmatprep.subr.bf16.mxu0 0
        %1312 = vmatpush2.bf16.xpose.msra.mxu0 0
        %1313 = vmatprep.subr.bf16.mxu0 0
        %1314 = vmatpush2.bf16.xpose.msra.mxu0 0
        %1315 = vmatprep.mubr.bf16.mxu0 0
        %1316 = vmatmul.mubr.bf16.gmra.mxu0 %v1278
        %v1317 = vpop.f32.mrf.mxu0
        %v1318 = vadd.f32 0.0, %v1317
        %v1319 = vpop.f32.mrf.mxu0
        %v1320 = vpop.f32.mrf.mxu0
        %v1321 = vpop.f32.mrf.mxu0
        %1322 = vdwg.mxu0
        %vm1323 = vcmask 64512
        %v1324 = vsel %vm1323, %v1272, -inf
        %1325 = vmax.xlane.f32.xlu0 %v1324
        %v1326 = vpop.xlane.xlu0 %1325
        %v1327 = vsel %vm1323, %v1318, -inf
        %1328 = vmax.xlane.f32.xlu0 %v1327
        %v1329 = vpop.xlane.xlu0 %1328
        %v1330 = vsub.f32 %v1272, %v1326
        %v1331 = vsub.f32 %v1318, %v1329
        %v1332 = vmul.f32 %v1330, 1.442695
        %v1333 = vpow.pop %v1332
        %v1334 = vmul.f32 %v1331, 1.442695
        %v1335 = vpow.pop %v1334
        %v1336 = vsel %vm1323, %v1333, 0.0
        %1337 = vadd.xlane.f32.xlu0 %v1336
        %v1338 = vpop.xlane.xlu0 %1337
        %v1339 = vsel %vm1323, %v1335, 0.0
        %1340 = vadd.xlane.f32.xlu0 %v1339
        %v1341 = vpop.xlane.xlu0 %1340
        %v1342 = vrcp.pop %v1338
        %v1343 = vrcp.pop %v1341
        %v1344 = vmul.f32 %v1333, %v1342
        %v1345 = vmul.f32 %v1335, %v1343
        %v1346 = vlog2.pop %v1338
        %v1347 = vmul.f32 %v1346, 0.6931472
        %v1348 = vlog2.pop %v1341
        %v1349 = vmul.f32 %v1348, 0.6931472
        %v1350 = vmul.f32 %v1344, %v1330
        %v1351 = vmul.f32 %v1345, %v1331
        %v1352 = vsel %vm1323, %v1350, 0.0
        %1353 = vadd.xlane.f32.xlu0 %v1352
        %v1354 = vpop.xlane.xlu0 %1353
        %v1355 = vsel %vm1323, %v1351, 0.0
        %1356 = vadd.xlane.f32.xlu0 %v1355
        %v1357 = vpop.xlane.xlu0 %1356
        %v1358 = vsub.f32 %v1347, %v1354
        %v1359 = vsub.f32 %v1349, %v1357
        %v1360 = vmax.f32 %v1358, %v1359
        %v1362 = vlaneseq
        %v1363 = vand.u32 %v1362, 127
        %v1364 = vlaneseq
        %v1365 = vshrl.u32 %v1364, 7
        %v1366 = vsub.s32 %v1363, %v1365
        %v1367 = vrot.slane %v1360, %v1366
        %vm1369 = vcmask 57344
        %1370 = vst.msk [vmem:[%s664] sm:$0x1] %vm1369, %v1367
        %v1371 = vpack.c.bf16 %v1344, %v1344
        %v1372 = vpack.c.bf16 %v1345, %v1345
        %v1374 = vsel %vm1323, %v1371, 0
        %vm1376 = vcmask 1043456
        %v1378 = vsel %vm1376, %v1228, 0
        %1380 = vmatprep.subr.bf16.mxu0 0
        %1381 = vmatpush1.bf16.msra.mxu0 0
        %1382 = vmatprep.subr.bf16.mxu0 0
        %1383 = vmatpush1.bf16.msra.mxu0 0
        %1384 = vmatprep.subr.bf16.mxu0 0
        %1385 = vmatpush1.bf16.msra.mxu0 0
        %1386 = vmatprep.subr.bf16.mxu0 0
        %1387 = vmatpush1.bf16.msra.mxu0 0
        %1388 = vmatprep.subr.bf16.mxu0 0
        %1389 = vmatpush1.bf16.msra.mxu0 0
        %1390 = vmatprep.subr.bf16.mxu0 0
        %1391 = vmatpush1.bf16.msra.mxu0 0
        %1392 = vmatprep.subr.bf16.mxu0 0
        %1393 = vmatpush1.bf16.msra.mxu0 0
        %1394 = vmatprep.subr.bf16.mxu0 0
        %1395 = vmatpush1.bf16.msra.mxu0 %v1378
        %1396 = vmatprep.subr.bf16.mxu0 0
        %1397 = vmatpush2.bf16.msra.mxu0 0
        %1398 = vmatprep.subr.bf16.mxu0 0
        %1399 = vmatpush2.bf16.msra.mxu0 0
        %1400 = vmatprep.subr.bf16.mxu0 0
        %1401 = vmatpush2.bf16.msra.mxu0 0
        %1402 = vmatprep.subr.bf16.mxu0 0
        %1403 = vmatpush2.bf16.msra.mxu0 0
        %1404 = vmatprep.subr.bf16.mxu0 0
        %1405 = vmatpush2.bf16.msra.mxu0 0
        %1406 = vmatprep.subr.bf16.mxu0 0
        %1407 = vmatpush2.bf16.msra.mxu0 0
        %1408 = vmatprep.subr.bf16.mxu0 0
        %1409 = vmatpush2.bf16.msra.mxu0 0
        %1410 = vmatprep.subr.bf16.mxu0 0
        %1411 = vmatpush2.bf16.msra.mxu0 0
        %1412 = vmatprep.mubr.bf16.mxu0 0
        %1413 = vmatmul.mubr.bf16.gmra.mxu0 %v1374
        %v1414 = vpop.f32.mrf.mxu0
        %v1415 = vadd.f32 0.0, %v1414
        %v1416 = vpop.f32.mrf.mxu0
        %v1417 = vpop.f32.mrf.mxu0
        %v1418 = vpop.f32.mrf.mxu0
        %1419 = vdwg.mxu0
        %v1421 = vsel %vm1323, %v1372, 0
        %v1424 = vsel %vm1376, %v1229, 0
        %1426 = vmatprep.subr.bf16.mxu0 0
        %1427 = vmatpush1.bf16.msra.mxu0 0
        %1428 = vmatprep.subr.bf16.mxu0 0
        %1429 = vmatpush1.bf16.msra.mxu0 0
        %1430 = vmatprep.subr.bf16.mxu0 0
        %1431 = vmatpush1.bf16.msra.mxu0 0
        %1432 = vmatprep.subr.bf16.mxu0 0
        %1433 = vmatpush1.bf16.msra.mxu0 0
        %1434 = vmatprep.subr.bf16.mxu0 0
        %1435 = vmatpush1.bf16.msra.mxu0 0
        %1436 = vmatprep.subr.bf16.mxu0 0
        %1437 = vmatpush1.bf16.msra.mxu0 0
        %1438 = vmatprep.subr.bf16.mxu0 0
        %1439 = vmatpush1.bf16.msra.mxu0 0
        %1440 = vmatprep.subr.bf16.mxu0 0
        %1441 = vmatpush1.bf16.msra.mxu0 %v1424
        %1442 = vmatprep.subr.bf16.mxu0 0
        %1443 = vmatpush2.bf16.msra.mxu0 0
        %1444 = vmatprep.subr.bf16.mxu0 0
        %1445 = vmatpush2.bf16.msra.mxu0 0
        %1446 = vmatprep.subr.bf16.mxu0 0
        %1447 = vmatpush2.bf16.msra.mxu0 0
        %1448 = vmatprep.subr.bf16.mxu0 0
        %1449 = vmatpush2.bf16.msra.mxu0 0
        %1450 = vmatprep.subr.bf16.mxu0 0
        %1451 = vmatpush2.bf16.msra.mxu0 0
        %1452 = vmatprep.subr.bf16.mxu0 0
        %1453 = vmatpush2.bf16.msra.mxu0 0
        %1454 = vmatprep.subr.bf16.mxu0 0
        %1455 = vmatpush2.bf16.msra.mxu0 0
        %1456 = vmatprep.subr.bf16.mxu0 0
        %1457 = vmatpush2.bf16.msra.mxu0 0
        %1458 = vmatprep.mubr.bf16.mxu0 0
        %1459 = vmatmul.mubr.bf16.gmra.mxu0 %v1421
        %v1460 = vpop.f32.mrf.mxu0
        %v1461 = vadd.f32 0.0, %v1460
        %v1462 = vpop.f32.mrf.mxu0
        %v1463 = vpop.f32.mrf.mxu0
        %v1464 = vpop.f32.mrf.mxu0
        %1465 = vdwg.mxu0
        %v1466 = vcombine.high %v1415, 0.0
        %v1468 = vunpack.c.l.s4 1983009808
        %v1469 = vunpack.c.0.s8 %v1468
        %v1470 = vlaneseq
        %v1471 = vshrl.u32 %v1470, 7
        %v1472 = vsub.s32 %v1469, %v1471
        %v1473 = vrot.slane %v1415, %v1472
        %v1475 = vunpack.c.l.s4 1983009808
        %v1476 = vunpack.c.0.s8 %v1475
        %v1477 = vlaneseq
        %v1478 = vshrl.u32 %v1477, 7
        %v1479 = vsub.s32 %v1476, %v1478
        %v1480 = vrot.slane %v1466, %v1479
        %v1481 = vcombine.high %v1461, 0.0
        %v1483 = vunpack.c.l.s4 1983009808
        %v1484 = vunpack.c.0.s8 %v1483
        %v1485 = vlaneseq
        %v1486 = vshrl.u32 %v1485, 7
        %v1487 = vsub.s32 %v1484, %v1486
        %v1488 = vrot.slane %v1461, %v1487
        %v1490 = vunpack.c.l.s4 1983009808
        %v1491 = vunpack.c.0.s8 %v1490
        %v1492 = vlaneseq
        %v1493 = vshrl.u32 %v1492, 7
        %v1494 = vsub.s32 %v1491, %v1493
        %v1495 = vrot.slane %v1481, %v1494
        %v1496 = vcombine.low %v1473, %v1488
        %v1497 = vcombine.high %v1473, %v1488
        %v1499 = vunpack.c.l.s4 1934713408
        %v1500 = vunpack.c.0.s8 %v1499
        %v1501 = vlaneseq
        %v1502 = vshrl.u32 %v1501, 7
        %v1503 = vsub.s32 %v1500, %v1502
        %v1504 = vrot.slane %v1496, %v1503
        %v1506 = vunpack.c.l.s4 1934713408
        %v1507 = vunpack.c.0.s8 %v1506
        %v1508 = vlaneseq
        %v1509 = vshrl.u32 %v1508, 7
        %v1510 = vsub.s32 %v1507, %v1509
        %v1511 = vrot.slane %v1497, %v1510
        %v1512 = vcombine.low %v1480, %v1495
        %v1513 = vcombine.high %v1480, %v1495
        %v1515 = vunpack.c.l.s4 1934713408
        %v1516 = vunpack.c.0.s8 %v1515
        %v1517 = vlaneseq
        %v1518 = vshrl.u32 %v1517, 7
        %v1519 = vsub.s32 %v1516, %v1518
        %v1520 = vrot.slane %v1512, %v1519
        %v1522 = vunpack.c.l.s4 1934713408
        %v1523 = vunpack.c.0.s8 %v1522
        %v1524 = vlaneseq
        %v1525 = vshrl.u32 %v1524, 7
        %v1526 = vsub.s32 %v1523, %v1525
        %v1527 = vrot.slane %v1513, %v1526
        %v1528 = vcombine.high %v1504, 0.0
        %v1529 = vcombine.high %v1511, 0.0
        %v1530 = vcombine.high %v1520, 0.0
        %v1531 = vcombine.high %v1527, 0.0
        %v1532 = vcombine.low %v1504, %v1511
        %v1534 = vunpack.c.l.s4 1983009808
        %v1535 = vunpack.c.0.s8 %v1534
        %v1536 = vlaneseq
        %v1537 = vshrl.u32 %v1536, 7
        %v1538 = vsub.s32 %v1535, %v1537
        %v1539 = vrot.slane %v1532, %v1538
        %v1540 = vcombine.low %v1528, %v1529
        %v1542 = vunpack.c.l.s4 1983009808
        %v1543 = vunpack.c.0.s8 %v1542
        %v1544 = vlaneseq
        %v1545 = vshrl.u32 %v1544, 7
        %v1546 = vsub.s32 %v1543, %v1545
        %v1547 = vrot.slane %v1540, %v1546
        %v1548 = vcombine.low %v1520, %v1527
        %v1550 = vunpack.c.l.s4 1983009808
        %v1551 = vunpack.c.0.s8 %v1550
        %v1552 = vlaneseq
        %v1553 = vshrl.u32 %v1552, 7
        %v1554 = vsub.s32 %v1551, %v1553
        %v1555 = vrot.slane %v1548, %v1554
        %v1556 = vcombine.low %v1530, %v1531
        %v1558 = vunpack.c.l.s4 1983009808
        %v1559 = vunpack.c.0.s8 %v1558
        %v1560 = vlaneseq
        %v1561 = vshrl.u32 %v1560, 7
        %v1562 = vsub.s32 %v1559, %v1561
        %v1563 = vrot.slane %v1556, %v1562
        %v1564 = vcombine.low %v1539, %v1547
        %v1566 = vunpack.c.l.s4 1934713408
        %v1567 = vunpack.c.0.s8 %v1566
        %v1568 = vlaneseq
        %v1569 = vshrl.u32 %v1568, 7
        %v1570 = vsub.s32 %v1567, %v1569
        %v1571 = vrot.slane %v1564, %v1570
        %v1572 = vcombine.low %v1555, %v1563
        %v1574 = vunpack.c.l.s4 1934713408
        %v1575 = vunpack.c.0.s8 %v1574
        %v1576 = vlaneseq
        %v1577 = vshrl.u32 %v1576, 7
        %v1578 = vsub.s32 %v1575, %v1577
        %v1579 = vrot.slane %v1572, %v1578
        %v1580 = vcombine.low %v1571, %v1579
        %v1581 = vcombine.high %v1571, %v1579
        %1583 = vrot.lane.b32.xlu0 %v1581, 16
        %v1584 = vpop.permute.xlu0 %1583
        %v1586 = vsel %vm1230, %v1580, %v1584
        %v1587 = vpack.c.bf16 %v1586, %v1586
        %v1588 = vld [vmem:[%s8] sm:$0xf]
        %v1589 = vld [vmem:[%s8 + $0x4] sm:$0xf]
        %v1590 = vld [vmem:[%s8 + $0x8] sm:$0xf]
        %v1591 = vld [vmem:[%s8 + $0xc] sm:$0xf]
        %v1592 = vld [vmem:[%s9] sm:$0x1]
        %v1594 = vlaneseq
        %v1595 = vshrl.u32 %v1594, 7
        %v1596 = vsub.s32 0, %v1595
        %v1597 = vrot.slane %v1592, %v1596
        %v1603 = vunpack.c.l.b16 %v1588
        %v1604 = vunpack.c.l.b16 %v1589
        %v1605 = vunpack.c.l.b16 %v1590
        %v1606 = vunpack.c.l.b16 %v1591
        %v1607 = vpack.c.b16 %v1604, %v1603
        %v1608 = vpack.c.b16 %v1606, %v1605
        %v1612 = vsel %vm691, %v1587, 0
        %1614 = vmatprep.subr.bf16.mxu0 0
        %1615 = vmatpush1.bf16.msra.mxu0 0
        %1616 = vmatprep.subr.bf16.mxu0 0
        %1617 = vmatpush1.bf16.msra.mxu0 0
        %1618 = vmatprep.subr.bf16.mxu0 0
        %1619 = vmatpush1.bf16.msra.mxu0 0
        %1620 = vmatprep.subr.bf16.mxu0 0
        %1621 = vmatpush1.bf16.msra.mxu0 0
        %1622 = vmatprep.subr.bf16.mxu0 0
        %1623 = vmatpush1.bf16.msra.mxu0 0
        %1624 = vmatprep.subr.bf16.mxu0 0
        %1625 = vmatpush1.bf16.msra.mxu0 0
        %1626 = vmatprep.subr.bf16.mxu0 0
        %1627 = vmatpush1.bf16.msra.mxu0 %v1608
        %1628 = vmatprep.subr.bf16.mxu0 0
        %1629 = vmatpush1.bf16.msra.mxu0 %v1607
        %1630 = vmatprep.subr.bf16.mxu0 0
        %1631 = vmatpush2.bf16.msra.mxu0 0
        %1632 = vmatprep.subr.bf16.mxu0 0
        %1633 = vmatpush2.bf16.msra.mxu0 0
        %1634 = vmatprep.subr.bf16.mxu0 0
        %1635 = vmatpush2.bf16.msra.mxu0 0
        %1636 = vmatprep.subr.bf16.mxu0 0
        %1637 = vmatpush2.bf16.msra.mxu0 0
        %1638 = vmatprep.subr.bf16.mxu0 0
        %1639 = vmatpush2.bf16.msra.mxu0 0
        %1640 = vmatprep.subr.bf16.mxu0 0
        %1641 = vmatpush2.bf16.msra.mxu0 0
        %1642 = vmatprep.subr.bf16.mxu0 0
        %1643 = vmatpush2.bf16.msra.mxu0 0
        %1644 = vmatprep.subr.bf16.mxu0 0
        %1645 = vmatpush2.bf16.msra.mxu0 0
        %1646 = vmatprep.mubr.bf16.mxu0 0
        %1647 = vmatmul.mubr.bf16.gmra.mxu0 %v1612
        %v1648 = vpop.f32.mrf.mxu0
        %v1649 = vadd.f32 %v1597, %v1648
        %v1650 = vpop.f32.mrf.mxu0
        %v1651 = vpop.f32.mrf.mxu0
        %v1652 = vpop.f32.mrf.mxu0
        %1653 = vdwg.mxu0
        %v1654 = vsel %vm691, %v1649, 0.0
        %1655 = vadd.xlane.f32.xlu0 %v1654
        %v1656 = vpop.xlane.xlu0 %1655
        %v1657 = vrcp.pop 32.0
        %v1658 = vmul.f32 %v1656, %v1657
        %v1659 = vsub.f32 %v1649, %v1658
        %v1660 = vmul.f32 %v1659, %v1659
        %v1661 = vsel %vm691, %v1660, 0.0
        %1662 = vadd.xlane.f32.xlu0 %v1661
        %v1663 = vpop.xlane.xlu0 %1662
        %v1664 = vmul.f32 %v1663, %v1657
        %v1665 = vadd.f32 %v1664, 1e-05
        %v1666 = vrsqrt.pop %v1665
        %v1667 = vmul.f32 %v1659, %v1666
        %v1668 = vld [vmem:[%s10] sm:$0x1]
        %v1670 = vlaneseq
        %v1671 = vshrl.u32 %v1670, 7
        %v1672 = vsub.s32 0, %v1671
        %v1673 = vrot.slane %v1668, %v1672
        %v1675 = vmul.f32 %v1667, %v1673
        %v1676 = vld [vmem:[%s11] sm:$0x1]
        %v1678 = vlaneseq
        %v1679 = vshrl.u32 %v1678, 7
        %v1680 = vsub.s32 0, %v1679
        %v1681 = vrot.slane %v1676, %v1680
        %v1683 = vadd.f32 %v1675, %v1681
        %v1684 = vpack.c.bf16 %v1683, %v1683
        %v1685 = vld [vmem:[%s12] sm:$0xf]
        %v1686 = vld [vmem:[%s12 + $0x4] sm:$0xf]
        %v1687 = vld [vmem:[%s12 + $0x8] sm:$0xf]
        %v1688 = vld [vmem:[%s12 + $0xc] sm:$0xf]
        %v1689 = vld [vmem:[%s13] sm:$0x1]
        %v1691 = vlaneseq
        %v1692 = vshrl.u32 %v1691, 7
        %v1693 = vsub.s32 0, %v1692
        %v1694 = vrot.slane %v1689, %v1693
        %v1700 = vunpack.c.l.b16 %v1685
        %v1701 = vunpack.c.l.b16 %v1686
        %v1702 = vunpack.c.l.b16 %v1687
        %v1703 = vunpack.c.l.b16 %v1688
        %v1704 = vpack.c.b16 %v1701, %v1700
        %v1705 = vpack.c.b16 %v1703, %v1702
        %v1709 = vsel %vm691, %v1684, 0
        %1711 = vmatprep.subr.bf16.mxu0 0
        %1712 = vmatpush1.bf16.msra.mxu0 0
        %1713 = vmatprep.subr.bf16.mxu0 0
        %1714 = vmatpush1.bf16.msra.mxu0 0
        %1715 = vmatprep.subr.bf16.mxu0 0
        %1716 = vmatpush1.bf16.msra.mxu0 0
        %1717 = vmatprep.subr.bf16.mxu0 0
        %1718 = vmatpush1.bf16.msra.mxu0 0
        %1719 = vmatprep.subr.bf16.mxu0 0
        %1720 = vmatpush1.bf16.msra.mxu0 0
        %1721 = vmatprep.subr.bf16.mxu0 0
        %1722 = vmatpush1.bf16.msra.mxu0 0
        %1723 = vmatprep.subr.bf16.mxu0 0
        %1724 = vmatpush1.bf16.msra.mxu0 %v1705
        %1725 = vmatprep.subr.bf16.mxu0 0
        %1726 = vmatpush1.bf16.msra.mxu0 %v1704
        %1727 = vmatprep.subr.bf16.mxu0 0
        %1728 = vmatpush2.bf16.msra.mxu0 0
        %1729 = vmatprep.subr.bf16.mxu0 0
        %1730 = vmatpush2.bf16.msra.mxu0 0
        %1731 = vmatprep.subr.bf16.mxu0 0
        %1732 = vmatpush2.bf16.msra.mxu0 0
        %1733 = vmatprep.subr.bf16.mxu0 0
        %1734 = vmatpush2.bf16.msra.mxu0 0
        %1735 = vmatprep.subr.bf16.mxu0 0
        %1736 = vmatpush2.bf16.msra.mxu0 0
        %1737 = vmatprep.subr.bf16.mxu0 0
        %1738 = vmatpush2.bf16.msra.mxu0 0
        %1739 = vmatprep.subr.bf16.mxu0 0
        %1740 = vmatpush2.bf16.msra.mxu0 0
        %1741 = vmatprep.subr.bf16.mxu0 0
        %1742 = vmatpush2.bf16.msra.mxu0 0
        %1743 = vmatprep.mubr.bf16.mxu0 0
        %1744 = vmatmul.mubr.bf16.gmra.mxu0 %v1709
        %v1745 = vpop.f32.mrf.mxu0
        %v1746 = vadd.f32 %v1694, %v1745
        %v1747 = vpop.f32.mrf.mxu0
        %v1748 = vpop.f32.mrf.mxu0
        %v1749 = vpop.f32.mrf.mxu0
        %1750 = vdwg.mxu0
        %v1751 = vmax.f32 %v1746, 0.0
        %v1752 = vpack.c.bf16 %v1751, %v1751
        %v1753 = vld [vmem:[%s14] sm:$0xf]
        %v1754 = vld [vmem:[%s14 + $0x4] sm:$0xf]
        %v1755 = vld [vmem:[%s14 + $0x8] sm:$0xf]
        %v1756 = vld [vmem:[%s14 + $0xc] sm:$0xf]
        %v1757 = vld [vmem:[%s14 + $0x10] sm:$0xf]
        %v1758 = vld [vmem:[%s14 + $0x14] sm:$0xf]
        %v1759 = vld [vmem:[%s14 + $0x18] sm:$0xf]
        %v1760 = vld [vmem:[%s14 + $0x1c] sm:$0xf]
        %v1761 = vld [vmem:[%s14 + $0x20] sm:$0xf]
        %v1762 = vld [vmem:[%s14 + $0x24] sm:$0xf]
        %v1763 = vld [vmem:[%s14 + $0x28] sm:$0xf]
        %v1764 = vld [vmem:[%s14 + $0x2c] sm:$0xf]
        %v1765 = vld [vmem:[%s14 + $0x30] sm:$0xf]
        %v1766 = vld [vmem:[%s14 + $0x34] sm:$0xf]
        %v1767 = vld [vmem:[%s14 + $0x38] sm:$0xf]
        %v1768 = vld [vmem:[%s14 + $0x3c] sm:$0xf]
        %v1769 = vld [vmem:[%s15] sm:$0x1]
        %v1771 = vlaneseq
        %v1772 = vshrl.u32 %v1771, 7
        %v1773 = vsub.s32 0, %v1772
        %v1774 = vrot.slane %v1769, %v1773
        %v1792 = vunpack.c.l.b16 %v1753
        %v1793 = vunpack.c.l.b16 %v1754
        %v1794 = vunpack.c.l.b16 %v1755
        %v1795 = vunpack.c.l.b16 %v1756
        %v1796 = vunpack.c.l.b16 %v1757
        %v1797 = vunpack.c.l.b16 %v1758
        %v1798 = vunpack.c.l.b16 %v1759
        %v1799 = vunpack.c.l.b16 %v1760
        %v1800 = vunpack.c.l.b16 %v1761
        %v1801 = vunpack.c.l.b16 %v1762
        %v1802 = vunpack.c.l.b16 %v1763
        %v1803 = vunpack.c.l.b16 %v1764
        %v1804 = vunpack.c.l.b16 %v1765
        %v1805 = vunpack.c.l.b16 %v1766
        %v1806 = vunpack.c.l.b16 %v1767
        %v1807 = vunpack.c.l.b16 %v1768
        %v1808 = vpack.c.b16 %v1793, %v1792
        %v1809 = vpack.c.b16 %v1795, %v1794
        %v1810 = vpack.c.b16 %v1797, %v1796
        %v1811 = vpack.c.b16 %v1799, %v1798
        %v1812 = vpack.c.b16 %v1801, %v1800
        %v1813 = vpack.c.b16 %v1803, %v1802
        %v1814 = vpack.c.b16 %v1805, %v1804
        %v1815 = vpack.c.b16 %v1807, %v1806
        %1824 = vmatprep.subr.bf16.mxu0 0
        %1825 = vmatpush1.bf16.msra.mxu0 %v1815
        %1826 = vmatprep.subr.bf16.mxu0 0
        %1827 = vmatpush1.bf16.msra.mxu0 %v1814
        %1828 = vmatprep.subr.bf16.mxu0 0
        %1829 = vmatpush1.bf16.msra.mxu0 %v1813
        %1830 = vmatprep.subr.bf16.mxu0 0
        %1831 = vmatpush1.bf16.msra.mxu0 %v1812
        %1832 = vmatprep.subr.bf16.mxu0 0
        %1833 = vmatpush1.bf16.msra.mxu0 %v1811
        %1834 = vmatprep.subr.bf16.mxu0 0
        %1835 = vmatpush1.bf16.msra.mxu0 %v1810
        %1836 = vmatprep.subr.bf16.mxu0 0
        %1837 = vmatpush1.bf16.msra.mxu0 %v1809
        %1838 = vmatprep.subr.bf16.mxu0 0
        %1839 = vmatpush1.bf16.msra.mxu0 %v1808
        %1840 = vmatprep.subr.bf16.mxu0 0
        %1841 = vmatpush2.bf16.msra.mxu0 0
        %1842 = vmatprep.subr.bf16.mxu0 0
        %1843 = vmatpush2.bf16.msra.mxu0 0
        %1844 = vmatprep.subr.bf16.mxu0 0
        %1845 = vmatpush2.bf16.msra.mxu0 0
        %1846 = vmatprep.subr.bf16.mxu0 0
        %1847 = vmatpush2.bf16.msra.mxu0 0
        %1848 = vmatprep.subr.bf16.mxu0 0
        %1849 = vmatpush2.bf16.msra.mxu0 0
        %1850 = vmatprep.subr.bf16.mxu0 0
        %1851 = vmatpush2.bf16.msra.mxu0 0
        %1852 = vmatprep.subr.bf16.mxu0 0
        %1853 = vmatpush2.bf16.msra.mxu0 0
        %1854 = vmatprep.subr.bf16.mxu0 0
        %1855 = vmatpush2.bf16.msra.mxu0 0
        %1856 = vmatprep.mubr.bf16.mxu0 0
        %1857 = vmatmul.mubr.bf16.gmra.mxu0 %v1752
        %v1858 = vpop.f32.mrf.mxu0
        %v1859 = vadd.f32 %v1774, %v1858
        %v1860 = vpop.f32.mrf.mxu0
        %v1861 = vpop.f32.mrf.mxu0
        %v1862 = vpop.f32.mrf.mxu0
        %1863 = vdwg.mxu0
        %v1864 = vsel %vm691, %v1859, 0.0
        %1865 = vadd.xlane.f32.xlu0 %v1864
        %v1866 = vpop.xlane.xlu0 %1865
        %v1867 = vmul.f32 %v1866, %v1657
        %v1868 = vsub.f32 %v1859, %v1867
        %v1869 = vmul.f32 %v1868, %v1868
        %v1870 = vsel %vm691, %v1869, 0.0
        %1871 = vadd.xlane.f32.xlu0 %v1870
        %v1872 = vpop.xlane.xlu0 %1871
        %v1873 = vmul.f32 %v1872, %v1657
        %v1874 = vadd.f32 %v1873, 1e-05
        %v1875 = vrsqrt.pop %v1874
        %v1876 = vmul.f32 %v1868, %v1875
        %v1877 = vld [vmem:[%s16] sm:$0x1]
        %v1879 = vlaneseq
        %v1880 = vshrl.u32 %v1879, 7
        %v1881 = vsub.s32 0, %v1880
        %v1882 = vrot.slane %v1877, %v1881
        %v1884 = vmul.f32 %v1876, %v1882
        %v1885 = vld [vmem:[%s17] sm:$0x1]
        %v1887 = vlaneseq
        %v1888 = vshrl.u32 %v1887, 7
        %v1889 = vsub.s32 0, %v1888
        %v1890 = vrot.slane %v1885, %v1889
        %v1892 = vadd.f32 %v1884, %v1890
        %v1893 = vpack.c.bf16 %v1892, %v1892
        %vm1894 = vcmask 257024
        %1895 = vst.msk [vmem:[%s658] sm:$0xf] %vm1894, %v1893
        %s1896 = sand.u32 %s439, 1
        %s1897 = scalar_lea.sflag [#allocation4], %s1896
        %s1898 = sand.u32 %s439, 1
        %s1899 = smul.addr %s1898, 4
        %s1900 = scalar_lea.vmem [#allocation7], %s1899
        %s1901 = sand.u32 %s465, 1
        %s1902 = scalar_lea.sflag [#allocation9], %s1901
        %s1903 = sand.u32 %s465, 1
        %s1904 = scalar_lea.vmem [#allocation8], %s1903
        // Predicated region
        $region101: #{tpu_custom_call.1} parent=91 // pred_check
          %p1905 = pneg %p449
        $region102: #{tpu_custom_call.1} parent=91 // pred_check_branch
          %1907 = sbr.rel (%p1905) target = $region104
        $region103: #{tpu_custom_call.1} parent=91 // pred_region
          %s1909 = ssub.s32 64, 64
          %1910 = vsyncadd %s1897, %s1909
          %s1911 = smul.addr %s43, 64
          %s1912 = scalar_lea.hbm %s18, %s1911
          %s1914 = sshll.u32 %s1900, 4
          %s1915 = int_to_ptr.vmem [resolvable:$true] %s1914
          %1917 = dma.vmem_to_hbm [thread:$0]  %s1915, 64, %s1912, %s1897
        $region104: #{tpu_custom_call.1} parent=91 // pred_fallthru
          _
        // Predicated region
        $region105: #{tpu_custom_call.1} parent=91 // pred_check
          %p1918 = pneg %p475
        $region106: #{tpu_custom_call.1} parent=91 // pred_check_branch
          %1920 = sbr.rel (%p1918) target = $region108
        $region107: #{tpu_custom_call.1} parent=91 // pred_region
          %s1922 = ssub.s32 16, 16
          %1923 = vsyncadd %s1902, %s1922
          %s1924 = smul.addr %s43, 16
          %s1925 = scalar_lea.hbm %s19, %s1924
          %s1927 = sshll.u32 %s1904, 4
          %s1928 = int_to_ptr.vmem [resolvable:$true] %s1927
          %1930 = dma.vmem_to_hbm [thread:$0]  %s1928, 16, %s1925, %s1902
        $region108: #{tpu_custom_call.1} parent=91 // pred_fallthru
          _
      $region92: #{tpu_custom_call.1} parent=5 // pred_fallthru
        _
      %p1931 = scmp.le.s32.totalorder 2, %s38
      // Predicated region
      $region109: #{tpu_custom_call.1} parent=5 // pred_check
        %p1932 = pneg %p1931
      $region110: #{tpu_custom_call.1} parent=5 // pred_check_branch
        %1934 = sbr.rel (%p1932) target = $region112
      $region111: #{tpu_custom_call.1} parent=5 // pred_region
        %s1935 = ssub.s32 %s38, 2
        // Predicated region
        $region113: #{tpu_custom_call.1} parent=111 // pred_check
          %p1936 = pneg %p455
        $region114: #{tpu_custom_call.1} parent=111 // pred_check_branch
          %1938 = sbr.rel (%p1936) target = $region116
        $region115: #{tpu_custom_call.1} parent=111 // pred_region
          %s1939 = sand.u32 %s440, 1
          %s1940 = scalar_lea.sflag [#allocation4], %s1939
          %s1941 = sand.u32 %s440, 1
          %s1942 = smul.addr %s1941, 4
          %s1943 = scalar_lea.vmem [#allocation7], %s1942
          %1944 = dma.done %s1940, 64
        $region116: #{tpu_custom_call.1} parent=111 // pred_fallthru
          _
        // Predicated region
        $region117: #{tpu_custom_call.1} parent=111 // pred_check
          %p1945 = pneg %p481
        $region118: #{tpu_custom_call.1} parent=111 // pred_check_branch
          %1947 = sbr.rel (%p1945) target = $region120
        $region119: #{tpu_custom_call.1} parent=111 // pred_region
          %s1948 = sand.u32 %s466, 1
          %s1949 = scalar_lea.sflag [#allocation9], %s1948
          %s1950 = sand.u32 %s466, 1
          %s1951 = scalar_lea.vmem [#allocation8], %s1950
          %1952 = dma.done %s1949, 16
        $region120: #{tpu_custom_call.1} parent=111 // pred_fallthru
          _
      $region112: #{tpu_custom_call.1} parent=5 // pred_fallthru
        _
    $region6: #{tpu_custom_call.1} parent=1 // loop_footer
      %s42 = sadd.s32 1, %s38
    $region7: #{tpu_custom_call.1} parent=1 // loop_footer_branch
      %37 = sbr.rel target = $region3
    $region8: #{tpu_custom_call.1} parent=1 // loop_exit
      _
    %1953 = vsyncpa [#allocation3], 1
    %s1954 = scalar_lea.sflag [#allocation3], 1
    %1955 = vsyncpa %s1954, 1
    %1956 = vsyncpa [#allocation6], 1
    %s1957 = scalar_lea.sflag [#allocation6], 1
    %1958 = vsyncpa %s1957, 1
    %1959 = vsyncpa [#allocation4], 1
    %s1960 = scalar_lea.sflag [#allocation4], 1
    %1961 = vsyncpa %s1960, 1
    %1962 = vsyncpa [#allocation9], 1
    %s1963 = scalar_lea.sflag [#allocation9], 1
    %1964 = vsyncpa %s1963, 1

// kernel: tpu_custom_call.1
$region0: #{tpu_custom_call.1}
  #allocation0 [shape = 'u32[]', space=smem, size = 0x4, offset = 0x4, fixed_abs, tag = 'smem constant byte address 0x4 - core index']
  #allocation1 [shape = 'u32[144,128]{1,0:T(1,128)}', space=vmem, size = 0x12000, scoped, tag = 'internal scratch']
  %s0 = inlined_call_operand.vmem [shape: bf16[2,8,32], index: 0, kind: input, shape index: {}]
  %s1 = inlined_call_operand.vmem [shape: bf16[2,8,32], index: 1, kind: input, shape index: {}]
  %s2 = inlined_call_operand.vmem [shape: bf16[2,32,16], index: 2, kind: input, shape index: {}]
  %s3 = inlined_call_operand.vmem [shape: f32[2,1,16], index: 3, kind: input, shape index: {}]
  %s4 = inlined_call_operand.vmem [shape: bf16[2,32,16], index: 4, kind: input, shape index: {}]
  %s5 = inlined_call_operand.vmem [shape: f32[2,1,16], index: 5, kind: input, shape index: {}]
  %s6 = inlined_call_operand.vmem [shape: bf16[2,32,16], index: 6, kind: input, shape index: {}]
  %s7 = inlined_call_operand.vmem [shape: f32[2,1,16], index: 7, kind: input, shape index: {}]
  %s8 = inlined_call_operand.vmem [shape: bf16[2,16,32], index: 8, kind: input, shape index: {}]
  %s9 = inlined_call_operand.vmem [shape: f32[1,32], index: 9, kind: input, shape index: {}]
  %s10 = inlined_call_operand.vmem [shape: f32[1,32], index: 10, kind: input, shape index: {}]
  %s11 = inlined_call_operand.vmem [shape: f32[1,32], index: 11, kind: input, shape index: {}]
  %s12 = inlined_call_operand.vmem [shape: bf16[32,128], index: 12, kind: input, shape index: {}]
  %s13 = inlined_call_operand.vmem [shape: f32[1,128], index: 13, kind: input, shape index: {}]
  %s14 = inlined_call_operand.vmem [shape: bf16[128,32], index: 14, kind: input, shape index: {}]
  %s15 = inlined_call_operand.vmem [shape: f32[1,32], index: 15, kind: input, shape index: {}]
  %s16 = inlined_call_operand.vmem [shape: f32[1,32], index: 16, kind: input, shape index: {}]
  %s17 = inlined_call_operand.vmem [shape: f32[1,32], index: 17, kind: input, shape index: {}]
  %s18 = inlined_call_operand.hbm [shape: bf16[2,8,32], index: 18, kind: output, shape index: {0}]
  %s19 = inlined_call_operand.hbm [shape: f32[2,1,8], index: 19, kind: output, shape index: {1}]
  %20 = xla_tuple %s18, %s19
  %s21 = sld [smem:[#allocation0]]
  $region113: #{tpu_custom_call.1} parent=0
    _
  %s23 = ssub.s32 1, %s21
  %s24 = scalar_select 0, %s23, %s21
  $region1: #{tpu_custom_call.1} parent=0
    #allocation2 [shape = 'u8[4096]{0}', space=vmem, size = 0x1000, scoped, tag = 'output window, operand 0']
    #allocation3 [shape = 's32[2]{0}', space=sflag, size = 0x8, scoped, tag = 'scoped memory for tpu_custom_call.1']
    #allocation4 [shape = 'u8[1024]{0}', space=vmem, size = 0x400, scoped, tag = 'output window, operand 1']
    #allocation5 [shape = 's32[2]{0}', space=sflag, size = 0x8, scoped, tag = 'scoped memory for tpu_custom_call.1']
    %25 = vsyncpa [#allocation3], 0
    %s26 = scalar_lea.sflag [#allocation3], 1
    %27 = vsyncpa %s26, 0
    %28 = vsyncpa [#allocation5], 0
    %s29 = scalar_lea.sflag [#allocation5], 1
    %30 = vsyncpa %s29, 0
    loop: start=0, step=1, limit=4
    $region2: #{tpu_custom_call.1} parent=1 // loop_pre_header
      _
    $region3: #{tpu_custom_call.1} parent=1 // loop_header
      %s32 = sphi 0, %s36
      %p33 = scmp.ge.s32.totalorder %s32, 4
      %s42 = sphi 0, %s44
      %s45 = sphi 0, %s42
      %s46 = sphi 0, %s45
      %s62 = sphi 0, %s46
      %s68 = sphi 0, %s70
      %s71 = sphi 0, %s68
      %s72 = sphi 0, %s71
      %s88 = sphi 0, %s72
      %s92 = sphi 0, %s92
      %s94 = sphi 0, %s92
      %s95 = sphi 0, %s94
      %s109 = sphi 0, %s95
      %s113 = sphi 0, %s113
      %s115 = sphi 0, %s113
      %s116 = sphi 0, %s115
      %s130 = sphi 0, %s116
      %s134 = sphi 0, %s134
      %s136 = sphi 0, %s134
      %s137 = sphi 0, %s136
      %s151 = sphi 0, %s137
      %s155 = sphi 0, %s155
      %s157 = sphi 0, %s155
      %s158 = sphi 0, %s157
      %s172 = sphi 0, %s158
      %s176 = sphi 0, %s176
      %s178 = sphi 0, %s176
      %s179 = sphi 0, %s178
      %s193 = sphi 0, %s179
      %s197 = sphi 0, %s197
      %s199 = sphi 0, %s197
      %s200 = sphi 0, %s199
      %s214 = sphi 0, %s200
      %s218 = sphi 0, %s218
      %s220 = sphi 0, %s218
      %s221 = sphi 0, %s220
      %s235 = sphi 0, %s221
      %s239 = sphi 0, %s239
      %s241 = sphi 0, %s239
      %s242 = sphi 0, %s241
      %s256 = sphi 0, %s242
      %s260 = sphi 0, %s260
      %s262 = sphi 0, %s260
      %s263 = sphi 0, %s262
      %s277 = sphi 0, %s263
      %s281 = sphi 0, %s281
      %s283 = sphi 0, %s281
      %s284 = sphi 0, %s283
      %s298 = sphi 0, %s284
      %s302 = sphi 0, %s302
      %s304 = sphi 0, %s302
      %s305 = sphi 0, %s304
      %s319 = sphi 0, %s305
      %s323 = sphi 0, %s323
      %s325 = sphi 0, %s323
      %s326 = sphi 0, %s325
      %s340 = sphi 0, %s326
      %s344 = sphi 0, %s344
      %s346 = sphi 0, %s344
      %s347 = sphi 0, %s346
      %s361 = sphi 0, %s347
      %s365 = sphi 0, %s365
      %s367 = sphi 0, %s365
      %s368 = sphi 0, %s367
      %s382 = sphi 0, %s368
      %s386 = sphi 0, %s386
      %s388 = sphi 0, %s386
      %s389 = sphi 0, %s388
      %s403 = sphi 0, %s389
      %s407 = sphi 0, %s407
      %s409 = sphi 0, %s407
      %s410 = sphi 0, %s409
      %s424 = sphi 0, %s410
      %s430 = sphi 0, %s432
      %s433 = sphi 0, %s430
      %s434 = sphi 0, %s433
      %s450 = sphi 0, %s434
      %s456 = sphi 0, %s458
      %s459 = sphi 0, %s456
      %s460 = sphi 0, %s459
      %s476 = sphi 0, %s460
    $region4: #{tpu_custom_call.1} parent=1 // loop_header_branch
      %35 = sbr.rel (%p33) target = $region8
    $region5: #{tpu_custom_call.1} parent=1 // loop_body
      %s37 = ssub.s32 %s32, 1
      %s38 = ssub.s32 %s32, 2
      %s39 = sadd.s32 %s32, 1
      %s40 = ssub.s32 %s32, %s39
      %p41 = scmp.eq.s32.totalorder %s40, 0
      %s43 = sadd.s32 %s42, 1
      %s44 = scalar_select %p41, %s42, %s43
      %p47 = pneg %p41
      %p48 = scmp.eq.s32.totalorder %s32, 1
      %p49 = por %p47, %p48
      %p50 = scmp.ne.s32.totalorder %s42, %s45
      %p51 = scmp.eq.s32.totalorder %s32, 0
      %p52 = por %p50, %p51
      %p53 = scmp.ne.s32.totalorder %s42, %s45
      %p54 = scmp.eq.s32.totalorder %s37, 1
      %p55 = por %p53, %p54
      %p56 = scmp.ne.s32.totalorder %s45, %s46
      %p57 = scmp.eq.s32.totalorder %s37, 0
      %p58 = por %p56, %p57
      %p59 = scmp.ne.s32.totalorder %s45, %s46
      %p60 = scmp.eq.s32.totalorder %s38, 1
      %p61 = por %p59, %p60
      %p63 = scmp.ne.s32.totalorder %s46, %s62
      %p64 = scmp.eq.s32.totalorder %s38, 0
      %p65 = por %p63, %p64
      %s66 = ssub.s32 %s32, %s39
      %p67 = scmp.eq.s32.totalorder %s66, 0
      %s69 = sadd.s32 %s68, 1
      %s70 = scalar_select %p67, %s68, %s69
      %p73 = pneg %p67
      %p74 = scmp.eq.s32.totalorder %s32, 1
      %p75 = por %p73, %p74
      %p76 = scmp.ne.s32.totalorder %s68, %s71
      %p77 = scmp.eq.s32.totalorder %s32, 0
      %p78 = por %p76, %p77
      %p79 = scmp.ne.s32.totalorder %s68, %s71
      %p80 = scmp.eq.s32.totalorder %s37, 1
      %p81 = por %p79, %p80
      %p82 = scmp.ne.s32.totalorder %s71, %s72
      %p83 = scmp.eq.s32.totalorder %s37, 0
      %p84 = por %p82, %p83
      %p85 = scmp.ne.s32.totalorder %s71, %s72
      %p86 = scmp.eq.s32.totalorder %s38, 1
      %p87 = por %p85, %p86
      %p89 = scmp.ne.s32.totalorder %s72, %s88
      %p90 = scmp.eq.s32.totalorder %s38, 0
      %p91 = por %p89, %p90
      %s93 = sadd.s32 %s92, 1
      %p96 = scmp.eq.s32.totalorder %s32, 1
      %p97 = scmp.ne.s32.totalorder %s92, %s94
      %p98 = scmp.eq.s32.totalorder %s32, 0
      %p99 = por %p97, %p98
      %p100 = scmp.ne.s32.totalorder %s92, %s94
      %p101 = scmp.eq.s32.totalorder %s37, 1
      %p102 = por %p100, %p101
      %p103 = scmp.ne.s32.totalorder %s94, %s95
      %p104 = scmp.eq.s32.totalorder %s37, 0
      %p105 = por %p103, %p104
      %p106 = scmp.ne.s32.totalorder %s94, %s95
      %p107 = scmp.eq.s32.totalorder %s38, 1
      %p108 = por %p106, %p107
      %p110 = scmp.ne.s32.totalorder %s95, %s109
      %p111 = scmp.eq.s32.totalorder %s38, 0
      %p112 = por %p110, %p111
      %s114 = sadd.s32 %s113, 1
      %p117 = scmp.eq.s32.totalorder %s32, 1
      %p118 = scmp.ne.s32.totalorder %s113, %s115
      %p119 = scmp.eq.s32.totalorder %s32, 0
      %p120 = por %p118, %p119
      %p121 = scmp.ne.s32.totalorder %s113, %s115
      %p122 = scmp.eq.s32.totalorder %s37, 1
      %p123 = por %p121, %p122
      %p124 = scmp.ne.s32.totalorder %s115, %s116
      %p125 = scmp.eq.s32.totalorder %s37, 0
      %p126 = por %p124, %p125
      %p127 = scmp.ne.s32.totalorder %s115, %s116
      %p128 = scmp.eq.s32.totalorder %s38, 1
      %p129 = por %p127, %p128
      %p131 = scmp.ne.s32.totalorder %s116, %s130
      %p132 = scmp.eq.s32.totalorder %s38, 0
      %p133 = por %p131, %p132
      %s135 = sadd.s32 %s134, 1
      %p138 = scmp.eq.s32.totalorder %s32, 1
      %p139 = scmp.ne.s32.totalorder %s134, %s136
      %p140 = scmp.eq.s32.totalorder %s32, 0
      %p141 = por %p139, %p140
      %p142 = scmp.ne.s32.totalorder %s134, %s136
      %p143 = scmp.eq.s32.totalorder %s37, 1
      %p144 = por %p142, %p143
      %p145 = scmp.ne.s32.totalorder %s136, %s137
      %p146 = scmp.eq.s32.totalorder %s37, 0
      %p147 = por %p145, %p146
      %p148 = scmp.ne.s32.totalorder %s136, %s137
      %p149 = scmp.eq.s32.totalorder %s38, 1
      %p150 = por %p148, %p149
      %p152 = scmp.ne.s32.totalorder %s137, %s151
      %p153 = scmp.eq.s32.totalorder %s38, 0
      %p154 = por %p152, %p153
      %s156 = sadd.s32 %s155, 1
      %p159 = scmp.eq.s32.totalorder %s32, 1
      %p160 = scmp.ne.s32.totalorder %s155, %s157
      %p161 = scmp.eq.s32.totalorder %s32, 0
      %p162 = por %p160, %p161
      %p163 = scmp.ne.s32.totalorder %s155, %s157
      %p164 = scmp.eq.s32.totalorder %s37, 1
      %p165 = por %p163, %p164
      %p166 = scmp.ne.s32.totalorder %s157, %s158
      %p167 = scmp.eq.s32.totalorder %s37, 0
      %p168 = por %p166, %p167
      %p169 = scmp.ne.s32.totalorder %s157, %s158
      %p170 = scmp.eq.s32.totalorder %s38, 1
      %p171 = por %p169, %p170
      %p173 = scmp.ne.s32.totalorder %s158, %s172
      %p174 = scmp.eq.s32.totalorder %s38, 0
      %p175 = por %p173, %p174
      %s177 = sadd.s32 %s176, 1
      %p180 = scmp.eq.s32.totalorder %s32, 1
      %p181 = scmp.ne.s32.totalorder %s176, %s178
      %p182 = scmp.eq.s32.totalorder %s32, 0
      %p183 = por %p181, %p182
      %p184 = scmp.ne.s32.totalorder %s176, %s178
      %p185 = scmp.eq.s32.totalorder %s37, 1
      %p186 = por %p184, %p185
      %p187 = scmp.ne.s32.totalorder %s178, %s179
      %p188 = scmp.eq.s32.totalorder %s37, 0
      %p189 = por %p187, %p188
      %p190 = scmp.ne.s32.totalorder %s178, %s179
      %p191 = scmp.eq.s32.totalorder %s38, 1
      %p192 = por %p190, %p191
      %p194 = scmp.ne.s32.totalorder %s179, %s193
      %p195 = scmp.eq.s32.totalorder %s38, 0
      %p196 = por %p194, %p195
      %s198 = sadd.s32 %s197, 1
      %p201 = scmp.eq.s32.totalorder %s32, 1
      %p202 = scmp.ne.s32.totalorder %s197, %s199
      %p203 = scmp.eq.s32.totalorder %s32, 0
      %p204 = por %p202, %p203
      %p205 = scmp.ne.s32.totalorder %s197, %s199
      %p206 = scmp.eq.s32.totalorder %s37, 1
      %p207 = por %p205, %p206
      %p208 = scmp.ne.s32.totalorder %s199, %s200
      %p209 = scmp.eq.s32.totalorder %s37, 0
      %p210 = por %p208, %p209
      %p211 = scmp.ne.s32.totalorder %s199, %s200
      %p212 = scmp.eq.s32.totalorder %s38, 1
      %p213 = por %p211, %p212
      %p215 = scmp.ne.s32.totalorder %s200, %s214
      %p216 = scmp.eq.s32.totalorder %s38, 0
      %p217 = por %p215, %p216
      %s219 = sadd.s32 %s218, 1
      %p222 = scmp.eq.s32.totalorder %s32, 1
      %p223 = scmp.ne.s32.totalorder %s218, %s220
      %p224 = scmp.eq.s32.totalorder %s32, 0
      %p225 = por %p223, %p224
      %p226 = scmp.ne.s32.totalorder %s218, %s220
      %p227 = scmp.eq.s32.totalorder %s37, 1
      %p228 = por %p226, %p227
      %p229 = scmp.ne.s32.totalorder %s220, %s221
      %p230 = scmp.eq.s32.totalorder %s37, 0
      %p231 = por %p229, %p230
      %p232 = scmp.ne.s32.totalorder %s220, %s221
      %p233 = scmp.eq.s32.totalorder %s38, 1
      %p234 = por %p232, %p233
      %p236 = scmp.ne.s32.totalorder %s221, %s235
      %p237 = scmp.eq.s32.totalorder %s38, 0
      %p238 = por %p236, %p237
      %s240 = sadd.s32 %s239, 1
      %p243 = scmp.eq.s32.totalorder %s32, 1
      %p244 = scmp.ne.s32.totalorder %s239, %s241
      %p245 = scmp.eq.s32.totalorder %s32, 0
      %p246 = por %p244, %p245
      %p247 = scmp.ne.s32.totalorder %s239, %s241
      %p248 = scmp.eq.s32.totalorder %s37, 1
      %p249 = por %p247, %p248
      %p250 = scmp.ne.s32.totalorder %s241, %s242
      %p251 = scmp.eq.s32.totalorder %s37, 0
      %p252 = por %p250, %p251
      %p253 = scmp.ne.s32.totalorder %s241, %s242
      %p254 = scmp.eq.s32.totalorder %s38, 1
      %p255 = por %p253, %p254
      %p257 = scmp.ne.s32.totalorder %s242, %s256
      %p258 = scmp.eq.s32.totalorder %s38, 0
      %p259 = por %p257, %p258
      %s261 = sadd.s32 %s260, 1
      %p264 = scmp.eq.s32.totalorder %s32, 1
      %p265 = scmp.ne.s32.totalorder %s260, %s262
      %p266 = scmp.eq.s32.totalorder %s32, 0
      %p267 = por %p265, %p266
      %p268 = scmp.ne.s32.totalorder %s260, %s262
      %p269 = scmp.eq.s32.totalorder %s37, 1
      %p270 = por %p268, %p269
      %p271 = scmp.ne.s32.totalorder %s262, %s263
      %p272 = scmp.eq.s32.totalorder %s37, 0
      %p273 = por %p271, %p272
      %p274 = scmp.ne.s32.totalorder %s262, %s263
      %p275 = scmp.eq.s32.totalorder %s38, 1
      %p276 = por %p274, %p275
      %p278 = scmp.ne.s32.totalorder %s263, %s277
      %p279 = scmp.eq.s32.totalorder %s38, 0
      %p280 = por %p278, %p279
      %s282 = sadd.s32 %s281, 1
      %p285 = scmp.eq.s32.totalorder %s32, 1
      %p286 = scmp.ne.s32.totalorder %s281, %s283
      %p287 = scmp.eq.s32.totalorder %s32, 0
      %p288 = por %p286, %p287
      %p289 = scmp.ne.s32.totalorder %s281, %s283
      %p290 = scmp.eq.s32.totalorder %s37, 1
      %p291 = por %p289, %p290
      %p292 = scmp.ne.s32.totalorder %s283, %s284
      %p293 = scmp.eq.s32.totalorder %s37, 0
      %p294 = por %p292, %p293
      %p295 = scmp.ne.s32.totalorder %s283, %s284
      %p296 = scmp.eq.s32.totalorder %s38, 1
      %p297 = por %p295, %p296
      %p299 = scmp.ne.s32.totalorder %s284, %s298
      %p300 = scmp.eq.s32.totalorder %s38, 0
      %p301 = por %p299, %p300
      %s303 = sadd.s32 %s302, 1
      %p306 = scmp.eq.s32.totalorder %s32, 1
      %p307 = scmp.ne.s32.totalorder %s302, %s304
      %p308 = scmp.eq.s32.totalorder %s32, 0
      %p309 = por %p307, %p308
      %p310 = scmp.ne.s32.totalorder %s302, %s304
      %p311 = scmp.eq.s32.totalorder %s37, 1
      %p312 = por %p310, %p311
      %p313 = scmp.ne.s32.totalorder %s304, %s305
      %p314 = scmp.eq.s32.totalorder %s37, 0
      %p315 = por %p313, %p314
      %p316 = scmp.ne.s32.totalorder %s304, %s305
      %p317 = scmp.eq.s32.totalorder %s38, 1
      %p318 = por %p316, %p317
      %p320 = scmp.ne.s32.totalorder %s305, %s319
      %p321 = scmp.eq.s32.totalorder %s38, 0
      %p322 = por %p320, %p321
      %s324 = sadd.s32 %s323, 1
      %p327 = scmp.eq.s32.totalorder %s32, 1
      %p328 = scmp.ne.s32.totalorder %s323, %s325
      %p329 = scmp.eq.s32.totalorder %s32, 0
      %p330 = por %p328, %p329
      %p331 = scmp.ne.s32.totalorder %s323, %s325
      %p332 = scmp.eq.s32.totalorder %s37, 1
      %p333 = por %p331, %p332
      %p334 = scmp.ne.s32.totalorder %s325, %s326
      %p335 = scmp.eq.s32.totalorder %s37, 0
      %p336 = por %p334, %p335
      %p337 = scmp.ne.s32.totalorder %s325, %s326
      %p338 = scmp.eq.s32.totalorder %s38, 1
      %p339 = por %p337, %p338
      %p341 = scmp.ne.s32.totalorder %s326, %s340
      %p342 = scmp.eq.s32.totalorder %s38, 0
      %p343 = por %p341, %p342
      %s345 = sadd.s32 %s344, 1
      %p348 = scmp.eq.s32.totalorder %s32, 1
      %p349 = scmp.ne.s32.totalorder %s344, %s346
      %p350 = scmp.eq.s32.totalorder %s32, 0
      %p351 = por %p349, %p350
      %p352 = scmp.ne.s32.totalorder %s344, %s346
      %p353 = scmp.eq.s32.totalorder %s37, 1
      %p354 = por %p352, %p353
      %p355 = scmp.ne.s32.totalorder %s346, %s347
      %p356 = scmp.eq.s32.totalorder %s37, 0
      %p357 = por %p355, %p356
      %p358 = scmp.ne.s32.totalorder %s346, %s347
      %p359 = scmp.eq.s32.totalorder %s38, 1
      %p360 = por %p358, %p359
      %p362 = scmp.ne.s32.totalorder %s347, %s361
      %p363 = scmp.eq.s32.totalorder %s38, 0
      %p364 = por %p362, %p363
      %s366 = sadd.s32 %s365, 1
      %p369 = scmp.eq.s32.totalorder %s32, 1
      %p370 = scmp.ne.s32.totalorder %s365, %s367
      %p371 = scmp.eq.s32.totalorder %s32, 0
      %p372 = por %p370, %p371
      %p373 = scmp.ne.s32.totalorder %s365, %s367
      %p374 = scmp.eq.s32.totalorder %s37, 1
      %p375 = por %p373, %p374
      %p376 = scmp.ne.s32.totalorder %s367, %s368
      %p377 = scmp.eq.s32.totalorder %s37, 0
      %p378 = por %p376, %p377
      %p379 = scmp.ne.s32.totalorder %s367, %s368
      %p380 = scmp.eq.s32.totalorder %s38, 1
      %p381 = por %p379, %p380
      %p383 = scmp.ne.s32.totalorder %s368, %s382
      %p384 = scmp.eq.s32.totalorder %s38, 0
      %p385 = por %p383, %p384
      %s387 = sadd.s32 %s386, 1
      %p390 = scmp.eq.s32.totalorder %s32, 1
      %p391 = scmp.ne.s32.totalorder %s386, %s388
      %p392 = scmp.eq.s32.totalorder %s32, 0
      %p393 = por %p391, %p392
      %p394 = scmp.ne.s32.totalorder %s386, %s388
      %p395 = scmp.eq.s32.totalorder %s37, 1
      %p396 = por %p394, %p395
      %p397 = scmp.ne.s32.totalorder %s388, %s389
      %p398 = scmp.eq.s32.totalorder %s37, 0
      %p399 = por %p397, %p398
      %p400 = scmp.ne.s32.totalorder %s388, %s389
      %p401 = scmp.eq.s32.totalorder %s38, 1
      %p402 = por %p400, %p401
      %p404 = scmp.ne.s32.totalorder %s389, %s403
      %p405 = scmp.eq.s32.totalorder %s38, 0
      %p406 = por %p404, %p405
      %s408 = sadd.s32 %s407, 1
      %p411 = scmp.eq.s32.totalorder %s32, 1
      %p412 = scmp.ne.s32.totalorder %s407, %s409
      %p413 = scmp.eq.s32.totalorder %s32, 0
      %p414 = por %p412, %p413
      %p415 = scmp.ne.s32.totalorder %s407, %s409
      %p416 = scmp.eq.s32.totalorder %s37, 1
      %p417 = por %p415, %p416
      %p418 = scmp.ne.s32.totalorder %s409, %s410
      %p419 = scmp.eq.s32.totalorder %s37, 0
      %p420 = por %p418, %p419
      %p421 = scmp.ne.s32.totalorder %s409, %s410
      %p422 = scmp.eq.s32.totalorder %s38, 1
      %p423 = por %p421, %p422
      %p425 = scmp.ne.s32.totalorder %s410, %s424
      %p426 = scmp.eq.s32.totalorder %s38, 0
      %p427 = por %p425, %p426
      %s428 = ssub.s32 %s32, %s39
      %p429 = scmp.eq.s32.totalorder %s428, 0
      %s431 = sadd.s32 %s430, 1
      %s432 = scalar_select %p429, %s430, %s431
      %p435 = pneg %p429
      %p436 = scmp.eq.s32.totalorder %s32, 1
      %p437 = por %p435, %p436
      %p438 = scmp.ne.s32.totalorder %s430, %s433
      %p439 = scmp.eq.s32.totalorder %s32, 0
      %p440 = por %p438, %p439
      %p441 = scmp.ne.s32.totalorder %s430, %s433
      %p442 = scmp.eq.s32.totalorder %s37, 1
      %p443 = por %p441, %p442
      %p444 = scmp.ne.s32.totalorder %s433, %s434
      %p445 = scmp.eq.s32.totalorder %s37, 0
      %p446 = por %p444, %p445
      %p447 = scmp.ne.s32.totalorder %s433, %s434
      %p448 = scmp.eq.s32.totalorder %s38, 1
      %p449 = por %p447, %p448
      %p451 = scmp.ne.s32.totalorder %s434, %s450
      %p452 = scmp.eq.s32.totalorder %s38, 0
      %p453 = por %p451, %p452
      %s454 = ssub.s32 %s32, %s39
      %p455 = scmp.eq.s32.totalorder %s454, 0
      %s457 = sadd.s32 %s456, 1
      %s458 = scalar_select %p455, %s456, %s457
      %p461 = pneg %p455
      %p462 = scmp.eq.s32.totalorder %s32, 1
      %p463 = por %p461, %p462
      %p464 = scmp.ne.s32.totalorder %s456, %s459
      %p465 = scmp.eq.s32.totalorder %s32, 0
      %p466 = por %p464, %p465
      %p467 = scmp.ne.s32.totalorder %s456, %s459
      %p468 = scmp.eq.s32.totalorder %s37, 1
      %p469 = por %p467, %p468
      %p470 = scmp.ne.s32.totalorder %s459, %s460
      %p471 = scmp.eq.s32.totalorder %s37, 0
      %p472 = por %p470, %p471
      %p473 = scmp.ne.s32.totalorder %s459, %s460
      %p474 = scmp.eq.s32.totalorder %s38, 1
      %p475 = por %p473, %p474
      %p477 = scmp.ne.s32.totalorder %s460, %s476
      %p478 = scmp.eq.s32.totalorder %s38, 0
      %p479 = por %p477, %p478
      %p480 = scmp.le.s32.totalorder 1, %s32
      %p481 = scmp.lt.s32.totalorder %s32, 3
      %p482 = pnand %p480, %p481
      %p483 = pneg %p482
      // Predicated region
      $region9: #{tpu_custom_call.1} parent=5 // pred_check
        _
      $region10: #{tpu_custom_call.1} parent=5 // pred_check_branch
        %485 = sbr.rel (%p482) target = $region12
      $region11: #{tpu_custom_call.1} parent=5 // pred_region
        %s486 = ssub.s32 %s32, 1
        // Predicated region
        $region13: #{tpu_custom_call.1} parent=11 // pred_check
          %p487 = pneg %p105
        $region14: #{tpu_custom_call.1} parent=11 // pred_check_branch
          %489 = sbr.rel (%p487) target = $region16
        $region15: #{tpu_custom_call.1} parent=11 // pred_region
          _
        $region16: #{tpu_custom_call.1} parent=11 // pred_fallthru
          _
        // Predicated region
        $region17: #{tpu_custom_call.1} parent=11 // pred_check
          %p490 = pneg %p126
        $region18: #{tpu_custom_call.1} parent=11 // pred_check_branch
          %492 = sbr.rel (%p490) target = $region20
        $region19: #{tpu_custom_call.1} parent=11 // pred_region
          _
        $region20: #{tpu_custom_call.1} parent=11 // pred_fallthru
          _
        // Predicated region
        $region21: #{tpu_custom_call.1} parent=11 // pred_check
          %p493 = pneg %p147
        $region22: #{tpu_custom_call.1} parent=11 // pred_check_branch
          %495 = sbr.rel (%p493) target = $region24
        $region23: #{tpu_custom_call.1} parent=11 // pred_region
          _
        $region24: #{tpu_custom_call.1} parent=11 // pred_fallthru
          _
        // Predicated region
        $region25: #{tpu_custom_call.1} parent=11 // pred_check
          %p496 = pneg %p168
        $region26: #{tpu_custom_call.1} parent=11 // pred_check_branch
          %498 = sbr.rel (%p496) target = $region28
        $region27: #{tpu_custom_call.1} parent=11 // pred_region
          _
        $region28: #{tpu_custom_call.1} parent=11 // pred_fallthru
          _
        // Predicated region
        $region29: #{tpu_custom_call.1} parent=11 // pred_check
          %p499 = pneg %p189
        $region30: #{tpu_custom_call.1} parent=11 // pred_check_branch
          %501 = sbr.rel (%p499) target = $region32
        $region31: #{tpu_custom_call.1} parent=11 // pred_region
          _
        $region32: #{tpu_custom_call.1} parent=11 // pred_fallthru
          _
        // Predicated region
        $region33: #{tpu_custom_call.1} parent=11 // pred_check
          %p502 = pneg %p210
        $region34: #{tpu_custom_call.1} parent=11 // pred_check_branch
          %504 = sbr.rel (%p502) target = $region36
        $region35: #{tpu_custom_call.1} parent=11 // pred_region
          _
        $region36: #{tpu_custom_call.1} parent=11 // pred_fallthru
          _
        // Predicated region
        $region37: #{tpu_custom_call.1} parent=11 // pred_check
          %p505 = pneg %p231
        $region38: #{tpu_custom_call.1} parent=11 // pred_check_branch
          %507 = sbr.rel (%p505) target = $region40
        $region39: #{tpu_custom_call.1} parent=11 // pred_region
          _
        $region40: #{tpu_custom_call.1} parent=11 // pred_fallthru
          _
        // Predicated region
        $region41: #{tpu_custom_call.1} parent=11 // pred_check
          %p508 = pneg %p252
        $region42: #{tpu_custom_call.1} parent=11 // pred_check_branch
          %510 = sbr.rel (%p508) target = $region44
        $region43: #{tpu_custom_call.1} parent=11 // pred_region
          _
        $region44: #{tpu_custom_call.1} parent=11 // pred_fallthru
          _
        // Predicated region
        $region45: #{tpu_custom_call.1} parent=11 // pred_check
          %p511 = pneg %p273
        $region46: #{tpu_custom_call.1} parent=11 // pred_check_branch
          %513 = sbr.rel (%p511) target = $region48
        $region47: #{tpu_custom_call.1} parent=11 // pred_region
          _
        $region48: #{tpu_custom_call.1} parent=11 // pred_fallthru
          _
        // Predicated region
        $region49: #{tpu_custom_call.1} parent=11 // pred_check
          %p514 = pneg %p294
        $region50: #{tpu_custom_call.1} parent=11 // pred_check_branch
          %516 = sbr.rel (%p514) target = $region52
        $region51: #{tpu_custom_call.1} parent=11 // pred_region
          _
        $region52: #{tpu_custom_call.1} parent=11 // pred_fallthru
          _
        // Predicated region
        $region53: #{tpu_custom_call.1} parent=11 // pred_check
          %p517 = pneg %p315
        $region54: #{tpu_custom_call.1} parent=11 // pred_check_branch
          %519 = sbr.rel (%p517) target = $region56
        $region55: #{tpu_custom_call.1} parent=11 // pred_region
          _
        $region56: #{tpu_custom_call.1} parent=11 // pred_fallthru
          _
        // Predicated region
        $region57: #{tpu_custom_call.1} parent=11 // pred_check
          %p520 = pneg %p336
        $region58: #{tpu_custom_call.1} parent=11 // pred_check_branch
          %522 = sbr.rel (%p520) target = $region60
        $region59: #{tpu_custom_call.1} parent=11 // pred_region
          _
        $region60: #{tpu_custom_call.1} parent=11 // pred_fallthru
          _
        // Predicated region
        $region61: #{tpu_custom_call.1} parent=11 // pred_check
          %p523 = pneg %p357
        $region62: #{tpu_custom_call.1} parent=11 // pred_check_branch
          %525 = sbr.rel (%p523) target = $region64
        $region63: #{tpu_custom_call.1} parent=11 // pred_region
          _
        $region64: #{tpu_custom_call.1} parent=11 // pred_fallthru
          _
        // Predicated region
        $region65: #{tpu_custom_call.1} parent=11 // pred_check
          %p526 = pneg %p378
        $region66: #{tpu_custom_call.1} parent=11 // pred_check_branch
          %528 = sbr.rel (%p526) target = $region68
        $region67: #{tpu_custom_call.1} parent=11 // pred_region
          _
        $region68: #{tpu_custom_call.1} parent=11 // pred_fallthru
          _
        // Predicated region
        $region69: #{tpu_custom_call.1} parent=11 // pred_check
          %p529 = pneg %p399
        $region70: #{tpu_custom_call.1} parent=11 // pred_check_branch
          %531 = sbr.rel (%p529) target = $region72
        $region71: #{tpu_custom_call.1} parent=11 // pred_region
          _
        $region72: #{tpu_custom_call.1} parent=11 // pred_fallthru
          _
        // Predicated region
        $region73: #{tpu_custom_call.1} parent=11 // pred_check
          %p532 = pneg %p420
        $region74: #{tpu_custom_call.1} parent=11 // pred_check_branch
          %534 = sbr.rel (%p532) target = $region76
        $region75: #{tpu_custom_call.1} parent=11 // pred_region
          _
        $region76: #{tpu_custom_call.1} parent=11 // pred_fallthru
          _
      $region12: #{tpu_custom_call.1} parent=5 // pred_fallthru
        _
      %p535 = scmp.lt.s32.totalorder %s32, 2
      // Predicated region
      $region77: #{tpu_custom_call.1} parent=5 // pred_check
        %p536 = pneg %p535
      $region78: #{tpu_custom_call.1} parent=5 // pred_check_branch
        %538 = sbr.rel (%p536) target = $region80
      $region79: #{tpu_custom_call.1} parent=5 // pred_region
        // Predicated region
        $region81: #{tpu_custom_call.1} parent=79 // pred_check
          %p539 = pneg %p52
        $region82: #{tpu_custom_call.1} parent=79 // pred_check_branch
          %541 = sbr.rel (%p539) target = $region84
        $region83: #{tpu_custom_call.1} parent=79 // pred_region
          %p542 = scmp.lt.s32.totalorder %s32, 1
          %s543 = scalar_select %p542, %s32, 1
          %s544 = smul.addr %s543, 4
          %s545 = scalar_lea.vmem %s0, %s544
        $region84: #{tpu_custom_call.1} parent=79 // pred_fallthru
          _
        // Predicated region
        $region85: #{tpu_custom_call.1} parent=79 // pred_check
          %p546 = pneg %p78
        $region86: #{tpu_custom_call.1} parent=79 // pred_check_branch
          %548 = sbr.rel (%p546) target = $region88
        $region87: #{tpu_custom_call.1} parent=79 // pred_region
          %p549 = scmp.lt.s32.totalorder %s32, 1
          %s550 = scalar_select %p549, %s32, 1
          %s551 = smul.addr %s550, 4
          %s552 = scalar_lea.vmem %s1, %s551
        $region88: #{tpu_custom_call.1} parent=79 // pred_fallthru
          _
      $region80: #{tpu_custom_call.1} parent=5 // pred_fallthru
        _
      %p553 = scmp.le.s32.totalorder 1, %s32
      %p554 = scmp.lt.s32.totalorder %s32, 3
      %p555 = pnand %p553, %p554
      %p556 = pneg %p555
      // Predicated region
      $region89: #{tpu_custom_call.1} parent=5 // pred_check
        _
      $region90: #{tpu_custom_call.1} parent=5 // pred_check_branch
        %558 = sbr.rel (%p555) target = $region92
      $region91: #{tpu_custom_call.1} parent=5 // pred_region
        %s559 = ssub.s32 %s32, 1
        %p560 = scmp.lt.s32.totalorder %s37, 1
        %s561 = scalar_select %p560, %s37, 1
        %s562 = smul.addr %s561, 4
        %s563 = scalar_lea.vmem %s0, %s562
        %p564 = pneg %p58
        %p565 = pneg %p55
        %p566 = scmp.lt.s32.totalorder %s37, 1
        %s567 = scalar_select %p566, %s37, 1
        %s568 = smul.addr %s567, 4
        %s569 = scalar_lea.vmem %s1, %s568
        %p570 = pneg %p84
        %p571 = pneg %p81
        %p572 = pneg %p105
        %p573 = pneg %p102
        %p574 = pneg %p126
        %p575 = pneg %p123
        %p576 = pneg %p147
        %p577 = pneg %p144
        %p578 = pneg %p168
        %p579 = pneg %p165
        %p580 = pneg %p189
        %p581 = pneg %p186
        %p582 = pneg %p210
        %p583 = pneg %p207
        %p584 = pneg %p231
        %p585 = pneg %p228
        %p586 = pneg %p252
        %p587 = pneg %p249
        %p588 = pneg %p273
        %p589 = pneg %p270
        %p590 = pneg %p294
        %p591 = pneg %p291
        %p592 = pneg %p315
        %p593 = pneg %p312
        %p594 = pneg %p336
        %p595 = pneg %p333
        %p596 = pneg %p357
        %p597 = pneg %p354
        %p598 = pneg %p378
        %p599 = pneg %p375
        %p600 = pneg %p399
        %p601 = pneg %p396
        %p602 = pneg %p420
        %p603 = pneg %p417
        %p604 = pneg %p446
        %p605 = pneg %p443
        %s606 = sand.u32 %s433, 1
        %s607 = scalar_lea.sflag [#allocation3], %s606
        %s608 = sand.u32 %s433, 1
        %s609 = smul.addr %s608, 4
        %s610 = scalar_lea.vmem [#allocation2], %s609
        %p611 = pneg %p472
        %p612 = pneg %p469
        %s613 = sand.u32 %s459, 1
        %s614 = scalar_lea.sflag [#allocation5], %s613
        %s615 = sand.u32 %s459, 1
        %s616 = scalar_lea.vmem [#allocation4], %s615
        %p617 = scmp.lt.s32.totalorder %s37, 1
        %s618 = scalar_select %p617, %s37, 1
        %s619 = smul.addr %s618, 4
        %s620 = scalar_lea.vmem %s0, %s619
        %p621 = scmp.lt.s32.totalorder %s37, 1
        %s622 = scalar_select %p621, %s37, 1
        %s623 = smul.addr %s622, 4
        %s624 = scalar_lea.vmem %s1, %s623
        %v626 = vld [vmem:[%s620] sm:$0xf]
        %v627 = vld [vmem:[%s624] sm:$0xf]
        %v628 = vld [vmem:[%s2] sm:$0xf]
        %v629 = vld [vmem:[%s2 + $0x4] sm:$0xf]
        %v630 = vld [vmem:[%s2 + $0x8] sm:$0xf]
        %v631 = vld [vmem:[%s2 + $0xc] sm:$0xf]
        %v632 = vld [vmem:[%s2 + $0x10] sm:$0xf]
        %v633 = vld [vmem:[%s2 + $0x14] sm:$0xf]
        %v634 = vld [vmem:[%s2 + $0x18] sm:$0xf]
        %v635 = vld [vmem:[%s2 + $0x1c] sm:$0xf]
        %v636 = vld [vmem:[%s3] sm:$0x1]
        %v637 = vld [vmem:[%s3 + $0x1] sm:$0x1]
        %v640 = vlaneseq
        %v641 = vshrl.u32 %v640, 7
        %v642 = vsub.s32 0, %v641
        %v643 = vrot.slane %v636, %v642
        %v644 = vlaneseq
        %v645 = vshrl.u32 %v644, 7
        %v646 = vsub.s32 0, %v645
        %v647 = vrot.slane %v637, %v646
        %v654 = vunpack.c.l.b16 %v628
        %v655 = vunpack.c.l.b16 %v629
        %v656 = vunpack.c.l.b16 %v630
        %v657 = vunpack.c.l.b16 %v631
        %v658 = vpack.c.b16 %v655, %v654
        %v659 = vpack.c.b16 %v657, %v656
        %vm662 = vcmask 261120
        %v664 = vsel %vm662, %v626, 0
        %666 = vmatprep.subr.bf16.mxu0 0
        %667 = vmatpush1.bf16.msra.mxu0 0
        %668 = vmatprep.subr.bf16.mxu0 0
        %669 = vmatpush1.bf16.msra.mxu0 0
        %670 = vmatprep.subr.bf16.mxu0 0
        %671 = vmatpush1.bf16.msra.mxu0 0
        %672 = vmatprep.subr.bf16.mxu0 0
        %673 = vmatpush1.bf16.msra.mxu0 0
        %674 = vmatprep.subr.bf16.mxu0 0
        %675 = vmatpush1.bf16.msra.mxu0 0
        %676 = vmatprep.subr.bf16.mxu0 0
        %677 = vmatpush1.bf16.msra.mxu0 0
        %678 = vmatprep.subr.bf16.mxu0 0
        %679 = vmatpush1.bf16.msra.mxu0 %v659
        %680 = vmatprep.subr.bf16.mxu0 0
        %681 = vmatpush1.bf16.msra.mxu0 %v658
        %682 = vmatprep.subr.bf16.mxu0 0
        %683 = vmatpush2.bf16.msra.mxu0 0
        %684 = vmatprep.subr.bf16.mxu0 0
        %685 = vmatpush2.bf16.msra.mxu0 0
        %686 = vmatprep.subr.bf16.mxu0 0
        %687 = vmatpush2.bf16.msra.mxu0 0
        %688 = vmatprep.subr.bf16.mxu0 0
        %689 = vmatpush2.bf16.msra.mxu0 0
        %690 = vmatprep.subr.bf16.mxu0 0
        %691 = vmatpush2.bf16.msra.mxu0 0
        %692 = vmatprep.subr.bf16.mxu0 0
        %693 = vmatpush2.bf16.msra.mxu0 0
        %694 = vmatprep.subr.bf16.mxu0 0
        %695 = vmatpush2.bf16.msra.mxu0 0
        %696 = vmatprep.subr.bf16.mxu0 0
        %697 = vmatpush2.bf16.msra.mxu0 0
        %698 = vmatprep.mubr.bf16.mxu0 0
        %699 = vmatmul.mubr.bf16.gmra.mxu0 %v664
        %v700 = vpop.f32.mrf.mxu0
        %v701 = vadd.f32 %v643, %v700
        %v702 = vpop.f32.mrf.mxu0
        %v703 = vpop.f32.mrf.mxu0
        %v704 = vpop.f32.mrf.mxu0
        %705 = vdwg.mxu0
        %v710 = vunpack.c.l.b16 %v632
        %v711 = vunpack.c.l.b16 %v633
        %v712 = vunpack.c.l.b16 %v634
        %v713 = vunpack.c.l.b16 %v635
        %v714 = vpack.c.b16 %v711, %v710
        %v715 = vpack.c.b16 %v713, %v712
        %718 = vmatprep.subr.bf16.mxu0 0
        %719 = vmatpush1.bf16.msra.mxu0 0
        %720 = vmatprep.subr.bf16.mxu0 0
        %721 = vmatpush1.bf16.msra.mxu0 0
        %722 = vmatprep.subr.bf16.mxu0 0
        %723 = vmatpush1.bf16.msra.mxu0 0
        %724 = vmatprep.subr.bf16.mxu0 0
        %725 = vmatpush1.bf16.msra.mxu0 0
        %726 = vmatprep.subr.bf16.mxu0 0
        %727 = vmatpush1.bf16.msra.mxu0 0
        %728 = vmatprep.subr.bf16.mxu0 0
        %729 = vmatpush1.bf16.msra.mxu0 0
        %730 = vmatprep.subr.bf16.mxu0 0
        %731 = vmatpush1.bf16.msra.mxu0 %v715
        %732 = vmatprep.subr.bf16.mxu0 0
        %733 = vmatpush1.bf16.msra.mxu0 %v714
        %734 = vmatprep.subr.bf16.mxu0 0
        %735 = vmatpush2.bf16.msra.mxu0 0
        %736 = vmatprep.subr.bf16.mxu0 0
        %737 = vmatpush2.bf16.msra.mxu0 0
        %738 = vmatprep.subr.bf16.mxu0 0
        %739 = vmatpush2.bf16.msra.mxu0 0
        %740 = vmatprep.subr.bf16.mxu0 0
        %741 = vmatpush2.bf16.msra.mxu0 0
        %742 = vmatprep.subr.bf16.mxu0 0
        %743 = vmatpush2.bf16.msra.mxu0 0
        %744 = vmatprep.subr.bf16.mxu0 0
        %745 = vmatpush2.bf16.msra.mxu0 0
        %746 = vmatprep.subr.bf16.mxu0 0
        %747 = vmatpush2.bf16.msra.mxu0 0
        %748 = vmatprep.subr.bf16.mxu0 0
        %749 = vmatpush2.bf16.msra.mxu0 0
        %750 = vmatprep.mubr.bf16.mxu0 0
        %751 = vmatmul.mubr.bf16.gmra.mxu0 %v664
        %v752 = vpop.f32.mrf.mxu0
        %v753 = vadd.f32 %v647, %v752
        %v754 = vpop.f32.mrf.mxu0
        %v755 = vpop.f32.mrf.mxu0
        %v756 = vpop.f32.mrf.mxu0
        %757 = vdwg.mxu0
        %v758 = vpack.c.bf16 %v701, %v701
        %v759 = vpack.c.bf16 %v753, %v753
        %v760 = vld [vmem:[%s4] sm:$0xf]
        %v761 = vld [vmem:[%s4 + $0x4] sm:$0xf]
        %v762 = vld [vmem:[%s4 + $0x8] sm:$0xf]
        %v763 = vld [vmem:[%s4 + $0xc] sm:$0xf]
        %v764 = vld [vmem:[%s4 + $0x10] sm:$0xf]
        %v765 = vld [vmem:[%s4 + $0x14] sm:$0xf]
        %v766 = vld [vmem:[%s4 + $0x18] sm:$0xf]
        %v767 = vld [vmem:[%s4 + $0x1c] sm:$0xf]
        %v768 = vld [vmem:[%s5] sm:$0x1]
        %v769 = vld [vmem:[%s5 + $0x1] sm:$0x1]
        %v772 = vlaneseq
        %v773 = vshrl.u32 %v772, 7
        %v774 = vsub.s32 0, %v773
        %v775 = vrot.slane %v768, %v774
        %v776 = vlaneseq
        %v777 = vshrl.u32 %v776, 7
        %v778 = vsub.s32 0, %v777
        %v779 = vrot.slane %v769, %v778
        %v786 = vunpack.c.l.b16 %v760
        %v787 = vunpack.c.l.b16 %v761
        %v788 = vunpack.c.l.b16 %v762
        %v789 = vunpack.c.l.b16 %v763
        %v790 = vpack.c.b16 %v787, %v786
        %v791 = vpack.c.b16 %v789, %v788
        %v795 = vsel %vm662, %v627, 0
        %797 = vmatprep.subr.bf16.mxu0 0
        %798 = vmatpush1.bf16.msra.mxu0 0
        %799 = vmatprep.subr.bf16.mxu0 0
        %800 = vmatpush1.bf16.msra.mxu0 0
        %801 = vmatprep.subr.bf16.mxu0 0
        %802 = vmatpush1.bf16.msra.mxu0 0
        %803 = vmatprep.subr.bf16.mxu0 0
        %804 = vmatpush1.bf16.msra.mxu0 0
        %805 = vmatprep.subr.bf16.mxu0 0
        %806 = vmatpush1.bf16.msra.mxu0 0
        %807 = vmatprep.subr.bf16.mxu0 0
        %808 = vmatpush1.bf16.msra.mxu0 0
        %809 = vmatprep.subr.bf16.mxu0 0
        %810 = vmatpush1.bf16.msra.mxu0 %v791
        %811 = vmatprep.subr.bf16.mxu0 0
        %812 = vmatpush1.bf16.msra.mxu0 %v790
        %813 = vmatprep.subr.bf16.mxu0 0
        %814 = vmatpush2.bf16.msra.mxu0 0
        %815 = vmatprep.subr.bf16.mxu0 0
        %816 = vmatpush2.bf16.msra.mxu0 0
        %817 = vmatprep.subr.bf16.mxu0 0
        %818 = vmatpush2.bf16.msra.mxu0 0
        %819 = vmatprep.subr.bf16.mxu0 0
        %820 = vmatpush2.bf16.msra.mxu0 0
        %821 = vmatprep.subr.bf16.mxu0 0
        %822 = vmatpush2.bf16.msra.mxu0 0
        %823 = vmatprep.subr.bf16.mxu0 0
        %824 = vmatpush2.bf16.msra.mxu0 0
        %825 = vmatprep.subr.bf16.mxu0 0
        %826 = vmatpush2.bf16.msra.mxu0 0
        %827 = vmatprep.subr.bf16.mxu0 0
        %828 = vmatpush2.bf16.msra.mxu0 0
        %829 = vmatprep.mubr.bf16.mxu0 0
        %830 = vmatmul.mubr.bf16.gmra.mxu0 %v795
        %v831 = vpop.f32.mrf.mxu0
        %v832 = vadd.f32 %v775, %v831
        %v833 = vpop.f32.mrf.mxu0
        %v834 = vpop.f32.mrf.mxu0
        %v835 = vpop.f32.mrf.mxu0
        %836 = vdwg.mxu0
        %v841 = vunpack.c.l.b16 %v764
        %v842 = vunpack.c.l.b16 %v765
        %v843 = vunpack.c.l.b16 %v766
        %v844 = vunpack.c.l.b16 %v767
        %v845 = vpack.c.b16 %v842, %v841
        %v846 = vpack.c.b16 %v844, %v843
        %849 = vmatprep.subr.bf16.mxu0 0
        %850 = vmatpush1.bf16.msra.mxu0 0
        %851 = vmatprep.subr.bf16.mxu0 0
        %852 = vmatpush1.bf16.msra.mxu0 0
        %853 = vmatprep.subr.bf16.mxu0 0
        %854 = vmatpush1.bf16.msra.mxu0 0
        %855 = vmatprep.subr.bf16.mxu0 0
        %856 = vmatpush1.bf16.msra.mxu0 0
        %857 = vmatprep.subr.bf16.mxu0 0
        %858 = vmatpush1.bf16.msra.mxu0 0
        %859 = vmatprep.subr.bf16.mxu0 0
        %860 = vmatpush1.bf16.msra.mxu0 0
        %861 = vmatprep.subr.bf16.mxu0 0
        %862 = vmatpush1.bf16.msra.mxu0 %v846
        %863 = vmatprep.subr.bf16.mxu0 0
        %864 = vmatpush1.bf16.msra.mxu0 %v845
        %865 = vmatprep.subr.bf16.mxu0 0
        %866 = vmatpush2.bf16.msra.mxu0 0
        %867 = vmatprep.subr.bf16.mxu0 0
        %868 = vmatpush2.bf16.msra.mxu0 0
        %869 = vmatprep.subr.bf16.mxu0 0
        %870 = vmatpush2.bf16.msra.mxu0 0
        %871 = vmatprep.subr.bf16.mxu0 0
        %872 = vmatpush2.bf16.msra.mxu0 0
        %873 = vmatprep.subr.bf16.mxu0 0
        %874 = vmatpush2.bf16.msra.mxu0 0
        %875 = vmatprep.subr.bf16.mxu0 0
        %876 = vmatpush2.bf16.msra.mxu0 0
        %877 = vmatprep.subr.bf16.mxu0 0
        %878 = vmatpush2.bf16.msra.mxu0 0
        %879 = vmatprep.subr.bf16.mxu0 0
        %880 = vmatpush2.bf16.msra.mxu0 0
        %881 = vmatprep.mubr.bf16.mxu0 0
        %882 = vmatmul.mubr.bf16.gmra.mxu0 %v795
        %v883 = vpop.f32.mrf.mxu0
        %v884 = vadd.f32 %v779, %v883
        %v885 = vpop.f32.mrf.mxu0
        %v886 = vpop.f32.mrf.mxu0
        %v887 = vpop.f32.mrf.mxu0
        %888 = vdwg.mxu0
        %v889 = vpack.c.bf16 %v832, %v832
        %v890 = vpack.c.bf16 %v884, %v884
        %v891 = vld [vmem:[%s6] sm:$0xf]
        %v892 = vld [vmem:[%s6 + $0x4] sm:$0xf]
        %v893 = vld [vmem:[%s6 + $0x8] sm:$0xf]
        %v894 = vld [vmem:[%s6 + $0xc] sm:$0xf]
        %v895 = vld [vmem:[%s6 + $0x10] sm:$0xf]
        %v896 = vld [vmem:[%s6 + $0x14] sm:$0xf]
        %v897 = vld [vmem:[%s6 + $0x18] sm:$0xf]
        %v898 = vld [vmem:[%s6 + $0x1c] sm:$0xf]
        %v899 = vld [vmem:[%s7] sm:$0x1]
        %v900 = vld [vmem:[%s7 + $0x1] sm:$0x1]
        %v903 = vlaneseq
        %v904 = vshrl.u32 %v903, 7
        %v905 = vsub.s32 0, %v904
        %v906 = vrot.slane %v899, %v905
        %v907 = vlaneseq
        %v908 = vshrl.u32 %v907, 7
        %v909 = vsub.s32 0, %v908
        %v910 = vrot.slane %v900, %v909
        %v917 = vunpack.c.l.b16 %v891
        %v918 = vunpack.c.l.b16 %v892
        %v919 = vunpack.c.l.b16 %v893
        %v920 = vunpack.c.l.b16 %v894
        %v921 = vpack.c.b16 %v918, %v917
        %v922 = vpack.c.b16 %v920, %v919
        %925 = vmatprep.subr.bf16.mxu0 0
        %926 = vmatpush1.bf16.msra.mxu0 0
        %927 = vmatprep.subr.bf16.mxu0 0
        %928 = vmatpush1.bf16.msra.mxu0 0
        %929 = vmatprep.subr.bf16.mxu0 0
        %930 = vmatpush1.bf16.msra.mxu0 0
        %931 = vmatprep.subr.bf16.mxu0 0
        %932 = vmatpush1.bf16.msra.mxu0 0
        %933 = vmatprep.subr.bf16.mxu0 0
        %934 = vmatpush1.bf16.msra.mxu0 0
        %935 = vmatprep.subr.bf16.mxu0 0
        %936 = vmatpush1.bf16.msra.mxu0 0
        %937 = vmatprep.subr.bf16.mxu0 0
        %938 = vmatpush1.bf16.msra.mxu0 %v922
        %939 = vmatprep.subr.bf16.mxu0 0
        %940 = vmatpush1.bf16.msra.mxu0 %v921
        %941 = vmatprep.subr.bf16.mxu0 0
        %942 = vmatpush2.bf16.msra.mxu0 0
        %943 = vmatprep.subr.bf16.mxu0 0
        %944 = vmatpush2.bf16.msra.mxu0 0
        %945 = vmatprep.subr.bf16.mxu0 0
        %946 = vmatpush2.bf16.msra.mxu0 0
        %947 = vmatprep.subr.bf16.mxu0 0
        %948 = vmatpush2.bf16.msra.mxu0 0
        %949 = vmatprep.subr.bf16.mxu0 0
        %950 = vmatpush2.bf16.msra.mxu0 0
        %951 = vmatprep.subr.bf16.mxu0 0
        %952 = vmatpush2.bf16.msra.mxu0 0
        %953 = vmatprep.subr.bf16.mxu0 0
        %954 = vmatpush2.bf16.msra.mxu0 0
        %955 = vmatprep.subr.bf16.mxu0 0
        %956 = vmatpush2.bf16.msra.mxu0 0
        %957 = vmatprep.mubr.bf16.mxu0 0
        %958 = vmatmul.mubr.bf16.gmra.mxu0 %v795
        %v959 = vpop.f32.mrf.mxu0
        %v960 = vadd.f32 %v906, %v959
        %v961 = vpop.f32.mrf.mxu0
        %v962 = vpop.f32.mrf.mxu0
        %v963 = vpop.f32.mrf.mxu0
        %964 = vdwg.mxu0
        %v969 = vunpack.c.l.b16 %v895
        %v970 = vunpack.c.l.b16 %v896
        %v971 = vunpack.c.l.b16 %v897
        %v972 = vunpack.c.l.b16 %v898
        %v973 = vpack.c.b16 %v970, %v969
        %v974 = vpack.c.b16 %v972, %v971
        %977 = vmatprep.subr.bf16.mxu0 0
        %978 = vmatpush1.bf16.msra.mxu0 0
        %979 = vmatprep.subr.bf16.mxu0 0
        %980 = vmatpush1.bf16.msra.mxu0 0
        %981 = vmatprep.subr.bf16.mxu0 0
        %982 = vmatpush1.bf16.msra.mxu0 0
        %983 = vmatprep.subr.bf16.mxu0 0
        %984 = vmatpush1.bf16.msra.mxu0 0
        %985 = vmatprep.subr.bf16.mxu0 0
        %986 = vmatpush1.bf16.msra.mxu0 0
        %987 = vmatprep.subr.bf16.mxu0 0
        %988 = vmatpush1.bf16.msra.mxu0 0
        %989 = vmatprep.subr.bf16.mxu0 0
        %990 = vmatpush1.bf16.msra.mxu0 %v974
        %991 = vmatprep.subr.bf16.mxu0 0
        %992 = vmatpush1.bf16.msra.mxu0 %v973
        %993 = vmatprep.subr.bf16.mxu0 0
        %994 = vmatpush2.bf16.msra.mxu0 0
        %995 = vmatprep.subr.bf16.mxu0 0
        %996 = vmatpush2.bf16.msra.mxu0 0
        %997 = vmatprep.subr.bf16.mxu0 0
        %998 = vmatpush2.bf16.msra.mxu0 0
        %999 = vmatprep.subr.bf16.mxu0 0
        %1000 = vmatpush2.bf16.msra.mxu0 0
        %1001 = vmatprep.subr.bf16.mxu0 0
        %1002 = vmatpush2.bf16.msra.mxu0 0
        %1003 = vmatprep.subr.bf16.mxu0 0
        %1004 = vmatpush2.bf16.msra.mxu0 0
        %1005 = vmatprep.subr.bf16.mxu0 0
        %1006 = vmatpush2.bf16.msra.mxu0 0
        %1007 = vmatprep.subr.bf16.mxu0 0
        %1008 = vmatpush2.bf16.msra.mxu0 0
        %1009 = vmatprep.mubr.bf16.mxu0 0
        %1010 = vmatmul.mubr.bf16.gmra.mxu0 %v795
        %v1011 = vpop.f32.mrf.mxu0
        %v1012 = vadd.f32 %v910, %v1011
        %v1013 = vpop.f32.mrf.mxu0
        %v1014 = vpop.f32.mrf.mxu0
        %v1015 = vpop.f32.mrf.mxu0
        %1016 = vdwg.mxu0
        %v1017 = vpack.c.bf16 %v960, %v960
        %v1018 = vpack.c.bf16 %v1012, %v1012
        %vm1019 = vcmask 130048
        %v1021 = vsel %vm1019, %v758, 0
        %v1024 = vsel %vm1019, %v889, 0
        %1026 = vmatprep.subr.bf16.mxu0 0
        %1027 = vmatpush1.bf16.xpose.msra.mxu0 0
        %1028 = vmatprep.subr.bf16.mxu0 0
        %1029 = vmatpush1.bf16.xpose.msra.mxu0 0
        %1030 = vmatprep.subr.bf16.mxu0 0
        %1031 = vmatpush1.bf16.xpose.msra.mxu0 0
        %1032 = vmatprep.subr.bf16.mxu0 0
        %1033 = vmatpush1.bf16.xpose.msra.mxu0 0
        %1034 = vmatprep.subr.bf16.mxu0 0
        %1035 = vmatpush1.bf16.xpose.msra.mxu0 0
        %1036 = vmatprep.subr.bf16.mxu0 0
        %1037 = vmatpush1.bf16.xpose.msra.mxu0 0
        %1038 = vmatprep.subr.bf16.mxu0 0
        %1039 = vmatpush1.bf16.xpose.msra.mxu0 0
        %1040 = vmatprep.subr.bf16.mxu0 0
        %1041 = vmatpush1.bf16.xpose.msra.mxu0 %v1024
        %1042 = vmatprep.subr.bf16.mxu0 0
        %1043 = vmatpush2.bf16.xpose.msra.mxu0 0
        %1044 = vmatprep.subr.bf16.mxu0 0
        %1045 = vmatpush2.bf16.xpose.msra.mxu0 0
        %1046 = vmatprep.subr.bf16.mxu0 0
        %1047 = vmatpush2.bf16.xpose.msra.mxu0 0
        %1048 = vmatprep.subr.bf16.mxu0 0
        %1049 = vmatpush2.bf16.xpose.msra.mxu0 0
        %1050 = vmatprep.subr.bf16.mxu0 0
        %1051 = vmatpush2.bf16.xpose.msra.mxu0 0
        %1052 = vmatprep.subr.bf16.mxu0 0
        %1053 = vmatpush2.bf16.xpose.msra.mxu0 0
        %1054 = vmatprep.subr.bf16.mxu0 0
        %1055 = vmatpush2.bf16.xpose.msra.mxu0 0
        %1056 = vmatprep.subr.bf16.mxu0 0
        %1057 = vmatpush2.bf16.xpose.msra.mxu0 0
        %1058 = vmatprep.mubr.bf16.mxu0 0
        %1059 = vmatmul.mubr.bf16.gmra.mxu0 %v1021
        %v1060 = vpop.f32.mrf.mxu0
        %v1061 = vadd.f32 0.0, %v1060
        %v1062 = vpop.f32.mrf.mxu0
        %v1063 = vpop.f32.mrf.mxu0
        %v1064 = vpop.f32.mrf.mxu0
        %1065 = vdwg.mxu0
        %v1067 = vsel %vm1019, %v759, 0
        %v1070 = vsel %vm1019, %v890, 0
        %1072 = vmatprep.subr.bf16.mxu0 0
        %1073 = vmatpush1.bf16.xpose.msra.mxu0 0
        %1074 = vmatprep.subr.bf16.mxu0 0
        %1075 = vmatpush1.bf16.xpose.msra.mxu0 0
        %1076 = vmatprep.subr.bf16.mxu0 0
        %1077 = vmatpush1.bf16.xpose.msra.mxu0 0
        %1078 = vmatprep.subr.bf16.mxu0 0
        %1079 = vmatpush1.bf16.xpose.msra.mxu0 0
        %1080 = vmatprep.subr.bf16.mxu0 0
        %1081 = vmatpush1.bf16.xpose.msra.mxu0 0
        %1082 = vmatprep.subr.bf16.mxu0 0
        %1083 = vmatpush1.bf16.xpose.msra.mxu0 0
        %1084 = vmatprep.subr.bf16.mxu0 0
        %1085 = vmatpush1.bf16.xpose.msra.mxu0 0
        %1086 = vmatprep.subr.bf16.mxu0 0
        %1087 = vmatpush1.bf16.xpose.msra.mxu0 %v1070
        %1088 = vmatprep.subr.bf16.mxu0 0
        %1089 = vmatpush2.bf16.xpose.msra.mxu0 0
        %1090 = vmatprep.subr.bf16.mxu0 0
        %1091 = vmatpush2.bf16.xpose.msra.mxu0 0
        %1092 = vmatprep.subr.bf16.mxu0 0
        %1093 = vmatpush2.bf16.xpose.msra.mxu0 0
        %1094 = vmatprep.subr.bf16.mxu0 0
        %1095 = vmatpush2.bf16.xpose.msra.mxu0 0
        %1096 = vmatprep.subr.bf16.mxu0 0
        %1097 = vmatpush2.bf16.xpose.msra.mxu0 0
        %1098 = vmatprep.subr.bf16.mxu0 0
        %1099 = vmatpush2.bf16.xpose.msra.mxu0 0
        %1100 = vmatprep.subr.bf16.mxu0 0
        %1101 = vmatpush2.bf16.xpose.msra.mxu0 0
        %1102 = vmatprep.subr.bf16.mxu0 0
        %1103 = vmatpush2.bf16.xpose.msra.mxu0 0
        %1104 = vmatprep.mubr.bf16.mxu0 0
        %1105 = vmatmul.mubr.bf16.gmra.mxu0 %v1067
        %v1106 = vpop.f32.mrf.mxu0
        %v1107 = vadd.f32 0.0, %v1106
        %v1108 = vpop.f32.mrf.mxu0
        %v1109 = vpop.f32.mrf.mxu0
        %v1110 = vpop.f32.mrf.mxu0
        %1111 = vdwg.mxu0
        %vm1112 = vcmask 64512
        %v1113 = vsel %vm1112, %v1061, -inf
        %1114 = vmax.xlane.f32.xlu0 %v1113
        %v1115 = vpop.xlane.xlu0 %1114
        %v1116 = vsel %vm1112, %v1107, -inf
        %1117 = vmax.xlane.f32.xlu0 %v1116
        %v1118 = vpop.xlane.xlu0 %1117
        %v1119 = vsub.f32 %v1061, %v1115
        %v1120 = vsub.f32 %v1107, %v1118
        %v1121 = vmul.f32 %v1119, 1.442695
        %v1122 = vpow.pop %v1121
        %v1123 = vmul.f32 %v1120, 1.442695
        %v1124 = vpow.pop %v1123
        %v1125 = vsel %vm1112, %v1122, 0.0
        %1126 = vadd.xlane.f32.xlu0 %v1125
        %v1127 = vpop.xlane.xlu0 %1126
        %v1128 = vsel %vm1112, %v1124, 0.0
        %1129 = vadd.xlane.f32.xlu0 %v1128
        %v1130 = vpop.xlane.xlu0 %1129
        %v1131 = vrcp.pop %v1127
        %v1132 = vrcp.pop %v1130
        %v1133 = vmul.f32 %v1122, %v1131
        %v1134 = vmul.f32 %v1124, %v1132
        %v1135 = vlog2.pop %v1127
        %v1136 = vmul.f32 %v1135, 0.6931472
        %v1137 = vlog2.pop %v1130
        %v1138 = vmul.f32 %v1137, 0.6931472
        %v1139 = vmul.f32 %v1133, %v1119
        %v1140 = vmul.f32 %v1134, %v1120
        %v1141 = vsel %vm1112, %v1139, 0.0
        %1142 = vadd.xlane.f32.xlu0 %v1141
        %v1143 = vpop.xlane.xlu0 %1142
        %v1144 = vsel %vm1112, %v1140, 0.0
        %1145 = vadd.xlane.f32.xlu0 %v1144
        %v1146 = vpop.xlane.xlu0 %1145
        %v1147 = vsub.f32 %v1136, %v1143
        %v1148 = vsub.f32 %v1138, %v1146
        %v1149 = vmax.f32 %v1147, %v1148
        %v1151 = vlaneseq
        %v1152 = vand.u32 %v1151, 127
        %v1153 = vlaneseq
        %v1154 = vshrl.u32 %v1153, 7
        %v1155 = vsub.s32 %v1152, %v1154
        %v1156 = vrot.slane %v1149, %v1155
        %vm1158 = vcmask 57344
        %1159 = vst.msk [vmem:[%s616] sm:$0x1] %vm1158, %v1156
        %v1160 = vpack.c.bf16 %v1133, %v1133
        %v1161 = vpack.c.bf16 %v1134, %v1134
        %v1163 = vsel %vm1112, %v1160, 0
        %vm1165 = vcmask 1043456
        %v1167 = vsel %vm1165, %v1017, 0
        %1169 = vmatprep.subr.bf16.mxu0 0
        %1170 = vmatpush1.bf16.msra.mxu0 0
        %1171 = vmatprep.subr.bf16.mxu0 0
        %1172 = vmatpush1.bf16.msra.mxu0 0
        %1173 = vmatprep.subr.bf16.mxu0 0
        %1174 = vmatpush1.bf16.msra.mxu0 0
        %1175 = vmatprep.subr.bf16.mxu0 0
        %1176 = vmatpush1.bf16.msra.mxu0 0
        %1177 = vmatprep.subr.bf16.mxu0 0
        %1178 = vmatpush1.bf16.msra.mxu0 0
        %1179 = vmatprep.subr.bf16.mxu0 0
        %1180 = vmatpush1.bf16.msra.mxu0 0
        %1181 = vmatprep.subr.bf16.mxu0 0
        %1182 = vmatpush1.bf16.msra.mxu0 0
        %1183 = vmatprep.subr.bf16.mxu0 0
        %1184 = vmatpush1.bf16.msra.mxu0 %v1167
        %1185 = vmatprep.subr.bf16.mxu0 0
        %1186 = vmatpush2.bf16.msra.mxu0 0
        %1187 = vmatprep.subr.bf16.mxu0 0
        %1188 = vmatpush2.bf16.msra.mxu0 0
        %1189 = vmatprep.subr.bf16.mxu0 0
        %1190 = vmatpush2.bf16.msra.mxu0 0
        %1191 = vmatprep.subr.bf16.mxu0 0
        %1192 = vmatpush2.bf16.msra.mxu0 0
        %1193 = vmatprep.subr.bf16.mxu0 0
        %1194 = vmatpush2.bf16.msra.mxu0 0
        %1195 = vmatprep.subr.bf16.mxu0 0
        %1196 = vmatpush2.bf16.msra.mxu0 0
        %1197 = vmatprep.subr.bf16.mxu0 0
        %1198 = vmatpush2.bf16.msra.mxu0 0
        %1199 = vmatprep.subr.bf16.mxu0 0
        %1200 = vmatpush2.bf16.msra.mxu0 0
        %1201 = vmatprep.mubr.bf16.mxu0 0
        %1202 = vmatmul.mubr.bf16.gmra.mxu0 %v1163
        %v1203 = vpop.f32.mrf.mxu0
        %v1204 = vadd.f32 0.0, %v1203
        %v1205 = vpop.f32.mrf.mxu0
        %v1206 = vpop.f32.mrf.mxu0
        %v1207 = vpop.f32.mrf.mxu0
        %1208 = vdwg.mxu0
        %v1210 = vsel %vm1112, %v1161, 0
        %v1213 = vsel %vm1165, %v1018, 0
        %1215 = vmatprep.subr.bf16.mxu0 0
        %1216 = vmatpush1.bf16.msra.mxu0 0
        %1217 = vmatprep.subr.bf16.mxu0 0
        %1218 = vmatpush1.bf16.msra.mxu0 0
        %1219 = vmatprep.subr.bf16.mxu0 0
        %1220 = vmatpush1.bf16.msra.mxu0 0
        %1221 = vmatprep.subr.bf16.mxu0 0
        %1222 = vmatpush1.bf16.msra.mxu0 0
        %1223 = vmatprep.subr.bf16.mxu0 0
        %1224 = vmatpush1.bf16.msra.mxu0 0
        %1225 = vmatprep.subr.bf16.mxu0 0
        %1226 = vmatpush1.bf16.msra.mxu0 0
        %1227 = vmatprep.subr.bf16.mxu0 0
        %1228 = vmatpush1.bf16.msra.mxu0 0
        %1229 = vmatprep.subr.bf16.mxu0 0
        %1230 = vmatpush1.bf16.msra.mxu0 %v1213
        %1231 = vmatprep.subr.bf16.mxu0 0
        %1232 = vmatpush2.bf16.msra.mxu0 0
        %1233 = vmatprep.subr.bf16.mxu0 0
        %1234 = vmatpush2.bf16.msra.mxu0 0
        %1235 = vmatprep.subr.bf16.mxu0 0
        %1236 = vmatpush2.bf16.msra.mxu0 0
        %1237 = vmatprep.subr.bf16.mxu0 0
        %1238 = vmatpush2.bf16.msra.mxu0 0
        %1239 = vmatprep.subr.bf16.mxu0 0
        %1240 = vmatpush2.bf16.msra.mxu0 0
        %1241 = vmatprep.subr.bf16.mxu0 0
        %1242 = vmatpush2.bf16.msra.mxu0 0
        %1243 = vmatprep.subr.bf16.mxu0 0
        %1244 = vmatpush2.bf16.msra.mxu0 0
        %1245 = vmatprep.subr.bf16.mxu0 0
        %1246 = vmatpush2.bf16.msra.mxu0 0
        %1247 = vmatprep.mubr.bf16.mxu0 0
        %1248 = vmatmul.mubr.bf16.gmra.mxu0 %v1210
        %v1249 = vpop.f32.mrf.mxu0
        %v1250 = vadd.f32 0.0, %v1249
        %v1251 = vpop.f32.mrf.mxu0
        %v1252 = vpop.f32.mrf.mxu0
        %v1253 = vpop.f32.mrf.mxu0
        %1254 = vdwg.mxu0
        %v1255 = vpack.c.bf16 %v1204, %v1204
        %v1256 = vpack.c.bf16 %v1250, %v1250
        %v1257 = vld [vmem:[%s8] sm:$0xf]
        %v1258 = vld [vmem:[%s8 + $0x4] sm:$0xf]
        %v1259 = vld [vmem:[%s8 + $0x8] sm:$0xf]
        %v1260 = vld [vmem:[%s8 + $0xc] sm:$0xf]
        %v1263 = vunpack.c.l.b16 %v1257
        %v1264 = vunpack.c.l.b16 %v1258
        %v1265 = vpack.c.b16 %v1264, %v1263
        %v1268 = vsel %vm1019, %v1255, 0
        %1270 = vmatprep.subr.bf16.mxu0 0
        %1271 = vmatpush1.bf16.msra.mxu0 0
        %1272 = vmatprep.subr.bf16.mxu0 0
        %1273 = vmatpush1.bf16.msra.mxu0 0
        %1274 = vmatprep.subr.bf16.mxu0 0
        %1275 = vmatpush1.bf16.msra.mxu0 0
        %1276 = vmatprep.subr.bf16.mxu0 0
        %1277 = vmatpush1.bf16.msra.mxu0 0
        %1278 = vmatprep.subr.bf16.mxu0 0
        %1279 = vmatpush1.bf16.msra.mxu0 0
        %1280 = vmatprep.subr.bf16.mxu0 0
        %1281 = vmatpush1.bf16.msra.mxu0 0
        %1282 = vmatprep.subr.bf16.mxu0 0
        %1283 = vmatpush1.bf16.msra.mxu0 0
        %1284 = vmatprep.subr.bf16.mxu0 0
        %1285 = vmatpush1.bf16.msra.mxu0 %v1265
        %1286 = vmatprep.subr.bf16.mxu0 0
        %1287 = vmatpush2.bf16.msra.mxu0 0
        %1288 = vmatprep.subr.bf16.mxu0 0
        %1289 = vmatpush2.bf16.msra.mxu0 0
        %1290 = vmatprep.subr.bf16.mxu0 0
        %1291 = vmatpush2.bf16.msra.mxu0 0
        %1292 = vmatprep.subr.bf16.mxu0 0
        %1293 = vmatpush2.bf16.msra.mxu0 0
        %1294 = vmatprep.subr.bf16.mxu0 0
        %1295 = vmatpush2.bf16.msra.mxu0 0
        %1296 = vmatprep.subr.bf16.mxu0 0
        %1297 = vmatpush2.bf16.msra.mxu0 0
        %1298 = vmatprep.subr.bf16.mxu0 0
        %1299 = vmatpush2.bf16.msra.mxu0 0
        %1300 = vmatprep.subr.bf16.mxu0 0
        %1301 = vmatpush2.bf16.msra.mxu0 0
        %1302 = vmatprep.mubr.bf16.mxu0 0
        %1303 = vmatmul.mubr.bf16.gmra.mxu0 %v1268
        %v1304 = vpop.f32.mrf.mxu0
        %v1305 = vadd.f32 0.0, %v1304
        %v1306 = vpop.f32.mrf.mxu0
        %v1307 = vpop.f32.mrf.mxu0
        %v1308 = vpop.f32.mrf.mxu0
        %1309 = vdwg.mxu0
        %v1312 = vunpack.c.l.b16 %v1259
        %v1313 = vunpack.c.l.b16 %v1260
        %v1314 = vpack.c.b16 %v1313, %v1312
        %v1317 = vsel %vm1019, %v1256, 0
        %1319 = vmatprep.subr.bf16.mxu0 0
        %1320 = vmatpush1.bf16.msra.mxu0 0
        %1321 = vmatprep.subr.bf16.mxu0 0
        %1322 = vmatpush1.bf16.msra.mxu0 0
        %1323 = vmatprep.subr.bf16.mxu0 0
        %1324 = vmatpush1.bf16.msra.mxu0 0
        %1325 = vmatprep.subr.bf16.mxu0 0
        %1326 = vmatpush1.bf16.msra.mxu0 0
        %1327 = vmatprep.subr.bf16.mxu0 0
        %1328 = vmatpush1.bf16.msra.mxu0 0
        %1329 = vmatprep.subr.bf16.mxu0 0
        %1330 = vmatpush1.bf16.msra.mxu0 0
        %1331 = vmatprep.subr.bf16.mxu0 0
        %1332 = vmatpush1.bf16.msra.mxu0 0
        %1333 = vmatprep.subr.bf16.mxu0 0
        %1334 = vmatpush1.bf16.msra.mxu0 %v1314
        %1335 = vmatprep.subr.bf16.mxu0 0
        %1336 = vmatpush2.bf16.msra.mxu0 0
        %1337 = vmatprep.subr.bf16.mxu0 0
        %1338 = vmatpush2.bf16.msra.mxu0 0
        %1339 = vmatprep.subr.bf16.mxu0 0
        %1340 = vmatpush2.bf16.msra.mxu0 0
        %1341 = vmatprep.subr.bf16.mxu0 0
        %1342 = vmatpush2.bf16.msra.mxu0 0
        %1343 = vmatprep.subr.bf16.mxu0 0
        %1344 = vmatpush2.bf16.msra.mxu0 0
        %1345 = vmatprep.subr.bf16.mxu0 0
        %1346 = vmatpush2.bf16.msra.mxu0 0
        %1347 = vmatprep.subr.bf16.mxu0 0
        %1348 = vmatpush2.bf16.msra.mxu0 0
        %1349 = vmatprep.subr.bf16.mxu0 0
        %1350 = vmatpush2.bf16.msra.mxu0 0
        %1351 = vmatprep.mubr.bf16.mxu0 0
        %1352 = vmatmul.mubr.bf16.gmra.mxu0 %v1317
        %v1353 = vpop.f32.mrf.mxu0
        %v1354 = vadd.f32 0.0, %v1353
        %v1355 = vpop.f32.mrf.mxu0
        %v1356 = vpop.f32.mrf.mxu0
        %v1357 = vpop.f32.mrf.mxu0
        %1358 = vdwg.mxu0
        %v1359 = vsel %vm662, %v1305, 0.0
        %v1360 = vsel %vm662, %v1354, 0.0
        %v1361 = vadd.f32 %v1359, %v1360
        %v1362 = vld [vmem:[%s9] sm:$0x1]
        %v1364 = vlaneseq
        %v1365 = vshrl.u32 %v1364, 7
        %v1366 = vsub.s32 0, %v1365
        %v1367 = vrot.slane %v1362, %v1366
        %v1369 = vadd.f32 %v1361, %v1367
        %v1370 = vsel %vm662, %v1369, 0.0
        %1371 = vadd.xlane.f32.xlu0 %v1370
        %v1372 = vpop.xlane.xlu0 %1371
        %v1373 = vrcp.pop 32.0
        %v1374 = vmul.f32 %v1372, %v1373
        %v1375 = vsub.f32 %v1369, %v1374
        %v1376 = vmul.f32 %v1375, %v1375
        %v1377 = vsel %vm662, %v1376, 0.0
        %1378 = vadd.xlane.f32.xlu0 %v1377
        %v1379 = vpop.xlane.xlu0 %1378
        %v1380 = vmul.f32 %v1379, %v1373
        %v1381 = vadd.f32 %v1380, 1e-05
        %v1382 = vrsqrt.pop %v1381
        %v1383 = vmul.f32 %v1375, %v1382
        %v1384 = vld [vmem:[%s10] sm:$0x1]
        %v1386 = vlaneseq
        %v1387 = vshrl.u32 %v1386, 7
        %v1388 = vsub.s32 0, %v1387
        %v1389 = vrot.slane %v1384, %v1388
        %v1391 = vmul.f32 %v1383, %v1389
        %v1392 = vld [vmem:[%s11] sm:$0x1]
        %v1394 = vlaneseq
        %v1395 = vshrl.u32 %v1394, 7
        %v1396 = vsub.s32 0, %v1395
        %v1397 = vrot.slane %v1392, %v1396
        %v1399 = vadd.f32 %v1391, %v1397
        %v1400 = vpack.c.bf16 %v1399, %v1399
        %v1401 = vld [vmem:[%s12] sm:$0xf]
        %v1402 = vld [vmem:[%s12 + $0x4] sm:$0xf]
        %v1403 = vld [vmem:[%s12 + $0x8] sm:$0xf]
        %v1404 = vld [vmem:[%s12 + $0xc] sm:$0xf]
        %v1405 = vld [vmem:[%s13] sm:$0x1]
        %v1407 = vlaneseq
        %v1408 = vshrl.u32 %v1407, 7
        %v1409 = vsub.s32 0, %v1408
        %v1410 = vrot.slane %v1405, %v1409
        %v1416 = vunpack.c.l.b16 %v1401
        %v1417 = vunpack.c.l.b16 %v1402
        %v1418 = vunpack.c.l.b16 %v1403
        %v1419 = vunpack.c.l.b16 %v1404
        %v1420 = vpack.c.b16 %v1417, %v1416
        %v1421 = vpack.c.b16 %v1419, %v1418
        %v1425 = vsel %vm662, %v1400, 0
        %1427 = vmatprep.subr.bf16.mxu0 0
        %1428 = vmatpush1.bf16.msra.mxu0 0
        %1429 = vmatprep.subr.bf16.mxu0 0
        %1430 = vmatpush1.bf16.msra.mxu0 0
        %1431 = vmatprep.subr.bf16.mxu0 0
        %1432 = vmatpush1.bf16.msra.mxu0 0
        %1433 = vmatprep.subr.bf16.mxu0 0
        %1434 = vmatpush1.bf16.msra.mxu0 0
        %1435 = vmatprep.subr.bf16.mxu0 0
        %1436 = vmatpush1.bf16.msra.mxu0 0
        %1437 = vmatprep.subr.bf16.mxu0 0
        %1438 = vmatpush1.bf16.msra.mxu0 0
        %1439 = vmatprep.subr.bf16.mxu0 0
        %1440 = vmatpush1.bf16.msra.mxu0 %v1421
        %1441 = vmatprep.subr.bf16.mxu0 0
        %1442 = vmatpush1.bf16.msra.mxu0 %v1420
        %1443 = vmatprep.subr.bf16.mxu0 0
        %1444 = vmatpush2.bf16.msra.mxu0 0
        %1445 = vmatprep.subr.bf16.mxu0 0
        %1446 = vmatpush2.bf16.msra.mxu0 0
        %1447 = vmatprep.subr.bf16.mxu0 0
        %1448 = vmatpush2.bf16.msra.mxu0 0
        %1449 = vmatprep.subr.bf16.mxu0 0
        %1450 = vmatpush2.bf16.msra.mxu0 0
        %1451 = vmatprep.subr.bf16.mxu0 0
        %1452 = vmatpush2.bf16.msra.mxu0 0
        %1453 = vmatprep.subr.bf16.mxu0 0
        %1454 = vmatpush2.bf16.msra.mxu0 0
        %1455 = vmatprep.subr.bf16.mxu0 0
        %1456 = vmatpush2.bf16.msra.mxu0 0
        %1457 = vmatprep.subr.bf16.mxu0 0
        %1458 = vmatpush2.bf16.msra.mxu0 0
        %1459 = vmatprep.mubr.bf16.mxu0 0
        %1460 = vmatmul.mubr.bf16.gmra.mxu0 %v1425
        %v1461 = vpop.f32.mrf.mxu0
        %v1462 = vadd.f32 %v1410, %v1461
        %v1463 = vpop.f32.mrf.mxu0
        %v1464 = vpop.f32.mrf.mxu0
        %v1465 = vpop.f32.mrf.mxu0
        %1466 = vdwg.mxu0
        %v1467 = vmax.f32 %v1462, 0.0
        %v1468 = vpack.c.bf16 %v1467, %v1467
        %v1469 = vld [vmem:[%s14] sm:$0xf]
        %v1470 = vld [vmem:[%s14 + $0x4] sm:$0xf]
        %v1471 = vld [vmem:[%s14 + $0x8] sm:$0xf]
        %v1472 = vld [vmem:[%s14 + $0xc] sm:$0xf]
        %v1473 = vld [vmem:[%s14 + $0x10] sm:$0xf]
        %v1474 = vld [vmem:[%s14 + $0x14] sm:$0xf]
        %v1475 = vld [vmem:[%s14 + $0x18] sm:$0xf]
        %v1476 = vld [vmem:[%s14 + $0x1c] sm:$0xf]
        %v1477 = vld [vmem:[%s14 + $0x20] sm:$0xf]
        %v1478 = vld [vmem:[%s14 + $0x24] sm:$0xf]
        %v1479 = vld [vmem:[%s14 + $0x28] sm:$0xf]
        %v1480 = vld [vmem:[%s14 + $0x2c] sm:$0xf]
        %v1481 = vld [vmem:[%s14 + $0x30] sm:$0xf]
        %v1482 = vld [vmem:[%s14 + $0x34] sm:$0xf]
        %v1483 = vld [vmem:[%s14 + $0x38] sm:$0xf]
        %v1484 = vld [vmem:[%s14 + $0x3c] sm:$0xf]
        %v1485 = vld [vmem:[%s15] sm:$0x1]
        %v1487 = vlaneseq
        %v1488 = vshrl.u32 %v1487, 7
        %v1489 = vsub.s32 0, %v1488
        %v1490 = vrot.slane %v1485, %v1489
        %v1508 = vunpack.c.l.b16 %v1469
        %v1509 = vunpack.c.l.b16 %v1470
        %v1510 = vunpack.c.l.b16 %v1471
        %v1511 = vunpack.c.l.b16 %v1472
        %v1512 = vunpack.c.l.b16 %v1473
        %v1513 = vunpack.c.l.b16 %v1474
        %v1514 = vunpack.c.l.b16 %v1475
        %v1515 = vunpack.c.l.b16 %v1476
        %v1516 = vunpack.c.l.b16 %v1477
        %v1517 = vunpack.c.l.b16 %v1478
        %v1518 = vunpack.c.l.b16 %v1479
        %v1519 = vunpack.c.l.b16 %v1480
        %v1520 = vunpack.c.l.b16 %v1481
        %v1521 = vunpack.c.l.b16 %v1482
        %v1522 = vunpack.c.l.b16 %v1483
        %v1523 = vunpack.c.l.b16 %v1484
        %v1524 = vpack.c.b16 %v1509, %v1508
        %v1525 = vpack.c.b16 %v1511, %v1510
        %v1526 = vpack.c.b16 %v1513, %v1512
        %v1527 = vpack.c.b16 %v1515, %v1514
        %v1528 = vpack.c.b16 %v1517, %v1516
        %v1529 = vpack.c.b16 %v1519, %v1518
        %v1530 = vpack.c.b16 %v1521, %v1520
        %v1531 = vpack.c.b16 %v1523, %v1522
        %1540 = vmatprep.subr.bf16.mxu0 0
        %1541 = vmatpush1.bf16.msra.mxu0 %v1531
        %1542 = vmatprep.subr.bf16.mxu0 0
        %1543 = vmatpush1.bf16.msra.mxu0 %v1530
        %1544 = vmatprep.subr.bf16.mxu0 0
        %1545 = vmatpush1.bf16.msra.mxu0 %v1529
        %1546 = vmatprep.subr.bf16.mxu0 0
        %1547 = vmatpush1.bf16.msra.mxu0 %v1528
        %1548 = vmatprep.subr.bf16.mxu0 0
        %1549 = vmatpush1.bf16.msra.mxu0 %v1527
        %1550 = vmatprep.subr.bf16.mxu0 0
        %1551 = vmatpush1.bf16.msra.mxu0 %v1526
        %1552 = vmatprep.subr.bf16.mxu0 0
        %1553 = vmatpush1.bf16.msra.mxu0 %v1525
        %1554 = vmatprep.subr.bf16.mxu0 0
        %1555 = vmatpush1.bf16.msra.mxu0 %v1524
        %1556 = vmatprep.subr.bf16.mxu0 0
        %1557 = vmatpush2.bf16.msra.mxu0 0
        %1558 = vmatprep.subr.bf16.mxu0 0
        %1559 = vmatpush2.bf16.msra.mxu0 0
        %1560 = vmatprep.subr.bf16.mxu0 0
        %1561 = vmatpush2.bf16.msra.mxu0 0
        %1562 = vmatprep.subr.bf16.mxu0 0
        %1563 = vmatpush2.bf16.msra.mxu0 0
        %1564 = vmatprep.subr.bf16.mxu0 0
        %1565 = vmatpush2.bf16.msra.mxu0 0
        %1566 = vmatprep.subr.bf16.mxu0 0
        %1567 = vmatpush2.bf16.msra.mxu0 0
        %1568 = vmatprep.subr.bf16.mxu0 0
        %1569 = vmatpush2.bf16.msra.mxu0 0
        %1570 = vmatprep.subr.bf16.mxu0 0
        %1571 = vmatpush2.bf16.msra.mxu0 0
        %1572 = vmatprep.mubr.bf16.mxu0 0
        %1573 = vmatmul.mubr.bf16.gmra.mxu0 %v1468
        %v1574 = vpop.f32.mrf.mxu0
        %v1575 = vadd.f32 %v1490, %v1574
        %v1576 = vpop.f32.mrf.mxu0
        %v1577 = vpop.f32.mrf.mxu0
        %v1578 = vpop.f32.mrf.mxu0
        %1579 = vdwg.mxu0
        %v1580 = vsel %vm662, %v1575, 0.0
        %1581 = vadd.xlane.f32.xlu0 %v1580
        %v1582 = vpop.xlane.xlu0 %1581
        %v1583 = vmul.f32 %v1582, %v1373
        %v1584 = vsub.f32 %v1575, %v1583
        %v1585 = vmul.f32 %v1584, %v1584
        %v1586 = vsel %vm662, %v1585, 0.0
        %1587 = vadd.xlane.f32.xlu0 %v1586
        %v1588 = vpop.xlane.xlu0 %1587
        %v1589 = vmul.f32 %v1588, %v1373
        %v1590 = vadd.f32 %v1589, 1e-05
        %v1591 = vrsqrt.pop %v1590
        %v1592 = vmul.f32 %v1584, %v1591
        %v1593 = vld [vmem:[%s16] sm:$0x1]
        %v1595 = vlaneseq
        %v1596 = vshrl.u32 %v1595, 7
        %v1597 = vsub.s32 0, %v1596
        %v1598 = vrot.slane %v1593, %v1597
        %v1600 = vmul.f32 %v1592, %v1598
        %v1601 = vld [vmem:[%s17] sm:$0x1]
        %v1603 = vlaneseq
        %v1604 = vshrl.u32 %v1603, 7
        %v1605 = vsub.s32 0, %v1604
        %v1606 = vrot.slane %v1601, %v1605
        %v1608 = vadd.f32 %v1600, %v1606
        %v1609 = vpack.c.bf16 %v1608, %v1608
        %vm1610 = vcmask 257024
        %1611 = vst.msk [vmem:[%s610] sm:$0xf] %vm1610, %v1609
        %s1612 = sand.u32 %s433, 1
        %s1613 = scalar_lea.sflag [#allocation3], %s1612
        %s1614 = sand.u32 %s433, 1
        %s1615 = smul.addr %s1614, 4
        %s1616 = scalar_lea.vmem [#allocation2], %s1615
        %s1617 = sand.u32 %s459, 1
        %s1618 = scalar_lea.sflag [#allocation5], %s1617
        %s1619 = sand.u32 %s459, 1
        %s1620 = scalar_lea.vmem [#allocation4], %s1619
        // Predicated region
        $region93: #{tpu_custom_call.1} parent=91 // pred_check
          %p1621 = pneg %p443
        $region94: #{tpu_custom_call.1} parent=91 // pred_check_branch
          %1623 = sbr.rel (%p1621) target = $region96
        $region95: #{tpu_custom_call.1} parent=91 // pred_region
          %s1625 = ssub.s32 64, 64
          %1626 = vsyncadd %s1613, %s1625
          %s1627 = smul.addr %s37, 64
          %s1628 = scalar_lea.hbm %s18, %s1627
          %s1630 = sshll.u32 %s1616, 4
          %s1631 = int_to_ptr.vmem [resolvable:$true] %s1630
          %1633 = dma.vmem_to_hbm [thread:$0]  %s1631, 64, %s1628, %s1613
        $region96: #{tpu_custom_call.1} parent=91 // pred_fallthru
          _
        // Predicated region
        $region97: #{tpu_custom_call.1} parent=91 // pred_check
          %p1634 = pneg %p469
        $region98: #{tpu_custom_call.1} parent=91 // pred_check_branch
          %1636 = sbr.rel (%p1634) target = $region100
        $region99: #{tpu_custom_call.1} parent=91 // pred_region
          %s1638 = ssub.s32 16, 16
          %1639 = vsyncadd %s1618, %s1638
          %s1640 = smul.addr %s37, 16
          %s1641 = scalar_lea.hbm %s19, %s1640
          %s1643 = sshll.u32 %s1620, 4
          %s1644 = int_to_ptr.vmem [resolvable:$true] %s1643
          %1646 = dma.vmem_to_hbm [thread:$0]  %s1644, 16, %s1641, %s1618
        $region100: #{tpu_custom_call.1} parent=91 // pred_fallthru
          _
      $region92: #{tpu_custom_call.1} parent=5 // pred_fallthru
        _
      %p1647 = scmp.le.s32.totalorder 2, %s32
      // Predicated region
      $region101: #{tpu_custom_call.1} parent=5 // pred_check
        %p1648 = pneg %p1647
      $region102: #{tpu_custom_call.1} parent=5 // pred_check_branch
        %1650 = sbr.rel (%p1648) target = $region104
      $region103: #{tpu_custom_call.1} parent=5 // pred_region
        %s1651 = ssub.s32 %s32, 2
        // Predicated region
        $region105: #{tpu_custom_call.1} parent=103 // pred_check
          %p1652 = pneg %p449
        $region106: #{tpu_custom_call.1} parent=103 // pred_check_branch
          %1654 = sbr.rel (%p1652) target = $region108
        $region107: #{tpu_custom_call.1} parent=103 // pred_region
          %s1655 = sand.u32 %s434, 1
          %s1656 = scalar_lea.sflag [#allocation3], %s1655
          %s1657 = sand.u32 %s434, 1
          %s1658 = smul.addr %s1657, 4
          %s1659 = scalar_lea.vmem [#allocation2], %s1658
          %1660 = dma.done %s1656, 64
        $region108: #{tpu_custom_call.1} parent=103 // pred_fallthru
          _
        // Predicated region
        $region109: #{tpu_custom_call.1} parent=103 // pred_check
          %p1661 = pneg %p475
        $region110: #{tpu_custom_call.1} parent=103 // pred_check_branch
          %1663 = sbr.rel (%p1661) target = $region112
        $region111: #{tpu_custom_call.1} parent=103 // pred_region
          %s1664 = sand.u32 %s460, 1
          %s1665 = scalar_lea.sflag [#allocation5], %s1664
          %s1666 = sand.u32 %s460, 1
          %s1667 = scalar_lea.vmem [#allocation4], %s1666
          %1668 = dma.done %s1665, 16
        $region112: #{tpu_custom_call.1} parent=103 // pred_fallthru
          _
      $region104: #{tpu_custom_call.1} parent=5 // pred_fallthru
        _
    $region6: #{tpu_custom_call.1} parent=1 // loop_footer
      %s36 = sadd.s32 1, %s32
    $region7: #{tpu_custom_call.1} parent=1 // loop_footer_branch
      %31 = sbr.rel target = $region3
    $region8: #{tpu_custom_call.1} parent=1 // loop_exit
      _
    %1669 = vsyncpa [#allocation3], 1
    %s1670 = scalar_lea.sflag [#allocation3], 1
    %1671 = vsyncpa %s1670, 1
    %1672 = vsyncpa [#allocation5], 1
    %s1673 = scalar_lea.sflag [#allocation5], 1
    %1674 = vsyncpa %s1673, 1

// kernel: tpu_custom_call.1
$region0: #{tpu_custom_call.1}
  #allocation0 [shape = 'u32[]', space=smem, size = 0x4, offset = 0x4, fixed_abs, tag = 'smem constant byte address 0x4 - core index']
  #allocation1 [shape = 'u32[144,128]{1,0:T(1,128)}', space=vmem, size = 0x12000, scoped, tag = 'internal scratch']
  %s0 = inlined_call_operand.vmem [shape: bf16[2,8,32], index: 0, kind: input, shape index: {}]
  %s1 = inlined_call_operand.vmem [shape: bf16[2,8,32], index: 1, kind: input, shape index: {}]
  %s2 = inlined_call_operand.vmem [shape: bf16[2,32,16], index: 2, kind: input, shape index: {}]
  %s3 = inlined_call_operand.vmem [shape: f32[2,1,16], index: 3, kind: input, shape index: {}]
  %s4 = inlined_call_operand.vmem [shape: bf16[2,32,16], index: 4, kind: input, shape index: {}]
  %s5 = inlined_call_operand.vmem [shape: f32[2,1,16], index: 5, kind: input, shape index: {}]
  %s6 = inlined_call_operand.vmem [shape: bf16[2,32,16], index: 6, kind: input, shape index: {}]
  %s7 = inlined_call_operand.vmem [shape: f32[2,1,16], index: 7, kind: input, shape index: {}]
  %s8 = inlined_call_operand.vmem [shape: bf16[2,16,32], index: 8, kind: input, shape index: {}]
  %s9 = inlined_call_operand.vmem [shape: f32[1,32], index: 9, kind: input, shape index: {}]
  %s10 = inlined_call_operand.vmem [shape: f32[1,32], index: 10, kind: input, shape index: {}]
  %s11 = inlined_call_operand.vmem [shape: f32[1,32], index: 11, kind: input, shape index: {}]
  %s12 = inlined_call_operand.vmem [shape: bf16[32,128], index: 12, kind: input, shape index: {}]
  %s13 = inlined_call_operand.vmem [shape: f32[1,128], index: 13, kind: input, shape index: {}]
  %s14 = inlined_call_operand.vmem [shape: bf16[128,32], index: 14, kind: input, shape index: {}]
  %s15 = inlined_call_operand.vmem [shape: f32[1,32], index: 15, kind: input, shape index: {}]
  %s16 = inlined_call_operand.vmem [shape: f32[1,32], index: 16, kind: input, shape index: {}]
  %s17 = inlined_call_operand.vmem [shape: f32[1,32], index: 17, kind: input, shape index: {}]
  %s18 = inlined_call_operand.hbm [shape: bf16[2,8,32], index: 18, kind: output, shape index: {0}]
  %s19 = inlined_call_operand.hbm [shape: f32[2,1,8], index: 19, kind: output, shape index: {1}]
  %20 = xla_tuple %s18, %s19
  %s21 = sld [smem:[#allocation0]]
  $region113: #{tpu_custom_call.1} parent=0
    _
  %s23 = ssub.s32 1, %s21
  %s24 = scalar_select 0, %s23, %s21
  $region1: #{tpu_custom_call.1} parent=0
    #allocation2 [shape = 'u8[4096]{0}', space=vmem, size = 0x1000, scoped, tag = 'output window, operand 0']
    #allocation3 [shape = 's32[2]{0}', space=sflag, size = 0x8, scoped, tag = 'scoped memory for tpu_custom_call.1']
    #allocation4 [shape = 'u8[1024]{0}', space=vmem, size = 0x400, scoped, tag = 'output window, operand 1']
    #allocation5 [shape = 's32[2]{0}', space=sflag, size = 0x8, scoped, tag = 'scoped memory for tpu_custom_call.1']
    %25 = vsyncpa [#allocation3], 0
    %s26 = scalar_lea.sflag [#allocation3], 1
    %27 = vsyncpa %s26, 0
    %28 = vsyncpa [#allocation5], 0
    %s29 = scalar_lea.sflag [#allocation5], 1
    %30 = vsyncpa %s29, 0
    loop: start=0, step=1, limit=4
    $region2: #{tpu_custom_call.1} parent=1 // loop_pre_header
      _
    $region3: #{tpu_custom_call.1} parent=1 // loop_header
      %s32 = sphi 0, %s36
      %p33 = scmp.ge.s32.totalorder %s32, 4
      %s42 = sphi 0, %s44
      %s45 = sphi 0, %s42
      %s46 = sphi 0, %s45
      %s62 = sphi 0, %s46
      %s68 = sphi 0, %s70
      %s71 = sphi 0, %s68
      %s72 = sphi 0, %s71
      %s88 = sphi 0, %s72
      %s92 = sphi 0, %s92
      %s94 = sphi 0, %s92
      %s95 = sphi 0, %s94
      %s109 = sphi 0, %s95
      %s113 = sphi 0, %s113
      %s115 = sphi 0, %s113
      %s116 = sphi 0, %s115
      %s130 = sphi 0, %s116
      %s134 = sphi 0, %s134
      %s136 = sphi 0, %s134
      %s137 = sphi 0, %s136
      %s151 = sphi 0, %s137
      %s155 = sphi 0, %s155
      %s157 = sphi 0, %s155
      %s158 = sphi 0, %s157
      %s172 = sphi 0, %s158
      %s176 = sphi 0, %s176
      %s178 = sphi 0, %s176
      %s179 = sphi 0, %s178
      %s193 = sphi 0, %s179
      %s197 = sphi 0, %s197
      %s199 = sphi 0, %s197
      %s200 = sphi 0, %s199
      %s214 = sphi 0, %s200
      %s218 = sphi 0, %s218
      %s220 = sphi 0, %s218
      %s221 = sphi 0, %s220
      %s235 = sphi 0, %s221
      %s239 = sphi 0, %s239
      %s241 = sphi 0, %s239
      %s242 = sphi 0, %s241
      %s256 = sphi 0, %s242
      %s260 = sphi 0, %s260
      %s262 = sphi 0, %s260
      %s263 = sphi 0, %s262
      %s277 = sphi 0, %s263
      %s281 = sphi 0, %s281
      %s283 = sphi 0, %s281
      %s284 = sphi 0, %s283
      %s298 = sphi 0, %s284
      %s302 = sphi 0, %s302
      %s304 = sphi 0, %s302
      %s305 = sphi 0, %s304
      %s319 = sphi 0, %s305
      %s323 = sphi 0, %s323
      %s325 = sphi 0, %s323
      %s326 = sphi 0, %s325
      %s340 = sphi 0, %s326
      %s344 = sphi 0, %s344
      %s346 = sphi 0, %s344
      %s347 = sphi 0, %s346
      %s361 = sphi 0, %s347
      %s365 = sphi 0, %s365
      %s367 = sphi 0, %s365
      %s368 = sphi 0, %s367
      %s382 = sphi 0, %s368
      %s386 = sphi 0, %s386
      %s388 = sphi 0, %s386
      %s389 = sphi 0, %s388
      %s403 = sphi 0, %s389
      %s407 = sphi 0, %s407
      %s409 = sphi 0, %s407
      %s410 = sphi 0, %s409
      %s424 = sphi 0, %s410
      %s430 = sphi 0, %s432
      %s433 = sphi 0, %s430
      %s434 = sphi 0, %s433
      %s450 = sphi 0, %s434
      %s456 = sphi 0, %s458
      %s459 = sphi 0, %s456
      %s460 = sphi 0, %s459
      %s476 = sphi 0, %s460
    $region4: #{tpu_custom_call.1} parent=1 // loop_header_branch
      %35 = sbr.rel (%p33) target = $region8
    $region5: #{tpu_custom_call.1} parent=1 // loop_body
      %s37 = ssub.s32 %s32, 1
      %s38 = ssub.s32 %s32, 2
      %s39 = sadd.s32 %s32, 1
      %s40 = ssub.s32 %s32, %s39
      %p41 = scmp.eq.s32.totalorder %s40, 0
      %s43 = sadd.s32 %s42, 1
      %s44 = scalar_select %p41, %s42, %s43
      %p47 = pneg %p41
      %p48 = scmp.eq.s32.totalorder %s32, 1
      %p49 = por %p47, %p48
      %p50 = scmp.ne.s32.totalorder %s42, %s45
      %p51 = scmp.eq.s32.totalorder %s32, 0
      %p52 = por %p50, %p51
      %p53 = scmp.ne.s32.totalorder %s42, %s45
      %p54 = scmp.eq.s32.totalorder %s37, 1
      %p55 = por %p53, %p54
      %p56 = scmp.ne.s32.totalorder %s45, %s46
      %p57 = scmp.eq.s32.totalorder %s37, 0
      %p58 = por %p56, %p57
      %p59 = scmp.ne.s32.totalorder %s45, %s46
      %p60 = scmp.eq.s32.totalorder %s38, 1
      %p61 = por %p59, %p60
      %p63 = scmp.ne.s32.totalorder %s46, %s62
      %p64 = scmp.eq.s32.totalorder %s38, 0
      %p65 = por %p63, %p64
      %s66 = ssub.s32 %s32, %s39
      %p67 = scmp.eq.s32.totalorder %s66, 0
      %s69 = sadd.s32 %s68, 1
      %s70 = scalar_select %p67, %s68, %s69
      %p73 = pneg %p67
      %p74 = scmp.eq.s32.totalorder %s32, 1
      %p75 = por %p73, %p74
      %p76 = scmp.ne.s32.totalorder %s68, %s71
      %p77 = scmp.eq.s32.totalorder %s32, 0
      %p78 = por %p76, %p77
      %p79 = scmp.ne.s32.totalorder %s68, %s71
      %p80 = scmp.eq.s32.totalorder %s37, 1
      %p81 = por %p79, %p80
      %p82 = scmp.ne.s32.totalorder %s71, %s72
      %p83 = scmp.eq.s32.totalorder %s37, 0
      %p84 = por %p82, %p83
      %p85 = scmp.ne.s32.totalorder %s71, %s72
      %p86 = scmp.eq.s32.totalorder %s38, 1
      %p87 = por %p85, %p86
      %p89 = scmp.ne.s32.totalorder %s72, %s88
      %p90 = scmp.eq.s32.totalorder %s38, 0
      %p91 = por %p89, %p90
      %s93 = sadd.s32 %s92, 1
      %p96 = scmp.eq.s32.totalorder %s32, 1
      %p97 = scmp.ne.s32.totalorder %s92, %s94
      %p98 = scmp.eq.s32.totalorder %s32, 0
      %p99 = por %p97, %p98
      %p100 = scmp.ne.s32.totalorder %s92, %s94
      %p101 = scmp.eq.s32.totalorder %s37, 1
      %p102 = por %p100, %p101
      %p103 = scmp.ne.s32.totalorder %s94, %s95
      %p104 = scmp.eq.s32.totalorder %s37, 0
      %p105 = por %p103, %p104
      %p106 = scmp.ne.s32.totalorder %s94, %s95
      %p107 = scmp.eq.s32.totalorder %s38, 1
      %p108 = por %p106, %p107
      %p110 = scmp.ne.s32.totalorder %s95, %s109
      %p111 = scmp.eq.s32.totalorder %s38, 0
      %p112 = por %p110, %p111
      %s114 = sadd.s32 %s113, 1
      %p117 = scmp.eq.s32.totalorder %s32, 1
      %p118 = scmp.ne.s32.totalorder %s113, %s115
      %p119 = scmp.eq.s32.totalorder %s32, 0
      %p120 = por %p118, %p119
      %p121 = scmp.ne.s32.totalorder %s113, %s115
      %p122 = scmp.eq.s32.totalorder %s37, 1
      %p123 = por %p121, %p122
      %p124 = scmp.ne.s32.totalorder %s115, %s116
      %p125 = scmp.eq.s32.totalorder %s37, 0
      %p126 = por %p124, %p125
      %p127 = scmp.ne.s32.totalorder %s115, %s116
      %p128 = scmp.eq.s32.totalorder %s38, 1
      %p129 = por %p127, %p128
      %p131 = scmp.ne.s32.totalorder %s116, %s130
      %p132 = scmp.eq.s32.totalorder %s38, 0
      %p133 = por %p131, %p132
      %s135 = sadd.s32 %s134, 1
      %p138 = scmp.eq.s32.totalorder %s32, 1
      %p139 = scmp.ne.s32.totalorder %s134, %s136
      %p140 = scmp.eq.s32.totalorder %s32, 0
      %p141 = por %p139, %p140
      %p142 = scmp.ne.s32.totalorder %s134, %s136
      %p143 = scmp.eq.s32.totalorder %s37, 1
      %p144 = por %p142, %p143
      %p145 = scmp.ne.s32.totalorder %s136, %s137
      %p146 = scmp.eq.s32.totalorder %s37, 0
      %p147 = por %p145, %p146
      %p148 = scmp.ne.s32.totalorder %s136, %s137
      %p149 = scmp.eq.s32.totalorder %s38, 1
      %p150 = por %p148, %p149
      %p152 = scmp.ne.s32.totalorder %s137, %s151
      %p153 = scmp.eq.s32.totalorder %s38, 0
      %p154 = por %p152, %p153
      %s156 = sadd.s32 %s155, 1
      %p159 = scmp.eq.s32.totalorder %s32, 1
      %p160 = scmp.ne.s32.totalorder %s155, %s157
      %p161 = scmp.eq.s32.totalorder %s32, 0
      %p162 = por %p160, %p161
      %p163 = scmp.ne.s32.totalorder %s155, %s157
      %p164 = scmp.eq.s32.totalorder %s37, 1
      %p165 = por %p163, %p164
      %p166 = scmp.ne.s32.totalorder %s157, %s158
      %p167 = scmp.eq.s32.totalorder %s37, 0
      %p168 = por %p166, %p167
      %p169 = scmp.ne.s32.totalorder %s157, %s158
      %p170 = scmp.eq.s32.totalorder %s38, 1
      %p171 = por %p169, %p170
      %p173 = scmp.ne.s32.totalorder %s158, %s172
      %p174 = scmp.eq.s32.totalorder %s38, 0
      %p175 = por %p173, %p174
      %s177 = sadd.s32 %s176, 1
      %p180 = scmp.eq.s32.totalorder %s32, 1
      %p181 = scmp.ne.s32.totalorder %s176, %s178
      %p182 = scmp.eq.s32.totalorder %s32, 0
      %p183 = por %p181, %p182
      %p184 = scmp.ne.s32.totalorder %s176, %s178
      %p185 = scmp.eq.s32.totalorder %s37, 1
      %p186 = por %p184, %p185
      %p187 = scmp.ne.s32.totalorder %s178, %s179
      %p188 = scmp.eq.s32.totalorder %s37, 0
      %p189 = por %p187, %p188
      %p190 = scmp.ne.s32.totalorder %s178, %s179
      %p191 = scmp.eq.s32.totalorder %s38, 1
      %p192 = por %p190, %p191
      %p194 = scmp.ne.s32.totalorder %s179, %s193
      %p195 = scmp.eq.s32.totalorder %s38, 0
      %p196 = por %p194, %p195
      %s198 = sadd.s32 %s197, 1
      %p201 = scmp.eq.s32.totalorder %s32, 1
      %p202 = scmp.ne.s32.totalorder %s197, %s199
      %p203 = scmp.eq.s32.totalorder %s32, 0
      %p204 = por %p202, %p203
      %p205 = scmp.ne.s32.totalorder %s197, %s199
      %p206 = scmp.eq.s32.totalorder %s37, 1
      %p207 = por %p205, %p206
      %p208 = scmp.ne.s32.totalorder %s199, %s200
      %p209 = scmp.eq.s32.totalorder %s37, 0
      %p210 = por %p208, %p209
      %p211 = scmp.ne.s32.totalorder %s199, %s200
      %p212 = scmp.eq.s32.totalorder %s38, 1
      %p213 = por %p211, %p212
      %p215 = scmp.ne.s32.totalorder %s200, %s214
      %p216 = scmp.eq.s32.totalorder %s38, 0
      %p217 = por %p215, %p216
      %s219 = sadd.s32 %s218, 1
      %p222 = scmp.eq.s32.totalorder %s32, 1
      %p223 = scmp.ne.s32.totalorder %s218, %s220
      %p224 = scmp.eq.s32.totalorder %s32, 0
      %p225 = por %p223, %p224
      %p226 = scmp.ne.s32.totalorder %s218, %s220
      %p227 = scmp.eq.s32.totalorder %s37, 1
      %p228 = por %p226, %p227
      %p229 = scmp.ne.s32.totalorder %s220, %s221
      %p230 = scmp.eq.s32.totalorder %s37, 0
      %p231 = por %p229, %p230
      %p232 = scmp.ne.s32.totalorder %s220, %s221
      %p233 = scmp.eq.s32.totalorder %s38, 1
      %p234 = por %p232, %p233
      %p236 = scmp.ne.s32.totalorder %s221, %s235
      %p237 = scmp.eq.s32.totalorder %s38, 0
      %p238 = por %p236, %p237
      %s240 = sadd.s32 %s239, 1
      %p243 = scmp.eq.s32.totalorder %s32, 1
      %p244 = scmp.ne.s32.totalorder %s239, %s241
      %p245 = scmp.eq.s32.totalorder %s32, 0
      %p246 = por %p244, %p245
      %p247 = scmp.ne.s32.totalorder %s239, %s241
      %p248 = scmp.eq.s32.totalorder %s37, 1
      %p249 = por %p247, %p248
      %p250 = scmp.ne.s32.totalorder %s241, %s242
      %p251 = scmp.eq.s32.totalorder %s37, 0
      %p252 = por %p250, %p251
      %p253 = scmp.ne.s32.totalorder %s241, %s242
      %p254 = scmp.eq.s32.totalorder %s38, 1
      %p255 = por %p253, %p254
      %p257 = scmp.ne.s32.totalorder %s242, %s256
      %p258 = scmp.eq.s32.totalorder %s38, 0
      %p259 = por %p257, %p258
      %s261 = sadd.s32 %s260, 1
      %p264 = scmp.eq.s32.totalorder %s32, 1
      %p265 = scmp.ne.s32.totalorder %s260, %s262
      %p266 = scmp.eq.s32.totalorder %s32, 0
      %p267 = por %p265, %p266
      %p268 = scmp.ne.s32.totalorder %s260, %s262
      %p269 = scmp.eq.s32.totalorder %s37, 1
      %p270 = por %p268, %p269
      %p271 = scmp.ne.s32.totalorder %s262, %s263
      %p272 = scmp.eq.s32.totalorder %s37, 0
      %p273 = por %p271, %p272
      %p274 = scmp.ne.s32.totalorder %s262, %s263
      %p275 = scmp.eq.s32.totalorder %s38, 1
      %p276 = por %p274, %p275
      %p278 = scmp.ne.s32.totalorder %s263, %s277
      %p279 = scmp.eq.s32.totalorder %s38, 0
      %p280 = por %p278, %p279
      %s282 = sadd.s32 %s281, 1
      %p285 = scmp.eq.s32.totalorder %s32, 1
      %p286 = scmp.ne.s32.totalorder %s281, %s283
      %p287 = scmp.eq.s32.totalorder %s32, 0
      %p288 = por %p286, %p287
      %p289 = scmp.ne.s32.totalorder %s281, %s283
      %p290 = scmp.eq.s32.totalorder %s37, 1
      %p291 = por %p289, %p290
      %p292 = scmp.ne.s32.totalorder %s283, %s284
      %p293 = scmp.eq.s32.totalorder %s37, 0
      %p294 = por %p292, %p293
      %p295 = scmp.ne.s32.totalorder %s283, %s284
      %p296 = scmp.eq.s32.totalorder %s38, 1
      %p297 = por %p295, %p296
      %p299 = scmp.ne.s32.totalorder %s284, %s298
      %p300 = scmp.eq.s32.totalorder %s38, 0
      %p301 = por %p299, %p300
      %s303 = sadd.s32 %s302, 1
      %p306 = scmp.eq.s32.totalorder %s32, 1
      %p307 = scmp.ne.s32.totalorder %s302, %s304
      %p308 = scmp.eq.s32.totalorder %s32, 0
      %p309 = por %p307, %p308
      %p310 = scmp.ne.s32.totalorder %s302, %s304
      %p311 = scmp.eq.s32.totalorder %s37, 1
      %p312 = por %p310, %p311
      %p313 = scmp.ne.s32.totalorder %s304, %s305
      %p314 = scmp.eq.s32.totalorder %s37, 0
      %p315 = por %p313, %p314
      %p316 = scmp.ne.s32.totalorder %s304, %s305
      %p317 = scmp.eq.s32.totalorder %s38, 1
      %p318 = por %p316, %p317
      %p320 = scmp.ne.s32.totalorder %s305, %s319
      %p321 = scmp.eq.s32.totalorder %s38, 0
      %p322 = por %p320, %p321
      %s324 = sadd.s32 %s323, 1
      %p327 = scmp.eq.s32.totalorder %s32, 1
      %p328 = scmp.ne.s32.totalorder %s323, %s325
      %p329 = scmp.eq.s32.totalorder %s32, 0
      %p330 = por %p328, %p329
      %p331 = scmp.ne.s32.totalorder %s323, %s325
      %p332 = scmp.eq.s32.totalorder %s37, 1
      %p333 = por %p331, %p332
      %p334 = scmp.ne.s32.totalorder %s325, %s326
      %p335 = scmp.eq.s32.totalorder %s37, 0
      %p336 = por %p334, %p335
      %p337 = scmp.ne.s32.totalorder %s325, %s326
      %p338 = scmp.eq.s32.totalorder %s38, 1
      %p339 = por %p337, %p338
      %p341 = scmp.ne.s32.totalorder %s326, %s340
      %p342 = scmp.eq.s32.totalorder %s38, 0
      %p343 = por %p341, %p342
      %s345 = sadd.s32 %s344, 1
      %p348 = scmp.eq.s32.totalorder %s32, 1
      %p349 = scmp.ne.s32.totalorder %s344, %s346
      %p350 = scmp.eq.s32.totalorder %s32, 0
      %p351 = por %p349, %p350
      %p352 = scmp.ne.s32.totalorder %s344, %s346
      %p353 = scmp.eq.s32.totalorder %s37, 1
      %p354 = por %p352, %p353
      %p355 = scmp.ne.s32.totalorder %s346, %s347
      %p356 = scmp.eq.s32.totalorder %s37, 0
      %p357 = por %p355, %p356
      %p358 = scmp.ne.s32.totalorder %s346, %s347
      %p359 = scmp.eq.s32.totalorder %s38, 1
      %p360 = por %p358, %p359
      %p362 = scmp.ne.s32.totalorder %s347, %s361
      %p363 = scmp.eq.s32.totalorder %s38, 0
      %p364 = por %p362, %p363
      %s366 = sadd.s32 %s365, 1
      %p369 = scmp.eq.s32.totalorder %s32, 1
      %p370 = scmp.ne.s32.totalorder %s365, %s367
      %p371 = scmp.eq.s32.totalorder %s32, 0
      %p372 = por %p370, %p371
      %p373 = scmp.ne.s32.totalorder %s365, %s367
      %p374 = scmp.eq.s32.totalorder %s37, 1
      %p375 = por %p373, %p374
      %p376 = scmp.ne.s32.totalorder %s367, %s368
      %p377 = scmp.eq.s32.totalorder %s37, 0
      %p378 = por %p376, %p377
      %p379 = scmp.ne.s32.totalorder %s367, %s368
      %p380 = scmp.eq.s32.totalorder %s38, 1
      %p381 = por %p379, %p380
      %p383 = scmp.ne.s32.totalorder %s368, %s382
      %p384 = scmp.eq.s32.totalorder %s38, 0
      %p385 = por %p383, %p384
      %s387 = sadd.s32 %s386, 1
      %p390 = scmp.eq.s32.totalorder %s32, 1
      %p391 = scmp.ne.s32.totalorder %s386, %s388
      %p392 = scmp.eq.s32.totalorder %s32, 0
      %p393 = por %p391, %p392
      %p394 = scmp.ne.s32.totalorder %s386, %s388
      %p395 = scmp.eq.s32.totalorder %s37, 1
      %p396 = por %p394, %p395
      %p397 = scmp.ne.s32.totalorder %s388, %s389
      %p398 = scmp.eq.s32.totalorder %s37, 0
      %p399 = por %p397, %p398
      %p400 = scmp.ne.s32.totalorder %s388, %s389
      %p401 = scmp.eq.s32.totalorder %s38, 1
      %p402 = por %p400, %p401
      %p404 = scmp.ne.s32.totalorder %s389, %s403
      %p405 = scmp.eq.s32.totalorder %s38, 0
      %p406 = por %p404, %p405
      %s408 = sadd.s32 %s407, 1
      %p411 = scmp.eq.s32.totalorder %s32, 1
      %p412 = scmp.ne.s32.totalorder %s407, %s409
      %p413 = scmp.eq.s32.totalorder %s32, 0
      %p414 = por %p412, %p413
      %p415 = scmp.ne.s32.totalorder %s407, %s409
      %p416 = scmp.eq.s32.totalorder %s37, 1
      %p417 = por %p415, %p416
      %p418 = scmp.ne.s32.totalorder %s409, %s410
      %p419 = scmp.eq.s32.totalorder %s37, 0
      %p420 = por %p418, %p419
      %p421 = scmp.ne.s32.totalorder %s409, %s410
      %p422 = scmp.eq.s32.totalorder %s38, 1
      %p423 = por %p421, %p422
      %p425 = scmp.ne.s32.totalorder %s410, %s424
      %p426 = scmp.eq.s32.totalorder %s38, 0
      %p427 = por %p425, %p426
      %s428 = ssub.s32 %s32, %s39
      %p429 = scmp.eq.s32.totalorder %s428, 0
      %s431 = sadd.s32 %s430, 1
      %s432 = scalar_select %p429, %s430, %s431
      %p435 = pneg %p429
      %p436 = scmp.eq.s32.totalorder %s32, 1
      %p437 = por %p435, %p436
      %p438 = scmp.ne.s32.totalorder %s430, %s433
      %p439 = scmp.eq.s32.totalorder %s32, 0
      %p440 = por %p438, %p439
      %p441 = scmp.ne.s32.totalorder %s430, %s433
      %p442 = scmp.eq.s32.totalorder %s37, 1
      %p443 = por %p441, %p442
      %p444 = scmp.ne.s32.totalorder %s433, %s434
      %p445 = scmp.eq.s32.totalorder %s37, 0
      %p446 = por %p444, %p445
      %p447 = scmp.ne.s32.totalorder %s433, %s434
      %p448 = scmp.eq.s32.totalorder %s38, 1
      %p449 = por %p447, %p448
      %p451 = scmp.ne.s32.totalorder %s434, %s450
      %p452 = scmp.eq.s32.totalorder %s38, 0
      %p453 = por %p451, %p452
      %s454 = ssub.s32 %s32, %s39
      %p455 = scmp.eq.s32.totalorder %s454, 0
      %s457 = sadd.s32 %s456, 1
      %s458 = scalar_select %p455, %s456, %s457
      %p461 = pneg %p455
      %p462 = scmp.eq.s32.totalorder %s32, 1
      %p463 = por %p461, %p462
      %p464 = scmp.ne.s32.totalorder %s456, %s459
      %p465 = scmp.eq.s32.totalorder %s32, 0
      %p466 = por %p464, %p465
      %p467 = scmp.ne.s32.totalorder %s456, %s459
      %p468 = scmp.eq.s32.totalorder %s37, 1
      %p469 = por %p467, %p468
      %p470 = scmp.ne.s32.totalorder %s459, %s460
      %p471 = scmp.eq.s32.totalorder %s37, 0
      %p472 = por %p470, %p471
      %p473 = scmp.ne.s32.totalorder %s459, %s460
      %p474 = scmp.eq.s32.totalorder %s38, 1
      %p475 = por %p473, %p474
      %p477 = scmp.ne.s32.totalorder %s460, %s476
      %p478 = scmp.eq.s32.totalorder %s38, 0
      %p479 = por %p477, %p478
      %p480 = scmp.le.s32.totalorder 1, %s32
      %p481 = scmp.lt.s32.totalorder %s32, 3
      %p482 = pnand %p480, %p481
      %p483 = pneg %p482
      // Predicated region
      $region9: #{tpu_custom_call.1} parent=5 // pred_check
        _
      $region10: #{tpu_custom_call.1} parent=5 // pred_check_branch
        %485 = sbr.rel (%p482) target = $region12
      $region11: #{tpu_custom_call.1} parent=5 // pred_region
        %s486 = ssub.s32 %s32, 1
        // Predicated region
        $region13: #{tpu_custom_call.1} parent=11 // pred_check
          %p487 = pneg %p105
        $region14: #{tpu_custom_call.1} parent=11 // pred_check_branch
          %489 = sbr.rel (%p487) target = $region16
        $region15: #{tpu_custom_call.1} parent=11 // pred_region
          _
        $region16: #{tpu_custom_call.1} parent=11 // pred_fallthru
          _
        // Predicated region
        $region17: #{tpu_custom_call.1} parent=11 // pred_check
          %p490 = pneg %p126
        $region18: #{tpu_custom_call.1} parent=11 // pred_check_branch
          %492 = sbr.rel (%p490) target = $region20
        $region19: #{tpu_custom_call.1} parent=11 // pred_region
          _
        $region20: #{tpu_custom_call.1} parent=11 // pred_fallthru
          _
        // Predicated region
        $region21: #{tpu_custom_call.1} parent=11 // pred_check
          %p493 = pneg %p147
        $region22: #{tpu_custom_call.1} parent=11 // pred_check_branch
          %495 = sbr.rel (%p493) target = $region24
        $region23: #{tpu_custom_call.1} parent=11 // pred_region
          _
        $region24: #{tpu_custom_call.1} parent=11 // pred_fallthru
          _
        // Predicated region
        $region25: #{tpu_custom_call.1} parent=11 // pred_check
          %p496 = pneg %p168
        $region26: #{tpu_custom_call.1} parent=11 // pred_check_branch
          %498 = sbr.rel (%p496) target = $region28
        $region27: #{tpu_custom_call.1} parent=11 // pred_region
          _
        $region28: #{tpu_custom_call.1} parent=11 // pred_fallthru
          _
        // Predicated region
        $region29: #{tpu_custom_call.1} parent=11 // pred_check
          %p499 = pneg %p189
        $region30: #{tpu_custom_call.1} parent=11 // pred_check_branch
          %501 = sbr.rel (%p499) target = $region32
        $region31: #{tpu_custom_call.1} parent=11 // pred_region
          _
        $region32: #{tpu_custom_call.1} parent=11 // pred_fallthru
          _
        // Predicated region
        $region33: #{tpu_custom_call.1} parent=11 // pred_check
          %p502 = pneg %p210
        $region34: #{tpu_custom_call.1} parent=11 // pred_check_branch
          %504 = sbr.rel (%p502) target = $region36
        $region35: #{tpu_custom_call.1} parent=11 // pred_region
          _
        $region36: #{tpu_custom_call.1} parent=11 // pred_fallthru
          _
        // Predicated region
        $region37: #{tpu_custom_call.1} parent=11 // pred_check
          %p505 = pneg %p231
        $region38: #{tpu_custom_call.1} parent=11 // pred_check_branch
          %507 = sbr.rel (%p505) target = $region40
        $region39: #{tpu_custom_call.1} parent=11 // pred_region
          _
        $region40: #{tpu_custom_call.1} parent=11 // pred_fallthru
          _
        // Predicated region
        $region41: #{tpu_custom_call.1} parent=11 // pred_check
          %p508 = pneg %p252
        $region42: #{tpu_custom_call.1} parent=11 // pred_check_branch
          %510 = sbr.rel (%p508) target = $region44
        $region43: #{tpu_custom_call.1} parent=11 // pred_region
          _
        $region44: #{tpu_custom_call.1} parent=11 // pred_fallthru
          _
        // Predicated region
        $region45: #{tpu_custom_call.1} parent=11 // pred_check
          %p511 = pneg %p273
        $region46: #{tpu_custom_call.1} parent=11 // pred_check_branch
          %513 = sbr.rel (%p511) target = $region48
        $region47: #{tpu_custom_call.1} parent=11 // pred_region
          _
        $region48: #{tpu_custom_call.1} parent=11 // pred_fallthru
          _
        // Predicated region
        $region49: #{tpu_custom_call.1} parent=11 // pred_check
          %p514 = pneg %p294
        $region50: #{tpu_custom_call.1} parent=11 // pred_check_branch
          %516 = sbr.rel (%p514) target = $region52
        $region51: #{tpu_custom_call.1} parent=11 // pred_region
          _
        $region52: #{tpu_custom_call.1} parent=11 // pred_fallthru
          _
        // Predicated region
        $region53: #{tpu_custom_call.1} parent=11 // pred_check
          %p517 = pneg %p315
        $region54: #{tpu_custom_call.1} parent=11 // pred_check_branch
          %519 = sbr.rel (%p517) target = $region56
        $region55: #{tpu_custom_call.1} parent=11 // pred_region
          _
        $region56: #{tpu_custom_call.1} parent=11 // pred_fallthru
          _
        // Predicated region
        $region57: #{tpu_custom_call.1} parent=11 // pred_check
          %p520 = pneg %p336
        $region58: #{tpu_custom_call.1} parent=11 // pred_check_branch
          %522 = sbr.rel (%p520) target = $region60
        $region59: #{tpu_custom_call.1} parent=11 // pred_region
          _
        $region60: #{tpu_custom_call.1} parent=11 // pred_fallthru
          _
        // Predicated region
        $region61: #{tpu_custom_call.1} parent=11 // pred_check
          %p523 = pneg %p357
        $region62: #{tpu_custom_call.1} parent=11 // pred_check_branch
          %525 = sbr.rel (%p523) target = $region64
        $region63: #{tpu_custom_call.1} parent=11 // pred_region
          _
        $region64: #{tpu_custom_call.1} parent=11 // pred_fallthru
          _
        // Predicated region
        $region65: #{tpu_custom_call.1} parent=11 // pred_check
          %p526 = pneg %p378
        $region66: #{tpu_custom_call.1} parent=11 // pred_check_branch
          %528 = sbr.rel (%p526) target = $region68
        $region67: #{tpu_custom_call.1} parent=11 // pred_region
          _
        $region68: #{tpu_custom_call.1} parent=11 // pred_fallthru
          _
        // Predicated region
        $region69: #{tpu_custom_call.1} parent=11 // pred_check
          %p529 = pneg %p399
        $region70: #{tpu_custom_call.1} parent=11 // pred_check_branch
          %531 = sbr.rel (%p529) target = $region72
        $region71: #{tpu_custom_call.1} parent=11 // pred_region
          _
        $region72: #{tpu_custom_call.1} parent=11 // pred_fallthru
          _
        // Predicated region
        $region73: #{tpu_custom_call.1} parent=11 // pred_check
          %p532 = pneg %p420
        $region74: #{tpu_custom_call.1} parent=11 // pred_check_branch
          %534 = sbr.rel (%p532) target = $region76
        $region75: #{tpu_custom_call.1} parent=11 // pred_region
          _
        $region76: #{tpu_custom_call.1} parent=11 // pred_fallthru
          _
      $region12: #{tpu_custom_call.1} parent=5 // pred_fallthru
        _
      %p535 = scmp.lt.s32.totalorder %s32, 2
      // Predicated region
      $region77: #{tpu_custom_call.1} parent=5 // pred_check
        %p536 = pneg %p535
      $region78: #{tpu_custom_call.1} parent=5 // pred_check_branch
        %538 = sbr.rel (%p536) target = $region80
      $region79: #{tpu_custom_call.1} parent=5 // pred_region
        // Predicated region
        $region81: #{tpu_custom_call.1} parent=79 // pred_check
          %p539 = pneg %p52
        $region82: #{tpu_custom_call.1} parent=79 // pred_check_branch
          %541 = sbr.rel (%p539) target = $region84
        $region83: #{tpu_custom_call.1} parent=79 // pred_region
          %p542 = scmp.lt.s32.totalorder %s32, 1
          %s543 = scalar_select %p542, %s32, 1
          %s544 = smul.addr %s543, 4
          %s545 = scalar_lea.vmem %s0, %s544
        $region84: #{tpu_custom_call.1} parent=79 // pred_fallthru
          _
        // Predicated region
        $region85: #{tpu_custom_call.1} parent=79 // pred_check
          %p546 = pneg %p78
        $region86: #{tpu_custom_call.1} parent=79 // pred_check_branch
          %548 = sbr.rel (%p546) target = $region88
        $region87: #{tpu_custom_call.1} parent=79 // pred_region
          %p549 = scmp.lt.s32.totalorder %s32, 1
          %s550 = scalar_select %p549, %s32, 1
          %s551 = smul.addr %s550, 4
          %s552 = scalar_lea.vmem %s1, %s551
        $region88: #{tpu_custom_call.1} parent=79 // pred_fallthru
          _
      $region80: #{tpu_custom_call.1} parent=5 // pred_fallthru
        _
      %p553 = scmp.le.s32.totalorder 1, %s32
      %p554 = scmp.lt.s32.totalorder %s32, 3
      %p555 = pnand %p553, %p554
      %p556 = pneg %p555
      // Predicated region
      $region89: #{tpu_custom_call.1} parent=5 // pred_check
        _
      $region90: #{tpu_custom_call.1} parent=5 // pred_check_branch
        %558 = sbr.rel (%p555) target = $region92
      $region91: #{tpu_custom_call.1} parent=5 // pred_region
        %s559 = ssub.s32 %s32, 1
        %p560 = scmp.lt.s32.totalorder %s37, 1
        %s561 = scalar_select %p560, %s37, 1
        %s562 = smul.addr %s561, 4
        %s563 = scalar_lea.vmem %s0, %s562
        %p564 = pneg %p58
        %p565 = pneg %p55
        %p566 = scmp.lt.s32.totalorder %s37, 1
        %s567 = scalar_select %p566, %s37, 1
        %s568 = smul.addr %s567, 4
        %s569 = scalar_lea.vmem %s1, %s568
        %p570 = pneg %p84
        %p571 = pneg %p81
        %p572 = pneg %p105
        %p573 = pneg %p102
        %p574 = pneg %p126
        %p575 = pneg %p123
        %p576 = pneg %p147
        %p577 = pneg %p144
        %p578 = pneg %p168
        %p579 = pneg %p165
        %p580 = pneg %p189
        %p581 = pneg %p186
        %p582 = pneg %p210
        %p583 = pneg %p207
        %p584 = pneg %p231
        %p585 = pneg %p228
        %p586 = pneg %p252
        %p587 = pneg %p249
        %p588 = pneg %p273
        %p589 = pneg %p270
        %p590 = pneg %p294
        %p591 = pneg %p291
        %p592 = pneg %p315
        %p593 = pneg %p312
        %p594 = pneg %p336
        %p595 = pneg %p333
        %p596 = pneg %p357
        %p597 = pneg %p354
        %p598 = pneg %p378
        %p599 = pneg %p375
        %p600 = pneg %p399
        %p601 = pneg %p396
        %p602 = pneg %p420
        %p603 = pneg %p417
        %p604 = pneg %p446
        %p605 = pneg %p443
        %s606 = sand.u32 %s433, 1
        %s607 = scalar_lea.sflag [#allocation3], %s606
        %s608 = sand.u32 %s433, 1
        %s609 = smul.addr %s608, 4
        %s610 = scalar_lea.vmem [#allocation2], %s609
        %p611 = pneg %p472
        %p612 = pneg %p469
        %s613 = sand.u32 %s459, 1
        %s614 = scalar_lea.sflag [#allocation5], %s613
        %s615 = sand.u32 %s459, 1
        %s616 = scalar_lea.vmem [#allocation4], %s615
        %p617 = scmp.lt.s32.totalorder %s37, 1
        %s618 = scalar_select %p617, %s37, 1
        %s619 = smul.addr %s618, 4
        %s620 = scalar_lea.vmem %s0, %s619
        %p621 = scmp.lt.s32.totalorder %s37, 1
        %s622 = scalar_select %p621, %s37, 1
        %s623 = smul.addr %s622, 4
        %s624 = scalar_lea.vmem %s1, %s623
        %v626 = vld [vmem:[%s620] sm:$0xf]
        %v627 = vld [vmem:[%s624] sm:$0xf]
        %v628 = vld [vmem:[%s2] sm:$0xf]
        %v629 = vld [vmem:[%s2 + $0x4] sm:$0xf]
        %v630 = vld [vmem:[%s2 + $0x8] sm:$0xf]
        %v631 = vld [vmem:[%s2 + $0xc] sm:$0xf]
        %v632 = vld [vmem:[%s2 + $0x10] sm:$0xf]
        %v633 = vld [vmem:[%s2 + $0x14] sm:$0xf]
        %v634 = vld [vmem:[%s2 + $0x18] sm:$0xf]
        %v635 = vld [vmem:[%s2 + $0x1c] sm:$0xf]
        %v636 = vld [vmem:[%s3] sm:$0x1]
        %v637 = vld [vmem:[%s3 + $0x1] sm:$0x1]
        %v640 = vlaneseq
        %v641 = vshrl.u32 %v640, 7
        %v642 = vsub.s32 0, %v641
        %v643 = vrot.slane %v636, %v642
        %v644 = vlaneseq
        %v645 = vshrl.u32 %v644, 7
        %v646 = vsub.s32 0, %v645
        %v647 = vrot.slane %v637, %v646
        %v654 = vunpack.c.l.b16 %v628
        %v655 = vunpack.c.l.b16 %v629
        %v656 = vunpack.c.l.b16 %v630
        %v657 = vunpack.c.l.b16 %v631
        %v658 = vpack.c.b16 %v655, %v654
        %v659 = vpack.c.b16 %v657, %v656
        %vm662 = vcmask 261120
        %v664 = vsel %vm662, %v626, 0
        %666 = vmatprep.subr.bf16.mxu0 0
        %667 = vmatpush1.bf16.msra.mxu0 0
        %668 = vmatprep.subr.bf16.mxu0 0
        %669 = vmatpush1.bf16.msra.mxu0 0
        %670 = vmatprep.subr.bf16.mxu0 0
        %671 = vmatpush1.bf16.msra.mxu0 0
        %672 = vmatprep.subr.bf16.mxu0 0
        %673 = vmatpush1.bf16.msra.mxu0 0
        %674 = vmatprep.subr.bf16.mxu0 0
        %675 = vmatpush1.bf16.msra.mxu0 0
        %676 = vmatprep.subr.bf16.mxu0 0
        %677 = vmatpush1.bf16.msra.mxu0 0
        %678 = vmatprep.subr.bf16.mxu0 0
        %679 = vmatpush1.bf16.msra.mxu0 %v659
        %680 = vmatprep.subr.bf16.mxu0 0
        %681 = vmatpush1.bf16.msra.mxu0 %v658
        %682 = vmatprep.subr.bf16.mxu0 0
        %683 = vmatpush2.bf16.msra.mxu0 0
        %684 = vmatprep.subr.bf16.mxu0 0
        %685 = vmatpush2.bf16.msra.mxu0 0
        %686 = vmatprep.subr.bf16.mxu0 0
        %687 = vmatpush2.bf16.msra.mxu0 0
        %688 = vmatprep.subr.bf16.mxu0 0
        %689 = vmatpush2.bf16.msra.mxu0 0
        %690 = vmatprep.subr.bf16.mxu0 0
        %691 = vmatpush2.bf16.msra.mxu0 0
        %692 = vmatprep.subr.bf16.mxu0 0
        %693 = vmatpush2.bf16.msra.mxu0 0
        %694 = vmatprep.subr.bf16.mxu0 0
        %695 = vmatpush2.bf16.msra.mxu0 0
        %696 = vmatprep.subr.bf16.mxu0 0
        %697 = vmatpush2.bf16.msra.mxu0 0
        %698 = vmatprep.mubr.bf16.mxu0 0
        %699 = vmatmul.mubr.bf16.gmra.mxu0 %v664
        %v700 = vpop.f32.mrf.mxu0
        %v701 = vadd.f32 %v643, %v700
        %v702 = vpop.f32.mrf.mxu0
        %v703 = vpop.f32.mrf.mxu0
        %v704 = vpop.f32.mrf.mxu0
        %705 = vdwg.mxu0
        %v710 = vunpack.c.l.b16 %v632
        %v711 = vunpack.c.l.b16 %v633
        %v712 = vunpack.c.l.b16 %v634
        %v713 = vunpack.c.l.b16 %v635
        %v714 = vpack.c.b16 %v711, %v710
        %v715 = vpack.c.b16 %v713, %v712
        %718 = vmatprep.subr.bf16.mxu0 0
        %719 = vmatpush1.bf16.msra.mxu0 0
        %720 = vmatprep.subr.bf16.mxu0 0
        %721 = vmatpush1.bf16.msra.mxu0 0
        %722 = vmatprep.subr.bf16.mxu0 0
        %723 = vmatpush1.bf16.msra.mxu0 0
        %724 = vmatprep.subr.bf16.mxu0 0
        %725 = vmatpush1.bf16.msra.mxu0 0
        %726 = vmatprep.subr.bf16.mxu0 0
        %727 = vmatpush1.bf16.msra.mxu0 0
        %728 = vmatprep.subr.bf16.mxu0 0
        %729 = vmatpush1.bf16.msra.mxu0 0
        %730 = vmatprep.subr.bf16.mxu0 0
        %731 = vmatpush1.bf16.msra.mxu0 %v715
        %732 = vmatprep.subr.bf16.mxu0 0
        %733 = vmatpush1.bf16.msra.mxu0 %v714
        %734 = vmatprep.subr.bf16.mxu0 0
        %735 = vmatpush2.bf16.msra.mxu0 0
        %736 = vmatprep.subr.bf16.mxu0 0
        %737 = vmatpush2.bf16.msra.mxu0 0
        %738 = vmatprep.subr.bf16.mxu0 0
        %739 = vmatpush2.bf16.msra.mxu0 0
        %740 = vmatprep.subr.bf16.mxu0 0
        %741 = vmatpush2.bf16.msra.mxu0 0
        %742 = vmatprep.subr.bf16.mxu0 0
        %743 = vmatpush2.bf16.msra.mxu0 0
        %744 = vmatprep.subr.bf16.mxu0 0
        %745 = vmatpush2.bf16.msra.mxu0 0
        %746 = vmatprep.subr.bf16.mxu0 0
        %747 = vmatpush2.bf16.msra.mxu0 0
        %748 = vmatprep.subr.bf16.mxu0 0
        %749 = vmatpush2.bf16.msra.mxu0 0
        %750 = vmatprep.mubr.bf16.mxu0 0
        %751 = vmatmul.mubr.bf16.gmra.mxu0 %v664
        %v752 = vpop.f32.mrf.mxu0
        %v753 = vadd.f32 %v647, %v752
        %v754 = vpop.f32.mrf.mxu0
        %v755 = vpop.f32.mrf.mxu0
        %v756 = vpop.f32.mrf.mxu0
        %757 = vdwg.mxu0
        %v758 = vpack.c.bf16 %v701, %v701
        %v759 = vpack.c.bf16 %v753, %v753
        %v760 = vld [vmem:[%s4] sm:$0xf]
        %v761 = vld [vmem:[%s4 + $0x4] sm:$0xf]
        %v762 = vld [vmem:[%s4 + $0x8] sm:$0xf]
        %v763 = vld [vmem:[%s4 + $0xc] sm:$0xf]
        %v764 = vld [vmem:[%s4 + $0x10] sm:$0xf]
        %v765 = vld [vmem:[%s4 + $0x14] sm:$0xf]
        %v766 = vld [vmem:[%s4 + $0x18] sm:$0xf]
        %v767 = vld [vmem:[%s4 + $0x1c] sm:$0xf]
        %v768 = vld [vmem:[%s5] sm:$0x1]
        %v769 = vld [vmem:[%s5 + $0x1] sm:$0x1]
        %v772 = vlaneseq
        %v773 = vshrl.u32 %v772, 7
        %v774 = vsub.s32 0, %v773
        %v775 = vrot.slane %v768, %v774
        %v776 = vlaneseq
        %v777 = vshrl.u32 %v776, 7
        %v778 = vsub.s32 0, %v777
        %v779 = vrot.slane %v769, %v778
        %v786 = vunpack.c.l.b16 %v760
        %v787 = vunpack.c.l.b16 %v761
        %v788 = vunpack.c.l.b16 %v762
        %v789 = vunpack.c.l.b16 %v763
        %v790 = vpack.c.b16 %v787, %v786
        %v791 = vpack.c.b16 %v789, %v788
        %v795 = vsel %vm662, %v627, 0
        %797 = vmatprep.subr.bf16.mxu0 0
        %798 = vmatpush1.bf16.msra.mxu0 0
        %799 = vmatprep.subr.bf16.mxu0 0
        %800 = vmatpush1.bf16.msra.mxu0 0
        %801 = vmatprep.subr.bf16.mxu0 0
        %802 = vmatpush1.bf16.msra.mxu0 0
        %803 = vmatprep.subr.bf16.mxu0 0
        %804 = vmatpush1.bf16.msra.mxu0 0
        %805 = vmatprep.subr.bf16.mxu0 0
        %806 = vmatpush1.bf16.msra.mxu0 0
        %807 = vmatprep.subr.bf16.mxu0 0
        %808 = vmatpush1.bf16.msra.mxu0 0
        %809 = vmatprep.subr.bf16.mxu0 0
        %810 = vmatpush1.bf16.msra.mxu0 %v791
        %811 = vmatprep.subr.bf16.mxu0 0
        %812 = vmatpush1.bf16.msra.mxu0 %v790
        %813 = vmatprep.subr.bf16.mxu0 0
        %814 = vmatpush2.bf16.msra.mxu0 0
        %815 = vmatprep.subr.bf16.mxu0 0
        %816 = vmatpush2.bf16.msra.mxu0 0
        %817 = vmatprep.subr.bf16.mxu0 0
        %818 = vmatpush2.bf16.msra.mxu0 0
        %819 = vmatprep.subr.bf16.mxu0 0
        %820 = vmatpush2.bf16.msra.mxu0 0
        %821 = vmatprep.subr.bf16.mxu0 0
        %822 = vmatpush2.bf16.msra.mxu0 0
        %823 = vmatprep.subr.bf16.mxu0 0
        %824 = vmatpush2.bf16.msra.mxu0 0
        %825 = vmatprep.subr.bf16.mxu0 0
        %826 = vmatpush2.bf16.msra.mxu0 0
        %827 = vmatprep.subr.bf16.mxu0 0
        %828 = vmatpush2.bf16.msra.mxu0 0
        %829 = vmatprep.mubr.bf16.mxu0 0
        %830 = vmatmul.mubr.bf16.gmra.mxu0 %v795
        %v831 = vpop.f32.mrf.mxu0
        %v832 = vadd.f32 %v775, %v831
        %v833 = vpop.f32.mrf.mxu0
        %v834 = vpop.f32.mrf.mxu0
        %v835 = vpop.f32.mrf.mxu0
        %836 = vdwg.mxu0
        %v841 = vunpack.c.l.b16 %v764
        %v842 = vunpack.c.l.b16 %v765
        %v843 = vunpack.c.l.b16 %v766
        %v844 = vunpack.c.l.b16 %v767
        %v845 = vpack.c.b16 %v842, %v841
        %v846 = vpack.c.b16 %v844, %v843
        %849 = vmatprep.subr.bf16.mxu0 0
        %850 = vmatpush1.bf16.msra.mxu0 0
        %851 = vmatprep.subr.bf16.mxu0 0
        %852 = vmatpush1.bf16.msra.mxu0 0
        %853 = vmatprep.subr.bf16.mxu0 0
        %854 = vmatpush1.bf16.msra.mxu0 0
        %855 = vmatprep.subr.bf16.mxu0 0
        %856 = vmatpush1.bf16.msra.mxu0 0
        %857 = vmatprep.subr.bf16.mxu0 0
        %858 = vmatpush1.bf16.msra.mxu0 0
        %859 = vmatprep.subr.bf16.mxu0 0
        %860 = vmatpush1.bf16.msra.mxu0 0
        %861 = vmatprep.subr.bf16.mxu0 0
        %862 = vmatpush1.bf16.msra.mxu0 %v846
        %863 = vmatprep.subr.bf16.mxu0 0
        %864 = vmatpush1.bf16.msra.mxu0 %v845
        %865 = vmatprep.subr.bf16.mxu0 0
        %866 = vmatpush2.bf16.msra.mxu0 0
        %867 = vmatprep.subr.bf16.mxu0 0
        %868 = vmatpush2.bf16.msra.mxu0 0
        %869 = vmatprep.subr.bf16.mxu0 0
        %870 = vmatpush2.bf16.msra.mxu0 0
        %871 = vmatprep.subr.bf16.mxu0 0
        %872 = vmatpush2.bf16.msra.mxu0 0
        %873 = vmatprep.subr.bf16.mxu0 0
        %874 = vmatpush2.bf16.msra.mxu0 0
        %875 = vmatprep.subr.bf16.mxu0 0
        %876 = vmatpush2.bf16.msra.mxu0 0
        %877 = vmatprep.subr.bf16.mxu0 0
        %878 = vmatpush2.bf16.msra.mxu0 0
        %879 = vmatprep.subr.bf16.mxu0 0
        %880 = vmatpush2.bf16.msra.mxu0 0
        %881 = vmatprep.mubr.bf16.mxu0 0
        %882 = vmatmul.mubr.bf16.gmra.mxu0 %v795
        %v883 = vpop.f32.mrf.mxu0
        %v884 = vadd.f32 %v779, %v883
        %v885 = vpop.f32.mrf.mxu0
        %v886 = vpop.f32.mrf.mxu0
        %v887 = vpop.f32.mrf.mxu0
        %888 = vdwg.mxu0
        %v889 = vpack.c.bf16 %v832, %v832
        %v890 = vpack.c.bf16 %v884, %v884
        %v891 = vld [vmem:[%s6] sm:$0xf]
        %v892 = vld [vmem:[%s6 + $0x4] sm:$0xf]
        %v893 = vld [vmem:[%s6 + $0x8] sm:$0xf]
        %v894 = vld [vmem:[%s6 + $0xc] sm:$0xf]
        %v895 = vld [vmem:[%s6 + $0x10] sm:$0xf]
        %v896 = vld [vmem:[%s6 + $0x14] sm:$0xf]
        %v897 = vld [vmem:[%s6 + $0x18] sm:$0xf]
        %v898 = vld [vmem:[%s6 + $0x1c] sm:$0xf]
        %v899 = vld [vmem:[%s7] sm:$0x1]
        %v900 = vld [vmem:[%s7 + $0x1] sm:$0x1]
        %v903 = vlaneseq
        %v904 = vshrl.u32 %v903, 7
        %v905 = vsub.s32 0, %v904
        %v906 = vrot.slane %v899, %v905
        %v907 = vlaneseq
        %v908 = vshrl.u32 %v907, 7
        %v909 = vsub.s32 0, %v908
        %v910 = vrot.slane %v900, %v909
        %v917 = vunpack.c.l.b16 %v891
        %v918 = vunpack.c.l.b16 %v892
        %v919 = vunpack.c.l.b16 %v893
        %v920 = vunpack.c.l.b16 %v894
        %v921 = vpack.c.b16 %v918, %v917
        %v922 = vpack.c.b16 %v920, %v919
        %925 = vmatprep.subr.bf16.mxu0 0
        %926 = vmatpush1.bf16.msra.mxu0 0
        %927 = vmatprep.subr.bf16.mxu0 0
        %928 = vmatpush1.bf16.msra.mxu0 0
        %929 = vmatprep.subr.bf16.mxu0 0
        %930 = vmatpush1.bf16.msra.mxu0 0
        %931 = vmatprep.subr.bf16.mxu0 0
        %932 = vmatpush1.bf16.msra.mxu0 0
        %933 = vmatprep.subr.bf16.mxu0 0
        %934 = vmatpush1.bf16.msra.mxu0 0
        %935 = vmatprep.subr.bf16.mxu0 0
        %936 = vmatpush1.bf16.msra.mxu0 0
        %937 = vmatprep.subr.bf16.mxu0 0
        %938 = vmatpush1.bf16.msra.mxu0 %v922
        %939 = vmatprep.subr.bf16.mxu0 0
        %940 = vmatpush1.bf16.msra.mxu0 %v921
        %941 = vmatprep.subr.bf16.mxu0 0
        %942 = vmatpush2.bf16.msra.mxu0 0
        %943 = vmatprep.subr.bf16.mxu0 0
        %944 = vmatpush2.bf16.msra.mxu0 0
        %945 = vmatprep.subr.bf16.mxu0 0
        %946 = vmatpush2.bf16.msra.mxu0 0
        %947 = vmatprep.subr.bf16.mxu0 0
        %948 = vmatpush2.bf16.msra.mxu0 0
        %949 = vmatprep.subr.bf16.mxu0 0
        %950 = vmatpush2.bf16.msra.mxu0 0
        %951 = vmatprep.subr.bf16.mxu0 0
        %952 = vmatpush2.bf16.msra.mxu0 0
        %953 = vmatprep.subr.bf16.mxu0 0
        %954 = vmatpush2.bf16.msra.mxu0 0
        %955 = vmatprep.subr.bf16.mxu0 0
        %956 = vmatpush2.bf16.msra.mxu0 0
        %957 = vmatprep.mubr.bf16.mxu0 0
        %958 = vmatmul.mubr.bf16.gmra.mxu0 %v795
        %v959 = vpop.f32.mrf.mxu0
        %v960 = vadd.f32 %v906, %v959
        %v961 = vpop.f32.mrf.mxu0
        %v962 = vpop.f32.mrf.mxu0
        %v963 = vpop.f32.mrf.mxu0
        %964 = vdwg.mxu0
        %v969 = vunpack.c.l.b16 %v895
        %v970 = vunpack.c.l.b16 %v896
        %v971 = vunpack.c.l.b16 %v897
        %v972 = vunpack.c.l.b16 %v898
        %v973 = vpack.c.b16 %v970, %v969
        %v974 = vpack.c.b16 %v972, %v971
        %977 = vmatprep.subr.bf16.mxu0 0
        %978 = vmatpush1.bf16.msra.mxu0 0
        %979 = vmatprep.subr.bf16.mxu0 0
        %980 = vmatpush1.bf16.msra.mxu0 0
        %981 = vmatprep.subr.bf16.mxu0 0
        %982 = vmatpush1.bf16.msra.mxu0 0
        %983 = vmatprep.subr.bf16.mxu0 0
        %984 = vmatpush1.bf16.msra.mxu0 0
        %985 = vmatprep.subr.bf16.mxu0 0
        %986 = vmatpush1.bf16.msra.mxu0 0
        %987 = vmatprep.subr.bf16.mxu0 0
        %988 = vmatpush1.bf16.msra.mxu0 0
        %989 = vmatprep.subr.bf16.mxu0 0
        %990 = vmatpush1.bf16.msra.mxu0 %v974
        %991 = vmatprep.subr.bf16.mxu0 0
        %992 = vmatpush1.bf16.msra.mxu0 %v973
        %993 = vmatprep.subr.bf16.mxu0 0
        %994 = vmatpush2.bf16.msra.mxu0 0
        %995 = vmatprep.subr.bf16.mxu0 0
        %996 = vmatpush2.bf16.msra.mxu0 0
        %997 = vmatprep.subr.bf16.mxu0 0
        %998 = vmatpush2.bf16.msra.mxu0 0
        %999 = vmatprep.subr.bf16.mxu0 0
        %1000 = vmatpush2.bf16.msra.mxu0 0
        %1001 = vmatprep.subr.bf16.mxu0 0
        %1002 = vmatpush2.bf16.msra.mxu0 0
        %1003 = vmatprep.subr.bf16.mxu0 0
        %1004 = vmatpush2.bf16.msra.mxu0 0
        %1005 = vmatprep.subr.bf16.mxu0 0
        %1006 = vmatpush2.bf16.msra.mxu0 0
        %1007 = vmatprep.subr.bf16.mxu0 0
        %1008 = vmatpush2.bf16.msra.mxu0 0
        %1009 = vmatprep.mubr.bf16.mxu0 0
        %1010 = vmatmul.mubr.bf16.gmra.mxu0 %v795
        %v1011 = vpop.f32.mrf.mxu0
        %v1012 = vadd.f32 %v910, %v1011
        %v1013 = vpop.f32.mrf.mxu0
        %v1014 = vpop.f32.mrf.mxu0
        %v1015 = vpop.f32.mrf.mxu0
        %1016 = vdwg.mxu0
        %v1017 = vpack.c.bf16 %v960, %v960
        %v1018 = vpack.c.bf16 %v1012, %v1012
        %vm1019 = vcmask 130048
        %v1021 = vsel %vm1019, %v758, 0
        %v1024 = vsel %vm1019, %v889, 0
        %1026 = vmatprep.subr.bf16.mxu0 0
        %1027 = vmatpush1.bf16.xpose.msra.mxu0 0
        %1028 = vmatprep.subr.bf16.mxu0 0
        %1029 = vmatpush1.bf16.xpose.msra.mxu0 0
        %1030 = vmatprep.subr.bf16.mxu0 0
        %1031 = vmatpush1.bf16.xpose.msra.mxu0 0
        %1032 = vmatprep.subr.bf16.mxu0 0
        %1033 = vmatpush1.bf16.xpose.msra.mxu0 0
        %1034 = vmatprep.subr.bf16.mxu0 0
        %1035 = vmatpush1.bf16.xpose.msra.mxu0 0
        %1036 = vmatprep.subr.bf16.mxu0 0
        %1037 = vmatpush1.bf16.xpose.msra.mxu0 0
        %1038 = vmatprep.subr.bf16.mxu0 0
        %1039 = vmatpush1.bf16.xpose.msra.mxu0 0
        %1040 = vmatprep.subr.bf16.mxu0 0
        %1041 = vmatpush1.bf16.xpose.msra.mxu0 %v1024
        %1042 = vmatprep.subr.bf16.mxu0 0
        %1043 = vmatpush2.bf16.xpose.msra.mxu0 0
        %1044 = vmatprep.subr.bf16.mxu0 0
        %1045 = vmatpush2.bf16.xpose.msra.mxu0 0
        %1046 = vmatprep.subr.bf16.mxu0 0
        %1047 = vmatpush2.bf16.xpose.msra.mxu0 0
        %1048 = vmatprep.subr.bf16.mxu0 0
        %1049 = vmatpush2.bf16.xpose.msra.mxu0 0
        %1050 = vmatprep.subr.bf16.mxu0 0
        %1051 = vmatpush2.bf16.xpose.msra.mxu0 0
        %1052 = vmatprep.subr.bf16.mxu0 0
        %1053 = vmatpush2.bf16.xpose.msra.mxu0 0
        %1054 = vmatprep.subr.bf16.mxu0 0
        %1055 = vmatpush2.bf16.xpose.msra.mxu0 0
        %1056 = vmatprep.subr.bf16.mxu0 0
        %1057 = vmatpush2.bf16.xpose.msra.mxu0 0
        %1058 = vmatprep.mubr.bf16.mxu0 0
        %1059 = vmatmul.mubr.bf16.gmra.mxu0 %v1021
        %v1060 = vpop.f32.mrf.mxu0
        %v1061 = vadd.f32 0.0, %v1060
        %v1062 = vpop.f32.mrf.mxu0
        %v1063 = vpop.f32.mrf.mxu0
        %v1064 = vpop.f32.mrf.mxu0
        %1065 = vdwg.mxu0
        %v1067 = vsel %vm1019, %v759, 0
        %v1070 = vsel %vm1019, %v890, 0
        %1072 = vmatprep.subr.bf16.mxu0 0
        %1073 = vmatpush1.bf16.xpose.msra.mxu0 0
        %1074 = vmatprep.subr.bf16.mxu0 0
        %1075 = vmatpush1.bf16.xpose.msra.mxu0 0
        %1076 = vmatprep.subr.bf16.mxu0 0
        %1077 = vmatpush1.bf16.xpose.msra.mxu0 0
        %1078 = vmatprep.subr.bf16.mxu0 0
        %1079 = vmatpush1.bf16.xpose.msra.mxu0 0
        %1080 = vmatprep.subr.bf16.mxu0 0
        %1081 = vmatpush1.bf16.xpose.msra.mxu0 0
        %1082 = vmatprep.subr.bf16.mxu0 0
        %1083 = vmatpush1.bf16.xpose.msra.mxu0 0
        %1084 = vmatprep.subr.bf16.mxu0 0
        %1085 = vmatpush1.bf16.xpose.msra.mxu0 0
        %1086 = vmatprep.subr.bf16.mxu0 0
        %1087 = vmatpush1.bf16.xpose.msra.mxu0 %v1070
        %1088 = vmatprep.subr.bf16.mxu0 0
        %1089 = vmatpush2.bf16.xpose.msra.mxu0 0
        %1090 = vmatprep.subr.bf16.mxu0 0
        %1091 = vmatpush2.bf16.xpose.msra.mxu0 0
        %1092 = vmatprep.subr.bf16.mxu0 0
        %1093 = vmatpush2.bf16.xpose.msra.mxu0 0
        %1094 = vmatprep.subr.bf16.mxu0 0
        %1095 = vmatpush2.bf16.xpose.msra.mxu0 0
        %1096 = vmatprep.subr.bf16.mxu0 0
        %1097 = vmatpush2.bf16.xpose.msra.mxu0 0
        %1098 = vmatprep.subr.bf16.mxu0 0
        %1099 = vmatpush2.bf16.xpose.msra.mxu0 0
        %1100 = vmatprep.subr.bf16.mxu0 0
        %1101 = vmatpush2.bf16.xpose.msra.mxu0 0
        %1102 = vmatprep.subr.bf16.mxu0 0
        %1103 = vmatpush2.bf16.xpose.msra.mxu0 0
        %1104 = vmatprep.mubr.bf16.mxu0 0
        %1105 = vmatmul.mubr.bf16.gmra.mxu0 %v1067
        %v1106 = vpop.f32.mrf.mxu0
        %v1107 = vadd.f32 0.0, %v1106
        %v1108 = vpop.f32.mrf.mxu0
        %v1109 = vpop.f32.mrf.mxu0
        %v1110 = vpop.f32.mrf.mxu0
        %1111 = vdwg.mxu0
        %vm1112 = vcmask 64512
        %v1113 = vsel %vm1112, %v1061, -inf
        %1114 = vmax.xlane.f32.xlu0 %v1113
        %v1115 = vpop.xlane.xlu0 %1114
        %v1116 = vsel %vm1112, %v1107, -inf
        %1117 = vmax.xlane.f32.xlu0 %v1116
        %v1118 = vpop.xlane.xlu0 %1117
        %v1119 = vsub.f32 %v1061, %v1115
        %v1120 = vsub.f32 %v1107, %v1118
        %v1121 = vmul.f32 %v1119, 1.442695
        %v1122 = vpow.pop %v1121
        %v1123 = vmul.f32 %v1120, 1.442695
        %v1124 = vpow.pop %v1123
        %v1125 = vsel %vm1112, %v1122, 0.0
        %1126 = vadd.xlane.f32.xlu0 %v1125
        %v1127 = vpop.xlane.xlu0 %1126
        %v1128 = vsel %vm1112, %v1124, 0.0
        %1129 = vadd.xlane.f32.xlu0 %v1128
        %v1130 = vpop.xlane.xlu0 %1129
        %v1131 = vrcp.pop %v1127
        %v1132 = vrcp.pop %v1130
        %v1133 = vmul.f32 %v1122, %v1131
        %v1134 = vmul.f32 %v1124, %v1132
        %v1135 = vlog2.pop %v1127
        %v1136 = vmul.f32 %v1135, 0.6931472
        %v1137 = vlog2.pop %v1130
        %v1138 = vmul.f32 %v1137, 0.6931472
        %v1139 = vmul.f32 %v1133, %v1119
        %v1140 = vmul.f32 %v1134, %v1120
        %v1141 = vsel %vm1112, %v1139, 0.0
        %1142 = vadd.xlane.f32.xlu0 %v1141
        %v1143 = vpop.xlane.xlu0 %1142
        %v1144 = vsel %vm1112, %v1140, 0.0
        %1145 = vadd.xlane.f32.xlu0 %v1144
        %v1146 = vpop.xlane.xlu0 %1145
        %v1147 = vsub.f32 %v1136, %v1143
        %v1148 = vsub.f32 %v1138, %v1146
        %v1149 = vmax.f32 %v1147, %v1148
        %v1151 = vlaneseq
        %v1152 = vand.u32 %v1151, 127
        %v1153 = vlaneseq
        %v1154 = vshrl.u32 %v1153, 7
        %v1155 = vsub.s32 %v1152, %v1154
        %v1156 = vrot.slane %v1149, %v1155
        %vm1158 = vcmask 57344
        %1159 = vst.msk [vmem:[%s616] sm:$0x1] %vm1158, %v1156
        %v1160 = vpack.c.bf16 %v1133, %v1133
        %v1161 = vpack.c.bf16 %v1134, %v1134
        %v1163 = vsel %vm1112, %v1160, 0
        %vm1165 = vcmask 1043456
        %v1167 = vsel %vm1165, %v1017, 0
        %1169 = vmatprep.subr.bf16.mxu0 0
        %1170 = vmatpush1.bf16.msra.mxu0 0
        %1171 = vmatprep.subr.bf16.mxu0 0
        %1172 = vmatpush1.bf16.msra.mxu0 0
        %1173 = vmatprep.subr.bf16.mxu0 0
        %1174 = vmatpush1.bf16.msra.mxu0 0
        %1175 = vmatprep.subr.bf16.mxu0 0
        %1176 = vmatpush1.bf16.msra.mxu0 0
        %1177 = vmatprep.subr.bf16.mxu0 0
        %1178 = vmatpush1.bf16.msra.mxu0 0
        %1179 = vmatprep.subr.bf16.mxu0 0
        %1180 = vmatpush1.bf16.msra.mxu0 0
        %1181 = vmatprep.subr.bf16.mxu0 0
        %1182 = vmatpush1.bf16.msra.mxu0 0
        %1183 = vmatprep.subr.bf16.mxu0 0
        %1184 = vmatpush1.bf16.msra.mxu0 %v1167
        %1185 = vmatprep.subr.bf16.mxu0 0
        %1186 = vmatpush2.bf16.msra.mxu0 0
        %1187 = vmatprep.subr.bf16.mxu0 0
        %1188 = vmatpush2.bf16.msra.mxu0 0
        %1189 = vmatprep.subr.bf16.mxu0 0
        %1190 = vmatpush2.bf16.msra.mxu0 0
        %1191 = vmatprep.subr.bf16.mxu0 0
        %1192 = vmatpush2.bf16.msra.mxu0 0
        %1193 = vmatprep.subr.bf16.mxu0 0
        %1194 = vmatpush2.bf16.msra.mxu0 0
        %1195 = vmatprep.subr.bf16.mxu0 0
        %1196 = vmatpush2.bf16.msra.mxu0 0
        %1197 = vmatprep.subr.bf16.mxu0 0
        %1198 = vmatpush2.bf16.msra.mxu0 0
        %1199 = vmatprep.subr.bf16.mxu0 0
        %1200 = vmatpush2.bf16.msra.mxu0 0
        %1201 = vmatprep.mubr.bf16.mxu0 0
        %1202 = vmatmul.mubr.bf16.gmra.mxu0 %v1163
        %v1203 = vpop.f32.mrf.mxu0
        %v1204 = vadd.f32 0.0, %v1203
        %v1205 = vpop.f32.mrf.mxu0
        %v1206 = vpop.f32.mrf.mxu0
        %v1207 = vpop.f32.mrf.mxu0
        %1208 = vdwg.mxu0
        %v1210 = vsel %vm1112, %v1161, 0
        %v1213 = vsel %vm1165, %v1018, 0
        %1215 = vmatprep.subr.bf16.mxu0 0
        %1216 = vmatpush1.bf16.msra.mxu0 0
        %1217 = vmatprep.subr.bf16.mxu0 0
        %1218 = vmatpush1.bf16.msra.mxu0 0
        %1219 = vmatprep.subr.bf16.mxu0 0
        %1220 = vmatpush1.bf16.msra.mxu0 0
        %1221 = vmatprep.subr.bf16.mxu0 0
        %1222 = vmatpush1.bf16.msra.mxu0 0
        %1223 = vmatprep.subr.bf16.mxu0 0
        %1224 = vmatpush1.bf16.msra.mxu0 0
        %1225 = vmatprep.subr.bf16.mxu0 0
        %1226 = vmatpush1.bf16.msra.mxu0 0
        %1227 = vmatprep.subr.bf16.mxu0 0
        %1228 = vmatpush1.bf16.msra.mxu0 0
        %1229 = vmatprep.subr.bf16.mxu0 0
        %1230 = vmatpush1.bf16.msra.mxu0 %v1213
        %1231 = vmatprep.subr.bf16.mxu0 0
        %1232 = vmatpush2.bf16.msra.mxu0 0
        %1233 = vmatprep.subr.bf16.mxu0 0
        %1234 = vmatpush2.bf16.msra.mxu0 0
        %1235 = vmatprep.subr.bf16.mxu0 0
        %1236 = vmatpush2.bf16.msra.mxu0 0
        %1237 = vmatprep.subr.bf16.mxu0 0
        %1238 = vmatpush2.bf16.msra.mxu0 0
        %1239 = vmatprep.subr.bf16.mxu0 0
        %1240 = vmatpush2.bf16.msra.mxu0 0
        %1241 = vmatprep.subr.bf16.mxu0 0
        %1242 = vmatpush2.bf16.msra.mxu0 0
        %1243 = vmatprep.subr.bf16.mxu0 0
        %1244 = vmatpush2.bf16.msra.mxu0 0
        %1245 = vmatprep.subr.bf16.mxu0 0
        %1246 = vmatpush2.bf16.msra.mxu0 0
        %1247 = vmatprep.mubr.bf16.mxu0 0
        %1248 = vmatmul.mubr.bf16.gmra.mxu0 %v1210
        %v1249 = vpop.f32.mrf.mxu0
        %v1250 = vadd.f32 0.0, %v1249
        %v1251 = vpop.f32.mrf.mxu0
        %v1252 = vpop.f32.mrf.mxu0
        %v1253 = vpop.f32.mrf.mxu0
        %1254 = vdwg.mxu0
        %v1255 = vpack.c.bf16 %v1204, %v1204
        %v1256 = vpack.c.bf16 %v1250, %v1250
        %v1257 = vld [vmem:[%s8] sm:$0xf]
        %v1258 = vld [vmem:[%s8 + $0x4] sm:$0xf]
        %v1259 = vld [vmem:[%s8 + $0x8] sm:$0xf]
        %v1260 = vld [vmem:[%s8 + $0xc] sm:$0xf]
        %v1263 = vunpack.c.l.b16 %v1257
        %v1264 = vunpack.c.l.b16 %v1258
        %v1265 = vpack.c.b16 %v1264, %v1263
        %v1268 = vsel %vm1019, %v1255, 0
        %1270 = vmatprep.subr.bf16.mxu0 0
        %1271 = vmatpush1.bf16.msra.mxu0 0
        %1272 = vmatprep.subr.bf16.mxu0 0
        %1273 = vmatpush1.bf16.msra.mxu0 0
        %1274 = vmatprep.subr.bf16.mxu0 0
        %1275 = vmatpush1.bf16.msra.mxu0 0
        %1276 = vmatprep.subr.bf16.mxu0 0
        %1277 = vmatpush1.bf16.msra.mxu0 0
        %1278 = vmatprep.subr.bf16.mxu0 0
        %1279 = vmatpush1.bf16.msra.mxu0 0
        %1280 = vmatprep.subr.bf16.mxu0 0
        %1281 = vmatpush1.bf16.msra.mxu0 0
        %1282 = vmatprep.subr.bf16.mxu0 0
        %1283 = vmatpush1.bf16.msra.mxu0 0
        %1284 = vmatprep.subr.bf16.mxu0 0
        %1285 = vmatpush1.bf16.msra.mxu0 %v1265
        %1286 = vmatprep.subr.bf16.mxu0 0
        %1287 = vmatpush2.bf16.msra.mxu0 0
        %1288 = vmatprep.subr.bf16.mxu0 0
        %1289 = vmatpush2.bf16.msra.mxu0 0
        %1290 = vmatprep.subr.bf16.mxu0 0
        %1291 = vmatpush2.bf16.msra.mxu0 0
        %1292 = vmatprep.subr.bf16.mxu0 0
        %1293 = vmatpush2.bf16.msra.mxu0 0
        %1294 = vmatprep.subr.bf16.mxu0 0
        %1295 = vmatpush2.bf16.msra.mxu0 0
        %1296 = vmatprep.subr.bf16.mxu0 0
        %1297 = vmatpush2.bf16.msra.mxu0 0
        %1298 = vmatprep.subr.bf16.mxu0 0
        %1299 = vmatpush2.bf16.msra.mxu0 0
        %1300 = vmatprep.subr.bf16.mxu0 0
        %1301 = vmatpush2.bf16.msra.mxu0 0
        %1302 = vmatprep.mubr.bf16.mxu0 0
        %1303 = vmatmul.mubr.bf16.gmra.mxu0 %v1268
        %v1304 = vpop.f32.mrf.mxu0
        %v1305 = vadd.f32 0.0, %v1304
        %v1306 = vpop.f32.mrf.mxu0
        %v1307 = vpop.f32.mrf.mxu0
        %v1308 = vpop.f32.mrf.mxu0
        %1309 = vdwg.mxu0
        %v1312 = vunpack.c.l.b16 %v1259
        %v1313 = vunpack.c.l.b16 %v1260
        %v1314 = vpack.c.b16 %v1313, %v1312
        %v1317 = vsel %vm1019, %v1256, 0
        %1319 = vmatprep.subr.bf16.mxu0 0
        %1320 = vmatpush1.bf16.msra.mxu0 0
        %1321 = vmatprep.subr.bf16.mxu0 0
        %1322 = vmatpush1.bf16.msra.mxu0 0
        %1323 = vmatprep.subr.bf16.mxu0 0
        %1324 = vmatpush1.bf16.msra.mxu0 0
        %1325 = vmatprep.subr.bf16.mxu0 0
        %1326 = vmatpush1.bf16.msra.mxu0 0
        %1327 = vmatprep.subr.bf16.mxu0 0
        %1328 = vmatpush1.bf16.msra.mxu0 0
        %1329 = vmatprep.subr.bf16.mxu0 0
        %1330 = vmatpush1.bf16.msra.mxu0 0
        %1331 = vmatprep.subr.bf16.mxu0 0
        %1332 = vmatpush1.bf16.msra.mxu0 0
        %1333 = vmatprep.subr.bf16.mxu0 0
        %1334 = vmatpush1.bf16.msra.mxu0 %v1314
        %1335 = vmatprep.subr.bf16.mxu0 0
        %1336 = vmatpush2.bf16.msra.mxu0 0
        %1337 = vmatprep.subr.bf16.mxu0 0
        %1338 = vmatpush2.bf16.msra.mxu0 0
        %1339 = vmatprep.subr.bf16.mxu0 0
        %1340 = vmatpush2.bf16.msra.mxu0 0
        %1341 = vmatprep.subr.bf16.mxu0 0
        %1342 = vmatpush2.bf16.msra.mxu0 0
        %1343 = vmatprep.subr.bf16.mxu0 0
        %1344 = vmatpush2.bf16.msra.mxu0 0
        %1345 = vmatprep.subr.bf16.mxu0 0
        %1346 = vmatpush2.bf16.msra.mxu0 0
        %1347 = vmatprep.subr.bf16.mxu0 0
        %1348 = vmatpush2.bf16.msra.mxu0 0
        %1349 = vmatprep.subr.bf16.mxu0 0
        %1350 = vmatpush2.bf16.msra.mxu0 0
        %1351 = vmatprep.mubr.bf16.mxu0 0
        %1352 = vmatmul.mubr.bf16.gmra.mxu0 %v1317
        %v1353 = vpop.f32.mrf.mxu0
        %v1354 = vadd.f32 0.0, %v1353
        %v1355 = vpop.f32.mrf.mxu0
        %v1356 = vpop.f32.mrf.mxu0
        %v1357 = vpop.f32.mrf.mxu0
        %1358 = vdwg.mxu0
        %v1359 = vsel %vm662, %v1305, 0.0
        %v1360 = vsel %vm662, %v1354, 0.0
        %v1361 = vadd.f32 %v1359, %v1360
        %v1362 = vld [vmem:[%s9] sm:$0x1]
        %v1364 = vlaneseq
        %v1365 = vshrl.u32 %v1364, 7
        %v1366 = vsub.s32 0, %v1365
        %v1367 = vrot.slane %v1362, %v1366
        %v1369 = vadd.f32 %v1361, %v1367
        %v1370 = vsel %vm662, %v1369, 0.0
        %1371 = vadd.xlane.f32.xlu0 %v1370
        %v1372 = vpop.xlane.xlu0 %1371
        %v1373 = vrcp.pop 32.0
        %v1374 = vmul.f32 %v1372, %v1373
        %v1375 = vsub.f32 %v1369, %v1374
        %v1376 = vmul.f32 %v1375, %v1375
        %v1377 = vsel %vm662, %v1376, 0.0
        %1378 = vadd.xlane.f32.xlu0 %v1377
        %v1379 = vpop.xlane.xlu0 %1378
        %v1380 = vmul.f32 %v1379, %v1373
        %v1381 = vadd.f32 %v1380, 1e-05
        %v1382 = vrsqrt.pop %v1381
        %v1383 = vmul.f32 %v1375, %v1382
        %v1384 = vld [vmem:[%s10] sm:$0x1]
        %v1386 = vlaneseq
        %v1387 = vshrl.u32 %v1386, 7
        %v1388 = vsub.s32 0, %v1387
        %v1389 = vrot.slane %v1384, %v1388
        %v1391 = vmul.f32 %v1383, %v1389
        %v1392 = vld [vmem:[%s11] sm:$0x1]
        %v1394 = vlaneseq
        %v1395 = vshrl.u32 %v1394, 7
        %v1396 = vsub.s32 0, %v1395
        %v1397 = vrot.slane %v1392, %v1396
        %v1399 = vadd.f32 %v1391, %v1397
        %v1400 = vpack.c.bf16 %v1399, %v1399
        %v1401 = vld [vmem:[%s12] sm:$0xf]
        %v1402 = vld [vmem:[%s12 + $0x4] sm:$0xf]
        %v1403 = vld [vmem:[%s12 + $0x8] sm:$0xf]
        %v1404 = vld [vmem:[%s12 + $0xc] sm:$0xf]
        %v1405 = vld [vmem:[%s13] sm:$0x1]
        %v1407 = vlaneseq
        %v1408 = vshrl.u32 %v1407, 7
        %v1409 = vsub.s32 0, %v1408
        %v1410 = vrot.slane %v1405, %v1409
        %v1416 = vunpack.c.l.b16 %v1401
        %v1417 = vunpack.c.l.b16 %v1402
        %v1418 = vunpack.c.l.b16 %v1403
        %v1419 = vunpack.c.l.b16 %v1404
        %v1420 = vpack.c.b16 %v1417, %v1416
        %v1421 = vpack.c.b16 %v1419, %v1418
        %v1425 = vsel %vm662, %v1400, 0
        %1427 = vmatprep.subr.bf16.mxu0 0
        %1428 = vmatpush1.bf16.msra.mxu0 0
        %1429 = vmatprep.subr.bf16.mxu0 0
        %1430 = vmatpush1.bf16.msra.mxu0 0
        %1431 = vmatprep.subr.bf16.mxu0 0
        %1432 = vmatpush1.bf16.msra.mxu0 0
        %1433 = vmatprep.subr.bf16.mxu0 0
        %1434 = vmatpush1.bf16.msra.mxu0 0
        %1435 = vmatprep.subr.bf16.mxu0 0
        %1436 = vmatpush1.bf16.msra.mxu0 0
        %1437 = vmatprep.subr.bf16.mxu0 0
        %1438 = vmatpush1.bf16.msra.mxu0 0
        %1439 = vmatprep.subr.bf16.mxu0 0
        %1440 = vmatpush1.bf16.msra.mxu0 %v1421
        %1441 = vmatprep.subr.bf16.mxu0 0
        %1442 = vmatpush1.bf16.msra.mxu0 %v1420
        %1443 = vmatprep.subr.bf16.mxu0 0
        %1444 = vmatpush2.bf16.msra.mxu0 0
        %1445 = vmatprep.subr.bf16.mxu0 0
        %1446 = vmatpush2.bf16.msra.mxu0 0
        %1447 = vmatprep.subr.bf16.mxu0 0
        %1448 = vmatpush2.bf16.msra.mxu0 0
        %1449 = vmatprep.subr.bf16.mxu0 0
        %1450 = vmatpush2.bf16.msra.mxu0 0
        %1451 = vmatprep.subr.bf16.mxu0 0
        %1452 = vmatpush2.bf16.msra.mxu0 0
        %1453 = vmatprep.subr.bf16.mxu0 0
        %1454 = vmatpush2.bf16.msra.mxu0 0
        %1455 = vmatprep.subr.bf16.mxu0 0
        %1456 = vmatpush2.bf16.msra.mxu0 0
        %1457 = vmatprep.subr.bf16.mxu0 0
        %1458 = vmatpush2.bf16.msra.mxu0 0
        %1459 = vmatprep.mubr.bf16.mxu0 0
        %1460 = vmatmul.mubr.bf16.gmra.mxu0 %v1425
        %v1461 = vpop.f32.mrf.mxu0
        %v1462 = vadd.f32 %v1410, %v1461
        %v1463 = vpop.f32.mrf.mxu0
        %v1464 = vpop.f32.mrf.mxu0
        %v1465 = vpop.f32.mrf.mxu0
        %1466 = vdwg.mxu0
        %v1467 = vmax.f32 %v1462, 0.0
        %v1468 = vpack.c.bf16 %v1467, %v1467
        %v1469 = vld [vmem:[%s14] sm:$0xf]
        %v1470 = vld [vmem:[%s14 + $0x4] sm:$0xf]
        %v1471 = vld [vmem:[%s14 + $0x8] sm:$0xf]
        %v1472 = vld [vmem:[%s14 + $0xc] sm:$0xf]
        %v1473 = vld [vmem:[%s14 + $0x10] sm:$0xf]
        %v1474 = vld [vmem:[%s14 + $0x14] sm:$0xf]
        %v1475 = vld [vmem:[%s14 + $0x18] sm:$0xf]
        %v1476 = vld [vmem:[%s14 + $0x1c] sm:$0xf]
        %v1477 = vld [vmem:[%s14 + $0x20] sm:$0xf]
        %v1478 = vld [vmem:[%s14 + $0x24] sm:$0xf]
        %v1479 = vld [vmem:[%s14 + $0x28] sm:$0xf]
        %v1480 = vld [vmem:[%s14 + $0x2c] sm:$0xf]
        %v1481 = vld [vmem:[%s14 + $0x30] sm:$0xf]
        %v1482 = vld [vmem:[%s14 + $0x34] sm:$0xf]
        %v1483 = vld [vmem:[%s14 + $0x38] sm:$0xf]
        %v1484 = vld [vmem:[%s14 + $0x3c] sm:$0xf]
        %v1485 = vld [vmem:[%s15] sm:$0x1]
        %v1487 = vlaneseq
        %v1488 = vshrl.u32 %v1487, 7
        %v1489 = vsub.s32 0, %v1488
        %v1490 = vrot.slane %v1485, %v1489
        %v1508 = vunpack.c.l.b16 %v1469
        %v1509 = vunpack.c.l.b16 %v1470
        %v1510 = vunpack.c.l.b16 %v1471
        %v1511 = vunpack.c.l.b16 %v1472
        %v1512 = vunpack.c.l.b16 %v1473
        %v1513 = vunpack.c.l.b16 %v1474
        %v1514 = vunpack.c.l.b16 %v1475
        %v1515 = vunpack.c.l.b16 %v1476
        %v1516 = vunpack.c.l.b16 %v1477
        %v1517 = vunpack.c.l.b16 %v1478
        %v1518 = vunpack.c.l.b16 %v1479
        %v1519 = vunpack.c.l.b16 %v1480
        %v1520 = vunpack.c.l.b16 %v1481
        %v1521 = vunpack.c.l.b16 %v1482
        %v1522 = vunpack.c.l.b16 %v1483
        %v1523 = vunpack.c.l.b16 %v1484
        %v1524 = vpack.c.b16 %v1509, %v1508
        %v1525 = vpack.c.b16 %v1511, %v1510
        %v1526 = vpack.c.b16 %v1513, %v1512
        %v1527 = vpack.c.b16 %v1515, %v1514
        %v1528 = vpack.c.b16 %v1517, %v1516
        %v1529 = vpack.c.b16 %v1519, %v1518
        %v1530 = vpack.c.b16 %v1521, %v1520
        %v1531 = vpack.c.b16 %v1523, %v1522
        %1540 = vmatprep.subr.bf16.mxu0 0
        %1541 = vmatpush1.bf16.msra.mxu0 %v1531
        %1542 = vmatprep.subr.bf16.mxu0 0
        %1543 = vmatpush1.bf16.msra.mxu0 %v1530
        %1544 = vmatprep.subr.bf16.mxu0 0
        %1545 = vmatpush1.bf16.msra.mxu0 %v1529
        %1546 = vmatprep.subr.bf16.mxu0 0
        %1547 = vmatpush1.bf16.msra.mxu0 %v1528
        %1548 = vmatprep.subr.bf16.mxu0 0
        %1549 = vmatpush1.bf16.msra.mxu0 %v1527
        %1550 = vmatprep.subr.bf16.mxu0 0
        %1551 = vmatpush1.bf16.msra.mxu0 %v1526
        %1552 = vmatprep.subr.bf16.mxu0 0
        %1553 = vmatpush1.bf16.msra.mxu0 %v1525
        %1554 = vmatprep.subr.bf16.mxu0 0
        %1555 = vmatpush1.bf16.msra.mxu0 %v1524
        %1556 = vmatprep.subr.bf16.mxu0 0
        %1557 = vmatpush2.bf16.msra.mxu0 0
        %1558 = vmatprep.subr.bf16.mxu0 0
        %1559 = vmatpush2.bf16.msra.mxu0 0
        %1560 = vmatprep.subr.bf16.mxu0 0
        %1561 = vmatpush2.bf16.msra.mxu0 0
        %1562 = vmatprep.subr.bf16.mxu0 0
        %1563 = vmatpush2.bf16.msra.mxu0 0
        %1564 = vmatprep.subr.bf16.mxu0 0
        %1565 = vmatpush2.bf16.msra.mxu0 0
        %1566 = vmatprep.subr.bf16.mxu0 0
        %1567 = vmatpush2.bf16.msra.mxu0 0
        %1568 = vmatprep.subr.bf16.mxu0 0
        %1569 = vmatpush2.bf16.msra.mxu0 0
        %1570 = vmatprep.subr.bf16.mxu0 0
        %1571 = vmatpush2.bf16.msra.mxu0 0
        %1572 = vmatprep.mubr.bf16.mxu0 0
        %1573 = vmatmul.mubr.bf16.gmra.mxu0 %v1468
        %v1574 = vpop.f32.mrf.mxu0
        %v1575 = vadd.f32 %v1490, %v1574
        %v1576 = vpop.f32.mrf.mxu0
        %v1577 = vpop.f32.mrf.mxu0
        %v1578 = vpop.f32.mrf.mxu0
        %1579 = vdwg.mxu0
        %v1580 = vsel %vm662, %v1575, 0.0
        %1581 = vadd.xlane.f32.xlu0 %v1580
        %v1582 = vpop.xlane.xlu0 %1581
        %v1583 = vmul.f32 %v1582, %v1373
        %v1584 = vsub.f32 %v1575, %v1583
        %v1585 = vmul.f32 %v1584, %v1584
        %v1586 = vsel %vm662, %v1585, 0.0
        %1587 = vadd.xlane.f32.xlu0 %v1586
        %v1588 = vpop.xlane.xlu0 %1587
        %v1589 = vmul.f32 %v1588, %v1373
        %v1590 = vadd.f32 %v1589, 1e-05
        %v1591 = vrsqrt.pop %v1590
        %v1592 = vmul.f32 %v1584, %v1591
        %v1593 = vld [vmem:[%s16] sm:$0x1]
        %v1595 = vlaneseq
        %v1596 = vshrl.u32 %v1595, 7
        %v1597 = vsub.s32 0, %v1596
        %v1598 = vrot.slane %v1593, %v1597
        %v1600 = vmul.f32 %v1592, %v1598
        %v1601 = vld [vmem:[%s17] sm:$0x1]
        %v1603 = vlaneseq
        %v1604 = vshrl.u32 %v1603, 7
        %v1605 = vsub.s32 0, %v1604
        %v1606 = vrot.slane %v1601, %v1605
        %v1608 = vadd.f32 %v1600, %v1606
        %v1609 = vpack.c.bf16 %v1608, %v1608
        %vm1610 = vcmask 257024
        %1611 = vst.msk [vmem:[%s610] sm:$0xf] %vm1610, %v1609
        %s1612 = sand.u32 %s433, 1
        %s1613 = scalar_lea.sflag [#allocation3], %s1612
        %s1614 = sand.u32 %s433, 1
        %s1615 = smul.addr %s1614, 4
        %s1616 = scalar_lea.vmem [#allocation2], %s1615
        %s1617 = sand.u32 %s459, 1
        %s1618 = scalar_lea.sflag [#allocation5], %s1617
        %s1619 = sand.u32 %s459, 1
        %s1620 = scalar_lea.vmem [#allocation4], %s1619
        // Predicated region
        $region93: #{tpu_custom_call.1} parent=91 // pred_check
          %p1621 = pneg %p443
        $region94: #{tpu_custom_call.1} parent=91 // pred_check_branch
          %1623 = sbr.rel (%p1621) target = $region96
        $region95: #{tpu_custom_call.1} parent=91 // pred_region
          %s1625 = ssub.s32 64, 64
          %1626 = vsyncadd %s1613, %s1625
          %s1627 = smul.addr %s37, 64
          %s1628 = scalar_lea.hbm %s18, %s1627
          %s1630 = sshll.u32 %s1616, 4
          %s1631 = int_to_ptr.vmem [resolvable:$true] %s1630
          %1633 = dma.vmem_to_hbm [thread:$0]  %s1631, 64, %s1628, %s1613
        $region96: #{tpu_custom_call.1} parent=91 // pred_fallthru
          _
        // Predicated region
        $region97: #{tpu_custom_call.1} parent=91 // pred_check
          %p1634 = pneg %p469
        $region98: #{tpu_custom_call.1} parent=91 // pred_check_branch
          %1636 = sbr.rel (%p1634) target = $region100
        $region99: #{tpu_custom_call.1} parent=91 // pred_region
          %s1638 = ssub.s32 16, 16
          %1639 = vsyncadd %s1618, %s1638
          %s1640 = smul.addr %s37, 16
          %s1641 = scalar_lea.hbm %s19, %s1640
          %s1643 = sshll.u32 %s1620, 4
          %s1644 = int_to_ptr.vmem [resolvable:$true] %s1643
          %1646 = dma.vmem_to_hbm [thread:$0]  %s1644, 16, %s1641, %s1618
        $region100: #{tpu_custom_call.1} parent=91 // pred_fallthru
          _
      $region92: #{tpu_custom_call.1} parent=5 // pred_fallthru
        _
      %p1647 = scmp.le.s32.totalorder 2, %s32
      // Predicated region
      $region101: #{tpu_custom_call.1} parent=5 // pred_check
        %p1648 = pneg %p1647
      $region102: #{tpu_custom_call.1} parent=5 // pred_check_branch
        %1650 = sbr.rel (%p1648) target = $region104
      $region103: #{tpu_custom_call.1} parent=5 // pred_region
        %s1651 = ssub.s32 %s32, 2
        // Predicated region
        $region105: #{tpu_custom_call.1} parent=103 // pred_check
          %p1652 = pneg %p449
        $region106: #{tpu_custom_call.1} parent=103 // pred_check_branch
          %1654 = sbr.rel (%p1652) target = $region108
        $region107: #{tpu_custom_call.1} parent=103 // pred_region
          %s1655 = sand.u32 %s434, 1
          %s1656 = scalar_lea.sflag [#allocation3], %s1655
          %s1657 = sand.u32 %s434, 1
          %s1658 = smul.addr %s1657, 4
          %s1659 = scalar_lea.vmem [#allocation2], %s1658
          %1660 = dma.done %s1656, 64
        $region108: #{tpu_custom_call.1} parent=103 // pred_fallthru
          _
        // Predicated region
        $region109: #{tpu_custom_call.1} parent=103 // pred_check
          %p1661 = pneg %p475
        $region110: #{tpu_custom_call.1} parent=103 // pred_check_branch
          %1663 = sbr.rel (%p1661) target = $region112
        $region111: #{tpu_custom_call.1} parent=103 // pred_region
          %s1664 = sand.u32 %s460, 1
          %s1665 = scalar_lea.sflag [#allocation5], %s1664
          %s1666 = sand.u32 %s460, 1
          %s1667 = scalar_lea.vmem [#allocation4], %s1666
          %1668 = dma.done %s1665, 16
        $region112: #{tpu_custom_call.1} parent=103 // pred_fallthru
          _
      $region104: #{tpu_custom_call.1} parent=5 // pred_fallthru
        _
    $region6: #{tpu_custom_call.1} parent=1 // loop_footer
      %s36 = sadd.s32 1, %s32
    $region7: #{tpu_custom_call.1} parent=1 // loop_footer_branch
      %31 = sbr.rel target = $region3
    $region8: #{tpu_custom_call.1} parent=1 // loop_exit
      _
    %1669 = vsyncpa [#allocation3], 1
    %s1670 = scalar_lea.sflag [#allocation3], 1
    %1671 = vsyncpa %s1670, 1
    %1672 = vsyncpa [#allocation5], 1
    %s1673 = scalar_lea.sflag [#allocation5], 1
    %1674 = vsyncpa %s1673, 1

</llo_original>
